<compile_context>
chip_gen: v5e
topology: v5e:2x2
jax: 0.10.0
libtpu: 0.0.40
codegen_flags: <defaults>
</compile_context>

<pallas_src>
import functools

import jax
import jax.numpy as jnp
from jax.experimental import pallas as pl
from jax.experimental.pallas import tpu as pltpu

_LANE = 128


def _round_up(x, m):
    return (x + m - 1) // m * m


# ----------------------------------------------------------------------------
# Pallas kernel 1: 3x3x3 conv as a single im2col GEMM, one sample per grid step.
# Also emits per-channel (sum, sum-of-squares) BN partial statistics.
# ----------------------------------------------------------------------------
def _conv3d_im2col_kernel(x_ref, w_ref, b_ref, y_ref, st_ref,
                          *, D, H, W, Cp_in, Cp_out):
    # x_ref : (1, D+2, H+2, W+2, Cp_in)  halo-padded, channel-padded input block
    # w_ref : (27*Cp_in, Cp_out)         weights, K ordered as (kd, kh, kw, cin)
    # b_ref : (1, Cp_out)                bias (f32)
    # y_ref : (1, D, H, W, Cp_out)       conv output
    # st_ref: (1, 1, 2*Cp_out)           [channel sums | channel sums of squares]
    xp = x_ref[0]                                                    # (D+2,H+2,W+2,Cp)

    # Fold the 27 taps into the contraction (lane) axis: K = 27*Cp_in.  All concats
    # are along the lane axis with 128-aligned pieces; kd/kh slices are on leading
    # dims (free), only the 3 kw slices touch the sublane axis.
    xw = jnp.concatenate([xp[:, :, kw:kw + W, :] for kw in range(3)], axis=-1)
    xh = jnp.concatenate([xw[:, kh:kh + H, :, :] for kh in range(3)], axis=-1)
    xd = jnp.concatenate([xh[kd:kd + D, :, :, :] for kd in range(3)], axis=-1)
    patches = xd.reshape(D * H * W, 27 * Cp_in)                      # layout-preserving

    acc = jnp.dot(patches, w_ref[...], preferred_element_type=jnp.float32)
    acc = acc + b_ref[...]                                           # (DHW, Cp_out) f32

    # BN batch-statistic partial sums for this grid step (finalized in the wrapper),
    # so y is never re-read from HBM just for mean/var.
    ssum = jnp.sum(acc, axis=0, keepdims=True)                       # (1, Cp_out)
    ssq = jnp.sum(acc * acc, axis=0, keepdims=True)                  # (1, Cp_out)
    st_ref[0] = jnp.concatenate([ssum, ssq], axis=-1)                # (1, 2*Cp_out)

    y_ref[0] = acc.reshape(D, H, W, Cp_out).astype(y_ref.dtype)


def conv3d_bn_stats_pallas(xpad, wmat, bias, *, out_dtype):
    """xpad: (N, D+2, H+2, W+2, Cp_in); wmat: (27*Cp_in, Cp_out); bias: (1, Cp_out) f32."""
    N, Dp, Hp, Wp, Cp_in = xpad.shape
    D, H, W = Dp - 2, Hp - 2, Wp - 2
    Cp_out = wmat.shape[1]
    kern = functools.partial(_conv3d_im2col_kernel,
                             D=D, H=H, W=W, Cp_in=Cp_in, Cp_out=Cp_out)
    # TODO(synk): for production UNet volumes add a spatial (D-tile) grid axis with
    # halo handling / in-kernel zero padding so blocks fit v7x's 64 MiB VMEM and the
    # grid shards across both TensorCores even at batch 1.
    return pl.pallas_call(
        kern,
        out_shape=(jax.ShapeDtypeStruct((N, D, H, W, Cp_out), out_dtype),
                   jax.ShapeDtypeStruct((N, 1, 2 * Cp_out), jnp.float32)),
        grid=(N,),
        in_specs=[
            pl.BlockSpec((1, Dp, Hp, Wp, Cp_in), lambda n: (n, 0, 0, 0, 0)),
            pl.BlockSpec((27 * Cp_in, Cp_out), lambda n: (0, 0)),
            pl.BlockSpec((1, Cp_out), lambda n: (0, 0)),
        ],
        out_specs=(
            pl.BlockSpec((1, D, H, W, Cp_out), lambda n: (n, 0, 0, 0, 0)),
            pl.BlockSpec((1, 1, 2 * Cp_out), lambda n: (n, 0, 0)),
        ),
        compiler_params=pltpu.CompilerParams(
            dimension_semantics=("parallel",),
            vmem_limit_bytes=48 * 1024 * 1024,
        ),
    )(xpad, wmat, bias)


# ----------------------------------------------------------------------------
# Pallas kernel 2: fused BatchNorm affine + ReLU on lane-dense (D*H*W, Cp) tiles.
# ----------------------------------------------------------------------------
def _bn_relu_kernel(y_ref, s_ref, t_ref, o_ref):
    y = y_ref[...].astype(jnp.float32)                               # (R, Cp)
    o_ref[...] = jnp.maximum(y * s_ref[...] + t_ref[...], 0.0).astype(o_ref.dtype)


def bn_relu_pallas(y, scale, shift, out_dtype=jnp.float32):
    """y: (N, D, H, W, Cp); scale/shift: (1, Cp) f32."""
    N, D, H, W, Cp = y.shape
    R = D * H * W
    out = pl.pallas_call(
        _bn_relu_kernel,
        out_shape=jax.ShapeDtypeStruct((N * R, Cp), out_dtype),
        grid=(N,),
        in_specs=[
            pl.BlockSpec((R, Cp), lambda n: (n, 0)),
            pl.BlockSpec((1, Cp), lambda n: (0, 0)),
            pl.BlockSpec((1, Cp), lambda n: (0, 0)),
        ],
        out_specs=pl.BlockSpec((R, Cp), lambda n: (n, 0)),
        compiler_params=pltpu.CompilerParams(dimension_semantics=("parallel",)),
    )(y.reshape(N * R, Cp), scale, shift)
    return out.reshape(N, D, H, W, Cp)


# ----------------------------------------------------------------------------
# double_conv forward:  (conv -> BN(batch stats) -> ReLU) x 2
# ----------------------------------------------------------------------------
def _bn_scale_shift(stats, gamma_p, beta_p, count, eps=1e-5):
    """stats: (N, 1, 2*Cp) per-sample [sum | sumsq] emitted by the conv kernel."""
    cp = gamma_p.shape[0]
    tot = jnp.sum(stats[:, 0, :], axis=0)                            # (2*Cp,)
    mean = tot[:cp] / count
    var = jnp.maximum(tot[cp:] / count - mean * mean, 0.0)           # biased batch var
    scale = gamma_p * jax.lax.rsqrt(var + eps)
    shift = beta_p - mean * scale
    return scale, shift


def double_conv_forward(x_ncdhw, params, compute_dtype=jnp.float32):
    N, Cin, D, H, W = x_ncdhw.shape
    Cout = params["b1"].shape[0]
    Cp_in = _round_up(Cin, _LANE)
    Cp_out = _round_up(Cout, _LANE)
    count = float(N * D * H * W)

    def prep_w(w_oidhw, ci_pad, co_pad):
        co, ci = w_oidhw.shape[:2]
        w = jnp.transpose(w_oidhw, (2, 3, 4, 1, 0))                  # (kd,kh,kw,ci,co)
        w = jnp.pad(w, ((0, 0), (0, 0), (0, 0), (0, ci_pad - ci), (0, co_pad - co)))
        return w.reshape(27 * ci_pad, co_pad).astype(compute_dtype)

    def prep_c(v, cp):
        return jnp.pad(v.astype(jnp.float32), (0, cp - v.shape[0]))

    w1 = prep_w(params["w1_oidhw"], Cp_in, Cp_out)
    w2 = prep_w(params["w2_oidhw"], Cp_out, Cp_out)
    b1 = prep_c(params["b1"], Cp_out).reshape(1, Cp_out)
    b2 = prep_c(params["b2"], Cp_out).reshape(1, Cp_out)
    g1, be1 = prep_c(params["g1"], Cp_out), prep_c(params["be1"], Cp_out)
    g2, be2 = prep_c(params["g2"], Cp_out), prep_c(params["be2"], Cp_out)

    # NCDHW -> NDHWC; channel pad (lane-dense 128) + conv halo pad fused in one op.
    # TODO(synk): in a full UNet keep activations channel-padded NDHWC end-to-end so
    # this transpose/pad happens once per network, not per double_conv block.
    x = jnp.transpose(x_ncdhw, (0, 2, 3, 4, 1))
    xpad = jnp.pad(x, ((0, 0), (1, 1), (1, 1), (1, 1), (0, Cp_in - Cin))).astype(compute_dtype)

    # ---- conv1 (+ fused BN partial statistics) ----
    y1, st1 = conv3d_bn_stats_pallas(xpad, w1, b1, out_dtype=compute_dtype)
    s1, t1 = _bn_scale_shift(st1, g1, be1, count)

    # BN1 + ReLU fused (by XLA) into the halo pad of conv2's input: one pass over y1.
    # TODO(synk): move this halo pad + BN/ReLU into the conv kernel (zero-initialized
    # VMEM scratch) to drop one HBM round trip per layer at production sizes.
    a1 = jnp.maximum(y1.astype(jnp.float32) * s1 + t1, 0.0)
    a1pad = jnp.pad(a1, ((0, 0), (1, 1), (1, 1), (1, 1), (0, 0))).astype(compute_dtype)

    # ---- conv2 (+ fused BN partial statistics) ----
    y2, st2 = conv3d_bn_stats_pallas(a1pad, w2, b2, out_dtype=compute_dtype)
    s2, t2 = _bn_scale_shift(st2, g2, be2, count)

    # ---- final BN + ReLU (lane-dense Pallas kernel), strip channel padding ----
    out = bn_relu_pallas(y2, s2.reshape(1, Cp_out), t2.reshape(1, Cp_out))
    out = out[..., :Cout]
    # TODO(synk): BatchNorm running-stat updates are a training-time side effect with
    # no bearing on the forward output; not modeled here.
    return jnp.transpose(out, (0, 4, 1, 2, 3))                       # NDHWC -> NCDHW


# ----------------------------------------------------------------------------
# Pure-JAX reference (mirrors the PyTorch module) for the correctness check.
# ----------------------------------------------------------------------------
def reference_forward(x, params):
    eps = 1e-5

    def conv3d(x, w_oidhw, b):
        y = jax.lax.conv_general_dilated(
            x, w_oidhw, window_strides=(1, 1, 1),
            padding=((1, 1), (1, 1), (1, 1)),
            dimension_numbers=("NCDHW", "OIDHW", "NCDHW"))
        return y + b[None, :, None, None, None]

    def bn_relu(y, g, be):
        mean = jnp.mean(y, axis=(0, 2, 3, 4), keepdims=True)
        var = jnp.mean((y - mean) ** 2, axis=(0, 2, 3, 4), keepdims=True)
        yn = (y - mean) * jax.lax.rsqrt(var + eps)
        return jnp.maximum(yn * g[None, :, None, None, None]
                           + be[None, :, None, None, None], 0.0)

    y = bn_relu(conv3d(x, params["w1_oidhw"], params["b1"]), params["g1"], params["be1"])
    y = bn_relu(conv3d(y, params["w2_oidhw"], params["b2"]), params["g2"], params["be2"])
    return y


def make_params(key, in_ch, out_ch):
    ks = jax.random.split(key, 8)
    params = {}
    for i, cin in zip((1, 2), (in_ch, out_ch)):
        fan_in = cin * 27
        bound = 1.0 / jnp.sqrt(jnp.float32(fan_in))
        params[f"w{i}_oidhw"] = jax.random.uniform(
            ks[4 * (i - 1) + 0], (out_ch, cin, 3, 3, 3), jnp.float32, -bound, bound)
        params[f"b{i}"] = jax.random.uniform(
            ks[4 * (i - 1) + 1], (out_ch,), jnp.float32, -bound, bound)
        params[f"g{i}"] = 1.0 + 0.1 * jax.random.normal(ks[4 * (i - 1) + 2], (out_ch,), jnp.float32)
        params[f"be{i}"] = 0.1 * jax.random.normal(ks[4 * (i - 1) + 3], (out_ch,), jnp.float32)
    return params


if __name__ == "__main__":
    key = jax.random.PRNGKey(0)
    k_x, k_p = jax.random.split(key)

    N, in_ch, out_ch, D, H, W = 2, 4, 8, 8, 8, 8
    x = jax.random.normal(k_x, (N, in_ch, D, H, W), jnp.float32)     # NCDHW
    params = make_params(k_p, in_ch, out_ch)

    ref = jax.block_until_ready(reference_forward(x, params))

    # f32 MXU path: numerically faithful to the PyTorch module.
    fwd_f32 = jax.jit(functools.partial(double_conv_forward, compute_dtype=jnp.float32))
    out = jax.block_until_ready(fwd_f32(x, params))
    assert out.shape == (N, out_ch, D, H, W)
    err = float(jnp.max(jnp.abs(out - ref)))
    assert jnp.allclose(out, ref, atol=1e-4, rtol=1e-4), err

    # bf16 MXU path (v6e/v7x throughput): bf16 activations/weights on the MXU with
    # f32 accumulation and f32 BN statistics/scale; checked at a looser tolerance.
    fwd_bf16 = jax.jit(functools.partial(double_conv_forward, compute_dtype=jnp.bfloat16))
    out_bf = jax.block_until_ready(fwd_bf16(x, params))
    err_bf = float(jnp.max(jnp.abs(out_bf - ref)))
    assert jnp.allclose(out_bf, ref, atol=1e-1, rtol=1e-1), err_bf

    print("KERNEL_OK")
</pallas_src>

<mosaic_0001>
module attributes {stable_mosaic.version = 11 : i64} {
  func.func @_conv3d_im2col_kernel(%arg0: i32, %arg1: memref<1x10x10x10x128xf32, #tpu.memory_space<vmem>>, %arg2: memref<3456x128xf32, #tpu.memory_space<vmem>>, %arg3: memref<1x128xf32, #tpu.memory_space<vmem>>, %arg4: memref<1x8x8x8x128xf32, #tpu.memory_space<vmem>>, %arg5: memref<1x1x256xf32, #tpu.memory_space<vmem>>) attributes {dimension_semantics = [#tpu.dimension_semantics<parallel>], iteration_bounds = array<i64: 2>, scalar_prefetch = 0 : i64, scratch_operands = 0 : i64, tpu.core_type = #tpu.core_type<tc>, window_params = [{transform_indices = @transform_0, window_bounds = array<i64: 1, 10, 10, 10, 128>}, {pipeline_mode = #tpu.pipeline_mode<synchronous>, transform_indices = @transform_1, window_bounds = array<i64: 3456, 128>}, {pipeline_mode = #tpu.pipeline_mode<synchronous>, transform_indices = @transform_2, window_bounds = array<i64: 1, 128>}, {transform_indices = @transform_3, window_bounds = array<i64: 1, 8, 8, 8, 128>}, {transform_indices = @transform_4, window_bounds = array<i64: 1, 1, 256>}]} {
    %c0 = arith.constant 0 : index
    %c0_0 = arith.constant 0 : index
    %c0_1 = arith.constant 0 : index
    %c0_2 = arith.constant 0 : index
    %c0_3 = arith.constant 0 : index
    %0 = vector.load %arg1[%c0, %c0_0, %c0_1, %c0_2, %c0_3] : memref<1x10x10x10x128xf32, #tpu.memory_space<vmem>>, vector<1x10x10x10x128xf32>
    %1 = vector.shape_cast %0 : vector<1x10x10x10x128xf32> to vector<10x10x10x128xf32>
    %2 = vector.extract_strided_slice %1 {offsets = [0, 0, 0, 0], sizes = [10, 10, 8, 128], strides = [1, 1, 1, 1]} : vector<10x10x10x128xf32> to vector<10x10x8x128xf32>
    %3 = vector.extract_strided_slice %1 {offsets = [0, 0, 1, 0], sizes = [10, 10, 8, 128], strides = [1, 1, 1, 1]} : vector<10x10x10x128xf32> to vector<10x10x8x128xf32>
    %4 = vector.extract_strided_slice %1 {offsets = [0, 0, 2, 0], sizes = [10, 10, 8, 128], strides = [1, 1, 1, 1]} : vector<10x10x10x128xf32> to vector<10x10x8x128xf32>
    %5 = tpu.concatenate %2, %3, %4 in 3 : vector<10x10x8x128xf32>, vector<10x10x8x128xf32>, vector<10x10x8x128xf32> -> vector<10x10x8x384xf32>
    %6 = vector.extract_strided_slice %5 {offsets = [0, 0, 0, 0], sizes = [10, 8, 8, 384], strides = [1, 1, 1, 1]} : vector<10x10x8x384xf32> to vector<10x8x8x384xf32>
    %7 = vector.extract_strided_slice %5 {offsets = [0, 1, 0, 0], sizes = [10, 8, 8, 384], strides = [1, 1, 1, 1]} : vector<10x10x8x384xf32> to vector<10x8x8x384xf32>
    %8 = vector.extract_strided_slice %5 {offsets = [0, 2, 0, 0], sizes = [10, 8, 8, 384], strides = [1, 1, 1, 1]} : vector<10x10x8x384xf32> to vector<10x8x8x384xf32>
    %9 = tpu.concatenate %6, %7, %8 in 3 : vector<10x8x8x384xf32>, vector<10x8x8x384xf32>, vector<10x8x8x384xf32> -> vector<10x8x8x1152xf32>
    %10 = vector.extract_strided_slice %9 {offsets = [0, 0, 0, 0], sizes = [8, 8, 8, 1152], strides = [1, 1, 1, 1]} : vector<10x8x8x1152xf32> to vector<8x8x8x1152xf32>
    %11 = vector.extract_strided_slice %9 {offsets = [1, 0, 0, 0], sizes = [8, 8, 8, 1152], strides = [1, 1, 1, 1]} : vector<10x8x8x1152xf32> to vector<8x8x8x1152xf32>
    %12 = vector.extract_strided_slice %9 {offsets = [2, 0, 0, 0], sizes = [8, 8, 8, 1152], strides = [1, 1, 1, 1]} : vector<10x8x8x1152xf32> to vector<8x8x8x1152xf32>
    %13 = tpu.concatenate %10, %11, %12 in 3 : vector<8x8x8x1152xf32>, vector<8x8x8x1152xf32>, vector<8x8x8x1152xf32> -> vector<8x8x8x3456xf32>
    %14 = vector.shape_cast %13 : vector<8x8x8x3456xf32> to vector<512x3456xf32>
    %c0_4 = arith.constant 0 : index
    %c0_5 = arith.constant 0 : index
    %15 = vector.load %arg2[%c0_4, %c0_5] : memref<3456x128xf32, #tpu.memory_space<vmem>>, vector<3456x128xf32>
    %cst = arith.constant dense<0.000000e+00> : vector<512x128xf32>
    %16 = tpu.matmul %14, %15, %cst {dimension_numbers = #tpu.dot_dimension_numbers<[1], [0], [0], [1], [0, 0, 1, 1], [], []>} : vector<512x3456xf32>, vector<3456x128xf32>, vector<512x128xf32> -> vector<512x128xf32>
    %c0_6 = arith.constant 0 : index
    %c0_7 = arith.constant 0 : index
    %17 = vector.load %arg3[%c0_6, %c0_7] : memref<1x128xf32, #tpu.memory_space<vmem>>, vector<1x128xf32>
    %18 = vector.broadcast %17 : vector<1x128xf32> to vector<512x128xf32>
    %19 = arith.addf %16, %18 : vector<512x128xf32>
    %cst_8 = arith.constant dense<0.000000e+00> : vector<128xf32>
    %20 = vector.multi_reduction <add>, %19, %cst_8 [0] : vector<512x128xf32> to vector<128xf32>
    %21 = vector.shape_cast %20 : vector<128xf32> to vector<1x128xf32>
    %22 = arith.mulf %19, %19 : vector<512x128xf32>
    %cst_9 = arith.constant dense<0.000000e+00> : vector<128xf32>
    %23 = vector.multi_reduction <add>, %22, %cst_9 [0] : vector<512x128xf32> to vector<128xf32>
    %24 = vector.shape_cast %23 : vector<128xf32> to vector<1x128xf32>
    %25 = tpu.concatenate %21, %24 in 1 : vector<1x128xf32>, vector<1x128xf32> -> vector<1x256xf32>
    %c0_10 = arith.constant 0 : index
    %c0_11 = arith.constant 0 : index
    %c0_12 = arith.constant 0 : index
    %26 = vector.load %arg5[%c0_10, %c0_11, %c0_12] : memref<1x1x256xf32, #tpu.memory_space<vmem>>, vector<1x1x256xf32>
    %27 = vector.shape_cast %26 : vector<1x1x256xf32> to vector<1x256xf32>
    %28 = vector.shape_cast %25 : vector<1x256xf32> to vector<1x1x256xf32>
    tpu.vector_store %arg5[%c0_10, %c0_11, %c0_12], %28 {strides = array<i32>} : memref<1x1x256xf32, #tpu.memory_space<vmem>>, vector<1x1x256xf32>,
    %29 = vector.shape_cast %19 : vector<512x128xf32> to vector<8x8x8x128xf32>
    %c0_13 = arith.constant 0 : index
    %c0_14 = arith.constant 0 : index
    %c0_15 = arith.constant 0 : index
    %c0_16 = arith.constant 0 : index
    %c0_17 = arith.constant 0 : index
    %30 = vector.load %arg4[%c0_13, %c0_14, %c0_15, %c0_16, %c0_17] : memref<1x8x8x8x128xf32, #tpu.memory_space<vmem>>, vector<1x8x8x8x128xf32>
    %31 = vector.shape_cast %30 : vector<1x8x8x8x128xf32> to vector<8x8x8x128xf32>
    %32 = vector.shape_cast %29 : vector<8x8x8x128xf32> to vector<1x8x8x8x128xf32>
    tpu.vector_store %arg4[%c0_13, %c0_14, %c0_15, %c0_16, %c0_17], %32 {strides = array<i32>} : memref<1x8x8x8x128xf32, #tpu.memory_space<vmem>>, vector<1x8x8x8x128xf32>,
    return
  }
  func.func @transform_0(%arg0: i32) -> (i32, i32, i32, i32, i32) {
    %c0_i32 = arith.constant 0 : i32
    %c0_i32_0 = arith.constant 0 : i32
    %c0_i32_1 = arith.constant 0 : i32
    %c0_i32_2 = arith.constant 0 : i32
    %c0_i32_3 = arith.constant 0 : i32
    return %arg0, %c0_i32, %c0_i32_0, %c0_i32_1, %c0_i32_2 : i32, i32, i32, i32, i32
  }
  func.func @transform_1(%arg0: i32) -> (i32, i32) {
    %c0_i32 = arith.constant 0 : i32
    %c0_i32_0 = arith.constant 0 : i32
    %c0_i32_1 = arith.constant 0 : i32
    return %c0_i32, %c0_i32_0 : i32, i32
  }
  func.func @transform_2(%arg0: i32) -> (i32, i32) {
    %c0_i32 = arith.constant 0 : i32
    %c0_i32_0 = arith.constant 0 : i32
    %c0_i32_1 = arith.constant 0 : i32
    return %c0_i32, %c0_i32_0 : i32, i32
  }
  func.func @transform_3(%arg0: i32) -> (i32, i32, i32, i32, i32) {
    %c0_i32 = arith.constant 0 : i32
    %c0_i32_0 = arith.constant 0 : i32
    %c0_i32_1 = arith.constant 0 : i32
    %c0_i32_2 = arith.constant 0 : i32
    %c0_i32_3 = arith.constant 0 : i32
    return %arg0, %c0_i32, %c0_i32_0, %c0_i32_1, %c0_i32_2 : i32, i32, i32, i32, i32
  }
  func.func @transform_4(%arg0: i32) -> (i32, i32, i32) {
    %c0_i32 = arith.constant 0 : i32
    %c0_i32_0 = arith.constant 0 : i32
    %c0_i32_1 = arith.constant 0 : i32
    return %arg0, %c0_i32, %c0_i32_0 : i32, i32, i32
  }
}

module attributes {stable_mosaic.version = 11 : i64} {
  func.func @_bn_relu_kernel(%arg0: i32, %arg1: memref<512x128xf32, #tpu.memory_space<vmem>>, %arg2: memref<1x128xf32, #tpu.memory_space<vmem>>, %arg3: memref<1x128xf32, #tpu.memory_space<vmem>>, %arg4: memref<512x128xf32, #tpu.memory_space<vmem>>) attributes {dimension_semantics = [#tpu.dimension_semantics<parallel>], iteration_bounds = array<i64: 2>, scalar_prefetch = 0 : i64, scratch_operands = 0 : i64, tpu.core_type = #tpu.core_type<tc>, window_params = [{transform_indices = @transform_0, window_bounds = array<i64: 512, 128>}, {pipeline_mode = #tpu.pipeline_mode<synchronous>, transform_indices = @transform_1, window_bounds = array<i64: 1, 128>}, {pipeline_mode = #tpu.pipeline_mode<synchronous>, transform_indices = @transform_2, window_bounds = array<i64: 1, 128>}, {transform_indices = @transform_3, window_bounds = array<i64: 512, 128>}]} {
    %c0 = arith.constant 0 : index
    %c0_0 = arith.constant 0 : index
    %0 = vector.load %arg1[%c0, %c0_0] : memref<512x128xf32, #tpu.memory_space<vmem>>, vector<512x128xf32>
    %c0_1 = arith.constant 0 : index
    %c0_2 = arith.constant 0 : index
    %1 = vector.load %arg2[%c0_1, %c0_2] : memref<1x128xf32, #tpu.memory_space<vmem>>, vector<1x128xf32>
    %2 = vector.broadcast %1 : vector<1x128xf32> to vector<512x128xf32>
    %3 = arith.mulf %0, %2 : vector<512x128xf32>
    %c0_3 = arith.constant 0 : index
    %c0_4 = arith.constant 0 : index
    %4 = vector.load %arg3[%c0_3, %c0_4] : memref<1x128xf32, #tpu.memory_space<vmem>>, vector<1x128xf32>
    %5 = vector.broadcast %4 : vector<1x128xf32> to vector<512x128xf32>
    %6 = arith.addf %3, %5 : vector<512x128xf32>
    %cst = arith.constant 0.000000e+00 : f32
    %7 = vector.broadcast %cst : f32 to vector<512x128xf32>
    %8 = arith.maximumf %6, %7 : vector<512x128xf32>
    %c0_5 = arith.constant 0 : index
    %c0_6 = arith.constant 0 : index
    %9 = vector.load %arg4[%c0_5, %c0_6] : memref<512x128xf32, #tpu.memory_space<vmem>>, vector<512x128xf32>
    tpu.vector_store %arg4[%c0_5, %c0_6], %8 {strides = array<i32>} : memref<512x128xf32, #tpu.memory_space<vmem>>, vector<512x128xf32>,
    return
  }
  func.func @transform_0(%arg0: i32) -> (i32, i32) {
    %c0_i32 = arith.constant 0 : i32
    %c0_i32_0 = arith.constant 0 : i32
    return %arg0, %c0_i32 : i32, i32
  }
  func.func @transform_1(%arg0: i32) -> (i32, i32) {
    %c0_i32 = arith.constant 0 : i32
    %c0_i32_0 = arith.constant 0 : i32
    %c0_i32_1 = arith.constant 0 : i32
    return %c0_i32, %c0_i32_0 : i32, i32
  }
  func.func @transform_2(%arg0: i32) -> (i32, i32) {
    %c0_i32 = arith.constant 0 : i32
    %c0_i32_0 = arith.constant 0 : i32
    %c0_i32_1 = arith.constant 0 : i32
    return %c0_i32, %c0_i32_0 : i32, i32
  }
  func.func @transform_3(%arg0: i32) -> (i32, i32) {
    %c0_i32 = arith.constant 0 : i32
    %c0_i32_0 = arith.constant 0 : i32
    return %arg0, %c0_i32 : i32, i32
  }
}

</mosaic_0001>

<llo_original>
// kernel: double_conv_forward.5
$region0: #{double_conv_forward.5}
  #allocation0 [shape = 'u32[]', space=smem, size = 0x4, offset = 0x4, fixed_abs, tag = 'smem constant byte address 0x4 - core index']
  #allocation1 [shape = 'u32[72,128]{1,0:T(1,128)}', space=vmem, size = 0x9000, scoped, tag = 'internal scratch']
  %s0 = inlined_call_operand.vmem [shape: f32[1024,128], index: 0, kind: input, shape index: {}]
  %s1 = inlined_call_operand.vmem [shape: f32[1,128], index: 1, kind: input, shape index: {}]
  %s2 = inlined_call_operand.vmem [shape: f32[1,128], index: 2, kind: input, shape index: {}]
  %s3 = inlined_call_operand.vmem [shape: f32[1024,128], index: 3, kind: output, shape index: {}]
  %s4 = sld [smem:[#allocation0]]
  $region45: #{double_conv_forward.5} parent=0
    _
  %s6 = ssub.s32 1, %s4
  %s7 = scalar_select 0, %s6, %s4
  loop: start=0, step=1, limit=4
  $region2: #{double_conv_forward.5} parent=0 // loop_pre_header
    _
  $region3: #{double_conv_forward.5} parent=0 // loop_header
    %s9 = sphi 0, %s13
    %p10 = scmp.ge.s32.totalorder %s9, 4
    %s19 = sphi 0, %s21
    %s22 = sphi 0, %s19
    %s23 = sphi 0, %s22
    %s39 = sphi 0, %s23
    %s43 = sphi 0, %s43
    %s45 = sphi 0, %s43
    %s46 = sphi 0, %s45
    %s60 = sphi 0, %s46
    %s64 = sphi 0, %s64
    %s66 = sphi 0, %s64
    %s67 = sphi 0, %s66
    %s81 = sphi 0, %s67
    %s87 = sphi 0, %s89
    %s90 = sphi 0, %s87
    %s91 = sphi 0, %s90
    %s107 = sphi 0, %s91
  $region4: #{double_conv_forward.5} parent=0 // loop_header_branch
    %12 = sbr.rel (%p10) target = $region8
  $region5: #{double_conv_forward.5} parent=0 // loop_body
    %s14 = ssub.s32 %s9, 1
    %s15 = ssub.s32 %s9, 2
    %s16 = sadd.s32 %s9, 1
    %s17 = ssub.s32 %s9, %s16
    %p18 = scmp.eq.s32.totalorder %s17, 0
    %s20 = sadd.s32 %s19, 1
    %s21 = scalar_select %p18, %s19, %s20
    %p24 = pneg %p18
    %p25 = scmp.eq.s32.totalorder %s9, 1
    %p26 = por %p24, %p25
    %p27 = scmp.ne.s32.totalorder %s19, %s22
    %p28 = scmp.eq.s32.totalorder %s9, 0
    %p29 = por %p27, %p28
    %p30 = scmp.ne.s32.totalorder %s19, %s22
    %p31 = scmp.eq.s32.totalorder %s14, 1
    %p32 = por %p30, %p31
    %p33 = scmp.ne.s32.totalorder %s22, %s23
    %p34 = scmp.eq.s32.totalorder %s14, 0
    %p35 = por %p33, %p34
    %p36 = scmp.ne.s32.totalorder %s22, %s23
    %p37 = scmp.eq.s32.totalorder %s15, 1
    %p38 = por %p36, %p37
    %p40 = scmp.ne.s32.totalorder %s23, %s39
    %p41 = scmp.eq.s32.totalorder %s15, 0
    %p42 = por %p40, %p41
    %s44 = sadd.s32 %s43, 1
    %p47 = scmp.eq.s32.totalorder %s9, 1
    %p48 = scmp.ne.s32.totalorder %s43, %s45
    %p49 = scmp.eq.s32.totalorder %s9, 0
    %p50 = por %p48, %p49
    %p51 = scmp.ne.s32.totalorder %s43, %s45
    %p52 = scmp.eq.s32.totalorder %s14, 1
    %p53 = por %p51, %p52
    %p54 = scmp.ne.s32.totalorder %s45, %s46
    %p55 = scmp.eq.s32.totalorder %s14, 0
    %p56 = por %p54, %p55
    %p57 = scmp.ne.s32.totalorder %s45, %s46
    %p58 = scmp.eq.s32.totalorder %s15, 1
    %p59 = por %p57, %p58
    %p61 = scmp.ne.s32.totalorder %s46, %s60
    %p62 = scmp.eq.s32.totalorder %s15, 0
    %p63 = por %p61, %p62
    %s65 = sadd.s32 %s64, 1
    %p68 = scmp.eq.s32.totalorder %s9, 1
    %p69 = scmp.ne.s32.totalorder %s64, %s66
    %p70 = scmp.eq.s32.totalorder %s9, 0
    %p71 = por %p69, %p70
    %p72 = scmp.ne.s32.totalorder %s64, %s66
    %p73 = scmp.eq.s32.totalorder %s14, 1
    %p74 = por %p72, %p73
    %p75 = scmp.ne.s32.totalorder %s66, %s67
    %p76 = scmp.eq.s32.totalorder %s14, 0
    %p77 = por %p75, %p76
    %p78 = scmp.ne.s32.totalorder %s66, %s67
    %p79 = scmp.eq.s32.totalorder %s15, 1
    %p80 = por %p78, %p79
    %p82 = scmp.ne.s32.totalorder %s67, %s81
    %p83 = scmp.eq.s32.totalorder %s15, 0
    %p84 = por %p82, %p83
    %s85 = ssub.s32 %s9, %s16
    %p86 = scmp.eq.s32.totalorder %s85, 0
    %s88 = sadd.s32 %s87, 1
    %s89 = scalar_select %p86, %s87, %s88
    %p92 = pneg %p86
    %p93 = scmp.eq.s32.totalorder %s9, 1
    %p94 = por %p92, %p93
    %p95 = scmp.ne.s32.totalorder %s87, %s90
    %p96 = scmp.eq.s32.totalorder %s9, 0
    %p97 = por %p95, %p96
    %p98 = scmp.ne.s32.totalorder %s87, %s90
    %p99 = scmp.eq.s32.totalorder %s14, 1
    %p100 = por %p98, %p99
    %p101 = scmp.ne.s32.totalorder %s90, %s91
    %p102 = scmp.eq.s32.totalorder %s14, 0
    %p103 = por %p101, %p102
    %p104 = scmp.ne.s32.totalorder %s90, %s91
    %p105 = scmp.eq.s32.totalorder %s15, 1
    %p106 = por %p104, %p105
    %p108 = scmp.ne.s32.totalorder %s91, %s107
    %p109 = scmp.eq.s32.totalorder %s15, 0
    %p110 = por %p108, %p109
    %p111 = scmp.le.s32.totalorder 1, %s9
    %p112 = scmp.lt.s32.totalorder %s9, 3
    %p113 = pnand %p111, %p112
    %p114 = pneg %p113
    // Predicated region
    $region9: #{double_conv_forward.5} parent=5 // pred_check
      _
    $region10: #{double_conv_forward.5} parent=5 // pred_check_branch
      %116 = sbr.rel (%p113) target = $region12
    $region11: #{double_conv_forward.5} parent=5 // pred_region
      %s117 = ssub.s32 %s9, 1
      // Predicated region
      $region13: #{double_conv_forward.5} parent=11 // pred_check
        %p118 = pneg %p56
      $region14: #{double_conv_forward.5} parent=11 // pred_check_branch
        %120 = sbr.rel (%p118) target = $region16
      $region15: #{double_conv_forward.5} parent=11 // pred_region
        _
      $region16: #{double_conv_forward.5} parent=11 // pred_fallthru
        _
      // Predicated region
      $region17: #{double_conv_forward.5} parent=11 // pred_check
        %p121 = pneg %p77
      $region18: #{double_conv_forward.5} parent=11 // pred_check_branch
        %123 = sbr.rel (%p121) target = $region20
      $region19: #{double_conv_forward.5} parent=11 // pred_region
        _
      $region20: #{double_conv_forward.5} parent=11 // pred_fallthru
        _
    $region12: #{double_conv_forward.5} parent=5 // pred_fallthru
      _
    %p124 = scmp.lt.s32.totalorder %s9, 2
    // Predicated region
    $region21: #{double_conv_forward.5} parent=5 // pred_check
      %p125 = pneg %p124
    $region22: #{double_conv_forward.5} parent=5 // pred_check_branch
      %127 = sbr.rel (%p125) target = $region24
    $region23: #{double_conv_forward.5} parent=5 // pred_region
      // Predicated region
      $region25: #{double_conv_forward.5} parent=23 // pred_check
        %p128 = pneg %p29
      $region26: #{double_conv_forward.5} parent=23 // pred_check_branch
        %130 = sbr.rel (%p128) target = $region28
      $region27: #{double_conv_forward.5} parent=23 // pred_region
        %s131 = smul.u32 64, %s9
        %p132 = scmp.lt.s32.totalorder %s131, 127
        %s133 = scalar_select %p132, %s131, 127
        %s134 = smul.addr %s133, 8
        %s135 = scalar_lea.vmem %s0, %s134
        %s136 = smul.u32 64, %s9
      $region28: #{double_conv_forward.5} parent=23 // pred_fallthru
        _
    $region24: #{double_conv_forward.5} parent=5 // pred_fallthru
      _
    %p137 = scmp.le.s32.totalorder 1, %s9
    %p138 = scmp.lt.s32.totalorder %s9, 3
    %p139 = pnand %p137, %p138
    %p140 = pneg %p139
    // Predicated region
    $region29: #{double_conv_forward.5} parent=5 // pred_check
      _
    $region30: #{double_conv_forward.5} parent=5 // pred_check_branch
      %142 = sbr.rel (%p139) target = $region32
    $region31: #{double_conv_forward.5} parent=5 // pred_region
      %s143 = ssub.s32 %s9, 1
      %s144 = smul.u32 64, %s14
      %p145 = scmp.lt.s32.totalorder %s144, 127
      %s146 = scalar_select %p145, %s144, 127
      %s147 = smul.addr %s146, 8
      %s148 = scalar_lea.vmem %s0, %s147
      %p149 = pneg %p35
      %p150 = pneg %p32
      %p151 = pneg %p56
      %p152 = pneg %p53
      %p153 = pneg %p77
      %p154 = pneg %p74
      %p155 = pneg %p103
      %p156 = pneg %p100
      %s157 = smul.u32 64, %s14
      %p158 = scmp.lt.s32.totalorder %s157, 127
      %s159 = scalar_select %p158, %s157, 127
      %s160 = smul.addr %s159, 8
      %s161 = scalar_lea.vmem %s3, %s160
      %s162 = smul.u32 64, %s14
      %p163 = scmp.lt.s32.totalorder %s162, 127
      %s164 = scalar_select %p163, %s162, 127
      %s165 = smul.addr %s164, 8
      %s166 = scalar_lea.vmem %s0, %s165
      %s167 = smul.u32 64, %s14
      %s168 = smul.u32 64, %s14
      %p169 = scmp.lt.s32.totalorder %s168, 127
      %s170 = scalar_select %p169, %s168, 127
      %s171 = smul.addr %s170, 8
      %s172 = scalar_lea.vmem %s3, %s171
      %s173 = smul.u32 64, %s14
      %v174 = vld [vmem:[%s166] sm:$0xff]
      %v175 = vld [vmem:[%s166 + $0x8] sm:$0xff]
      %v176 = vld [vmem:[%s166 + $0x10] sm:$0xff]
      %v177 = vld [vmem:[%s166 + $0x18] sm:$0xff]
      %v178 = vld [vmem:[%s166 + $0x20] sm:$0xff]
      %v179 = vld [vmem:[%s166 + $0x28] sm:$0xff]
      %v180 = vld [vmem:[%s166 + $0x30] sm:$0xff]
      %v181 = vld [vmem:[%s166 + $0x38] sm:$0xff]
      %v182 = vld [vmem:[%s166 + $0x40] sm:$0xff]
      %v183 = vld [vmem:[%s166 + $0x48] sm:$0xff]
      %v184 = vld [vmem:[%s166 + $0x50] sm:$0xff]
      %v185 = vld [vmem:[%s166 + $0x58] sm:$0xff]
      %v186 = vld [vmem:[%s166 + $0x60] sm:$0xff]
      %v187 = vld [vmem:[%s166 + $0x68] sm:$0xff]
      %v188 = vld [vmem:[%s166 + $0x70] sm:$0xff]
      %v189 = vld [vmem:[%s166 + $0x78] sm:$0xff]
      %v190 = vld [vmem:[%s166 + $0x80] sm:$0xff]
      %v191 = vld [vmem:[%s166 + $0x88] sm:$0xff]
      %v192 = vld [vmem:[%s166 + $0x90] sm:$0xff]
      %v193 = vld [vmem:[%s166 + $0x98] sm:$0xff]
      %v194 = vld [vmem:[%s166 + $0xa0] sm:$0xff]
      %v195 = vld [vmem:[%s166 + $0xa8] sm:$0xff]
      %v196 = vld [vmem:[%s166 + $0xb0] sm:$0xff]
      %v197 = vld [vmem:[%s166 + $0xb8] sm:$0xff]
      %v198 = vld [vmem:[%s166 + $0xc0] sm:$0xff]
      %v199 = vld [vmem:[%s166 + $0xc8] sm:$0xff]
      %v200 = vld [vmem:[%s166 + $0xd0] sm:$0xff]
      %v201 = vld [vmem:[%s166 + $0xd8] sm:$0xff]
      %v202 = vld [vmem:[%s166 + $0xe0] sm:$0xff]
      %v203 = vld [vmem:[%s166 + $0xe8] sm:$0xff]
      %v204 = vld [vmem:[%s166 + $0xf0] sm:$0xff]
      %v205 = vld [vmem:[%s166 + $0xf8] sm:$0xff]
      %v206 = vld [vmem:[%s166 + $0x100] sm:$0xff]
      %v207 = vld [vmem:[%s166 + $0x108] sm:$0xff]
      %v208 = vld [vmem:[%s166 + $0x110] sm:$0xff]
      %v209 = vld [vmem:[%s166 + $0x118] sm:$0xff]
      %v210 = vld [vmem:[%s166 + $0x120] sm:$0xff]
      %v211 = vld [vmem:[%s166 + $0x128] sm:$0xff]
      %v212 = vld [vmem:[%s166 + $0x130] sm:$0xff]
      %v213 = vld [vmem:[%s166 + $0x138] sm:$0xff]
      %v214 = vld [vmem:[%s166 + $0x140] sm:$0xff]
      %v215 = vld [vmem:[%s166 + $0x148] sm:$0xff]
      %v216 = vld [vmem:[%s166 + $0x150] sm:$0xff]
      %v217 = vld [vmem:[%s166 + $0x158] sm:$0xff]
      %v218 = vld [vmem:[%s166 + $0x160] sm:$0xff]
      %v219 = vld [vmem:[%s166 + $0x168] sm:$0xff]
      %v220 = vld [vmem:[%s166 + $0x170] sm:$0xff]
      %v221 = vld [vmem:[%s166 + $0x178] sm:$0xff]
      %v222 = vld [vmem:[%s166 + $0x180] sm:$0xff]
      %v223 = vld [vmem:[%s166 + $0x188] sm:$0xff]
      %v224 = vld [vmem:[%s166 + $0x190] sm:$0xff]
      %v225 = vld [vmem:[%s166 + $0x198] sm:$0xff]
      %v226 = vld [vmem:[%s166 + $0x1a0] sm:$0xff]
      %v227 = vld [vmem:[%s166 + $0x1a8] sm:$0xff]
      %v228 = vld [vmem:[%s166 + $0x1b0] sm:$0xff]
      %v229 = vld [vmem:[%s166 + $0x1b8] sm:$0xff]
      %v230 = vld [vmem:[%s166 + $0x1c0] sm:$0xff]
      %v231 = vld [vmem:[%s166 + $0x1c8] sm:$0xff]
      %v232 = vld [vmem:[%s166 + $0x1d0] sm:$0xff]
      %v233 = vld [vmem:[%s166 + $0x1d8] sm:$0xff]
      %v234 = vld [vmem:[%s166 + $0x1e0] sm:$0xff]
      %v235 = vld [vmem:[%s166 + $0x1e8] sm:$0xff]
      %v236 = vld [vmem:[%s166 + $0x1f0] sm:$0xff]
      %v237 = vld [vmem:[%s166 + $0x1f8] sm:$0xff]
      %v238 = vld [vmem:[%s1] sm:$0x1]
      %v240 = vperm.slane %v238, 0
      %v242 = vmul.f32 %v174, %v240
      %v243 = vmul.f32 %v175, %v240
      %v244 = vmul.f32 %v176, %v240
      %v245 = vmul.f32 %v177, %v240
      %v246 = vmul.f32 %v178, %v240
      %v247 = vmul.f32 %v179, %v240
      %v248 = vmul.f32 %v180, %v240
      %v249 = vmul.f32 %v181, %v240
      %v250 = vmul.f32 %v182, %v240
      %v251 = vmul.f32 %v183, %v240
      %v252 = vmul.f32 %v184, %v240
      %v253 = vmul.f32 %v185, %v240
      %v254 = vmul.f32 %v186, %v240
      %v255 = vmul.f32 %v187, %v240
      %v256 = vmul.f32 %v188, %v240
      %v257 = vmul.f32 %v189, %v240
      %v258 = vmul.f32 %v190, %v240
      %v259 = vmul.f32 %v191, %v240
      %v260 = vmul.f32 %v192, %v240
      %v261 = vmul.f32 %v193, %v240
      %v262 = vmul.f32 %v194, %v240
      %v263 = vmul.f32 %v195, %v240
      %v264 = vmul.f32 %v196, %v240
      %v265 = vmul.f32 %v197, %v240
      %v266 = vmul.f32 %v198, %v240
      %v267 = vmul.f32 %v199, %v240
      %v268 = vmul.f32 %v200, %v240
      %v269 = vmul.f32 %v201, %v240
      %v270 = vmul.f32 %v202, %v240
      %v271 = vmul.f32 %v203, %v240
      %v272 = vmul.f32 %v204, %v240
      %v273 = vmul.f32 %v205, %v240
      %v274 = vmul.f32 %v206, %v240
      %v275 = vmul.f32 %v207, %v240
      %v276 = vmul.f32 %v208, %v240
      %v277 = vmul.f32 %v209, %v240
      %v278 = vmul.f32 %v210, %v240
      %v279 = vmul.f32 %v211, %v240
      %v280 = vmul.f32 %v212, %v240
      %v281 = vmul.f32 %v213, %v240
      %v282 = vmul.f32 %v214, %v240
      %v283 = vmul.f32 %v215, %v240
      %v284 = vmul.f32 %v216, %v240
      %v285 = vmul.f32 %v217, %v240
      %v286 = vmul.f32 %v218, %v240
      %v287 = vmul.f32 %v219, %v240
      %v288 = vmul.f32 %v220, %v240
      %v289 = vmul.f32 %v221, %v240
      %v290 = vmul.f32 %v222, %v240
      %v291 = vmul.f32 %v223, %v240
      %v292 = vmul.f32 %v224, %v240
      %v293 = vmul.f32 %v225, %v240
      %v294 = vmul.f32 %v226, %v240
      %v295 = vmul.f32 %v227, %v240
      %v296 = vmul.f32 %v228, %v240
      %v297 = vmul.f32 %v229, %v240
      %v298 = vmul.f32 %v230, %v240
      %v299 = vmul.f32 %v231, %v240
      %v300 = vmul.f32 %v232, %v240
      %v301 = vmul.f32 %v233, %v240
      %v302 = vmul.f32 %v234, %v240
      %v303 = vmul.f32 %v235, %v240
      %v304 = vmul.f32 %v236, %v240
      %v305 = vmul.f32 %v237, %v240
      %v306 = vld [vmem:[%s2] sm:$0x1]
      %v308 = vperm.slane %v306, 0
      %v310 = vadd.f32 %v242, %v308
      %v311 = vadd.f32 %v243, %v308
      %v312 = vadd.f32 %v244, %v308
      %v313 = vadd.f32 %v245, %v308
      %v314 = vadd.f32 %v246, %v308
      %v315 = vadd.f32 %v247, %v308
      %v316 = vadd.f32 %v248, %v308
      %v317 = vadd.f32 %v249, %v308
      %v318 = vadd.f32 %v250, %v308
      %v319 = vadd.f32 %v251, %v308
      %v320 = vadd.f32 %v252, %v308
      %v321 = vadd.f32 %v253, %v308
      %v322 = vadd.f32 %v254, %v308
      %v323 = vadd.f32 %v255, %v308
      %v324 = vadd.f32 %v256, %v308
      %v325 = vadd.f32 %v257, %v308
      %v326 = vadd.f32 %v258, %v308
      %v327 = vadd.f32 %v259, %v308
      %v328 = vadd.f32 %v260, %v308
      %v329 = vadd.f32 %v261, %v308
      %v330 = vadd.f32 %v262, %v308
      %v331 = vadd.f32 %v263, %v308
      %v332 = vadd.f32 %v264, %v308
      %v333 = vadd.f32 %v265, %v308
      %v334 = vadd.f32 %v266, %v308
      %v335 = vadd.f32 %v267, %v308
      %v336 = vadd.f32 %v268, %v308
      %v337 = vadd.f32 %v269, %v308
      %v338 = vadd.f32 %v270, %v308
      %v339 = vadd.f32 %v271, %v308
      %v340 = vadd.f32 %v272, %v308
      %v341 = vadd.f32 %v273, %v308
      %v342 = vadd.f32 %v274, %v308
      %v343 = vadd.f32 %v275, %v308
      %v344 = vadd.f32 %v276, %v308
      %v345 = vadd.f32 %v277, %v308
      %v346 = vadd.f32 %v278, %v308
      %v347 = vadd.f32 %v279, %v308
      %v348 = vadd.f32 %v280, %v308
      %v349 = vadd.f32 %v281, %v308
      %v350 = vadd.f32 %v282, %v308
      %v351 = vadd.f32 %v283, %v308
      %v352 = vadd.f32 %v284, %v308
      %v353 = vadd.f32 %v285, %v308
      %v354 = vadd.f32 %v286, %v308
      %v355 = vadd.f32 %v287, %v308
      %v356 = vadd.f32 %v288, %v308
      %v357 = vadd.f32 %v289, %v308
      %v358 = vadd.f32 %v290, %v308
      %v359 = vadd.f32 %v291, %v308
      %v360 = vadd.f32 %v292, %v308
      %v361 = vadd.f32 %v293, %v308
      %v362 = vadd.f32 %v294, %v308
      %v363 = vadd.f32 %v295, %v308
      %v364 = vadd.f32 %v296, %v308
      %v365 = vadd.f32 %v297, %v308
      %v366 = vadd.f32 %v298, %v308
      %v367 = vadd.f32 %v299, %v308
      %v368 = vadd.f32 %v300, %v308
      %v369 = vadd.f32 %v301, %v308
      %v370 = vadd.f32 %v302, %v308
      %v371 = vadd.f32 %v303, %v308
      %v372 = vadd.f32 %v304, %v308
      %v373 = vadd.f32 %v305, %v308
      %v374 = vmax.f32 %v310, 0.0
      %v375 = vmax.f32 %v311, 0.0
      %v376 = vmax.f32 %v312, 0.0
      %v377 = vmax.f32 %v313, 0.0
      %v378 = vmax.f32 %v314, 0.0
      %v379 = vmax.f32 %v315, 0.0
      %v380 = vmax.f32 %v316, 0.0
      %v381 = vmax.f32 %v317, 0.0
      %v382 = vmax.f32 %v318, 0.0
      %v383 = vmax.f32 %v319, 0.0
      %v384 = vmax.f32 %v320, 0.0
      %v385 = vmax.f32 %v321, 0.0
      %v386 = vmax.f32 %v322, 0.0
      %v387 = vmax.f32 %v323, 0.0
      %v388 = vmax.f32 %v324, 0.0
      %v389 = vmax.f32 %v325, 0.0
      %v390 = vmax.f32 %v326, 0.0
      %v391 = vmax.f32 %v327, 0.0
      %v392 = vmax.f32 %v328, 0.0
      %v393 = vmax.f32 %v329, 0.0
      %v394 = vmax.f32 %v330, 0.0
      %v395 = vmax.f32 %v331, 0.0
      %v396 = vmax.f32 %v332, 0.0
      %v397 = vmax.f32 %v333, 0.0
      %v398 = vmax.f32 %v334, 0.0
      %v399 = vmax.f32 %v335, 0.0
      %v400 = vmax.f32 %v336, 0.0
      %v401 = vmax.f32 %v337, 0.0
      %v402 = vmax.f32 %v338, 0.0
      %v403 = vmax.f32 %v339, 0.0
      %v404 = vmax.f32 %v340, 0.0
      %v405 = vmax.f32 %v341, 0.0
      %v406 = vmax.f32 %v342, 0.0
      %v407 = vmax.f32 %v343, 0.0
      %v408 = vmax.f32 %v344, 0.0
      %v409 = vmax.f32 %v345, 0.0
      %v410 = vmax.f32 %v346, 0.0
      %v411 = vmax.f32 %v347, 0.0
      %v412 = vmax.f32 %v348, 0.0
      %v413 = vmax.f32 %v349, 0.0
      %v414 = vmax.f32 %v350, 0.0
      %v415 = vmax.f32 %v351, 0.0
      %v416 = vmax.f32 %v352, 0.0
      %v417 = vmax.f32 %v353, 0.0
      %v418 = vmax.f32 %v354, 0.0
      %v419 = vmax.f32 %v355, 0.0
      %v420 = vmax.f32 %v356, 0.0
      %v421 = vmax.f32 %v357, 0.0
      %v422 = vmax.f32 %v358, 0.0
      %v423 = vmax.f32 %v359, 0.0
      %v424 = vmax.f32 %v360, 0.0
      %v425 = vmax.f32 %v361, 0.0
      %v426 = vmax.f32 %v362, 0.0
      %v427 = vmax.f32 %v363, 0.0
      %v428 = vmax.f32 %v364, 0.0
      %v429 = vmax.f32 %v365, 0.0
      %v430 = vmax.f32 %v366, 0.0
      %v431 = vmax.f32 %v367, 0.0
      %v432 = vmax.f32 %v368, 0.0
      %v433 = vmax.f32 %v369, 0.0
      %v434 = vmax.f32 %v370, 0.0
      %v435 = vmax.f32 %v371, 0.0
      %v436 = vmax.f32 %v372, 0.0
      %v437 = vmax.f32 %v373, 0.0
      %438 = vst [vmem:[%s172] sm:$0xff] %v374
      %439 = vst [vmem:[%s172 + $0x8] sm:$0xff] %v375
      %440 = vst [vmem:[%s172 + $0x10] sm:$0xff] %v376
      %441 = vst [vmem:[%s172 + $0x18] sm:$0xff] %v377
      %442 = vst [vmem:[%s172 + $0x20] sm:$0xff] %v378
      %443 = vst [vmem:[%s172 + $0x28] sm:$0xff] %v379
      %444 = vst [vmem:[%s172 + $0x30] sm:$0xff] %v380
      %445 = vst [vmem:[%s172 + $0x38] sm:$0xff] %v381
      %446 = vst [vmem:[%s172 + $0x40] sm:$0xff] %v382
      %447 = vst [vmem:[%s172 + $0x48] sm:$0xff] %v383
      %448 = vst [vmem:[%s172 + $0x50] sm:$0xff] %v384
      %449 = vst [vmem:[%s172 + $0x58] sm:$0xff] %v385
      %450 = vst [vmem:[%s172 + $0x60] sm:$0xff] %v386
      %451 = vst [vmem:[%s172 + $0x68] sm:$0xff] %v387
      %452 = vst [vmem:[%s172 + $0x70] sm:$0xff] %v388
      %453 = vst [vmem:[%s172 + $0x78] sm:$0xff] %v389
      %454 = vst [vmem:[%s172 + $0x80] sm:$0xff] %v390
      %455 = vst [vmem:[%s172 + $0x88] sm:$0xff] %v391
      %456 = vst [vmem:[%s172 + $0x90] sm:$0xff] %v392
      %457 = vst [vmem:[%s172 + $0x98] sm:$0xff] %v393
      %458 = vst [vmem:[%s172 + $0xa0] sm:$0xff] %v394
      %459 = vst [vmem:[%s172 + $0xa8] sm:$0xff] %v395
      %460 = vst [vmem:[%s172 + $0xb0] sm:$0xff] %v396
      %461 = vst [vmem:[%s172 + $0xb8] sm:$0xff] %v397
      %462 = vst [vmem:[%s172 + $0xc0] sm:$0xff] %v398
      %463 = vst [vmem:[%s172 + $0xc8] sm:$0xff] %v399
      %464 = vst [vmem:[%s172 + $0xd0] sm:$0xff] %v400
      %465 = vst [vmem:[%s172 + $0xd8] sm:$0xff] %v401
      %466 = vst [vmem:[%s172 + $0xe0] sm:$0xff] %v402
      %467 = vst [vmem:[%s172 + $0xe8] sm:$0xff] %v403
      %468 = vst [vmem:[%s172 + $0xf0] sm:$0xff] %v404
      %469 = vst [vmem:[%s172 + $0xf8] sm:$0xff] %v405
      %470 = vst [vmem:[%s172 + $0x100] sm:$0xff] %v406
      %471 = vst [vmem:[%s172 + $0x108] sm:$0xff] %v407
      %472 = vst [vmem:[%s172 + $0x110] sm:$0xff] %v408
      %473 = vst [vmem:[%s172 + $0x118] sm:$0xff] %v409
      %474 = vst [vmem:[%s172 + $0x120] sm:$0xff] %v410
      %475 = vst [vmem:[%s172 + $0x128] sm:$0xff] %v411
      %476 = vst [vmem:[%s172 + $0x130] sm:$0xff] %v412
      %477 = vst [vmem:[%s172 + $0x138] sm:$0xff] %v413
      %478 = vst [vmem:[%s172 + $0x140] sm:$0xff] %v414
      %479 = vst [vmem:[%s172 + $0x148] sm:$0xff] %v415
      %480 = vst [vmem:[%s172 + $0x150] sm:$0xff] %v416
      %481 = vst [vmem:[%s172 + $0x158] sm:$0xff] %v417
      %482 = vst [vmem:[%s172 + $0x160] sm:$0xff] %v418
      %483 = vst [vmem:[%s172 + $0x168] sm:$0xff] %v419
      %484 = vst [vmem:[%s172 + $0x170] sm:$0xff] %v420
      %485 = vst [vmem:[%s172 + $0x178] sm:$0xff] %v421
      %486 = vst [vmem:[%s172 + $0x180] sm:$0xff] %v422
      %487 = vst [vmem:[%s172 + $0x188] sm:$0xff] %v423
      %488 = vst [vmem:[%s172 + $0x190] sm:$0xff] %v424
      %489 = vst [vmem:[%s172 + $0x198] sm:$0xff] %v425
      %490 = vst [vmem:[%s172 + $0x1a0] sm:$0xff] %v426
      %491 = vst [vmem:[%s172 + $0x1a8] sm:$0xff] %v427
      %492 = vst [vmem:[%s172 + $0x1b0] sm:$0xff] %v428
      %493 = vst [vmem:[%s172 + $0x1b8] sm:$0xff] %v429
      %494 = vst [vmem:[%s172 + $0x1c0] sm:$0xff] %v430
      %495 = vst [vmem:[%s172 + $0x1c8] sm:$0xff] %v431
      %496 = vst [vmem:[%s172 + $0x1d0] sm:$0xff] %v432
      %497 = vst [vmem:[%s172 + $0x1d8] sm:$0xff] %v433
      %498 = vst [vmem:[%s172 + $0x1e0] sm:$0xff] %v434
      %499 = vst [vmem:[%s172 + $0x1e8] sm:$0xff] %v435
      %500 = vst [vmem:[%s172 + $0x1f0] sm:$0xff] %v436
      %501 = vst [vmem:[%s172 + $0x1f8] sm:$0xff] %v437
      %s502 = smul.u32 64, %s14
      %p503 = scmp.lt.s32.totalorder %s502, 127
      %s504 = scalar_select %p503, %s502, 127
      %s505 = smul.addr %s504, 8
      %s506 = scalar_lea.vmem %s3, %s505
      // Predicated region
      $region33: #{double_conv_forward.5} parent=31 // pred_check
        %p507 = pneg %p100
      $region34: #{double_conv_forward.5} parent=31 // pred_check_branch
        %509 = sbr.rel (%p507) target = $region36
      $region35: #{double_conv_forward.5} parent=31 // pred_region
        %s510 = smul.u32 64, %s14
      $region36: #{double_conv_forward.5} parent=31 // pred_fallthru
        _
    $region32: #{double_conv_forward.5} parent=5 // pred_fallthru
      _
    %p511 = scmp.le.s32.totalorder 2, %s9
    // Predicated region
    $region37: #{double_conv_forward.5} parent=5 // pred_check
      %p512 = pneg %p511
    $region38: #{double_conv_forward.5} parent=5 // pred_check_branch
      %514 = sbr.rel (%p512) target = $region40
    $region39: #{double_conv_forward.5} parent=5 // pred_region
      %s515 = ssub.s32 %s9, 2
      // Predicated region
      $region41: #{double_conv_forward.5} parent=39 // pred_check
        %p516 = pneg %p106
      $region42: #{double_conv_forward.5} parent=39 // pred_check_branch
        %518 = sbr.rel (%p516) target = $region44
      $region43: #{double_conv_forward.5} parent=39 // pred_region
        %s519 = smul.u32 64, %s15
        %p520 = scmp.lt.s32.totalorder %s519, 127
        %s521 = scalar_select %p520, %s519, 127
        %s522 = smul.addr %s521, 8
        %s523 = scalar_lea.vmem %s3, %s522
      $region44: #{double_conv_forward.5} parent=39 // pred_fallthru
        _
    $region40: #{double_conv_forward.5} parent=5 // pred_fallthru
      _
  $region6: #{double_conv_forward.5} parent=0 // loop_footer
    %s13 = sadd.s32 1, %s9
  $region7: #{double_conv_forward.5} parent=0 // loop_footer_branch
    %8 = sbr.rel target = $region3
  $region8: #{double_conv_forward.5} parent=0 // loop_exit
    _

// kernel: double_conv_forward.3
$region0: #{double_conv_forward.3}
  #allocation0 [shape = 'u32[]', space=smem, size = 0x4, offset = 0x4, fixed_abs, tag = 'smem constant byte address 0x4 - core index']
  #allocation1 [shape = 'u32[72,128]{1,0:T(1,128)}', space=vmem, size = 0x9000, scoped, tag = 'internal scratch']
  %s0 = inlined_call_operand.vmem [shape: f32[2,10,10,10,128], index: 0, kind: input, shape index: {}]
  %s1 = inlined_call_operand.vmem [shape: f32[3456,128], index: 1, kind: input, shape index: {}]
  %s2 = inlined_call_operand.vmem [shape: f32[1,128], index: 2, kind: input, shape index: {}]
  %s3 = inlined_call_operand.vmem [shape: f32[2,8,8,8,128], index: 3, kind: output, shape index: {0}]
  %s4 = inlined_call_operand.vmem [shape: f32[2,1,256], index: 4, kind: output, shape index: {1}]
  %5 = xla_tuple %s3, %s4
  %s6 = sld [smem:[#allocation0]]
  $region53: #{double_conv_forward.3} parent=0
    _
  %s8 = ssub.s32 1, %s6
  %s9 = scalar_select 0, %s8, %s6
  loop: start=0, step=1, limit=4
  $region2: #{double_conv_forward.3} parent=0 // loop_pre_header
    _
  $region3: #{double_conv_forward.3} parent=0 // loop_header
    %s11 = sphi 0, %s15
    %p12 = scmp.ge.s32.totalorder %s11, 4
    %s21 = sphi 0, %s23
    %s24 = sphi 0, %s21
    %s25 = sphi 0, %s24
    %s41 = sphi 0, %s25
    %s45 = sphi 0, %s45
    %s47 = sphi 0, %s45
    %s48 = sphi 0, %s47
    %s62 = sphi 0, %s48
    %s66 = sphi 0, %s66
    %s68 = sphi 0, %s66
    %s69 = sphi 0, %s68
    %s83 = sphi 0, %s69
    %s89 = sphi 0, %s91
    %s92 = sphi 0, %s89
    %s93 = sphi 0, %s92
    %s109 = sphi 0, %s93
    %s115 = sphi 0, %s117
    %s118 = sphi 0, %s115
    %s119 = sphi 0, %s118
    %s135 = sphi 0, %s119
  $region4: #{double_conv_forward.3} parent=0 // loop_header_branch
    %14 = sbr.rel (%p12) target = $region8
  $region5: #{double_conv_forward.3} parent=0 // loop_body
    %s16 = ssub.s32 %s11, 1
    %s17 = ssub.s32 %s11, 2
    %s18 = sadd.s32 %s11, 1
    %s19 = ssub.s32 %s11, %s18
    %p20 = scmp.eq.s32.totalorder %s19, 0
    %s22 = sadd.s32 %s21, 1
    %s23 = scalar_select %p20, %s21, %s22
    %p26 = pneg %p20
    %p27 = scmp.eq.s32.totalorder %s11, 1
    %p28 = por %p26, %p27
    %p29 = scmp.ne.s32.totalorder %s21, %s24
    %p30 = scmp.eq.s32.totalorder %s11, 0
    %p31 = por %p29, %p30
    %p32 = scmp.ne.s32.totalorder %s21, %s24
    %p33 = scmp.eq.s32.totalorder %s16, 1
    %p34 = por %p32, %p33
    %p35 = scmp.ne.s32.totalorder %s24, %s25
    %p36 = scmp.eq.s32.totalorder %s16, 0
    %p37 = por %p35, %p36
    %p38 = scmp.ne.s32.totalorder %s24, %s25
    %p39 = scmp.eq.s32.totalorder %s17, 1
    %p40 = por %p38, %p39
    %p42 = scmp.ne.s32.totalorder %s25, %s41
    %p43 = scmp.eq.s32.totalorder %s17, 0
    %p44 = por %p42, %p43
    %s46 = sadd.s32 %s45, 1
    %p49 = scmp.eq.s32.totalorder %s11, 1
    %p50 = scmp.ne.s32.totalorder %s45, %s47
    %p51 = scmp.eq.s32.totalorder %s11, 0
    %p52 = por %p50, %p51
    %p53 = scmp.ne.s32.totalorder %s45, %s47
    %p54 = scmp.eq.s32.totalorder %s16, 1
    %p55 = por %p53, %p54
    %p56 = scmp.ne.s32.totalorder %s47, %s48
    %p57 = scmp.eq.s32.totalorder %s16, 0
    %p58 = por %p56, %p57
    %p59 = scmp.ne.s32.totalorder %s47, %s48
    %p60 = scmp.eq.s32.totalorder %s17, 1
    %p61 = por %p59, %p60
    %p63 = scmp.ne.s32.totalorder %s48, %s62
    %p64 = scmp.eq.s32.totalorder %s17, 0
    %p65 = por %p63, %p64
    %s67 = sadd.s32 %s66, 1
    %p70 = scmp.eq.s32.totalorder %s11, 1
    %p71 = scmp.ne.s32.totalorder %s66, %s68
    %p72 = scmp.eq.s32.totalorder %s11, 0
    %p73 = por %p71, %p72
    %p74 = scmp.ne.s32.totalorder %s66, %s68
    %p75 = scmp.eq.s32.totalorder %s16, 1
    %p76 = por %p74, %p75
    %p77 = scmp.ne.s32.totalorder %s68, %s69
    %p78 = scmp.eq.s32.totalorder %s16, 0
    %p79 = por %p77, %p78
    %p80 = scmp.ne.s32.totalorder %s68, %s69
    %p81 = scmp.eq.s32.totalorder %s17, 1
    %p82 = por %p80, %p81
    %p84 = scmp.ne.s32.totalorder %s69, %s83
    %p85 = scmp.eq.s32.totalorder %s17, 0
    %p86 = por %p84, %p85
    %s87 = ssub.s32 %s11, %s18
    %p88 = scmp.eq.s32.totalorder %s87, 0
    %s90 = sadd.s32 %s89, 1
    %s91 = scalar_select %p88, %s89, %s90
    %p94 = pneg %p88
    %p95 = scmp.eq.s32.totalorder %s11, 1
    %p96 = por %p94, %p95
    %p97 = scmp.ne.s32.totalorder %s89, %s92
    %p98 = scmp.eq.s32.totalorder %s11, 0
    %p99 = por %p97, %p98
    %p100 = scmp.ne.s32.totalorder %s89, %s92
    %p101 = scmp.eq.s32.totalorder %s16, 1
    %p102 = por %p100, %p101
    %p103 = scmp.ne.s32.totalorder %s92, %s93
    %p104 = scmp.eq.s32.totalorder %s16, 0
    %p105 = por %p103, %p104
    %p106 = scmp.ne.s32.totalorder %s92, %s93
    %p107 = scmp.eq.s32.totalorder %s17, 1
    %p108 = por %p106, %p107
    %p110 = scmp.ne.s32.totalorder %s93, %s109
    %p111 = scmp.eq.s32.totalorder %s17, 0
    %p112 = por %p110, %p111
    %s113 = ssub.s32 %s11, %s18
    %p114 = scmp.eq.s32.totalorder %s113, 0
    %s116 = sadd.s32 %s115, 1
    %s117 = scalar_select %p114, %s115, %s116
    %p120 = pneg %p114
    %p121 = scmp.eq.s32.totalorder %s11, 1
    %p122 = por %p120, %p121
    %p123 = scmp.ne.s32.totalorder %s115, %s118
    %p124 = scmp.eq.s32.totalorder %s11, 0
    %p125 = por %p123, %p124
    %p126 = scmp.ne.s32.totalorder %s115, %s118
    %p127 = scmp.eq.s32.totalorder %s16, 1
    %p128 = por %p126, %p127
    %p129 = scmp.ne.s32.totalorder %s118, %s119
    %p130 = scmp.eq.s32.totalorder %s16, 0
    %p131 = por %p129, %p130
    %p132 = scmp.ne.s32.totalorder %s118, %s119
    %p133 = scmp.eq.s32.totalorder %s17, 1
    %p134 = por %p132, %p133
    %p136 = scmp.ne.s32.totalorder %s119, %s135
    %p137 = scmp.eq.s32.totalorder %s17, 0
    %p138 = por %p136, %p137
    %p139 = scmp.le.s32.totalorder 1, %s11
    %p140 = scmp.lt.s32.totalorder %s11, 3
    %p141 = pnand %p139, %p140
    %p142 = pneg %p141
    // Predicated region
    $region9: #{double_conv_forward.3} parent=5 // pred_check
      _
    $region10: #{double_conv_forward.3} parent=5 // pred_check_branch
      %144 = sbr.rel (%p141) target = $region12
    $region11: #{double_conv_forward.3} parent=5 // pred_region
      %s145 = ssub.s32 %s11, 1
      // Predicated region
      $region13: #{double_conv_forward.3} parent=11 // pred_check
        %p146 = pneg %p58
      $region14: #{double_conv_forward.3} parent=11 // pred_check_branch
        %148 = sbr.rel (%p146) target = $region16
      $region15: #{double_conv_forward.3} parent=11 // pred_region
        _
      $region16: #{double_conv_forward.3} parent=11 // pred_fallthru
        _
      // Predicated region
      $region17: #{double_conv_forward.3} parent=11 // pred_check
        %p149 = pneg %p79
      $region18: #{double_conv_forward.3} parent=11 // pred_check_branch
        %151 = sbr.rel (%p149) target = $region20
      $region19: #{double_conv_forward.3} parent=11 // pred_region
        _
      $region20: #{double_conv_forward.3} parent=11 // pred_fallthru
        _
    $region12: #{double_conv_forward.3} parent=5 // pred_fallthru
      _
    %p152 = scmp.lt.s32.totalorder %s11, 2
    // Predicated region
    $region21: #{double_conv_forward.3} parent=5 // pred_check
      %p153 = pneg %p152
    $region22: #{double_conv_forward.3} parent=5 // pred_check_branch
      %155 = sbr.rel (%p153) target = $region24
    $region23: #{double_conv_forward.3} parent=5 // pred_region
      // Predicated region
      $region25: #{double_conv_forward.3} parent=23 // pred_check
        %p156 = pneg %p31
      $region26: #{double_conv_forward.3} parent=23 // pred_check_branch
        %158 = sbr.rel (%p156) target = $region28
      $region27: #{double_conv_forward.3} parent=23 // pred_region
        %p159 = scmp.lt.s32.totalorder %s11, 1
        %s160 = scalar_select %p159, %s11, 1
        %s161 = smul.addr %s160, 200
        %s162 = smul.addr %s161, 8
        %s163 = scalar_lea.vmem %s0, %s162
      $region28: #{double_conv_forward.3} parent=23 // pred_fallthru
        _
    $region24: #{double_conv_forward.3} parent=5 // pred_fallthru
      _
    %p164 = scmp.le.s32.totalorder 1, %s11
    %p165 = scmp.lt.s32.totalorder %s11, 3
    %p166 = pnand %p164, %p165
    %p167 = pneg %p166
    // Predicated region
    $region29: #{double_conv_forward.3} parent=5 // pred_check
      _
    $region30: #{double_conv_forward.3} parent=5 // pred_check_branch
      %169 = sbr.rel (%p166) target = $region32
    $region31: #{double_conv_forward.3} parent=5 // pred_region
      %s170 = ssub.s32 %s11, 1
      %p171 = scmp.lt.s32.totalorder %s16, 1
      %s172 = scalar_select %p171, %s16, 1
      %s173 = smul.addr %s172, 200
      %s174 = smul.addr %s173, 8
      %s175 = scalar_lea.vmem %s0, %s174
      %p176 = pneg %p37
      %p177 = pneg %p34
      %p178 = pneg %p58
      %p179 = pneg %p55
      %p180 = pneg %p79
      %p181 = pneg %p76
      %p182 = pneg %p105
      %p183 = pneg %p102
      %p184 = scmp.lt.s32.totalorder %s16, 1
      %s185 = scalar_select %p184, %s16, 1
      %s186 = smul.addr %s185, 64
      %s187 = smul.addr %s186, 8
      %s188 = scalar_lea.vmem %s3, %s187
      %p189 = pneg %p131
      %p190 = pneg %p128
      %p191 = scmp.lt.s32.totalorder %s16, 1
      %s192 = scalar_select %p191, %s16, 1
      %s193 = smul.addr %s192, 2
      %s194 = scalar_lea.vmem %s4, %s193
      %p195 = scmp.lt.s32.totalorder %s16, 1
      %s196 = scalar_select %p195, %s16, 1
      %s197 = smul.addr %s196, 200
      %s198 = smul.addr %s197, 8
      %s199 = scalar_lea.vmem %s0, %s198
      %p200 = scmp.lt.s32.totalorder %s16, 1
      %s201 = scalar_select %p200, %s16, 1
      %s202 = smul.addr %s201, 64
      %s203 = smul.addr %s202, 8
      %s204 = scalar_lea.vmem %s3, %s203
      %p205 = scmp.lt.s32.totalorder %s16, 1
      %s206 = scalar_select %p205, %s16, 1
      %s207 = smul.addr %s206, 2
      %s208 = scalar_lea.vmem %s4, %s207
      %v209 = vld [vmem:[%s199] sm:$0xff]
      %v210 = vld [vmem:[%s199 + $0x8] sm:$0x3]
      %v211 = vld [vmem:[%s199 + $0x10] sm:$0xff]
      %v212 = vld [vmem:[%s199 + $0x18] sm:$0x3]
      %v213 = vld [vmem:[%s199 + $0x20] sm:$0xff]
      %v214 = vld [vmem:[%s199 + $0x28] sm:$0x3]
      %v215 = vld [vmem:[%s199 + $0x30] sm:$0xff]
      %v216 = vld [vmem:[%s199 + $0x38] sm:$0x3]
      %v217 = vld [vmem:[%s199 + $0x40] sm:$0xff]
      %v218 = vld [vmem:[%s199 + $0x48] sm:$0x3]
      %v219 = vld [vmem:[%s199 + $0x50] sm:$0xff]
      %v220 = vld [vmem:[%s199 + $0x58] sm:$0x3]
      %v221 = vld [vmem:[%s199 + $0x60] sm:$0xff]
      %v222 = vld [vmem:[%s199 + $0x68] sm:$0x3]
      %v223 = vld [vmem:[%s199 + $0x70] sm:$0xff]
      %v224 = vld [vmem:[%s199 + $0x78] sm:$0x3]
      %v225 = vld [vmem:[%s199 + $0x80] sm:$0xff]
      %v226 = vld [vmem:[%s199 + $0x88] sm:$0x3]
      %v227 = vld [vmem:[%s199 + $0x90] sm:$0xff]
      %v228 = vld [vmem:[%s199 + $0x98] sm:$0x3]
      %v229 = vld [vmem:[%s199 + $0xa0] sm:$0xff]
      %v230 = vld [vmem:[%s199 + $0xa8] sm:$0x3]
      %v231 = vld [vmem:[%s199 + $0xb0] sm:$0xff]
      %v232 = vld [vmem:[%s199 + $0xb8] sm:$0x3]
      %v233 = vld [vmem:[%s199 + $0xc0] sm:$0xff]
      %v234 = vld [vmem:[%s199 + $0xc8] sm:$0x3]
      %v235 = vld [vmem:[%s199 + $0xd0] sm:$0xff]
      %v236 = vld [vmem:[%s199 + $0xd8] sm:$0x3]
      %v237 = vld [vmem:[%s199 + $0xe0] sm:$0xff]
      %v238 = vld [vmem:[%s199 + $0xe8] sm:$0x3]
      %v239 = vld [vmem:[%s199 + $0xf0] sm:$0xff]
      %v240 = vld [vmem:[%s199 + $0xf8] sm:$0x3]
      %v241 = vld [vmem:[%s199 + $0x100] sm:$0xff]
      %v242 = vld [vmem:[%s199 + $0x108] sm:$0x3]
      %v243 = vld [vmem:[%s199 + $0x110] sm:$0xff]
      %v244 = vld [vmem:[%s199 + $0x118] sm:$0x3]
      %v245 = vld [vmem:[%s199 + $0x120] sm:$0xff]
      %v246 = vld [vmem:[%s199 + $0x128] sm:$0x3]
      %v247 = vld [vmem:[%s199 + $0x130] sm:$0xff]
      %v248 = vld [vmem:[%s199 + $0x138] sm:$0x3]
      %v249 = vld [vmem:[%s199 + $0x140] sm:$0xff]
      %v250 = vld [vmem:[%s199 + $0x148] sm:$0x3]
      %v251 = vld [vmem:[%s199 + $0x150] sm:$0xff]
      %v252 = vld [vmem:[%s199 + $0x158] sm:$0x3]
      %v253 = vld [vmem:[%s199 + $0x160] sm:$0xff]
      %v254 = vld [vmem:[%s199 + $0x168] sm:$0x3]
      %v255 = vld [vmem:[%s199 + $0x170] sm:$0xff]
      %v256 = vld [vmem:[%s199 + $0x178] sm:$0x3]
      %v257 = vld [vmem:[%s199 + $0x180] sm:$0xff]
      %v258 = vld [vmem:[%s199 + $0x188] sm:$0x3]
      %v259 = vld [vmem:[%s199 + $0x190] sm:$0xff]
      %v260 = vld [vmem:[%s199 + $0x198] sm:$0x3]
      %v261 = vld [vmem:[%s199 + $0x1a0] sm:$0xff]
      %v262 = vld [vmem:[%s199 + $0x1a8] sm:$0x3]
      %v263 = vld [vmem:[%s199 + $0x1b0] sm:$0xff]
      %v264 = vld [vmem:[%s199 + $0x1b8] sm:$0x3]
      %v265 = vld [vmem:[%s199 + $0x1c0] sm:$0xff]
      %v266 = vld [vmem:[%s199 + $0x1c8] sm:$0x3]
      %v267 = vld [vmem:[%s199 + $0x1d0] sm:$0xff]
      %v268 = vld [vmem:[%s199 + $0x1d8] sm:$0x3]
      %v269 = vld [vmem:[%s199 + $0x1e0] sm:$0xff]
      %v270 = vld [vmem:[%s199 + $0x1e8] sm:$0x3]
      %v271 = vld [vmem:[%s199 + $0x1f0] sm:$0xff]
      %v272 = vld [vmem:[%s199 + $0x1f8] sm:$0x3]
      %v273 = vld [vmem:[%s199 + $0x200] sm:$0xff]
      %v274 = vld [vmem:[%s199 + $0x208] sm:$0x3]
      %v275 = vld [vmem:[%s199 + $0x210] sm:$0xff]
      %v276 = vld [vmem:[%s199 + $0x218] sm:$0x3]
      %v277 = vld [vmem:[%s199 + $0x220] sm:$0xff]
      %v278 = vld [vmem:[%s199 + $0x228] sm:$0x3]
      %v279 = vld [vmem:[%s199 + $0x230] sm:$0xff]
      %v280 = vld [vmem:[%s199 + $0x238] sm:$0x3]
      %v281 = vld [vmem:[%s199 + $0x240] sm:$0xff]
      %v282 = vld [vmem:[%s199 + $0x248] sm:$0x3]
      %v283 = vld [vmem:[%s199 + $0x250] sm:$0xff]
      %v284 = vld [vmem:[%s199 + $0x258] sm:$0x3]
      %v285 = vld [vmem:[%s199 + $0x260] sm:$0xff]
      %v286 = vld [vmem:[%s199 + $0x268] sm:$0x3]
      %v287 = vld [vmem:[%s199 + $0x270] sm:$0xff]
      %v288 = vld [vmem:[%s199 + $0x278] sm:$0x3]
      %v289 = vld [vmem:[%s199 + $0x280] sm:$0xff]
      %v290 = vld [vmem:[%s199 + $0x288] sm:$0x3]
      %v291 = vld [vmem:[%s199 + $0x290] sm:$0xff]
      %v292 = vld [vmem:[%s199 + $0x298] sm:$0x3]
      %v293 = vld [vmem:[%s199 + $0x2a0] sm:$0xff]
      %v294 = vld [vmem:[%s199 + $0x2a8] sm:$0x3]
      %v295 = vld [vmem:[%s199 + $0x2b0] sm:$0xff]
      %v296 = vld [vmem:[%s199 + $0x2b8] sm:$0x3]
      %v297 = vld [vmem:[%s199 + $0x2c0] sm:$0xff]
      %v298 = vld [vmem:[%s199 + $0x2c8] sm:$0x3]
      %v299 = vld [vmem:[%s199 + $0x2d0] sm:$0xff]
      %v300 = vld [vmem:[%s199 + $0x2d8] sm:$0x3]
      %v301 = vld [vmem:[%s199 + $0x2e0] sm:$0xff]
      %v302 = vld [vmem:[%s199 + $0x2e8] sm:$0x3]
      %v303 = vld [vmem:[%s199 + $0x2f0] sm:$0xff]
      %v304 = vld [vmem:[%s199 + $0x2f8] sm:$0x3]
      %v305 = vld [vmem:[%s199 + $0x300] sm:$0xff]
      %v306 = vld [vmem:[%s199 + $0x308] sm:$0x3]
      %v307 = vld [vmem:[%s199 + $0x310] sm:$0xff]
      %v308 = vld [vmem:[%s199 + $0x318] sm:$0x3]
      %v309 = vld [vmem:[%s199 + $0x320] sm:$0xff]
      %v310 = vld [vmem:[%s199 + $0x328] sm:$0x3]
      %v311 = vld [vmem:[%s199 + $0x330] sm:$0xff]
      %v312 = vld [vmem:[%s199 + $0x338] sm:$0x3]
      %v313 = vld [vmem:[%s199 + $0x340] sm:$0xff]
      %v314 = vld [vmem:[%s199 + $0x348] sm:$0x3]
      %v315 = vld [vmem:[%s199 + $0x350] sm:$0xff]
      %v316 = vld [vmem:[%s199 + $0x358] sm:$0x3]
      %v317 = vld [vmem:[%s199 + $0x360] sm:$0xff]
      %v318 = vld [vmem:[%s199 + $0x368] sm:$0x3]
      %v319 = vld [vmem:[%s199 + $0x370] sm:$0xff]
      %v320 = vld [vmem:[%s199 + $0x378] sm:$0x3]
      %v321 = vld [vmem:[%s199 + $0x380] sm:$0xff]
      %v322 = vld [vmem:[%s199 + $0x388] sm:$0x3]
      %v323 = vld [vmem:[%s199 + $0x390] sm:$0xff]
      %v324 = vld [vmem:[%s199 + $0x398] sm:$0x3]
      %v325 = vld [vmem:[%s199 + $0x3a0] sm:$0xff]
      %v326 = vld [vmem:[%s199 + $0x3a8] sm:$0x3]
      %v327 = vld [vmem:[%s199 + $0x3b0] sm:$0xff]
      %v328 = vld [vmem:[%s199 + $0x3b8] sm:$0x3]
      %v329 = vld [vmem:[%s199 + $0x3c0] sm:$0xff]
      %v330 = vld [vmem:[%s199 + $0x3c8] sm:$0x3]
      %v331 = vld [vmem:[%s199 + $0x3d0] sm:$0xff]
      %v332 = vld [vmem:[%s199 + $0x3d8] sm:$0x3]
      %v333 = vld [vmem:[%s199 + $0x3e0] sm:$0xff]
      %v334 = vld [vmem:[%s199 + $0x3e8] sm:$0x3]
      %v335 = vld [vmem:[%s199 + $0x3f0] sm:$0xff]
      %v336 = vld [vmem:[%s199 + $0x3f8] sm:$0x3]
      %v337 = vld [vmem:[%s199 + $0x400] sm:$0xff]
      %v338 = vld [vmem:[%s199 + $0x408] sm:$0x3]
      %v339 = vld [vmem:[%s199 + $0x410] sm:$0xff]
      %v340 = vld [vmem:[%s199 + $0x418] sm:$0x3]
      %v341 = vld [vmem:[%s199 + $0x420] sm:$0xff]
      %v342 = vld [vmem:[%s199 + $0x428] sm:$0x3]
      %v343 = vld [vmem:[%s199 + $0x430] sm:$0xff]
      %v344 = vld [vmem:[%s199 + $0x438] sm:$0x3]
      %v345 = vld [vmem:[%s199 + $0x440] sm:$0xff]
      %v346 = vld [vmem:[%s199 + $0x448] sm:$0x3]
      %v347 = vld [vmem:[%s199 + $0x450] sm:$0xff]
      %v348 = vld [vmem:[%s199 + $0x458] sm:$0x3]
      %v349 = vld [vmem:[%s199 + $0x460] sm:$0xff]
      %v350 = vld [vmem:[%s199 + $0x468] sm:$0x3]
      %v351 = vld [vmem:[%s199 + $0x470] sm:$0xff]
      %v352 = vld [vmem:[%s199 + $0x478] sm:$0x3]
      %v353 = vld [vmem:[%s199 + $0x480] sm:$0xff]
      %v354 = vld [vmem:[%s199 + $0x488] sm:$0x3]
      %v355 = vld [vmem:[%s199 + $0x490] sm:$0xff]
      %v356 = vld [vmem:[%s199 + $0x498] sm:$0x3]
      %v357 = vld [vmem:[%s199 + $0x4a0] sm:$0xff]
      %v358 = vld [vmem:[%s199 + $0x4a8] sm:$0x3]
      %v359 = vld [vmem:[%s199 + $0x4b0] sm:$0xff]
      %v360 = vld [vmem:[%s199 + $0x4b8] sm:$0x3]
      %v361 = vld [vmem:[%s199 + $0x4c0] sm:$0xff]
      %v362 = vld [vmem:[%s199 + $0x4c8] sm:$0x3]
      %v363 = vld [vmem:[%s199 + $0x4d0] sm:$0xff]
      %v364 = vld [vmem:[%s199 + $0x4d8] sm:$0x3]
      %v365 = vld [vmem:[%s199 + $0x4e0] sm:$0xff]
      %v366 = vld [vmem:[%s199 + $0x4e8] sm:$0x3]
      %v367 = vld [vmem:[%s199 + $0x4f0] sm:$0xff]
      %v368 = vld [vmem:[%s199 + $0x4f8] sm:$0x3]
      %v369 = vld [vmem:[%s199 + $0x500] sm:$0xff]
      %v370 = vld [vmem:[%s199 + $0x508] sm:$0x3]
      %v371 = vld [vmem:[%s199 + $0x510] sm:$0xff]
      %v372 = vld [vmem:[%s199 + $0x518] sm:$0x3]
      %v373 = vld [vmem:[%s199 + $0x520] sm:$0xff]
      %v374 = vld [vmem:[%s199 + $0x528] sm:$0x3]
      %v375 = vld [vmem:[%s199 + $0x530] sm:$0xff]
      %v376 = vld [vmem:[%s199 + $0x538] sm:$0x3]
      %v377 = vld [vmem:[%s199 + $0x540] sm:$0xff]
      %v378 = vld [vmem:[%s199 + $0x548] sm:$0x3]
      %v379 = vld [vmem:[%s199 + $0x550] sm:$0xff]
      %v380 = vld [vmem:[%s199 + $0x558] sm:$0x3]
      %v381 = vld [vmem:[%s199 + $0x560] sm:$0xff]
      %v382 = vld [vmem:[%s199 + $0x568] sm:$0x3]
      %v383 = vld [vmem:[%s199 + $0x570] sm:$0xff]
      %v384 = vld [vmem:[%s199 + $0x578] sm:$0x3]
      %v385 = vld [vmem:[%s199 + $0x580] sm:$0xff]
      %v386 = vld [vmem:[%s199 + $0x588] sm:$0x3]
      %v387 = vld [vmem:[%s199 + $0x590] sm:$0xff]
      %v388 = vld [vmem:[%s199 + $0x598] sm:$0x3]
      %v389 = vld [vmem:[%s199 + $0x5a0] sm:$0xff]
      %v390 = vld [vmem:[%s199 + $0x5a8] sm:$0x3]
      %v391 = vld [vmem:[%s199 + $0x5b0] sm:$0xff]
      %v392 = vld [vmem:[%s199 + $0x5b8] sm:$0x3]
      %v393 = vld [vmem:[%s199 + $0x5c0] sm:$0xff]
      %v394 = vld [vmem:[%s199 + $0x5c8] sm:$0x3]
      %v395 = vld [vmem:[%s199 + $0x5d0] sm:$0xff]
      %v396 = vld [vmem:[%s199 + $0x5d8] sm:$0x3]
      %v397 = vld [vmem:[%s199 + $0x5e0] sm:$0xff]
      %v398 = vld [vmem:[%s199 + $0x5e8] sm:$0x3]
      %v399 = vld [vmem:[%s199 + $0x5f0] sm:$0xff]
      %v400 = vld [vmem:[%s199 + $0x5f8] sm:$0x3]
      %v401 = vld [vmem:[%s199 + $0x600] sm:$0xff]
      %v402 = vld [vmem:[%s199 + $0x608] sm:$0x3]
      %v403 = vld [vmem:[%s199 + $0x610] sm:$0xff]
      %v404 = vld [vmem:[%s199 + $0x618] sm:$0x3]
      %v405 = vld [vmem:[%s199 + $0x620] sm:$0xff]
      %v406 = vld [vmem:[%s199 + $0x628] sm:$0x3]
      %v407 = vld [vmem:[%s199 + $0x630] sm:$0xff]
      %v408 = vld [vmem:[%s199 + $0x638] sm:$0x3]
      %vm609 = vcmask 1046528
      %v610 = vrot.slane %v209, 1
      %v611 = vrot.slane %v210, 1
      %v612 = vsel %vm609, %v610, %v611
      %v613 = vrot.slane %v211, 1
      %v614 = vrot.slane %v212, 1
      %v615 = vsel %vm609, %v613, %v614
      %v616 = vrot.slane %v213, 1
      %v617 = vrot.slane %v214, 1
      %v618 = vsel %vm609, %v616, %v617
      %v619 = vrot.slane %v215, 1
      %v620 = vrot.slane %v216, 1
      %v621 = vsel %vm609, %v619, %v620
      %v622 = vrot.slane %v217, 1
      %v623 = vrot.slane %v218, 1
      %v624 = vsel %vm609, %v622, %v623
      %v625 = vrot.slane %v219, 1
      %v626 = vrot.slane %v220, 1
      %v627 = vsel %vm609, %v625, %v626
      %v628 = vrot.slane %v221, 1
      %v629 = vrot.slane %v222, 1
      %v630 = vsel %vm609, %v628, %v629
      %v631 = vrot.slane %v223, 1
      %v632 = vrot.slane %v224, 1
      %v633 = vsel %vm609, %v631, %v632
      %v634 = vrot.slane %v225, 1
      %v635 = vrot.slane %v226, 1
      %v636 = vsel %vm609, %v634, %v635
      %v637 = vrot.slane %v227, 1
      %v638 = vrot.slane %v228, 1
      %v639 = vsel %vm609, %v637, %v638
      %v640 = vrot.slane %v229, 1
      %v641 = vrot.slane %v230, 1
      %v642 = vsel %vm609, %v640, %v641
      %v643 = vrot.slane %v231, 1
      %v644 = vrot.slane %v232, 1
      %v645 = vsel %vm609, %v643, %v644
      %v646 = vrot.slane %v233, 1
      %v647 = vrot.slane %v234, 1
      %v648 = vsel %vm609, %v646, %v647
      %v649 = vrot.slane %v235, 1
      %v650 = vrot.slane %v236, 1
      %v651 = vsel %vm609, %v649, %v650
      %v652 = vrot.slane %v237, 1
      %v653 = vrot.slane %v238, 1
      %v654 = vsel %vm609, %v652, %v653
      %v655 = vrot.slane %v239, 1
      %v656 = vrot.slane %v240, 1
      %v657 = vsel %vm609, %v655, %v656
      %v658 = vrot.slane %v241, 1
      %v659 = vrot.slane %v242, 1
      %v660 = vsel %vm609, %v658, %v659
      %v661 = vrot.slane %v243, 1
      %v662 = vrot.slane %v244, 1
      %v663 = vsel %vm609, %v661, %v662
      %v664 = vrot.slane %v245, 1
      %v665 = vrot.slane %v246, 1
      %v666 = vsel %vm609, %v664, %v665
      %v667 = vrot.slane %v247, 1
      %v668 = vrot.slane %v248, 1
      %v669 = vsel %vm609, %v667, %v668
      %v670 = vrot.slane %v249, 1
      %v671 = vrot.slane %v250, 1
      %v672 = vsel %vm609, %v670, %v671
      %v673 = vrot.slane %v251, 1
      %v674 = vrot.slane %v252, 1
      %v675 = vsel %vm609, %v673, %v674
      %v676 = vrot.slane %v253, 1
      %v677 = vrot.slane %v254, 1
      %v678 = vsel %vm609, %v676, %v677
      %v679 = vrot.slane %v255, 1
      %v680 = vrot.slane %v256, 1
      %v681 = vsel %vm609, %v679, %v680
      %v682 = vrot.slane %v257, 1
      %v683 = vrot.slane %v258, 1
      %v684 = vsel %vm609, %v682, %v683
      %v685 = vrot.slane %v259, 1
      %v686 = vrot.slane %v260, 1
      %v687 = vsel %vm609, %v685, %v686
      %v688 = vrot.slane %v261, 1
      %v689 = vrot.slane %v262, 1
      %v690 = vsel %vm609, %v688, %v689
      %v691 = vrot.slane %v263, 1
      %v692 = vrot.slane %v264, 1
      %v693 = vsel %vm609, %v691, %v692
      %v694 = vrot.slane %v265, 1
      %v695 = vrot.slane %v266, 1
      %v696 = vsel %vm609, %v694, %v695
      %v697 = vrot.slane %v267, 1
      %v698 = vrot.slane %v268, 1
      %v699 = vsel %vm609, %v697, %v698
      %v700 = vrot.slane %v269, 1
      %v701 = vrot.slane %v270, 1
      %v702 = vsel %vm609, %v700, %v701
      %v703 = vrot.slane %v271, 1
      %v704 = vrot.slane %v272, 1
      %v705 = vsel %vm609, %v703, %v704
      %v706 = vrot.slane %v273, 1
      %v707 = vrot.slane %v274, 1
      %v708 = vsel %vm609, %v706, %v707
      %v709 = vrot.slane %v275, 1
      %v710 = vrot.slane %v276, 1
      %v711 = vsel %vm609, %v709, %v710
      %v712 = vrot.slane %v277, 1
      %v713 = vrot.slane %v278, 1
      %v714 = vsel %vm609, %v712, %v713
      %v715 = vrot.slane %v279, 1
      %v716 = vrot.slane %v280, 1
      %v717 = vsel %vm609, %v715, %v716
      %v718 = vrot.slane %v281, 1
      %v719 = vrot.slane %v282, 1
      %v720 = vsel %vm609, %v718, %v719
      %v721 = vrot.slane %v283, 1
      %v722 = vrot.slane %v284, 1
      %v723 = vsel %vm609, %v721, %v722
      %v724 = vrot.slane %v285, 1
      %v725 = vrot.slane %v286, 1
      %v726 = vsel %vm609, %v724, %v725
      %v727 = vrot.slane %v287, 1
      %v728 = vrot.slane %v288, 1
      %v729 = vsel %vm609, %v727, %v728
      %v730 = vrot.slane %v289, 1
      %v731 = vrot.slane %v290, 1
      %v732 = vsel %vm609, %v730, %v731
      %v733 = vrot.slane %v291, 1
      %v734 = vrot.slane %v292, 1
      %v735 = vsel %vm609, %v733, %v734
      %v736 = vrot.slane %v293, 1
      %v737 = vrot.slane %v294, 1
      %v738 = vsel %vm609, %v736, %v737
      %v739 = vrot.slane %v295, 1
      %v740 = vrot.slane %v296, 1
      %v741 = vsel %vm609, %v739, %v740
      %v742 = vrot.slane %v297, 1
      %v743 = vrot.slane %v298, 1
      %v744 = vsel %vm609, %v742, %v743
      %v745 = vrot.slane %v299, 1
      %v746 = vrot.slane %v300, 1
      %v747 = vsel %vm609, %v745, %v746
      %v748 = vrot.slane %v301, 1
      %v749 = vrot.slane %v302, 1
      %v750 = vsel %vm609, %v748, %v749
      %v751 = vrot.slane %v303, 1
      %v752 = vrot.slane %v304, 1
      %v753 = vsel %vm609, %v751, %v752
      %v754 = vrot.slane %v305, 1
      %v755 = vrot.slane %v306, 1
      %v756 = vsel %vm609, %v754, %v755
      %v757 = vrot.slane %v307, 1
      %v758 = vrot.slane %v308, 1
      %v759 = vsel %vm609, %v757, %v758
      %v760 = vrot.slane %v309, 1
      %v761 = vrot.slane %v310, 1
      %v762 = vsel %vm609, %v760, %v761
      %v763 = vrot.slane %v311, 1
      %v764 = vrot.slane %v312, 1
      %v765 = vsel %vm609, %v763, %v764
      %v766 = vrot.slane %v313, 1
      %v767 = vrot.slane %v314, 1
      %v768 = vsel %vm609, %v766, %v767
      %v769 = vrot.slane %v315, 1
      %v770 = vrot.slane %v316, 1
      %v771 = vsel %vm609, %v769, %v770
      %v772 = vrot.slane %v317, 1
      %v773 = vrot.slane %v318, 1
      %v774 = vsel %vm609, %v772, %v773
      %v775 = vrot.slane %v319, 1
      %v776 = vrot.slane %v320, 1
      %v777 = vsel %vm609, %v775, %v776
      %v778 = vrot.slane %v321, 1
      %v779 = vrot.slane %v322, 1
      %v780 = vsel %vm609, %v778, %v779
      %v781 = vrot.slane %v323, 1
      %v782 = vrot.slane %v324, 1
      %v783 = vsel %vm609, %v781, %v782
      %v784 = vrot.slane %v325, 1
      %v785 = vrot.slane %v326, 1
      %v786 = vsel %vm609, %v784, %v785
      %v787 = vrot.slane %v327, 1
      %v788 = vrot.slane %v328, 1
      %v789 = vsel %vm609, %v787, %v788
      %v790 = vrot.slane %v329, 1
      %v791 = vrot.slane %v330, 1
      %v792 = vsel %vm609, %v790, %v791
      %v793 = vrot.slane %v331, 1
      %v794 = vrot.slane %v332, 1
      %v795 = vsel %vm609, %v793, %v794
      %v796 = vrot.slane %v333, 1
      %v797 = vrot.slane %v334, 1
      %v798 = vsel %vm609, %v796, %v797
      %v799 = vrot.slane %v335, 1
      %v800 = vrot.slane %v336, 1
      %v801 = vsel %vm609, %v799, %v800
      %v802 = vrot.slane %v337, 1
      %v803 = vrot.slane %v338, 1
      %v804 = vsel %vm609, %v802, %v803
      %v805 = vrot.slane %v339, 1
      %v806 = vrot.slane %v340, 1
      %v807 = vsel %vm609, %v805, %v806
      %v808 = vrot.slane %v341, 1
      %v809 = vrot.slane %v342, 1
      %v810 = vsel %vm609, %v808, %v809
      %v811 = vrot.slane %v343, 1
      %v812 = vrot.slane %v344, 1
      %v813 = vsel %vm609, %v811, %v812
      %v814 = vrot.slane %v345, 1
      %v815 = vrot.slane %v346, 1
      %v816 = vsel %vm609, %v814, %v815
      %v817 = vrot.slane %v347, 1
      %v818 = vrot.slane %v348, 1
      %v819 = vsel %vm609, %v817, %v818
      %v820 = vrot.slane %v349, 1
      %v821 = vrot.slane %v350, 1
      %v822 = vsel %vm609, %v820, %v821
      %v823 = vrot.slane %v351, 1
      %v824 = vrot.slane %v352, 1
      %v825 = vsel %vm609, %v823, %v824
      %v826 = vrot.slane %v353, 1
      %v827 = vrot.slane %v354, 1
      %v828 = vsel %vm609, %v826, %v827
      %v829 = vrot.slane %v355, 1
      %v830 = vrot.slane %v356, 1
      %v831 = vsel %vm609, %v829, %v830
      %v832 = vrot.slane %v357, 1
      %v833 = vrot.slane %v358, 1
      %v834 = vsel %vm609, %v832, %v833
      %v835 = vrot.slane %v359, 1
      %v836 = vrot.slane %v360, 1
      %v837 = vsel %vm609, %v835, %v836
      %v838 = vrot.slane %v361, 1
      %v839 = vrot.slane %v362, 1
      %v840 = vsel %vm609, %v838, %v839
      %v841 = vrot.slane %v363, 1
      %v842 = vrot.slane %v364, 1
      %v843 = vsel %vm609, %v841, %v842
      %v844 = vrot.slane %v365, 1
      %v845 = vrot.slane %v366, 1
      %v846 = vsel %vm609, %v844, %v845
      %v847 = vrot.slane %v367, 1
      %v848 = vrot.slane %v368, 1
      %v849 = vsel %vm609, %v847, %v848
      %v850 = vrot.slane %v369, 1
      %v851 = vrot.slane %v370, 1
      %v852 = vsel %vm609, %v850, %v851
      %v853 = vrot.slane %v371, 1
      %v854 = vrot.slane %v372, 1
      %v855 = vsel %vm609, %v853, %v854
      %v856 = vrot.slane %v373, 1
      %v857 = vrot.slane %v374, 1
      %v858 = vsel %vm609, %v856, %v857
      %v859 = vrot.slane %v375, 1
      %v860 = vrot.slane %v376, 1
      %v861 = vsel %vm609, %v859, %v860
      %v862 = vrot.slane %v377, 1
      %v863 = vrot.slane %v378, 1
      %v864 = vsel %vm609, %v862, %v863
      %v865 = vrot.slane %v379, 1
      %v866 = vrot.slane %v380, 1
      %v867 = vsel %vm609, %v865, %v866
      %v868 = vrot.slane %v381, 1
      %v869 = vrot.slane %v382, 1
      %v870 = vsel %vm609, %v868, %v869
      %v871 = vrot.slane %v383, 1
      %v872 = vrot.slane %v384, 1
      %v873 = vsel %vm609, %v871, %v872
      %v874 = vrot.slane %v385, 1
      %v875 = vrot.slane %v386, 1
      %v876 = vsel %vm609, %v874, %v875
      %v877 = vrot.slane %v387, 1
      %v878 = vrot.slane %v388, 1
      %v879 = vsel %vm609, %v877, %v878
      %v880 = vrot.slane %v389, 1
      %v881 = vrot.slane %v390, 1
      %v882 = vsel %vm609, %v880, %v881
      %v883 = vrot.slane %v391, 1
      %v884 = vrot.slane %v392, 1
      %v885 = vsel %vm609, %v883, %v884
      %v886 = vrot.slane %v393, 1
      %v887 = vrot.slane %v394, 1
      %v888 = vsel %vm609, %v886, %v887
      %v889 = vrot.slane %v395, 1
      %v890 = vrot.slane %v396, 1
      %v891 = vsel %vm609, %v889, %v890
      %v892 = vrot.slane %v397, 1
      %v893 = vrot.slane %v398, 1
      %v894 = vsel %vm609, %v892, %v893
      %v895 = vrot.slane %v399, 1
      %v896 = vrot.slane %v400, 1
      %v897 = vsel %vm609, %v895, %v896
      %v898 = vrot.slane %v401, 1
      %v899 = vrot.slane %v402, 1
      %v900 = vsel %vm609, %v898, %v899
      %v901 = vrot.slane %v403, 1
      %v902 = vrot.slane %v404, 1
      %v903 = vsel %vm609, %v901, %v902
      %v904 = vrot.slane %v405, 1
      %v905 = vrot.slane %v406, 1
      %v906 = vsel %vm609, %v904, %v905
      %v907 = vrot.slane %v407, 1
      %v908 = vrot.slane %v408, 1
      %v909 = vsel %vm609, %v907, %v908
      %vm1010 = vcmask 1045504
      %v1011 = vrot.slane %v209, 2
      %v1012 = vrot.slane %v210, 2
      %v1013 = vsel %vm1010, %v1011, %v1012
      %v1014 = vrot.slane %v211, 2
      %v1015 = vrot.slane %v212, 2
      %v1016 = vsel %vm1010, %v1014, %v1015
      %v1017 = vrot.slane %v213, 2
      %v1018 = vrot.slane %v214, 2
      %v1019 = vsel %vm1010, %v1017, %v1018
      %v1020 = vrot.slane %v215, 2
      %v1021 = vrot.slane %v216, 2
      %v1022 = vsel %vm1010, %v1020, %v1021
      %v1023 = vrot.slane %v217, 2
      %v1024 = vrot.slane %v218, 2
      %v1025 = vsel %vm1010, %v1023, %v1024
      %v1026 = vrot.slane %v219, 2
      %v1027 = vrot.slane %v220, 2
      %v1028 = vsel %vm1010, %v1026, %v1027
      %v1029 = vrot.slane %v221, 2
      %v1030 = vrot.slane %v222, 2
      %v1031 = vsel %vm1010, %v1029, %v1030
      %v1032 = vrot.slane %v223, 2
      %v1033 = vrot.slane %v224, 2
      %v1034 = vsel %vm1010, %v1032, %v1033
      %v1035 = vrot.slane %v225, 2
      %v1036 = vrot.slane %v226, 2
      %v1037 = vsel %vm1010, %v1035, %v1036
      %v1038 = vrot.slane %v227, 2
      %v1039 = vrot.slane %v228, 2
      %v1040 = vsel %vm1010, %v1038, %v1039
      %v1041 = vrot.slane %v229, 2
      %v1042 = vrot.slane %v230, 2
      %v1043 = vsel %vm1010, %v1041, %v1042
      %v1044 = vrot.slane %v231, 2
      %v1045 = vrot.slane %v232, 2
      %v1046 = vsel %vm1010, %v1044, %v1045
      %v1047 = vrot.slane %v233, 2
      %v1048 = vrot.slane %v234, 2
      %v1049 = vsel %vm1010, %v1047, %v1048
      %v1050 = vrot.slane %v235, 2
      %v1051 = vrot.slane %v236, 2
      %v1052 = vsel %vm1010, %v1050, %v1051
      %v1053 = vrot.slane %v237, 2
      %v1054 = vrot.slane %v238, 2
      %v1055 = vsel %vm1010, %v1053, %v1054
      %v1056 = vrot.slane %v239, 2
      %v1057 = vrot.slane %v240, 2
      %v1058 = vsel %vm1010, %v1056, %v1057
      %v1059 = vrot.slane %v241, 2
      %v1060 = vrot.slane %v242, 2
      %v1061 = vsel %vm1010, %v1059, %v1060
      %v1062 = vrot.slane %v243, 2
      %v1063 = vrot.slane %v244, 2
      %v1064 = vsel %vm1010, %v1062, %v1063
      %v1065 = vrot.slane %v245, 2
      %v1066 = vrot.slane %v246, 2
      %v1067 = vsel %vm1010, %v1065, %v1066
      %v1068 = vrot.slane %v247, 2
      %v1069 = vrot.slane %v248, 2
      %v1070 = vsel %vm1010, %v1068, %v1069
      %v1071 = vrot.slane %v249, 2
      %v1072 = vrot.slane %v250, 2
      %v1073 = vsel %vm1010, %v1071, %v1072
      %v1074 = vrot.slane %v251, 2
      %v1075 = vrot.slane %v252, 2
      %v1076 = vsel %vm1010, %v1074, %v1075
      %v1077 = vrot.slane %v253, 2
      %v1078 = vrot.slane %v254, 2
      %v1079 = vsel %vm1010, %v1077, %v1078
      %v1080 = vrot.slane %v255, 2
      %v1081 = vrot.slane %v256, 2
      %v1082 = vsel %vm1010, %v1080, %v1081
      %v1083 = vrot.slane %v257, 2
      %v1084 = vrot.slane %v258, 2
      %v1085 = vsel %vm1010, %v1083, %v1084
      %v1086 = vrot.slane %v259, 2
      %v1087 = vrot.slane %v260, 2
      %v1088 = vsel %vm1010, %v1086, %v1087
      %v1089 = vrot.slane %v261, 2
      %v1090 = vrot.slane %v262, 2
      %v1091 = vsel %vm1010, %v1089, %v1090
      %v1092 = vrot.slane %v263, 2
      %v1093 = vrot.slane %v264, 2
      %v1094 = vsel %vm1010, %v1092, %v1093
      %v1095 = vrot.slane %v265, 2
      %v1096 = vrot.slane %v266, 2
      %v1097 = vsel %vm1010, %v1095, %v1096
      %v1098 = vrot.slane %v267, 2
      %v1099 = vrot.slane %v268, 2
      %v1100 = vsel %vm1010, %v1098, %v1099
      %v1101 = vrot.slane %v269, 2
      %v1102 = vrot.slane %v270, 2
      %v1103 = vsel %vm1010, %v1101, %v1102
      %v1104 = vrot.slane %v271, 2
      %v1105 = vrot.slane %v272, 2
      %v1106 = vsel %vm1010, %v1104, %v1105
      %v1107 = vrot.slane %v273, 2
      %v1108 = vrot.slane %v274, 2
      %v1109 = vsel %vm1010, %v1107, %v1108
      %v1110 = vrot.slane %v275, 2
      %v1111 = vrot.slane %v276, 2
      %v1112 = vsel %vm1010, %v1110, %v1111
      %v1113 = vrot.slane %v277, 2
      %v1114 = vrot.slane %v278, 2
      %v1115 = vsel %vm1010, %v1113, %v1114
      %v1116 = vrot.slane %v279, 2
      %v1117 = vrot.slane %v280, 2
      %v1118 = vsel %vm1010, %v1116, %v1117
      %v1119 = vrot.slane %v281, 2
      %v1120 = vrot.slane %v282, 2
      %v1121 = vsel %vm1010, %v1119, %v1120
      %v1122 = vrot.slane %v283, 2
      %v1123 = vrot.slane %v284, 2
      %v1124 = vsel %vm1010, %v1122, %v1123
      %v1125 = vrot.slane %v285, 2
      %v1126 = vrot.slane %v286, 2
      %v1127 = vsel %vm1010, %v1125, %v1126
      %v1128 = vrot.slane %v287, 2
      %v1129 = vrot.slane %v288, 2
      %v1130 = vsel %vm1010, %v1128, %v1129
      %v1131 = vrot.slane %v289, 2
      %v1132 = vrot.slane %v290, 2
      %v1133 = vsel %vm1010, %v1131, %v1132
      %v1134 = vrot.slane %v291, 2
      %v1135 = vrot.slane %v292, 2
      %v1136 = vsel %vm1010, %v1134, %v1135
      %v1137 = vrot.slane %v293, 2
      %v1138 = vrot.slane %v294, 2
      %v1139 = vsel %vm1010, %v1137, %v1138
      %v1140 = vrot.slane %v295, 2
      %v1141 = vrot.slane %v296, 2
      %v1142 = vsel %vm1010, %v1140, %v1141
      %v1143 = vrot.slane %v297, 2
      %v1144 = vrot.slane %v298, 2
      %v1145 = vsel %vm1010, %v1143, %v1144
      %v1146 = vrot.slane %v299, 2
      %v1147 = vrot.slane %v300, 2
      %v1148 = vsel %vm1010, %v1146, %v1147
      %v1149 = vrot.slane %v301, 2
      %v1150 = vrot.slane %v302, 2
      %v1151 = vsel %vm1010, %v1149, %v1150
      %v1152 = vrot.slane %v303, 2
      %v1153 = vrot.slane %v304, 2
      %v1154 = vsel %vm1010, %v1152, %v1153
      %v1155 = vrot.slane %v305, 2
      %v1156 = vrot.slane %v306, 2
      %v1157 = vsel %vm1010, %v1155, %v1156
      %v1158 = vrot.slane %v307, 2
      %v1159 = vrot.slane %v308, 2
      %v1160 = vsel %vm1010, %v1158, %v1159
      %v1161 = vrot.slane %v309, 2
      %v1162 = vrot.slane %v310, 2
      %v1163 = vsel %vm1010, %v1161, %v1162
      %v1164 = vrot.slane %v311, 2
      %v1165 = vrot.slane %v312, 2
      %v1166 = vsel %vm1010, %v1164, %v1165
      %v1167 = vrot.slane %v313, 2
      %v1168 = vrot.slane %v314, 2
      %v1169 = vsel %vm1010, %v1167, %v1168
      %v1170 = vrot.slane %v315, 2
      %v1171 = vrot.slane %v316, 2
      %v1172 = vsel %vm1010, %v1170, %v1171
      %v1173 = vrot.slane %v317, 2
      %v1174 = vrot.slane %v318, 2
      %v1175 = vsel %vm1010, %v1173, %v1174
      %v1176 = vrot.slane %v319, 2
      %v1177 = vrot.slane %v320, 2
      %v1178 = vsel %vm1010, %v1176, %v1177
      %v1179 = vrot.slane %v321, 2
      %v1180 = vrot.slane %v322, 2
      %v1181 = vsel %vm1010, %v1179, %v1180
      %v1182 = vrot.slane %v323, 2
      %v1183 = vrot.slane %v324, 2
      %v1184 = vsel %vm1010, %v1182, %v1183
      %v1185 = vrot.slane %v325, 2
      %v1186 = vrot.slane %v326, 2
      %v1187 = vsel %vm1010, %v1185, %v1186
      %v1188 = vrot.slane %v327, 2
      %v1189 = vrot.slane %v328, 2
      %v1190 = vsel %vm1010, %v1188, %v1189
      %v1191 = vrot.slane %v329, 2
      %v1192 = vrot.slane %v330, 2
      %v1193 = vsel %vm1010, %v1191, %v1192
      %v1194 = vrot.slane %v331, 2
      %v1195 = vrot.slane %v332, 2
      %v1196 = vsel %vm1010, %v1194, %v1195
      %v1197 = vrot.slane %v333, 2
      %v1198 = vrot.slane %v334, 2
      %v1199 = vsel %vm1010, %v1197, %v1198
      %v1200 = vrot.slane %v335, 2
      %v1201 = vrot.slane %v336, 2
      %v1202 = vsel %vm1010, %v1200, %v1201
      %v1203 = vrot.slane %v337, 2
      %v1204 = vrot.slane %v338, 2
      %v1205 = vsel %vm1010, %v1203, %v1204
      %v1206 = vrot.slane %v339, 2
      %v1207 = vrot.slane %v340, 2
      %v1208 = vsel %vm1010, %v1206, %v1207
      %v1209 = vrot.slane %v341, 2
      %v1210 = vrot.slane %v342, 2
      %v1211 = vsel %vm1010, %v1209, %v1210
      %v1212 = vrot.slane %v343, 2
      %v1213 = vrot.slane %v344, 2
      %v1214 = vsel %vm1010, %v1212, %v1213
      %v1215 = vrot.slane %v345, 2
      %v1216 = vrot.slane %v346, 2
      %v1217 = vsel %vm1010, %v1215, %v1216
      %v1218 = vrot.slane %v347, 2
      %v1219 = vrot.slane %v348, 2
      %v1220 = vsel %vm1010, %v1218, %v1219
      %v1221 = vrot.slane %v349, 2
      %v1222 = vrot.slane %v350, 2
      %v1223 = vsel %vm1010, %v1221, %v1222
      %v1224 = vrot.slane %v351, 2
      %v1225 = vrot.slane %v352, 2
      %v1226 = vsel %vm1010, %v1224, %v1225
      %v1227 = vrot.slane %v353, 2
      %v1228 = vrot.slane %v354, 2
      %v1229 = vsel %vm1010, %v1227, %v1228
      %v1230 = vrot.slane %v355, 2
      %v1231 = vrot.slane %v356, 2
      %v1232 = vsel %vm1010, %v1230, %v1231
      %v1233 = vrot.slane %v357, 2
      %v1234 = vrot.slane %v358, 2
      %v1235 = vsel %vm1010, %v1233, %v1234
      %v1236 = vrot.slane %v359, 2
      %v1237 = vrot.slane %v360, 2
      %v1238 = vsel %vm1010, %v1236, %v1237
      %v1239 = vrot.slane %v361, 2
      %v1240 = vrot.slane %v362, 2
      %v1241 = vsel %vm1010, %v1239, %v1240
      %v1242 = vrot.slane %v363, 2
      %v1243 = vrot.slane %v364, 2
      %v1244 = vsel %vm1010, %v1242, %v1243
      %v1245 = vrot.slane %v365, 2
      %v1246 = vrot.slane %v366, 2
      %v1247 = vsel %vm1010, %v1245, %v1246
      %v1248 = vrot.slane %v367, 2
      %v1249 = vrot.slane %v368, 2
      %v1250 = vsel %vm1010, %v1248, %v1249
      %v1251 = vrot.slane %v369, 2
      %v1252 = vrot.slane %v370, 2
      %v1253 = vsel %vm1010, %v1251, %v1252
      %v1254 = vrot.slane %v371, 2
      %v1255 = vrot.slane %v372, 2
      %v1256 = vsel %vm1010, %v1254, %v1255
      %v1257 = vrot.slane %v373, 2
      %v1258 = vrot.slane %v374, 2
      %v1259 = vsel %vm1010, %v1257, %v1258
      %v1260 = vrot.slane %v375, 2
      %v1261 = vrot.slane %v376, 2
      %v1262 = vsel %vm1010, %v1260, %v1261
      %v1263 = vrot.slane %v377, 2
      %v1264 = vrot.slane %v378, 2
      %v1265 = vsel %vm1010, %v1263, %v1264
      %v1266 = vrot.slane %v379, 2
      %v1267 = vrot.slane %v380, 2
      %v1268 = vsel %vm1010, %v1266, %v1267
      %v1269 = vrot.slane %v381, 2
      %v1270 = vrot.slane %v382, 2
      %v1271 = vsel %vm1010, %v1269, %v1270
      %v1272 = vrot.slane %v383, 2
      %v1273 = vrot.slane %v384, 2
      %v1274 = vsel %vm1010, %v1272, %v1273
      %v1275 = vrot.slane %v385, 2
      %v1276 = vrot.slane %v386, 2
      %v1277 = vsel %vm1010, %v1275, %v1276
      %v1278 = vrot.slane %v387, 2
      %v1279 = vrot.slane %v388, 2
      %v1280 = vsel %vm1010, %v1278, %v1279
      %v1281 = vrot.slane %v389, 2
      %v1282 = vrot.slane %v390, 2
      %v1283 = vsel %vm1010, %v1281, %v1282
      %v1284 = vrot.slane %v391, 2
      %v1285 = vrot.slane %v392, 2
      %v1286 = vsel %vm1010, %v1284, %v1285
      %v1287 = vrot.slane %v393, 2
      %v1288 = vrot.slane %v394, 2
      %v1289 = vsel %vm1010, %v1287, %v1288
      %v1290 = vrot.slane %v395, 2
      %v1291 = vrot.slane %v396, 2
      %v1292 = vsel %vm1010, %v1290, %v1291
      %v1293 = vrot.slane %v397, 2
      %v1294 = vrot.slane %v398, 2
      %v1295 = vsel %vm1010, %v1293, %v1294
      %v1296 = vrot.slane %v399, 2
      %v1297 = vrot.slane %v400, 2
      %v1298 = vsel %vm1010, %v1296, %v1297
      %v1299 = vrot.slane %v401, 2
      %v1300 = vrot.slane %v402, 2
      %v1301 = vsel %vm1010, %v1299, %v1300
      %v1302 = vrot.slane %v403, 2
      %v1303 = vrot.slane %v404, 2
      %v1304 = vsel %vm1010, %v1302, %v1303
      %v1305 = vrot.slane %v405, 2
      %v1306 = vrot.slane %v406, 2
      %v1307 = vsel %vm1010, %v1305, %v1306
      %v1308 = vrot.slane %v407, 2
      %v1309 = vrot.slane %v408, 2
      %v1310 = vsel %vm1010, %v1308, %v1309
      %v1411 = vld [vmem:[%s1] sm:$0xff]
      %v1412 = vld [vmem:[%s1 + $0x8] sm:$0xff]
      %v1413 = vld [vmem:[%s1 + $0x10] sm:$0xff]
      %v1414 = vld [vmem:[%s1 + $0x18] sm:$0xff]
      %v1415 = vld [vmem:[%s1 + $0x20] sm:$0xff]
      %v1416 = vld [vmem:[%s1 + $0x28] sm:$0xff]
      %v1417 = vld [vmem:[%s1 + $0x30] sm:$0xff]
      %v1418 = vld [vmem:[%s1 + $0x38] sm:$0xff]
      %v1419 = vld [vmem:[%s1 + $0x40] sm:$0xff]
      %v1420 = vld [vmem:[%s1 + $0x48] sm:$0xff]
      %v1421 = vld [vmem:[%s1 + $0x50] sm:$0xff]
      %v1422 = vld [vmem:[%s1 + $0x58] sm:$0xff]
      %v1423 = vld [vmem:[%s1 + $0x60] sm:$0xff]
      %v1424 = vld [vmem:[%s1 + $0x68] sm:$0xff]
      %v1425 = vld [vmem:[%s1 + $0x70] sm:$0xff]
      %v1426 = vld [vmem:[%s1 + $0x78] sm:$0xff]
      %v1427 = vld [vmem:[%s1 + $0x80] sm:$0xff]
      %v1428 = vld [vmem:[%s1 + $0x88] sm:$0xff]
      %v1429 = vld [vmem:[%s1 + $0x90] sm:$0xff]
      %v1430 = vld [vmem:[%s1 + $0x98] sm:$0xff]
      %v1431 = vld [vmem:[%s1 + $0xa0] sm:$0xff]
      %v1432 = vld [vmem:[%s1 + $0xa8] sm:$0xff]
      %v1433 = vld [vmem:[%s1 + $0xb0] sm:$0xff]
      %v1434 = vld [vmem:[%s1 + $0xb8] sm:$0xff]
      %v1435 = vld [vmem:[%s1 + $0xc0] sm:$0xff]
      %v1436 = vld [vmem:[%s1 + $0xc8] sm:$0xff]
      %v1437 = vld [vmem:[%s1 + $0xd0] sm:$0xff]
      %v1438 = vld [vmem:[%s1 + $0xd8] sm:$0xff]
      %v1439 = vld [vmem:[%s1 + $0xe0] sm:$0xff]
      %v1440 = vld [vmem:[%s1 + $0xe8] sm:$0xff]
      %v1441 = vld [vmem:[%s1 + $0xf0] sm:$0xff]
      %v1442 = vld [vmem:[%s1 + $0xf8] sm:$0xff]
      %v1443 = vld [vmem:[%s1 + $0x100] sm:$0xff]
      %v1444 = vld [vmem:[%s1 + $0x108] sm:$0xff]
      %v1445 = vld [vmem:[%s1 + $0x110] sm:$0xff]
      %v1446 = vld [vmem:[%s1 + $0x118] sm:$0xff]
      %v1447 = vld [vmem:[%s1 + $0x120] sm:$0xff]
      %v1448 = vld [vmem:[%s1 + $0x128] sm:$0xff]
      %v1449 = vld [vmem:[%s1 + $0x130] sm:$0xff]
      %v1450 = vld [vmem:[%s1 + $0x138] sm:$0xff]
      %v1451 = vld [vmem:[%s1 + $0x140] sm:$0xff]
      %v1452 = vld [vmem:[%s1 + $0x148] sm:$0xff]
      %v1453 = vld [vmem:[%s1 + $0x150] sm:$0xff]
      %v1454 = vld [vmem:[%s1 + $0x158] sm:$0xff]
      %v1455 = vld [vmem:[%s1 + $0x160] sm:$0xff]
      %v1456 = vld [vmem:[%s1 + $0x168] sm:$0xff]
      %v1457 = vld [vmem:[%s1 + $0x170] sm:$0xff]
      %v1458 = vld [vmem:[%s1 + $0x178] sm:$0xff]
      %v1459 = vld [vmem:[%s1 + $0x180] sm:$0xff]
      %v1460 = vld [vmem:[%s1 + $0x188] sm:$0xff]
      %v1461 = vld [vmem:[%s1 + $0x190] sm:$0xff]
      %v1462 = vld [vmem:[%s1 + $0x198] sm:$0xff]
      %v1463 = vld [vmem:[%s1 + $0x1a0] sm:$0xff]
      %v1464 = vld [vmem:[%s1 + $0x1a8] sm:$0xff]
      %v1465 = vld [vmem:[%s1 + $0x1b0] sm:$0xff]
      %v1466 = vld [vmem:[%s1 + $0x1b8] sm:$0xff]
      %v1467 = vld [vmem:[%s1 + $0x1c0] sm:$0xff]
      %v1468 = vld [vmem:[%s1 + $0x1c8] sm:$0xff]
      %v1469 = vld [vmem:[%s1 + $0x1d0] sm:$0xff]
      %v1470 = vld [vmem:[%s1 + $0x1d8] sm:$0xff]
      %v1471 = vld [vmem:[%s1 + $0x1e0] sm:$0xff]
      %v1472 = vld [vmem:[%s1 + $0x1e8] sm:$0xff]
      %v1473 = vld [vmem:[%s1 + $0x1f0] sm:$0xff]
      %v1474 = vld [vmem:[%s1 + $0x1f8] sm:$0xff]
      %v1475 = vld [vmem:[%s1 + $0x200] sm:$0xff]
      %v1476 = vld [vmem:[%s1 + $0x208] sm:$0xff]
      %v1477 = vld [vmem:[%s1 + $0x210] sm:$0xff]
      %v1478 = vld [vmem:[%s1 + $0x218] sm:$0xff]
      %v1479 = vld [vmem:[%s1 + $0x220] sm:$0xff]
      %v1480 = vld [vmem:[%s1 + $0x228] sm:$0xff]
      %v1481 = vld [vmem:[%s1 + $0x230] sm:$0xff]
      %v1482 = vld [vmem:[%s1 + $0x238] sm:$0xff]
      %v1483 = vld [vmem:[%s1 + $0x240] sm:$0xff]
      %v1484 = vld [vmem:[%s1 + $0x248] sm:$0xff]
      %v1485 = vld [vmem:[%s1 + $0x250] sm:$0xff]
      %v1486 = vld [vmem:[%s1 + $0x258] sm:$0xff]
      %v1487 = vld [vmem:[%s1 + $0x260] sm:$0xff]
      %v1488 = vld [vmem:[%s1 + $0x268] sm:$0xff]
      %v1489 = vld [vmem:[%s1 + $0x270] sm:$0xff]
      %v1490 = vld [vmem:[%s1 + $0x278] sm:$0xff]
      %v1491 = vld [vmem:[%s1 + $0x280] sm:$0xff]
      %v1492 = vld [vmem:[%s1 + $0x288] sm:$0xff]
      %v1493 = vld [vmem:[%s1 + $0x290] sm:$0xff]
      %v1494 = vld [vmem:[%s1 + $0x298] sm:$0xff]
      %v1495 = vld [vmem:[%s1 + $0x2a0] sm:$0xff]
      %v1496 = vld [vmem:[%s1 + $0x2a8] sm:$0xff]
      %v1497 = vld [vmem:[%s1 + $0x2b0] sm:$0xff]
      %v1498 = vld [vmem:[%s1 + $0x2b8] sm:$0xff]
      %v1499 = vld [vmem:[%s1 + $0x2c0] sm:$0xff]
      %v1500 = vld [vmem:[%s1 + $0x2c8] sm:$0xff]
      %v1501 = vld [vmem:[%s1 + $0x2d0] sm:$0xff]
      %v1502 = vld [vmem:[%s1 + $0x2d8] sm:$0xff]
      %v1503 = vld [vmem:[%s1 + $0x2e0] sm:$0xff]
      %v1504 = vld [vmem:[%s1 + $0x2e8] sm:$0xff]
      %v1505 = vld [vmem:[%s1 + $0x2f0] sm:$0xff]
      %v1506 = vld [vmem:[%s1 + $0x2f8] sm:$0xff]
      %v1507 = vld [vmem:[%s1 + $0x300] sm:$0xff]
      %v1508 = vld [vmem:[%s1 + $0x308] sm:$0xff]
      %v1509 = vld [vmem:[%s1 + $0x310] sm:$0xff]
      %v1510 = vld [vmem:[%s1 + $0x318] sm:$0xff]
      %v1511 = vld [vmem:[%s1 + $0x320] sm:$0xff]
      %v1512 = vld [vmem:[%s1 + $0x328] sm:$0xff]
      %v1513 = vld [vmem:[%s1 + $0x330] sm:$0xff]
      %v1514 = vld [vmem:[%s1 + $0x338] sm:$0xff]
      %v1515 = vld [vmem:[%s1 + $0x340] sm:$0xff]
      %v1516 = vld [vmem:[%s1 + $0x348] sm:$0xff]
      %v1517 = vld [vmem:[%s1 + $0x350] sm:$0xff]
      %v1518 = vld [vmem:[%s1 + $0x358] sm:$0xff]
      %v1519 = vld [vmem:[%s1 + $0x360] sm:$0xff]
      %v1520 = vld [vmem:[%s1 + $0x368] sm:$0xff]
      %v1521 = vld [vmem:[%s1 + $0x370] sm:$0xff]
      %v1522 = vld [vmem:[%s1 + $0x378] sm:$0xff]
      %v1523 = vld [vmem:[%s1 + $0x380] sm:$0xff]
      %v1524 = vld [vmem:[%s1 + $0x388] sm:$0xff]
      %v1525 = vld [vmem:[%s1 + $0x390] sm:$0xff]
      %v1526 = vld [vmem:[%s1 + $0x398] sm:$0xff]
      %v1527 = vld [vmem:[%s1 + $0x3a0] sm:$0xff]
      %v1528 = vld [vmem:[%s1 + $0x3a8] sm:$0xff]
      %v1529 = vld [vmem:[%s1 + $0x3b0] sm:$0xff]
      %v1530 = vld [vmem:[%s1 + $0x3b8] sm:$0xff]
      %v1531 = vld [vmem:[%s1 + $0x3c0] sm:$0xff]
      %v1532 = vld [vmem:[%s1 + $0x3c8] sm:$0xff]
      %v1533 = vld [vmem:[%s1 + $0x3d0] sm:$0xff]
      %v1534 = vld [vmem:[%s1 + $0x3d8] sm:$0xff]
      %v1535 = vld [vmem:[%s1 + $0x3e0] sm:$0xff]
      %v1536 = vld [vmem:[%s1 + $0x3e8] sm:$0xff]
      %v1537 = vld [vmem:[%s1 + $0x3f0] sm:$0xff]
      %v1538 = vld [vmem:[%s1 + $0x3f8] sm:$0xff]
      %v1539 = vld [vmem:[%s1 + $0x400] sm:$0xff]
      %v1540 = vld [vmem:[%s1 + $0x408] sm:$0xff]
      %v1541 = vld [vmem:[%s1 + $0x410] sm:$0xff]
      %v1542 = vld [vmem:[%s1 + $0x418] sm:$0xff]
      %v1543 = vld [vmem:[%s1 + $0x420] sm:$0xff]
      %v1544 = vld [vmem:[%s1 + $0x428] sm:$0xff]
      %v1545 = vld [vmem:[%s1 + $0x430] sm:$0xff]
      %v1546 = vld [vmem:[%s1 + $0x438] sm:$0xff]
      %v1547 = vld [vmem:[%s1 + $0x440] sm:$0xff]
      %v1548 = vld [vmem:[%s1 + $0x448] sm:$0xff]
      %v1549 = vld [vmem:[%s1 + $0x450] sm:$0xff]
      %v1550 = vld [vmem:[%s1 + $0x458] sm:$0xff]
      %v1551 = vld [vmem:[%s1 + $0x460] sm:$0xff]
      %v1552 = vld [vmem:[%s1 + $0x468] sm:$0xff]
      %v1553 = vld [vmem:[%s1 + $0x470] sm:$0xff]
      %v1554 = vld [vmem:[%s1 + $0x478] sm:$0xff]
      %v1555 = vld [vmem:[%s1 + $0x480] sm:$0xff]
      %v1556 = vld [vmem:[%s1 + $0x488] sm:$0xff]
      %v1557 = vld [vmem:[%s1 + $0x490] sm:$0xff]
      %v1558 = vld [vmem:[%s1 + $0x498] sm:$0xff]
      %v1559 = vld [vmem:[%s1 + $0x4a0] sm:$0xff]
      %v1560 = vld [vmem:[%s1 + $0x4a8] sm:$0xff]
      %v1561 = vld [vmem:[%s1 + $0x4b0] sm:$0xff]
      %v1562 = vld [vmem:[%s1 + $0x4b8] sm:$0xff]
      %v1563 = vld [vmem:[%s1 + $0x4c0] sm:$0xff]
      %v1564 = vld [vmem:[%s1 + $0x4c8] sm:$0xff]
      %v1565 = vld [vmem:[%s1 + $0x4d0] sm:$0xff]
      %v1566 = vld [vmem:[%s1 + $0x4d8] sm:$0xff]
      %v1567 = vld [vmem:[%s1 + $0x4e0] sm:$0xff]
      %v1568 = vld [vmem:[%s1 + $0x4e8] sm:$0xff]
      %v1569 = vld [vmem:[%s1 + $0x4f0] sm:$0xff]
      %v1570 = vld [vmem:[%s1 + $0x4f8] sm:$0xff]
      %v1571 = vld [vmem:[%s1 + $0x500] sm:$0xff]
      %v1572 = vld [vmem:[%s1 + $0x508] sm:$0xff]
      %v1573 = vld [vmem:[%s1 + $0x510] sm:$0xff]
      %v1574 = vld [vmem:[%s1 + $0x518] sm:$0xff]
      %v1575 = vld [vmem:[%s1 + $0x520] sm:$0xff]
      %v1576 = vld [vmem:[%s1 + $0x528] sm:$0xff]
      %v1577 = vld [vmem:[%s1 + $0x530] sm:$0xff]
      %v1578 = vld [vmem:[%s1 + $0x538] sm:$0xff]
      %v1579 = vld [vmem:[%s1 + $0x540] sm:$0xff]
      %v1580 = vld [vmem:[%s1 + $0x548] sm:$0xff]
      %v1581 = vld [vmem:[%s1 + $0x550] sm:$0xff]
      %v1582 = vld [vmem:[%s1 + $0x558] sm:$0xff]
      %v1583 = vld [vmem:[%s1 + $0x560] sm:$0xff]
      %v1584 = vld [vmem:[%s1 + $0x568] sm:$0xff]
      %v1585 = vld [vmem:[%s1 + $0x570] sm:$0xff]
      %v1586 = vld [vmem:[%s1 + $0x578] sm:$0xff]
      %v1587 = vld [vmem:[%s1 + $0x580] sm:$0xff]
      %v1588 = vld [vmem:[%s1 + $0x588] sm:$0xff]
      %v1589 = vld [vmem:[%s1 + $0x590] sm:$0xff]
      %v1590 = vld [vmem:[%s1 + $0x598] sm:$0xff]
      %v1591 = vld [vmem:[%s1 + $0x5a0] sm:$0xff]
      %v1592 = vld [vmem:[%s1 + $0x5a8] sm:$0xff]
      %v1593 = vld [vmem:[%s1 + $0x5b0] sm:$0xff]
      %v1594 = vld [vmem:[%s1 + $0x5b8] sm:$0xff]
      %v1595 = vld [vmem:[%s1 + $0x5c0] sm:$0xff]
      %v1596 = vld [vmem:[%s1 + $0x5c8] sm:$0xff]
      %v1597 = vld [vmem:[%s1 + $0x5d0] sm:$0xff]
      %v1598 = vld [vmem:[%s1 + $0x5d8] sm:$0xff]
      %v1599 = vld [vmem:[%s1 + $0x5e0] sm:$0xff]
      %v1600 = vld [vmem:[%s1 + $0x5e8] sm:$0xff]
      %v1601 = vld [vmem:[%s1 + $0x5f0] sm:$0xff]
      %v1602 = vld [vmem:[%s1 + $0x5f8] sm:$0xff]
      %v1603 = vld [vmem:[%s1 + $0x600] sm:$0xff]
      %v1604 = vld [vmem:[%s1 + $0x608] sm:$0xff]
      %v1605 = vld [vmem:[%s1 + $0x610] sm:$0xff]
      %v1606 = vld [vmem:[%s1 + $0x618] sm:$0xff]
      %v1607 = vld [vmem:[%s1 + $0x620] sm:$0xff]
      %v1608 = vld [vmem:[%s1 + $0x628] sm:$0xff]
      %v1609 = vld [vmem:[%s1 + $0x630] sm:$0xff]
      %v1610 = vld [vmem:[%s1 + $0x638] sm:$0xff]
      %v1611 = vld [vmem:[%s1 + $0x640] sm:$0xff]
      %v1612 = vld [vmem:[%s1 + $0x648] sm:$0xff]
      %v1613 = vld [vmem:[%s1 + $0x650] sm:$0xff]
      %v1614 = vld [vmem:[%s1 + $0x658] sm:$0xff]
      %v1615 = vld [vmem:[%s1 + $0x660] sm:$0xff]
      %v1616 = vld [vmem:[%s1 + $0x668] sm:$0xff]
      %v1617 = vld [vmem:[%s1 + $0x670] sm:$0xff]
      %v1618 = vld [vmem:[%s1 + $0x678] sm:$0xff]
      %v1619 = vld [vmem:[%s1 + $0x680] sm:$0xff]
      %v1620 = vld [vmem:[%s1 + $0x688] sm:$0xff]
      %v1621 = vld [vmem:[%s1 + $0x690] sm:$0xff]
      %v1622 = vld [vmem:[%s1 + $0x698] sm:$0xff]
      %v1623 = vld [vmem:[%s1 + $0x6a0] sm:$0xff]
      %v1624 = vld [vmem:[%s1 + $0x6a8] sm:$0xff]
      %v1625 = vld [vmem:[%s1 + $0x6b0] sm:$0xff]
      %v1626 = vld [vmem:[%s1 + $0x6b8] sm:$0xff]
      %v1627 = vld [vmem:[%s1 + $0x6c0] sm:$0xff]
      %v1628 = vld [vmem:[%s1 + $0x6c8] sm:$0xff]
      %v1629 = vld [vmem:[%s1 + $0x6d0] sm:$0xff]
      %v1630 = vld [vmem:[%s1 + $0x6d8] sm:$0xff]
      %v1631 = vld [vmem:[%s1 + $0x6e0] sm:$0xff]
      %v1632 = vld [vmem:[%s1 + $0x6e8] sm:$0xff]
      %v1633 = vld [vmem:[%s1 + $0x6f0] sm:$0xff]
      %v1634 = vld [vmem:[%s1 + $0x6f8] sm:$0xff]
      %v1635 = vld [vmem:[%s1 + $0x700] sm:$0xff]
      %v1636 = vld [vmem:[%s1 + $0x708] sm:$0xff]
      %v1637 = vld [vmem:[%s1 + $0x710] sm:$0xff]
      %v1638 = vld [vmem:[%s1 + $0x718] sm:$0xff]
      %v1639 = vld [vmem:[%s1 + $0x720] sm:$0xff]
      %v1640 = vld [vmem:[%s1 + $0x728] sm:$0xff]
      %v1641 = vld [vmem:[%s1 + $0x730] sm:$0xff]
      %v1642 = vld [vmem:[%s1 + $0x738] sm:$0xff]
      %v1643 = vld [vmem:[%s1 + $0x740] sm:$0xff]
      %v1644 = vld [vmem:[%s1 + $0x748] sm:$0xff]
      %v1645 = vld [vmem:[%s1 + $0x750] sm:$0xff]
      %v1646 = vld [vmem:[%s1 + $0x758] sm:$0xff]
      %v1647 = vld [vmem:[%s1 + $0x760] sm:$0xff]
      %v1648 = vld [vmem:[%s1 + $0x768] sm:$0xff]
      %v1649 = vld [vmem:[%s1 + $0x770] sm:$0xff]
      %v1650 = vld [vmem:[%s1 + $0x778] sm:$0xff]
      %v1651 = vld [vmem:[%s1 + $0x780] sm:$0xff]
      %v1652 = vld [vmem:[%s1 + $0x788] sm:$0xff]
      %v1653 = vld [vmem:[%s1 + $0x790] sm:$0xff]
      %v1654 = vld [vmem:[%s1 + $0x798] sm:$0xff]
      %v1655 = vld [vmem:[%s1 + $0x7a0] sm:$0xff]
      %v1656 = vld [vmem:[%s1 + $0x7a8] sm:$0xff]
      %v1657 = vld [vmem:[%s1 + $0x7b0] sm:$0xff]
      %v1658 = vld [vmem:[%s1 + $0x7b8] sm:$0xff]
      %v1659 = vld [vmem:[%s1 + $0x7c0] sm:$0xff]
      %v1660 = vld [vmem:[%s1 + $0x7c8] sm:$0xff]
      %v1661 = vld [vmem:[%s1 + $0x7d0] sm:$0xff]
      %v1662 = vld [vmem:[%s1 + $0x7d8] sm:$0xff]
      %v1663 = vld [vmem:[%s1 + $0x7e0] sm:$0xff]
      %v1664 = vld [vmem:[%s1 + $0x7e8] sm:$0xff]
      %v1665 = vld [vmem:[%s1 + $0x7f0] sm:$0xff]
      %v1666 = vld [vmem:[%s1 + $0x7f8] sm:$0xff]
      %v1667 = vld [vmem:[%s1 + $0x800] sm:$0xff]
      %v1668 = vld [vmem:[%s1 + $0x808] sm:$0xff]
      %v1669 = vld [vmem:[%s1 + $0x810] sm:$0xff]
      %v1670 = vld [vmem:[%s1 + $0x818] sm:$0xff]
      %v1671 = vld [vmem:[%s1 + $0x820] sm:$0xff]
      %v1672 = vld [vmem:[%s1 + $0x828] sm:$0xff]
      %v1673 = vld [vmem:[%s1 + $0x830] sm:$0xff]
      %v1674 = vld [vmem:[%s1 + $0x838] sm:$0xff]
      %v1675 = vld [vmem:[%s1 + $0x840] sm:$0xff]
      %v1676 = vld [vmem:[%s1 + $0x848] sm:$0xff]
      %v1677 = vld [vmem:[%s1 + $0x850] sm:$0xff]
      %v1678 = vld [vmem:[%s1 + $0x858] sm:$0xff]
      %v1679 = vld [vmem:[%s1 + $0x860] sm:$0xff]
      %v1680 = vld [vmem:[%s1 + $0x868] sm:$0xff]
      %v1681 = vld [vmem:[%s1 + $0x870] sm:$0xff]
      %v1682 = vld [vmem:[%s1 + $0x878] sm:$0xff]
      %v1683 = vld [vmem:[%s1 + $0x880] sm:$0xff]
      %v1684 = vld [vmem:[%s1 + $0x888] sm:$0xff]
      %v1685 = vld [vmem:[%s1 + $0x890] sm:$0xff]
      %v1686 = vld [vmem:[%s1 + $0x898] sm:$0xff]
      %v1687 = vld [vmem:[%s1 + $0x8a0] sm:$0xff]
      %v1688 = vld [vmem:[%s1 + $0x8a8] sm:$0xff]
      %v1689 = vld [vmem:[%s1 + $0x8b0] sm:$0xff]
      %v1690 = vld [vmem:[%s1 + $0x8b8] sm:$0xff]
      %v1691 = vld [vmem:[%s1 + $0x8c0] sm:$0xff]
      %v1692 = vld [vmem:[%s1 + $0x8c8] sm:$0xff]
      %v1693 = vld [vmem:[%s1 + $0x8d0] sm:$0xff]
      %v1694 = vld [vmem:[%s1 + $0x8d8] sm:$0xff]
      %v1695 = vld [vmem:[%s1 + $0x8e0] sm:$0xff]
      %v1696 = vld [vmem:[%s1 + $0x8e8] sm:$0xff]
      %v1697 = vld [vmem:[%s1 + $0x8f0] sm:$0xff]
      %v1698 = vld [vmem:[%s1 + $0x8f8] sm:$0xff]
      %v1699 = vld [vmem:[%s1 + $0x900] sm:$0xff]
      %v1700 = vld [vmem:[%s1 + $0x908] sm:$0xff]
      %v1701 = vld [vmem:[%s1 + $0x910] sm:$0xff]
      %v1702 = vld [vmem:[%s1 + $0x918] sm:$0xff]
      %v1703 = vld [vmem:[%s1 + $0x920] sm:$0xff]
      %v1704 = vld [vmem:[%s1 + $0x928] sm:$0xff]
      %v1705 = vld [vmem:[%s1 + $0x930] sm:$0xff]
      %v1706 = vld [vmem:[%s1 + $0x938] sm:$0xff]
      %v1707 = vld [vmem:[%s1 + $0x940] sm:$0xff]
      %v1708 = vld [vmem:[%s1 + $0x948] sm:$0xff]
      %v1709 = vld [vmem:[%s1 + $0x950] sm:$0xff]
      %v1710 = vld [vmem:[%s1 + $0x958] sm:$0xff]
      %v1711 = vld [vmem:[%s1 + $0x960] sm:$0xff]
      %v1712 = vld [vmem:[%s1 + $0x968] sm:$0xff]
      %v1713 = vld [vmem:[%s1 + $0x970] sm:$0xff]
      %v1714 = vld [vmem:[%s1 + $0x978] sm:$0xff]
      %v1715 = vld [vmem:[%s1 + $0x980] sm:$0xff]
      %v1716 = vld [vmem:[%s1 + $0x988] sm:$0xff]
      %v1717 = vld [vmem:[%s1 + $0x990] sm:$0xff]
      %v1718 = vld [vmem:[%s1 + $0x998] sm:$0xff]
      %v1719 = vld [vmem:[%s1 + $0x9a0] sm:$0xff]
      %v1720 = vld [vmem:[%s1 + $0x9a8] sm:$0xff]
      %v1721 = vld [vmem:[%s1 + $0x9b0] sm:$0xff]
      %v1722 = vld [vmem:[%s1 + $0x9b8] sm:$0xff]
      %v1723 = vld [vmem:[%s1 + $0x9c0] sm:$0xff]
      %v1724 = vld [vmem:[%s1 + $0x9c8] sm:$0xff]
      %v1725 = vld [vmem:[%s1 + $0x9d0] sm:$0xff]
      %v1726 = vld [vmem:[%s1 + $0x9d8] sm:$0xff]
      %v1727 = vld [vmem:[%s1 + $0x9e0] sm:$0xff]
      %v1728 = vld [vmem:[%s1 + $0x9e8] sm:$0xff]
      %v1729 = vld [vmem:[%s1 + $0x9f0] sm:$0xff]
      %v1730 = vld [vmem:[%s1 + $0x9f8] sm:$0xff]
      %v1731 = vld [vmem:[%s1 + $0xa00] sm:$0xff]
      %v1732 = vld [vmem:[%s1 + $0xa08] sm:$0xff]
      %v1733 = vld [vmem:[%s1 + $0xa10] sm:$0xff]
      %v1734 = vld [vmem:[%s1 + $0xa18] sm:$0xff]
      %v1735 = vld [vmem:[%s1 + $0xa20] sm:$0xff]
      %v1736 = vld [vmem:[%s1 + $0xa28] sm:$0xff]
      %v1737 = vld [vmem:[%s1 + $0xa30] sm:$0xff]
      %v1738 = vld [vmem:[%s1 + $0xa38] sm:$0xff]
      %v1739 = vld [vmem:[%s1 + $0xa40] sm:$0xff]
      %v1740 = vld [vmem:[%s1 + $0xa48] sm:$0xff]
      %v1741 = vld [vmem:[%s1 + $0xa50] sm:$0xff]
      %v1742 = vld [vmem:[%s1 + $0xa58] sm:$0xff]
      %v1743 = vld [vmem:[%s1 + $0xa60] sm:$0xff]
      %v1744 = vld [vmem:[%s1 + $0xa68] sm:$0xff]
      %v1745 = vld [vmem:[%s1 + $0xa70] sm:$0xff]
      %v1746 = vld [vmem:[%s1 + $0xa78] sm:$0xff]
      %v1747 = vld [vmem:[%s1 + $0xa80] sm:$0xff]
      %v1748 = vld [vmem:[%s1 + $0xa88] sm:$0xff]
      %v1749 = vld [vmem:[%s1 + $0xa90] sm:$0xff]
      %v1750 = vld [vmem:[%s1 + $0xa98] sm:$0xff]
      %v1751 = vld [vmem:[%s1 + $0xaa0] sm:$0xff]
      %v1752 = vld [vmem:[%s1 + $0xaa8] sm:$0xff]
      %v1753 = vld [vmem:[%s1 + $0xab0] sm:$0xff]
      %v1754 = vld [vmem:[%s1 + $0xab8] sm:$0xff]
      %v1755 = vld [vmem:[%s1 + $0xac0] sm:$0xff]
      %v1756 = vld [vmem:[%s1 + $0xac8] sm:$0xff]
      %v1757 = vld [vmem:[%s1 + $0xad0] sm:$0xff]
      %v1758 = vld [vmem:[%s1 + $0xad8] sm:$0xff]
      %v1759 = vld [vmem:[%s1 + $0xae0] sm:$0xff]
      %v1760 = vld [vmem:[%s1 + $0xae8] sm:$0xff]
      %v1761 = vld [vmem:[%s1 + $0xaf0] sm:$0xff]
      %v1762 = vld [vmem:[%s1 + $0xaf8] sm:$0xff]
      %v1763 = vld [vmem:[%s1 + $0xb00] sm:$0xff]
      %v1764 = vld [vmem:[%s1 + $0xb08] sm:$0xff]
      %v1765 = vld [vmem:[%s1 + $0xb10] sm:$0xff]
      %v1766 = vld [vmem:[%s1 + $0xb18] sm:$0xff]
      %v1767 = vld [vmem:[%s1 + $0xb20] sm:$0xff]
      %v1768 = vld [vmem:[%s1 + $0xb28] sm:$0xff]
      %v1769 = vld [vmem:[%s1 + $0xb30] sm:$0xff]
      %v1770 = vld [vmem:[%s1 + $0xb38] sm:$0xff]
      %v1771 = vld [vmem:[%s1 + $0xb40] sm:$0xff]
      %v1772 = vld [vmem:[%s1 + $0xb48] sm:$0xff]
      %v1773 = vld [vmem:[%s1 + $0xb50] sm:$0xff]
      %v1774 = vld [vmem:[%s1 + $0xb58] sm:$0xff]
      %v1775 = vld [vmem:[%s1 + $0xb60] sm:$0xff]
      %v1776 = vld [vmem:[%s1 + $0xb68] sm:$0xff]
      %v1777 = vld [vmem:[%s1 + $0xb70] sm:$0xff]
      %v1778 = vld [vmem:[%s1 + $0xb78] sm:$0xff]
      %v1779 = vld [vmem:[%s1 + $0xb80] sm:$0xff]
      %v1780 = vld [vmem:[%s1 + $0xb88] sm:$0xff]
      %v1781 = vld [vmem:[%s1 + $0xb90] sm:$0xff]
      %v1782 = vld [vmem:[%s1 + $0xb98] sm:$0xff]
      %v1783 = vld [vmem:[%s1 + $0xba0] sm:$0xff]
      %v1784 = vld [vmem:[%s1 + $0xba8] sm:$0xff]
      %v1785 = vld [vmem:[%s1 + $0xbb0] sm:$0xff]
      %v1786 = vld [vmem:[%s1 + $0xbb8] sm:$0xff]
      %v1787 = vld [vmem:[%s1 + $0xbc0] sm:$0xff]
      %v1788 = vld [vmem:[%s1 + $0xbc8] sm:$0xff]
      %v1789 = vld [vmem:[%s1 + $0xbd0] sm:$0xff]
      %v1790 = vld [vmem:[%s1 + $0xbd8] sm:$0xff]
      %v1791 = vld [vmem:[%s1 + $0xbe0] sm:$0xff]
      %v1792 = vld [vmem:[%s1 + $0xbe8] sm:$0xff]
      %v1793 = vld [vmem:[%s1 + $0xbf0] sm:$0xff]
      %v1794 = vld [vmem:[%s1 + $0xbf8] sm:$0xff]
      %v1795 = vld [vmem:[%s1 + $0xc00] sm:$0xff]
      %v1796 = vld [vmem:[%s1 + $0xc08] sm:$0xff]
      %v1797 = vld [vmem:[%s1 + $0xc10] sm:$0xff]
      %v1798 = vld [vmem:[%s1 + $0xc18] sm:$0xff]
      %v1799 = vld [vmem:[%s1 + $0xc20] sm:$0xff]
      %v1800 = vld [vmem:[%s1 + $0xc28] sm:$0xff]
      %v1801 = vld [vmem:[%s1 + $0xc30] sm:$0xff]
      %v1802 = vld [vmem:[%s1 + $0xc38] sm:$0xff]
      %v1803 = vld [vmem:[%s1 + $0xc40] sm:$0xff]
      %v1804 = vld [vmem:[%s1 + $0xc48] sm:$0xff]
      %v1805 = vld [vmem:[%s1 + $0xc50] sm:$0xff]
      %v1806 = vld [vmem:[%s1 + $0xc58] sm:$0xff]
      %v1807 = vld [vmem:[%s1 + $0xc60] sm:$0xff]
      %v1808 = vld [vmem:[%s1 + $0xc68] sm:$0xff]
      %v1809 = vld [vmem:[%s1 + $0xc70] sm:$0xff]
      %v1810 = vld [vmem:[%s1 + $0xc78] sm:$0xff]
      %v1811 = vld [vmem:[%s1 + $0xc80] sm:$0xff]
      %v1812 = vld [vmem:[%s1 + $0xc88] sm:$0xff]
      %v1813 = vld [vmem:[%s1 + $0xc90] sm:$0xff]
      %v1814 = vld [vmem:[%s1 + $0xc98] sm:$0xff]
      %v1815 = vld [vmem:[%s1 + $0xca0] sm:$0xff]
      %v1816 = vld [vmem:[%s1 + $0xca8] sm:$0xff]
      %v1817 = vld [vmem:[%s1 + $0xcb0] sm:$0xff]
      %v1818 = vld [vmem:[%s1 + $0xcb8] sm:$0xff]
      %v1819 = vld [vmem:[%s1 + $0xcc0] sm:$0xff]
      %v1820 = vld [vmem:[%s1 + $0xcc8] sm:$0xff]
      %v1821 = vld [vmem:[%s1 + $0xcd0] sm:$0xff]
      %v1822 = vld [vmem:[%s1 + $0xcd8] sm:$0xff]
      %v1823 = vld [vmem:[%s1 + $0xce0] sm:$0xff]
      %v1824 = vld [vmem:[%s1 + $0xce8] sm:$0xff]
      %v1825 = vld [vmem:[%s1 + $0xcf0] sm:$0xff]
      %v1826 = vld [vmem:[%s1 + $0xcf8] sm:$0xff]
      %v1827 = vld [vmem:[%s1 + $0xd00] sm:$0xff]
      %v1828 = vld [vmem:[%s1 + $0xd08] sm:$0xff]
      %v1829 = vld [vmem:[%s1 + $0xd10] sm:$0xff]
      %v1830 = vld [vmem:[%s1 + $0xd18] sm:$0xff]
      %v1831 = vld [vmem:[%s1 + $0xd20] sm:$0xff]
      %v1832 = vld [vmem:[%s1 + $0xd28] sm:$0xff]
      %v1833 = vld [vmem:[%s1 + $0xd30] sm:$0xff]
      %v1834 = vld [vmem:[%s1 + $0xd38] sm:$0xff]
      %v1835 = vld [vmem:[%s1 + $0xd40] sm:$0xff]
      %v1836 = vld [vmem:[%s1 + $0xd48] sm:$0xff]
      %v1837 = vld [vmem:[%s1 + $0xd50] sm:$0xff]
      %v1838 = vld [vmem:[%s1 + $0xd58] sm:$0xff]
      %v1839 = vld [vmem:[%s1 + $0xd60] sm:$0xff]
      %v1840 = vld [vmem:[%s1 + $0xd68] sm:$0xff]
      %v1841 = vld [vmem:[%s1 + $0xd70] sm:$0xff]
      %v1842 = vld [vmem:[%s1 + $0xd78] sm:$0xff]
      %v1843 = vld [vmem:[%s2] sm:$0x1]
      %v1845 = vperm.slane %v1843, 0
      %1847 = vmatpush.msra.mxu0 %v1426
      %1848 = vmatpush.msra.mxu0 %v1425
      %1849 = vmatpush.msra.mxu0 %v1424
      %1850 = vmatpush.msra.mxu0 %v1423
      %1851 = vmatpush.msra.mxu0 %v1422
      %1852 = vmatpush.msra.mxu0 %v1421
      %1853 = vmatpush.msra.mxu0 %v1420
      %1854 = vmatpush.msra.mxu0 %v1419
      %1855 = vmatpush.msra.mxu0 %v1418
      %1856 = vmatpush.msra.mxu0 %v1417
      %1857 = vmatpush.msra.mxu0 %v1416
      %1858 = vmatpush.msra.mxu0 %v1415
      %1859 = vmatpush.msra.mxu0 %v1414
      %1860 = vmatpush.msra.mxu0 %v1413
      %1861 = vmatpush.msra.mxu0 %v1412
      %1862 = vmatpush.msra.mxu0 %v1411
      %1863 = vmatmul.f32.gmra.mxu0 %v209
      %v1864 = vpop.f32.mrf.mxu0
      %v1865 = vadd.f32 %v1845, %v1864
      %1866 = vmatmul.f32.gmra.mxu0 %v211
      %v1867 = vpop.f32.mrf.mxu0
      %v1868 = vadd.f32 %v1845, %v1867
      %1869 = vmatmul.f32.gmra.mxu0 %v213
      %v1870 = vpop.f32.mrf.mxu0
      %v1871 = vadd.f32 %v1845, %v1870
      %1872 = vmatmul.f32.gmra.mxu0 %v215
      %v1873 = vpop.f32.mrf.mxu0
      %v1874 = vadd.f32 %v1845, %v1873
      %1875 = vmatmul.f32.gmra.mxu0 %v217
      %v1876 = vpop.f32.mrf.mxu0
      %v1877 = vadd.f32 %v1845, %v1876
      %1878 = vmatmul.f32.gmra.mxu0 %v219
      %v1879 = vpop.f32.mrf.mxu0
      %v1880 = vadd.f32 %v1845, %v1879
      %1881 = vmatmul.f32.gmra.mxu0 %v221
      %v1882 = vpop.f32.mrf.mxu0
      %v1883 = vadd.f32 %v1845, %v1882
      %1884 = vmatmul.f32.gmra.mxu0 %v223
      %v1885 = vpop.f32.mrf.mxu0
      %v1886 = vadd.f32 %v1845, %v1885
      %1887 = vmatmul.f32.gmra.mxu0 %v229
      %v1888 = vpop.f32.mrf.mxu0
      %v1889 = vadd.f32 %v1845, %v1888
      %1890 = vmatmul.f32.gmra.mxu0 %v231
      %v1891 = vpop.f32.mrf.mxu0
      %v1892 = vadd.f32 %v1845, %v1891
      %1893 = vmatmul.f32.gmra.mxu0 %v233
      %v1894 = vpop.f32.mrf.mxu0
      %v1895 = vadd.f32 %v1845, %v1894
      %1896 = vmatmul.f32.gmra.mxu0 %v235
      %v1897 = vpop.f32.mrf.mxu0
      %v1898 = vadd.f32 %v1845, %v1897
      %1899 = vmatmul.f32.gmra.mxu0 %v237
      %v1900 = vpop.f32.mrf.mxu0
      %v1901 = vadd.f32 %v1845, %v1900
      %1902 = vmatmul.f32.gmra.mxu0 %v239
      %v1903 = vpop.f32.mrf.mxu0
      %v1904 = vadd.f32 %v1845, %v1903
      %1905 = vmatmul.f32.gmra.mxu0 %v241
      %v1906 = vpop.f32.mrf.mxu0
      %v1907 = vadd.f32 %v1845, %v1906
      %1908 = vmatmul.f32.gmra.mxu0 %v243
      %v1909 = vpop.f32.mrf.mxu0
      %v1910 = vadd.f32 %v1845, %v1909
      %1911 = vmatmul.f32.gmra.mxu0 %v249
      %v1912 = vpop.f32.mrf.mxu0
      %v1913 = vadd.f32 %v1845, %v1912
      %1914 = vmatmul.f32.gmra.mxu0 %v251
      %v1915 = vpop.f32.mrf.mxu0
      %v1916 = vadd.f32 %v1845, %v1915
      %1917 = vmatmul.f32.gmra.mxu0 %v253
      %v1918 = vpop.f32.mrf.mxu0
      %v1919 = vadd.f32 %v1845, %v1918
      %1920 = vmatmul.f32.gmra.mxu0 %v255
      %v1921 = vpop.f32.mrf.mxu0
      %v1922 = vadd.f32 %v1845, %v1921
      %1923 = vmatmul.f32.gmra.mxu0 %v257
      %v1924 = vpop.f32.mrf.mxu0
      %v1925 = vadd.f32 %v1845, %v1924
      %1926 = vmatmul.f32.gmra.mxu0 %v259
      %v1927 = vpop.f32.mrf.mxu0
      %v1928 = vadd.f32 %v1845, %v1927
      %1929 = vmatmul.f32.gmra.mxu0 %v261
      %v1930 = vpop.f32.mrf.mxu0
      %v1931 = vadd.f32 %v1845, %v1930
      %1932 = vmatmul.f32.gmra.mxu0 %v263
      %v1933 = vpop.f32.mrf.mxu0
      %v1934 = vadd.f32 %v1845, %v1933
      %1935 = vmatmul.f32.gmra.mxu0 %v269
      %v1936 = vpop.f32.mrf.mxu0
      %v1937 = vadd.f32 %v1845, %v1936
      %1938 = vmatmul.f32.gmra.mxu0 %v271
      %v1939 = vpop.f32.mrf.mxu0
      %v1940 = vadd.f32 %v1845, %v1939
      %1941 = vmatmul.f32.gmra.mxu0 %v273
      %v1942 = vpop.f32.mrf.mxu0
      %v1943 = vadd.f32 %v1845, %v1942
      %1944 = vmatmul.f32.gmra.mxu0 %v275
      %v1945 = vpop.f32.mrf.mxu0
      %v1946 = vadd.f32 %v1845, %v1945
      %1947 = vmatmul.f32.gmra.mxu0 %v277
      %v1948 = vpop.f32.mrf.mxu0
      %v1949 = vadd.f32 %v1845, %v1948
      %1950 = vmatmul.f32.gmra.mxu0 %v279
      %v1951 = vpop.f32.mrf.mxu0
      %v1952 = vadd.f32 %v1845, %v1951
      %1953 = vmatmul.f32.gmra.mxu0 %v281
      %v1954 = vpop.f32.mrf.mxu0
      %v1955 = vadd.f32 %v1845, %v1954
      %1956 = vmatmul.f32.gmra.mxu0 %v283
      %v1957 = vpop.f32.mrf.mxu0
      %v1958 = vadd.f32 %v1845, %v1957
      %1959 = vmatmul.f32.gmra.mxu0 %v289
      %v1960 = vpop.f32.mrf.mxu0
      %v1961 = vadd.f32 %v1845, %v1960
      %1962 = vmatmul.f32.gmra.mxu0 %v291
      %v1963 = vpop.f32.mrf.mxu0
      %v1964 = vadd.f32 %v1845, %v1963
      %1965 = vmatmul.f32.gmra.mxu0 %v293
      %v1966 = vpop.f32.mrf.mxu0
      %v1967 = vadd.f32 %v1845, %v1966
      %1968 = vmatmul.f32.gmra.mxu0 %v295
      %v1969 = vpop.f32.mrf.mxu0
      %v1970 = vadd.f32 %v1845, %v1969
      %1971 = vmatmul.f32.gmra.mxu0 %v297
      %v1972 = vpop.f32.mrf.mxu0
      %v1973 = vadd.f32 %v1845, %v1972
      %1974 = vmatmul.f32.gmra.mxu0 %v299
      %v1975 = vpop.f32.mrf.mxu0
      %v1976 = vadd.f32 %v1845, %v1975
      %1977 = vmatmul.f32.gmra.mxu0 %v301
      %v1978 = vpop.f32.mrf.mxu0
      %v1979 = vadd.f32 %v1845, %v1978
      %1980 = vmatmul.f32.gmra.mxu0 %v303
      %v1981 = vpop.f32.mrf.mxu0
      %v1982 = vadd.f32 %v1845, %v1981
      %1983 = vmatmul.f32.gmra.mxu0 %v309
      %v1984 = vpop.f32.mrf.mxu0
      %v1985 = vadd.f32 %v1845, %v1984
      %1986 = vmatmul.f32.gmra.mxu0 %v311
      %v1987 = vpop.f32.mrf.mxu0
      %v1988 = vadd.f32 %v1845, %v1987
      %1989 = vmatmul.f32.gmra.mxu0 %v313
      %v1990 = vpop.f32.mrf.mxu0
      %v1991 = vadd.f32 %v1845, %v1990
      %1992 = vmatmul.f32.gmra.mxu0 %v315
      %v1993 = vpop.f32.mrf.mxu0
      %v1994 = vadd.f32 %v1845, %v1993
      %1995 = vmatmul.f32.gmra.mxu0 %v317
      %v1996 = vpop.f32.mrf.mxu0
      %v1997 = vadd.f32 %v1845, %v1996
      %1998 = vmatmul.f32.gmra.mxu0 %v319
      %v1999 = vpop.f32.mrf.mxu0
      %v2000 = vadd.f32 %v1845, %v1999
      %2001 = vmatmul.f32.gmra.mxu0 %v321
      %v2002 = vpop.f32.mrf.mxu0
      %v2003 = vadd.f32 %v1845, %v2002
      %2004 = vmatmul.f32.gmra.mxu0 %v323
      %v2005 = vpop.f32.mrf.mxu0
      %v2006 = vadd.f32 %v1845, %v2005
      %2007 = vmatmul.f32.gmra.mxu0 %v329
      %v2008 = vpop.f32.mrf.mxu0
      %v2009 = vadd.f32 %v1845, %v2008
      %2010 = vmatmul.f32.gmra.mxu0 %v331
      %v2011 = vpop.f32.mrf.mxu0
      %v2012 = vadd.f32 %v1845, %v2011
      %2013 = vmatmul.f32.gmra.mxu0 %v333
      %v2014 = vpop.f32.mrf.mxu0
      %v2015 = vadd.f32 %v1845, %v2014
      %2016 = vmatmul.f32.gmra.mxu0 %v335
      %v2017 = vpop.f32.mrf.mxu0
      %v2018 = vadd.f32 %v1845, %v2017
      %2019 = vmatmul.f32.gmra.mxu0 %v337
      %v2020 = vpop.f32.mrf.mxu0
      %v2021 = vadd.f32 %v1845, %v2020
      %2022 = vmatmul.f32.gmra.mxu0 %v339
      %v2023 = vpop.f32.mrf.mxu0
      %v2024 = vadd.f32 %v1845, %v2023
      %2025 = vmatmul.f32.gmra.mxu0 %v341
      %v2026 = vpop.f32.mrf.mxu0
      %v2027 = vadd.f32 %v1845, %v2026
      %2028 = vmatmul.f32.gmra.mxu0 %v343
      %v2029 = vpop.f32.mrf.mxu0
      %v2030 = vadd.f32 %v1845, %v2029
      %2031 = vmatmul.f32.gmra.mxu0 %v349
      %v2032 = vpop.f32.mrf.mxu0
      %v2033 = vadd.f32 %v1845, %v2032
      %2034 = vmatmul.f32.gmra.mxu0 %v351
      %v2035 = vpop.f32.mrf.mxu0
      %v2036 = vadd.f32 %v1845, %v2035
      %2037 = vmatmul.f32.gmra.mxu0 %v353
      %v2038 = vpop.f32.mrf.mxu0
      %v2039 = vadd.f32 %v1845, %v2038
      %2040 = vmatmul.f32.gmra.mxu0 %v355
      %v2041 = vpop.f32.mrf.mxu0
      %v2042 = vadd.f32 %v1845, %v2041
      %2043 = vmatmul.f32.gmra.mxu0 %v357
      %v2044 = vpop.f32.mrf.mxu0
      %v2045 = vadd.f32 %v1845, %v2044
      %2046 = vmatmul.f32.gmra.mxu0 %v359
      %v2047 = vpop.f32.mrf.mxu0
      %v2048 = vadd.f32 %v1845, %v2047
      %2049 = vmatmul.f32.gmra.mxu0 %v361
      %v2050 = vpop.f32.mrf.mxu0
      %v2051 = vadd.f32 %v1845, %v2050
      %2052 = vmatmul.f32.gmra.mxu0 %v363
      %v2053 = vpop.f32.mrf.mxu0
      %v2054 = vadd.f32 %v1845, %v2053
      %2055 = vdwg.mxu0
      %2056 = vmatpush.msra.mxu0 %v1442
      %2057 = vmatpush.msra.mxu0 %v1441
      %2058 = vmatpush.msra.mxu0 %v1440
      %2059 = vmatpush.msra.mxu0 %v1439
      %2060 = vmatpush.msra.mxu0 %v1438
      %2061 = vmatpush.msra.mxu0 %v1437
      %2062 = vmatpush.msra.mxu0 %v1436
      %2063 = vmatpush.msra.mxu0 %v1435
      %2064 = vmatpush.msra.mxu0 %v1434
      %2065 = vmatpush.msra.mxu0 %v1433
      %2066 = vmatpush.msra.mxu0 %v1432
      %2067 = vmatpush.msra.mxu0 %v1431
      %2068 = vmatpush.msra.mxu0 %v1430
      %2069 = vmatpush.msra.mxu0 %v1429
      %2070 = vmatpush.msra.mxu0 %v1428
      %2071 = vmatpush.msra.mxu0 %v1427
      %2072 = vmatmul.f32.gmra.mxu0 %v612
      %v2073 = vpop.f32.mrf.mxu0
      %v2074 = vadd.f32 %v1865, %v2073
      %2075 = vmatmul.f32.gmra.mxu0 %v615
      %v2076 = vpop.f32.mrf.mxu0
      %v2077 = vadd.f32 %v1868, %v2076
      %2078 = vmatmul.f32.gmra.mxu0 %v618
      %v2079 = vpop.f32.mrf.mxu0
      %v2080 = vadd.f32 %v1871, %v2079
      %2081 = vmatmul.f32.gmra.mxu0 %v621
      %v2082 = vpop.f32.mrf.mxu0
      %v2083 = vadd.f32 %v1874, %v2082
      %2084 = vmatmul.f32.gmra.mxu0 %v624
      %v2085 = vpop.f32.mrf.mxu0
      %v2086 = vadd.f32 %v1877, %v2085
      %2087 = vmatmul.f32.gmra.mxu0 %v627
      %v2088 = vpop.f32.mrf.mxu0
      %v2089 = vadd.f32 %v1880, %v2088
      %2090 = vmatmul.f32.gmra.mxu0 %v630
      %v2091 = vpop.f32.mrf.mxu0
      %v2092 = vadd.f32 %v1883, %v2091
      %2093 = vmatmul.f32.gmra.mxu0 %v633
      %v2094 = vpop.f32.mrf.mxu0
      %v2095 = vadd.f32 %v1886, %v2094
      %2096 = vmatmul.f32.gmra.mxu0 %v642
      %v2097 = vpop.f32.mrf.mxu0
      %v2098 = vadd.f32 %v1889, %v2097
      %2099 = vmatmul.f32.gmra.mxu0 %v645
      %v2100 = vpop.f32.mrf.mxu0
      %v2101 = vadd.f32 %v1892, %v2100
      %2102 = vmatmul.f32.gmra.mxu0 %v648
      %v2103 = vpop.f32.mrf.mxu0
      %v2104 = vadd.f32 %v1895, %v2103
      %2105 = vmatmul.f32.gmra.mxu0 %v651
      %v2106 = vpop.f32.mrf.mxu0
      %v2107 = vadd.f32 %v1898, %v2106
      %2108 = vmatmul.f32.gmra.mxu0 %v654
      %v2109 = vpop.f32.mrf.mxu0
      %v2110 = vadd.f32 %v1901, %v2109
      %2111 = vmatmul.f32.gmra.mxu0 %v657
      %v2112 = vpop.f32.mrf.mxu0
      %v2113 = vadd.f32 %v1904, %v2112
      %2114 = vmatmul.f32.gmra.mxu0 %v660
      %v2115 = vpop.f32.mrf.mxu0
      %v2116 = vadd.f32 %v1907, %v2115
      %2117 = vmatmul.f32.gmra.mxu0 %v663
      %v2118 = vpop.f32.mrf.mxu0
      %v2119 = vadd.f32 %v1910, %v2118
      %2120 = vmatmul.f32.gmra.mxu0 %v672
      %v2121 = vpop.f32.mrf.mxu0
      %v2122 = vadd.f32 %v1913, %v2121
      %2123 = vmatmul.f32.gmra.mxu0 %v675
      %v2124 = vpop.f32.mrf.mxu0
      %v2125 = vadd.f32 %v1916, %v2124
      %2126 = vmatmul.f32.gmra.mxu0 %v678
      %v2127 = vpop.f32.mrf.mxu0
      %v2128 = vadd.f32 %v1919, %v2127
      %2129 = vmatmul.f32.gmra.mxu0 %v681
      %v2130 = vpop.f32.mrf.mxu0
      %v2131 = vadd.f32 %v1922, %v2130
      %2132 = vmatmul.f32.gmra.mxu0 %v684
      %v2133 = vpop.f32.mrf.mxu0
      %v2134 = vadd.f32 %v1925, %v2133
      %2135 = vmatmul.f32.gmra.mxu0 %v687
      %v2136 = vpop.f32.mrf.mxu0
      %v2137 = vadd.f32 %v1928, %v2136
      %2138 = vmatmul.f32.gmra.mxu0 %v690
      %v2139 = vpop.f32.mrf.mxu0
      %v2140 = vadd.f32 %v1931, %v2139
      %2141 = vmatmul.f32.gmra.mxu0 %v693
      %v2142 = vpop.f32.mrf.mxu0
      %v2143 = vadd.f32 %v1934, %v2142
      %2144 = vmatmul.f32.gmra.mxu0 %v702
      %v2145 = vpop.f32.mrf.mxu0
      %v2146 = vadd.f32 %v1937, %v2145
      %2147 = vmatmul.f32.gmra.mxu0 %v705
      %v2148 = vpop.f32.mrf.mxu0
      %v2149 = vadd.f32 %v1940, %v2148
      %2150 = vmatmul.f32.gmra.mxu0 %v708
      %v2151 = vpop.f32.mrf.mxu0
      %v2152 = vadd.f32 %v1943, %v2151
      %2153 = vmatmul.f32.gmra.mxu0 %v711
      %v2154 = vpop.f32.mrf.mxu0
      %v2155 = vadd.f32 %v1946, %v2154
      %2156 = vmatmul.f32.gmra.mxu0 %v714
      %v2157 = vpop.f32.mrf.mxu0
      %v2158 = vadd.f32 %v1949, %v2157
      %2159 = vmatmul.f32.gmra.mxu0 %v717
      %v2160 = vpop.f32.mrf.mxu0
      %v2161 = vadd.f32 %v1952, %v2160
      %2162 = vmatmul.f32.gmra.mxu0 %v720
      %v2163 = vpop.f32.mrf.mxu0
      %v2164 = vadd.f32 %v1955, %v2163
      %2165 = vmatmul.f32.gmra.mxu0 %v723
      %v2166 = vpop.f32.mrf.mxu0
      %v2167 = vadd.f32 %v1958, %v2166
      %2168 = vmatmul.f32.gmra.mxu0 %v732
      %v2169 = vpop.f32.mrf.mxu0
      %v2170 = vadd.f32 %v1961, %v2169
      %2171 = vmatmul.f32.gmra.mxu0 %v735
      %v2172 = vpop.f32.mrf.mxu0
      %v2173 = vadd.f32 %v1964, %v2172
      %2174 = vmatmul.f32.gmra.mxu0 %v738
      %v2175 = vpop.f32.mrf.mxu0
      %v2176 = vadd.f32 %v1967, %v2175
      %2177 = vmatmul.f32.gmra.mxu0 %v741
      %v2178 = vpop.f32.mrf.mxu0
      %v2179 = vadd.f32 %v1970, %v2178
      %2180 = vmatmul.f32.gmra.mxu0 %v744
      %v2181 = vpop.f32.mrf.mxu0
      %v2182 = vadd.f32 %v1973, %v2181
      %2183 = vmatmul.f32.gmra.mxu0 %v747
      %v2184 = vpop.f32.mrf.mxu0
      %v2185 = vadd.f32 %v1976, %v2184
      %2186 = vmatmul.f32.gmra.mxu0 %v750
      %v2187 = vpop.f32.mrf.mxu0
      %v2188 = vadd.f32 %v1979, %v2187
      %2189 = vmatmul.f32.gmra.mxu0 %v753
      %v2190 = vpop.f32.mrf.mxu0
      %v2191 = vadd.f32 %v1982, %v2190
      %2192 = vmatmul.f32.gmra.mxu0 %v762
      %v2193 = vpop.f32.mrf.mxu0
      %v2194 = vadd.f32 %v1985, %v2193
      %2195 = vmatmul.f32.gmra.mxu0 %v765
      %v2196 = vpop.f32.mrf.mxu0
      %v2197 = vadd.f32 %v1988, %v2196
      %2198 = vmatmul.f32.gmra.mxu0 %v768
      %v2199 = vpop.f32.mrf.mxu0
      %v2200 = vadd.f32 %v1991, %v2199
      %2201 = vmatmul.f32.gmra.mxu0 %v771
      %v2202 = vpop.f32.mrf.mxu0
      %v2203 = vadd.f32 %v1994, %v2202
      %2204 = vmatmul.f32.gmra.mxu0 %v774
      %v2205 = vpop.f32.mrf.mxu0
      %v2206 = vadd.f32 %v1997, %v2205
      %2207 = vmatmul.f32.gmra.mxu0 %v777
      %v2208 = vpop.f32.mrf.mxu0
      %v2209 = vadd.f32 %v2000, %v2208
      %2210 = vmatmul.f32.gmra.mxu0 %v780
      %v2211 = vpop.f32.mrf.mxu0
      %v2212 = vadd.f32 %v2003, %v2211
      %2213 = vmatmul.f32.gmra.mxu0 %v783
      %v2214 = vpop.f32.mrf.mxu0
      %v2215 = vadd.f32 %v2006, %v2214
      %2216 = vmatmul.f32.gmra.mxu0 %v792
      %v2217 = vpop.f32.mrf.mxu0
      %v2218 = vadd.f32 %v2009, %v2217
      %2219 = vmatmul.f32.gmra.mxu0 %v795
      %v2220 = vpop.f32.mrf.mxu0
      %v2221 = vadd.f32 %v2012, %v2220
      %2222 = vmatmul.f32.gmra.mxu0 %v798
      %v2223 = vpop.f32.mrf.mxu0
      %v2224 = vadd.f32 %v2015, %v2223
      %2225 = vmatmul.f32.gmra.mxu0 %v801
      %v2226 = vpop.f32.mrf.mxu0
      %v2227 = vadd.f32 %v2018, %v2226
      %2228 = vmatmul.f32.gmra.mxu0 %v804
      %v2229 = vpop.f32.mrf.mxu0
      %v2230 = vadd.f32 %v2021, %v2229
      %2231 = vmatmul.f32.gmra.mxu0 %v807
      %v2232 = vpop.f32.mrf.mxu0
      %v2233 = vadd.f32 %v2024, %v2232
      %2234 = vmatmul.f32.gmra.mxu0 %v810
      %v2235 = vpop.f32.mrf.mxu0
      %v2236 = vadd.f32 %v2027, %v2235
      %2237 = vmatmul.f32.gmra.mxu0 %v813
      %v2238 = vpop.f32.mrf.mxu0
      %v2239 = vadd.f32 %v2030, %v2238
      %2240 = vmatmul.f32.gmra.mxu0 %v822
      %v2241 = vpop.f32.mrf.mxu0
      %v2242 = vadd.f32 %v2033, %v2241
      %2243 = vmatmul.f32.gmra.mxu0 %v825
      %v2244 = vpop.f32.mrf.mxu0
      %v2245 = vadd.f32 %v2036, %v2244
      %2246 = vmatmul.f32.gmra.mxu0 %v828
      %v2247 = vpop.f32.mrf.mxu0
      %v2248 = vadd.f32 %v2039, %v2247
      %2249 = vmatmul.f32.gmra.mxu0 %v831
      %v2250 = vpop.f32.mrf.mxu0
      %v2251 = vadd.f32 %v2042, %v2250
      %2252 = vmatmul.f32.gmra.mxu0 %v834
      %v2253 = vpop.f32.mrf.mxu0
      %v2254 = vadd.f32 %v2045, %v2253
      %2255 = vmatmul.f32.gmra.mxu0 %v837
      %v2256 = vpop.f32.mrf.mxu0
      %v2257 = vadd.f32 %v2048, %v2256
      %2258 = vmatmul.f32.gmra.mxu0 %v840
      %v2259 = vpop.f32.mrf.mxu0
      %v2260 = vadd.f32 %v2051, %v2259
      %2261 = vmatmul.f32.gmra.mxu0 %v843
      %v2262 = vpop.f32.mrf.mxu0
      %v2263 = vadd.f32 %v2054, %v2262
      %2264 = vdwg.mxu0
      %2265 = vmatpush.msra.mxu0 %v1458
      %2266 = vmatpush.msra.mxu0 %v1457
      %2267 = vmatpush.msra.mxu0 %v1456
      %2268 = vmatpush.msra.mxu0 %v1455
      %2269 = vmatpush.msra.mxu0 %v1454
      %2270 = vmatpush.msra.mxu0 %v1453
      %2271 = vmatpush.msra.mxu0 %v1452
      %2272 = vmatpush.msra.mxu0 %v1451
      %2273 = vmatpush.msra.mxu0 %v1450
      %2274 = vmatpush.msra.mxu0 %v1449
      %2275 = vmatpush.msra.mxu0 %v1448
      %2276 = vmatpush.msra.mxu0 %v1447
      %2277 = vmatpush.msra.mxu0 %v1446
      %2278 = vmatpush.msra.mxu0 %v1445
      %2279 = vmatpush.msra.mxu0 %v1444
      %2280 = vmatpush.msra.mxu0 %v1443
      %2281 = vmatmul.f32.gmra.mxu0 %v1013
      %v2282 = vpop.f32.mrf.mxu0
      %v2283 = vadd.f32 %v2074, %v2282
      %2284 = vmatmul.f32.gmra.mxu0 %v1016
      %v2285 = vpop.f32.mrf.mxu0
      %v2286 = vadd.f32 %v2077, %v2285
      %2287 = vmatmul.f32.gmra.mxu0 %v1019
      %v2288 = vpop.f32.mrf.mxu0
      %v2289 = vadd.f32 %v2080, %v2288
      %2290 = vmatmul.f32.gmra.mxu0 %v1022
      %v2291 = vpop.f32.mrf.mxu0
      %v2292 = vadd.f32 %v2083, %v2291
      %2293 = vmatmul.f32.gmra.mxu0 %v1025
      %v2294 = vpop.f32.mrf.mxu0
      %v2295 = vadd.f32 %v2086, %v2294
      %2296 = vmatmul.f32.gmra.mxu0 %v1028
      %v2297 = vpop.f32.mrf.mxu0
      %v2298 = vadd.f32 %v2089, %v2297
      %2299 = vmatmul.f32.gmra.mxu0 %v1031
      %v2300 = vpop.f32.mrf.mxu0
      %v2301 = vadd.f32 %v2092, %v2300
      %2302 = vmatmul.f32.gmra.mxu0 %v1034
      %v2303 = vpop.f32.mrf.mxu0
      %v2304 = vadd.f32 %v2095, %v2303
      %2305 = vmatmul.f32.gmra.mxu0 %v1043
      %v2306 = vpop.f32.mrf.mxu0
      %v2307 = vadd.f32 %v2098, %v2306
      %2308 = vmatmul.f32.gmra.mxu0 %v1046
      %v2309 = vpop.f32.mrf.mxu0
      %v2310 = vadd.f32 %v2101, %v2309
      %2311 = vmatmul.f32.gmra.mxu0 %v1049
      %v2312 = vpop.f32.mrf.mxu0
      %v2313 = vadd.f32 %v2104, %v2312
      %2314 = vmatmul.f32.gmra.mxu0 %v1052
      %v2315 = vpop.f32.mrf.mxu0
      %v2316 = vadd.f32 %v2107, %v2315
      %2317 = vmatmul.f32.gmra.mxu0 %v1055
      %v2318 = vpop.f32.mrf.mxu0
      %v2319 = vadd.f32 %v2110, %v2318
      %2320 = vmatmul.f32.gmra.mxu0 %v1058
      %v2321 = vpop.f32.mrf.mxu0
      %v2322 = vadd.f32 %v2113, %v2321
      %2323 = vmatmul.f32.gmra.mxu0 %v1061
      %v2324 = vpop.f32.mrf.mxu0
      %v2325 = vadd.f32 %v2116, %v2324
      %2326 = vmatmul.f32.gmra.mxu0 %v1064
      %v2327 = vpop.f32.mrf.mxu0
      %v2328 = vadd.f32 %v2119, %v2327
      %2329 = vmatmul.f32.gmra.mxu0 %v1073
      %v2330 = vpop.f32.mrf.mxu0
      %v2331 = vadd.f32 %v2122, %v2330
      %2332 = vmatmul.f32.gmra.mxu0 %v1076
      %v2333 = vpop.f32.mrf.mxu0
      %v2334 = vadd.f32 %v2125, %v2333
      %2335 = vmatmul.f32.gmra.mxu0 %v1079
      %v2336 = vpop.f32.mrf.mxu0
      %v2337 = vadd.f32 %v2128, %v2336
      %2338 = vmatmul.f32.gmra.mxu0 %v1082
      %v2339 = vpop.f32.mrf.mxu0
      %v2340 = vadd.f32 %v2131, %v2339
      %2341 = vmatmul.f32.gmra.mxu0 %v1085
      %v2342 = vpop.f32.mrf.mxu0
      %v2343 = vadd.f32 %v2134, %v2342
      %2344 = vmatmul.f32.gmra.mxu0 %v1088
      %v2345 = vpop.f32.mrf.mxu0
      %v2346 = vadd.f32 %v2137, %v2345
      %2347 = vmatmul.f32.gmra.mxu0 %v1091
      %v2348 = vpop.f32.mrf.mxu0
      %v2349 = vadd.f32 %v2140, %v2348
      %2350 = vmatmul.f32.gmra.mxu0 %v1094
      %v2351 = vpop.f32.mrf.mxu0
      %v2352 = vadd.f32 %v2143, %v2351
      %2353 = vmatmul.f32.gmra.mxu0 %v1103
      %v2354 = vpop.f32.mrf.mxu0
      %v2355 = vadd.f32 %v2146, %v2354
      %2356 = vmatmul.f32.gmra.mxu0 %v1106
      %v2357 = vpop.f32.mrf.mxu0
      %v2358 = vadd.f32 %v2149, %v2357
      %2359 = vmatmul.f32.gmra.mxu0 %v1109
      %v2360 = vpop.f32.mrf.mxu0
      %v2361 = vadd.f32 %v2152, %v2360
      %2362 = vmatmul.f32.gmra.mxu0 %v1112
      %v2363 = vpop.f32.mrf.mxu0
      %v2364 = vadd.f32 %v2155, %v2363
      %2365 = vmatmul.f32.gmra.mxu0 %v1115
      %v2366 = vpop.f32.mrf.mxu0
      %v2367 = vadd.f32 %v2158, %v2366
      %2368 = vmatmul.f32.gmra.mxu0 %v1118
      %v2369 = vpop.f32.mrf.mxu0
      %v2370 = vadd.f32 %v2161, %v2369
      %2371 = vmatmul.f32.gmra.mxu0 %v1121
      %v2372 = vpop.f32.mrf.mxu0
      %v2373 = vadd.f32 %v2164, %v2372
      %2374 = vmatmul.f32.gmra.mxu0 %v1124
      %v2375 = vpop.f32.mrf.mxu0
      %v2376 = vadd.f32 %v2167, %v2375
      %2377 = vmatmul.f32.gmra.mxu0 %v1133
      %v2378 = vpop.f32.mrf.mxu0
      %v2379 = vadd.f32 %v2170, %v2378
      %2380 = vmatmul.f32.gmra.mxu0 %v1136
      %v2381 = vpop.f32.mrf.mxu0
      %v2382 = vadd.f32 %v2173, %v2381
      %2383 = vmatmul.f32.gmra.mxu0 %v1139
      %v2384 = vpop.f32.mrf.mxu0
      %v2385 = vadd.f32 %v2176, %v2384
      %2386 = vmatmul.f32.gmra.mxu0 %v1142
      %v2387 = vpop.f32.mrf.mxu0
      %v2388 = vadd.f32 %v2179, %v2387
      %2389 = vmatmul.f32.gmra.mxu0 %v1145
      %v2390 = vpop.f32.mrf.mxu0
      %v2391 = vadd.f32 %v2182, %v2390
      %2392 = vmatmul.f32.gmra.mxu0 %v1148
      %v2393 = vpop.f32.mrf.mxu0
      %v2394 = vadd.f32 %v2185, %v2393
      %2395 = vmatmul.f32.gmra.mxu0 %v1151
      %v2396 = vpop.f32.mrf.mxu0
      %v2397 = vadd.f32 %v2188, %v2396
      %2398 = vmatmul.f32.gmra.mxu0 %v1154
      %v2399 = vpop.f32.mrf.mxu0
      %v2400 = vadd.f32 %v2191, %v2399
      %2401 = vmatmul.f32.gmra.mxu0 %v1163
      %v2402 = vpop.f32.mrf.mxu0
      %v2403 = vadd.f32 %v2194, %v2402
      %2404 = vmatmul.f32.gmra.mxu0 %v1166
      %v2405 = vpop.f32.mrf.mxu0
      %v2406 = vadd.f32 %v2197, %v2405
      %2407 = vmatmul.f32.gmra.mxu0 %v1169
      %v2408 = vpop.f32.mrf.mxu0
      %v2409 = vadd.f32 %v2200, %v2408
      %2410 = vmatmul.f32.gmra.mxu0 %v1172
      %v2411 = vpop.f32.mrf.mxu0
      %v2412 = vadd.f32 %v2203, %v2411
      %2413 = vmatmul.f32.gmra.mxu0 %v1175
      %v2414 = vpop.f32.mrf.mxu0
      %v2415 = vadd.f32 %v2206, %v2414
      %2416 = vmatmul.f32.gmra.mxu0 %v1178
      %v2417 = vpop.f32.mrf.mxu0
      %v2418 = vadd.f32 %v2209, %v2417
      %2419 = vmatmul.f32.gmra.mxu0 %v1181
      %v2420 = vpop.f32.mrf.mxu0
      %v2421 = vadd.f32 %v2212, %v2420
      %2422 = vmatmul.f32.gmra.mxu0 %v1184
      %v2423 = vpop.f32.mrf.mxu0
      %v2424 = vadd.f32 %v2215, %v2423
      %2425 = vmatmul.f32.gmra.mxu0 %v1193
      %v2426 = vpop.f32.mrf.mxu0
      %v2427 = vadd.f32 %v2218, %v2426
      %2428 = vmatmul.f32.gmra.mxu0 %v1196
      %v2429 = vpop.f32.mrf.mxu0
      %v2430 = vadd.f32 %v2221, %v2429
      %2431 = vmatmul.f32.gmra.mxu0 %v1199
      %v2432 = vpop.f32.mrf.mxu0
      %v2433 = vadd.f32 %v2224, %v2432
      %2434 = vmatmul.f32.gmra.mxu0 %v1202
      %v2435 = vpop.f32.mrf.mxu0
      %v2436 = vadd.f32 %v2227, %v2435
      %2437 = vmatmul.f32.gmra.mxu0 %v1205
      %v2438 = vpop.f32.mrf.mxu0
      %v2439 = vadd.f32 %v2230, %v2438
      %2440 = vmatmul.f32.gmra.mxu0 %v1208
      %v2441 = vpop.f32.mrf.mxu0
      %v2442 = vadd.f32 %v2233, %v2441
      %2443 = vmatmul.f32.gmra.mxu0 %v1211
      %v2444 = vpop.f32.mrf.mxu0
      %v2445 = vadd.f32 %v2236, %v2444
      %2446 = vmatmul.f32.gmra.mxu0 %v1214
      %v2447 = vpop.f32.mrf.mxu0
      %v2448 = vadd.f32 %v2239, %v2447
      %2449 = vmatmul.f32.gmra.mxu0 %v1223
      %v2450 = vpop.f32.mrf.mxu0
      %v2451 = vadd.f32 %v2242, %v2450
      %2452 = vmatmul.f32.gmra.mxu0 %v1226
      %v2453 = vpop.f32.mrf.mxu0
      %v2454 = vadd.f32 %v2245, %v2453
      %2455 = vmatmul.f32.gmra.mxu0 %v1229
      %v2456 = vpop.f32.mrf.mxu0
      %v2457 = vadd.f32 %v2248, %v2456
      %2458 = vmatmul.f32.gmra.mxu0 %v1232
      %v2459 = vpop.f32.mrf.mxu0
      %v2460 = vadd.f32 %v2251, %v2459
      %2461 = vmatmul.f32.gmra.mxu0 %v1235
      %v2462 = vpop.f32.mrf.mxu0
      %v2463 = vadd.f32 %v2254, %v2462
      %2464 = vmatmul.f32.gmra.mxu0 %v1238
      %v2465 = vpop.f32.mrf.mxu0
      %v2466 = vadd.f32 %v2257, %v2465
      %2467 = vmatmul.f32.gmra.mxu0 %v1241
      %v2468 = vpop.f32.mrf.mxu0
      %v2469 = vadd.f32 %v2260, %v2468
      %2470 = vmatmul.f32.gmra.mxu0 %v1244
      %v2471 = vpop.f32.mrf.mxu0
      %v2472 = vadd.f32 %v2263, %v2471
      %2473 = vdwg.mxu0
      %2474 = vmatpush.msra.mxu0 %v1474
      %2475 = vmatpush.msra.mxu0 %v1473
      %2476 = vmatpush.msra.mxu0 %v1472
      %2477 = vmatpush.msra.mxu0 %v1471
      %2478 = vmatpush.msra.mxu0 %v1470
      %2479 = vmatpush.msra.mxu0 %v1469
      %2480 = vmatpush.msra.mxu0 %v1468
      %2481 = vmatpush.msra.mxu0 %v1467
      %2482 = vmatpush.msra.mxu0 %v1466
      %2483 = vmatpush.msra.mxu0 %v1465
      %2484 = vmatpush.msra.mxu0 %v1464
      %2485 = vmatpush.msra.mxu0 %v1463
      %2486 = vmatpush.msra.mxu0 %v1462
      %2487 = vmatpush.msra.mxu0 %v1461
      %2488 = vmatpush.msra.mxu0 %v1460
      %2489 = vmatpush.msra.mxu0 %v1459
      %2490 = vmatmul.f32.gmra.mxu0 %v211
      %v2491 = vpop.f32.mrf.mxu0
      %v2492 = vadd.f32 %v2283, %v2491
      %2493 = vmatmul.f32.gmra.mxu0 %v213
      %v2494 = vpop.f32.mrf.mxu0
      %v2495 = vadd.f32 %v2286, %v2494
      %2496 = vmatmul.f32.gmra.mxu0 %v215
      %v2497 = vpop.f32.mrf.mxu0
      %v2498 = vadd.f32 %v2289, %v2497
      %2499 = vmatmul.f32.gmra.mxu0 %v217
      %v2500 = vpop.f32.mrf.mxu0
      %v2501 = vadd.f32 %v2292, %v2500
      %2502 = vmatmul.f32.gmra.mxu0 %v219
      %v2503 = vpop.f32.mrf.mxu0
      %v2504 = vadd.f32 %v2295, %v2503
      %2505 = vmatmul.f32.gmra.mxu0 %v221
      %v2506 = vpop.f32.mrf.mxu0
      %v2507 = vadd.f32 %v2298, %v2506
      %2508 = vmatmul.f32.gmra.mxu0 %v223
      %v2509 = vpop.f32.mrf.mxu0
      %v2510 = vadd.f32 %v2301, %v2509
      %2511 = vmatmul.f32.gmra.mxu0 %v225
      %v2512 = vpop.f32.mrf.mxu0
      %v2513 = vadd.f32 %v2304, %v2512
      %2514 = vmatmul.f32.gmra.mxu0 %v231
      %v2515 = vpop.f32.mrf.mxu0
      %v2516 = vadd.f32 %v2307, %v2515
      %2517 = vmatmul.f32.gmra.mxu0 %v233
      %v2518 = vpop.f32.mrf.mxu0
      %v2519 = vadd.f32 %v2310, %v2518
      %2520 = vmatmul.f32.gmra.mxu0 %v235
      %v2521 = vpop.f32.mrf.mxu0
      %v2522 = vadd.f32 %v2313, %v2521
      %2523 = vmatmul.f32.gmra.mxu0 %v237
      %v2524 = vpop.f32.mrf.mxu0
      %v2525 = vadd.f32 %v2316, %v2524
      %2526 = vmatmul.f32.gmra.mxu0 %v239
      %v2527 = vpop.f32.mrf.mxu0
      %v2528 = vadd.f32 %v2319, %v2527
      %2529 = vmatmul.f32.gmra.mxu0 %v241
      %v2530 = vpop.f32.mrf.mxu0
      %v2531 = vadd.f32 %v2322, %v2530
      %2532 = vmatmul.f32.gmra.mxu0 %v243
      %v2533 = vpop.f32.mrf.mxu0
      %v2534 = vadd.f32 %v2325, %v2533
      %2535 = vmatmul.f32.gmra.mxu0 %v245
      %v2536 = vpop.f32.mrf.mxu0
      %v2537 = vadd.f32 %v2328, %v2536
      %2538 = vmatmul.f32.gmra.mxu0 %v251
      %v2539 = vpop.f32.mrf.mxu0
      %v2540 = vadd.f32 %v2331, %v2539
      %2541 = vmatmul.f32.gmra.mxu0 %v253
      %v2542 = vpop.f32.mrf.mxu0
      %v2543 = vadd.f32 %v2334, %v2542
      %2544 = vmatmul.f32.gmra.mxu0 %v255
      %v2545 = vpop.f32.mrf.mxu0
      %v2546 = vadd.f32 %v2337, %v2545
      %2547 = vmatmul.f32.gmra.mxu0 %v257
      %v2548 = vpop.f32.mrf.mxu0
      %v2549 = vadd.f32 %v2340, %v2548
      %2550 = vmatmul.f32.gmra.mxu0 %v259
      %v2551 = vpop.f32.mrf.mxu0
      %v2552 = vadd.f32 %v2343, %v2551
      %2553 = vmatmul.f32.gmra.mxu0 %v261
      %v2554 = vpop.f32.mrf.mxu0
      %v2555 = vadd.f32 %v2346, %v2554
      %2556 = vmatmul.f32.gmra.mxu0 %v263
      %v2557 = vpop.f32.mrf.mxu0
      %v2558 = vadd.f32 %v2349, %v2557
      %2559 = vmatmul.f32.gmra.mxu0 %v265
      %v2560 = vpop.f32.mrf.mxu0
      %v2561 = vadd.f32 %v2352, %v2560
      %2562 = vmatmul.f32.gmra.mxu0 %v271
      %v2563 = vpop.f32.mrf.mxu0
      %v2564 = vadd.f32 %v2355, %v2563
      %2565 = vmatmul.f32.gmra.mxu0 %v273
      %v2566 = vpop.f32.mrf.mxu0
      %v2567 = vadd.f32 %v2358, %v2566
      %2568 = vmatmul.f32.gmra.mxu0 %v275
      %v2569 = vpop.f32.mrf.mxu0
      %v2570 = vadd.f32 %v2361, %v2569
      %2571 = vmatmul.f32.gmra.mxu0 %v277
      %v2572 = vpop.f32.mrf.mxu0
      %v2573 = vadd.f32 %v2364, %v2572
      %2574 = vmatmul.f32.gmra.mxu0 %v279
      %v2575 = vpop.f32.mrf.mxu0
      %v2576 = vadd.f32 %v2367, %v2575
      %2577 = vmatmul.f32.gmra.mxu0 %v281
      %v2578 = vpop.f32.mrf.mxu0
      %v2579 = vadd.f32 %v2370, %v2578
      %2580 = vmatmul.f32.gmra.mxu0 %v283
      %v2581 = vpop.f32.mrf.mxu0
      %v2582 = vadd.f32 %v2373, %v2581
      %2583 = vmatmul.f32.gmra.mxu0 %v285
      %v2584 = vpop.f32.mrf.mxu0
      %v2585 = vadd.f32 %v2376, %v2584
      %2586 = vmatmul.f32.gmra.mxu0 %v291
      %v2587 = vpop.f32.mrf.mxu0
      %v2588 = vadd.f32 %v2379, %v2587
      %2589 = vmatmul.f32.gmra.mxu0 %v293
      %v2590 = vpop.f32.mrf.mxu0
      %v2591 = vadd.f32 %v2382, %v2590
      %2592 = vmatmul.f32.gmra.mxu0 %v295
      %v2593 = vpop.f32.mrf.mxu0
      %v2594 = vadd.f32 %v2385, %v2593
      %2595 = vmatmul.f32.gmra.mxu0 %v297
      %v2596 = vpop.f32.mrf.mxu0
      %v2597 = vadd.f32 %v2388, %v2596
      %2598 = vmatmul.f32.gmra.mxu0 %v299
      %v2599 = vpop.f32.mrf.mxu0
      %v2600 = vadd.f32 %v2391, %v2599
      %2601 = vmatmul.f32.gmra.mxu0 %v301
      %v2602 = vpop.f32.mrf.mxu0
      %v2603 = vadd.f32 %v2394, %v2602
      %2604 = vmatmul.f32.gmra.mxu0 %v303
      %v2605 = vpop.f32.mrf.mxu0
      %v2606 = vadd.f32 %v2397, %v2605
      %2607 = vmatmul.f32.gmra.mxu0 %v305
      %v2608 = vpop.f32.mrf.mxu0
      %v2609 = vadd.f32 %v2400, %v2608
      %2610 = vmatmul.f32.gmra.mxu0 %v311
      %v2611 = vpop.f32.mrf.mxu0
      %v2612 = vadd.f32 %v2403, %v2611
      %2613 = vmatmul.f32.gmra.mxu0 %v313
      %v2614 = vpop.f32.mrf.mxu0
      %v2615 = vadd.f32 %v2406, %v2614
      %2616 = vmatmul.f32.gmra.mxu0 %v315
      %v2617 = vpop.f32.mrf.mxu0
      %v2618 = vadd.f32 %v2409, %v2617
      %2619 = vmatmul.f32.gmra.mxu0 %v317
      %v2620 = vpop.f32.mrf.mxu0
      %v2621 = vadd.f32 %v2412, %v2620
      %2622 = vmatmul.f32.gmra.mxu0 %v319
      %v2623 = vpop.f32.mrf.mxu0
      %v2624 = vadd.f32 %v2415, %v2623
      %2625 = vmatmul.f32.gmra.mxu0 %v321
      %v2626 = vpop.f32.mrf.mxu0
      %v2627 = vadd.f32 %v2418, %v2626
      %2628 = vmatmul.f32.gmra.mxu0 %v323
      %v2629 = vpop.f32.mrf.mxu0
      %v2630 = vadd.f32 %v2421, %v2629
      %2631 = vmatmul.f32.gmra.mxu0 %v325
      %v2632 = vpop.f32.mrf.mxu0
      %v2633 = vadd.f32 %v2424, %v2632
      %2634 = vmatmul.f32.gmra.mxu0 %v331
      %v2635 = vpop.f32.mrf.mxu0
      %v2636 = vadd.f32 %v2427, %v2635
      %2637 = vmatmul.f32.gmra.mxu0 %v333
      %v2638 = vpop.f32.mrf.mxu0
      %v2639 = vadd.f32 %v2430, %v2638
      %2640 = vmatmul.f32.gmra.mxu0 %v335
      %v2641 = vpop.f32.mrf.mxu0
      %v2642 = vadd.f32 %v2433, %v2641
      %2643 = vmatmul.f32.gmra.mxu0 %v337
      %v2644 = vpop.f32.mrf.mxu0
      %v2645 = vadd.f32 %v2436, %v2644
      %2646 = vmatmul.f32.gmra.mxu0 %v339
      %v2647 = vpop.f32.mrf.mxu0
      %v2648 = vadd.f32 %v2439, %v2647
      %2649 = vmatmul.f32.gmra.mxu0 %v341
      %v2650 = vpop.f32.mrf.mxu0
      %v2651 = vadd.f32 %v2442, %v2650
      %2652 = vmatmul.f32.gmra.mxu0 %v343
      %v2653 = vpop.f32.mrf.mxu0
      %v2654 = vadd.f32 %v2445, %v2653
      %2655 = vmatmul.f32.gmra.mxu0 %v345
      %v2656 = vpop.f32.mrf.mxu0
      %v2657 = vadd.f32 %v2448, %v2656
      %2658 = vmatmul.f32.gmra.mxu0 %v351
      %v2659 = vpop.f32.mrf.mxu0
      %v2660 = vadd.f32 %v2451, %v2659
      %2661 = vmatmul.f32.gmra.mxu0 %v353
      %v2662 = vpop.f32.mrf.mxu0
      %v2663 = vadd.f32 %v2454, %v2662
      %2664 = vmatmul.f32.gmra.mxu0 %v355
      %v2665 = vpop.f32.mrf.mxu0
      %v2666 = vadd.f32 %v2457, %v2665
      %2667 = vmatmul.f32.gmra.mxu0 %v357
      %v2668 = vpop.f32.mrf.mxu0
      %v2669 = vadd.f32 %v2460, %v2668
      %2670 = vmatmul.f32.gmra.mxu0 %v359
      %v2671 = vpop.f32.mrf.mxu0
      %v2672 = vadd.f32 %v2463, %v2671
      %2673 = vmatmul.f32.gmra.mxu0 %v361
      %v2674 = vpop.f32.mrf.mxu0
      %v2675 = vadd.f32 %v2466, %v2674
      %2676 = vmatmul.f32.gmra.mxu0 %v363
      %v2677 = vpop.f32.mrf.mxu0
      %v2678 = vadd.f32 %v2469, %v2677
      %2679 = vmatmul.f32.gmra.mxu0 %v365
      %v2680 = vpop.f32.mrf.mxu0
      %v2681 = vadd.f32 %v2472, %v2680
      %2682 = vdwg.mxu0
      %2683 = vmatpush.msra.mxu0 %v1490
      %2684 = vmatpush.msra.mxu0 %v1489
      %2685 = vmatpush.msra.mxu0 %v1488
      %2686 = vmatpush.msra.mxu0 %v1487
      %2687 = vmatpush.msra.mxu0 %v1486
      %2688 = vmatpush.msra.mxu0 %v1485
      %2689 = vmatpush.msra.mxu0 %v1484
      %2690 = vmatpush.msra.mxu0 %v1483
      %2691 = vmatpush.msra.mxu0 %v1482
      %2692 = vmatpush.msra.mxu0 %v1481
      %2693 = vmatpush.msra.mxu0 %v1480
      %2694 = vmatpush.msra.mxu0 %v1479
      %2695 = vmatpush.msra.mxu0 %v1478
      %2696 = vmatpush.msra.mxu0 %v1477
      %2697 = vmatpush.msra.mxu0 %v1476
      %2698 = vmatpush.msra.mxu0 %v1475
      %2699 = vmatmul.f32.gmra.mxu0 %v615
      %v2700 = vpop.f32.mrf.mxu0
      %v2701 = vadd.f32 %v2492, %v2700
      %2702 = vmatmul.f32.gmra.mxu0 %v618
      %v2703 = vpop.f32.mrf.mxu0
      %v2704 = vadd.f32 %v2495, %v2703
      %2705 = vmatmul.f32.gmra.mxu0 %v621
      %v2706 = vpop.f32.mrf.mxu0
      %v2707 = vadd.f32 %v2498, %v2706
      %2708 = vmatmul.f32.gmra.mxu0 %v624
      %v2709 = vpop.f32.mrf.mxu0
      %v2710 = vadd.f32 %v2501, %v2709
      %2711 = vmatmul.f32.gmra.mxu0 %v627
      %v2712 = vpop.f32.mrf.mxu0
      %v2713 = vadd.f32 %v2504, %v2712
      %2714 = vmatmul.f32.gmra.mxu0 %v630
      %v2715 = vpop.f32.mrf.mxu0
      %v2716 = vadd.f32 %v2507, %v2715
      %2717 = vmatmul.f32.gmra.mxu0 %v633
      %v2718 = vpop.f32.mrf.mxu0
      %v2719 = vadd.f32 %v2510, %v2718
      %2720 = vmatmul.f32.gmra.mxu0 %v636
      %v2721 = vpop.f32.mrf.mxu0
      %v2722 = vadd.f32 %v2513, %v2721
      %2723 = vmatmul.f32.gmra.mxu0 %v645
      %v2724 = vpop.f32.mrf.mxu0
      %v2725 = vadd.f32 %v2516, %v2724
      %2726 = vmatmul.f32.gmra.mxu0 %v648
      %v2727 = vpop.f32.mrf.mxu0
      %v2728 = vadd.f32 %v2519, %v2727
      %2729 = vmatmul.f32.gmra.mxu0 %v651
      %v2730 = vpop.f32.mrf.mxu0
      %v2731 = vadd.f32 %v2522, %v2730
      %2732 = vmatmul.f32.gmra.mxu0 %v654
      %v2733 = vpop.f32.mrf.mxu0
      %v2734 = vadd.f32 %v2525, %v2733
      %2735 = vmatmul.f32.gmra.mxu0 %v657
      %v2736 = vpop.f32.mrf.mxu0
      %v2737 = vadd.f32 %v2528, %v2736
      %2738 = vmatmul.f32.gmra.mxu0 %v660
      %v2739 = vpop.f32.mrf.mxu0
      %v2740 = vadd.f32 %v2531, %v2739
      %2741 = vmatmul.f32.gmra.mxu0 %v663
      %v2742 = vpop.f32.mrf.mxu0
      %v2743 = vadd.f32 %v2534, %v2742
      %2744 = vmatmul.f32.gmra.mxu0 %v666
      %v2745 = vpop.f32.mrf.mxu0
      %v2746 = vadd.f32 %v2537, %v2745
      %2747 = vmatmul.f32.gmra.mxu0 %v675
      %v2748 = vpop.f32.mrf.mxu0
      %v2749 = vadd.f32 %v2540, %v2748
      %2750 = vmatmul.f32.gmra.mxu0 %v678
      %v2751 = vpop.f32.mrf.mxu0
      %v2752 = vadd.f32 %v2543, %v2751
      %2753 = vmatmul.f32.gmra.mxu0 %v681
      %v2754 = vpop.f32.mrf.mxu0
      %v2755 = vadd.f32 %v2546, %v2754
      %2756 = vmatmul.f32.gmra.mxu0 %v684
      %v2757 = vpop.f32.mrf.mxu0
      %v2758 = vadd.f32 %v2549, %v2757
      %2759 = vmatmul.f32.gmra.mxu0 %v687
      %v2760 = vpop.f32.mrf.mxu0
      %v2761 = vadd.f32 %v2552, %v2760
      %2762 = vmatmul.f32.gmra.mxu0 %v690
      %v2763 = vpop.f32.mrf.mxu0
      %v2764 = vadd.f32 %v2555, %v2763
      %2765 = vmatmul.f32.gmra.mxu0 %v693
      %v2766 = vpop.f32.mrf.mxu0
      %v2767 = vadd.f32 %v2558, %v2766
      %2768 = vmatmul.f32.gmra.mxu0 %v696
      %v2769 = vpop.f32.mrf.mxu0
      %v2770 = vadd.f32 %v2561, %v2769
      %2771 = vmatmul.f32.gmra.mxu0 %v705
      %v2772 = vpop.f32.mrf.mxu0
      %v2773 = vadd.f32 %v2564, %v2772
      %2774 = vmatmul.f32.gmra.mxu0 %v708
      %v2775 = vpop.f32.mrf.mxu0
      %v2776 = vadd.f32 %v2567, %v2775
      %2777 = vmatmul.f32.gmra.mxu0 %v711
      %v2778 = vpop.f32.mrf.mxu0
      %v2779 = vadd.f32 %v2570, %v2778
      %2780 = vmatmul.f32.gmra.mxu0 %v714
      %v2781 = vpop.f32.mrf.mxu0
      %v2782 = vadd.f32 %v2573, %v2781
      %2783 = vmatmul.f32.gmra.mxu0 %v717
      %v2784 = vpop.f32.mrf.mxu0
      %v2785 = vadd.f32 %v2576, %v2784
      %2786 = vmatmul.f32.gmra.mxu0 %v720
      %v2787 = vpop.f32.mrf.mxu0
      %v2788 = vadd.f32 %v2579, %v2787
      %2789 = vmatmul.f32.gmra.mxu0 %v723
      %v2790 = vpop.f32.mrf.mxu0
      %v2791 = vadd.f32 %v2582, %v2790
      %2792 = vmatmul.f32.gmra.mxu0 %v726
      %v2793 = vpop.f32.mrf.mxu0
      %v2794 = vadd.f32 %v2585, %v2793
      %2795 = vmatmul.f32.gmra.mxu0 %v735
      %v2796 = vpop.f32.mrf.mxu0
      %v2797 = vadd.f32 %v2588, %v2796
      %2798 = vmatmul.f32.gmra.mxu0 %v738
      %v2799 = vpop.f32.mrf.mxu0
      %v2800 = vadd.f32 %v2591, %v2799
      %2801 = vmatmul.f32.gmra.mxu0 %v741
      %v2802 = vpop.f32.mrf.mxu0
      %v2803 = vadd.f32 %v2594, %v2802
      %2804 = vmatmul.f32.gmra.mxu0 %v744
      %v2805 = vpop.f32.mrf.mxu0
      %v2806 = vadd.f32 %v2597, %v2805
      %2807 = vmatmul.f32.gmra.mxu0 %v747
      %v2808 = vpop.f32.mrf.mxu0
      %v2809 = vadd.f32 %v2600, %v2808
      %2810 = vmatmul.f32.gmra.mxu0 %v750
      %v2811 = vpop.f32.mrf.mxu0
      %v2812 = vadd.f32 %v2603, %v2811
      %2813 = vmatmul.f32.gmra.mxu0 %v753
      %v2814 = vpop.f32.mrf.mxu0
      %v2815 = vadd.f32 %v2606, %v2814
      %2816 = vmatmul.f32.gmra.mxu0 %v756
      %v2817 = vpop.f32.mrf.mxu0
      %v2818 = vadd.f32 %v2609, %v2817
      %2819 = vmatmul.f32.gmra.mxu0 %v765
      %v2820 = vpop.f32.mrf.mxu0
      %v2821 = vadd.f32 %v2612, %v2820
      %2822 = vmatmul.f32.gmra.mxu0 %v768
      %v2823 = vpop.f32.mrf.mxu0
      %v2824 = vadd.f32 %v2615, %v2823
      %2825 = vmatmul.f32.gmra.mxu0 %v771
      %v2826 = vpop.f32.mrf.mxu0
      %v2827 = vadd.f32 %v2618, %v2826
      %2828 = vmatmul.f32.gmra.mxu0 %v774
      %v2829 = vpop.f32.mrf.mxu0
      %v2830 = vadd.f32 %v2621, %v2829
      %2831 = vmatmul.f32.gmra.mxu0 %v777
      %v2832 = vpop.f32.mrf.mxu0
      %v2833 = vadd.f32 %v2624, %v2832
      %2834 = vmatmul.f32.gmra.mxu0 %v780
      %v2835 = vpop.f32.mrf.mxu0
      %v2836 = vadd.f32 %v2627, %v2835
      %2837 = vmatmul.f32.gmra.mxu0 %v783
      %v2838 = vpop.f32.mrf.mxu0
      %v2839 = vadd.f32 %v2630, %v2838
      %2840 = vmatmul.f32.gmra.mxu0 %v786
      %v2841 = vpop.f32.mrf.mxu0
      %v2842 = vadd.f32 %v2633, %v2841
      %2843 = vmatmul.f32.gmra.mxu0 %v795
      %v2844 = vpop.f32.mrf.mxu0
      %v2845 = vadd.f32 %v2636, %v2844
      %2846 = vmatmul.f32.gmra.mxu0 %v798
      %v2847 = vpop.f32.mrf.mxu0
      %v2848 = vadd.f32 %v2639, %v2847
      %2849 = vmatmul.f32.gmra.mxu0 %v801
      %v2850 = vpop.f32.mrf.mxu0
      %v2851 = vadd.f32 %v2642, %v2850
      %2852 = vmatmul.f32.gmra.mxu0 %v804
      %v2853 = vpop.f32.mrf.mxu0
      %v2854 = vadd.f32 %v2645, %v2853
      %2855 = vmatmul.f32.gmra.mxu0 %v807
      %v2856 = vpop.f32.mrf.mxu0
      %v2857 = vadd.f32 %v2648, %v2856
      %2858 = vmatmul.f32.gmra.mxu0 %v810
      %v2859 = vpop.f32.mrf.mxu0
      %v2860 = vadd.f32 %v2651, %v2859
      %2861 = vmatmul.f32.gmra.mxu0 %v813
      %v2862 = vpop.f32.mrf.mxu0
      %v2863 = vadd.f32 %v2654, %v2862
      %2864 = vmatmul.f32.gmra.mxu0 %v816
      %v2865 = vpop.f32.mrf.mxu0
      %v2866 = vadd.f32 %v2657, %v2865
      %2867 = vmatmul.f32.gmra.mxu0 %v825
      %v2868 = vpop.f32.mrf.mxu0
      %v2869 = vadd.f32 %v2660, %v2868
      %2870 = vmatmul.f32.gmra.mxu0 %v828
      %v2871 = vpop.f32.mrf.mxu0
      %v2872 = vadd.f32 %v2663, %v2871
      %2873 = vmatmul.f32.gmra.mxu0 %v831
      %v2874 = vpop.f32.mrf.mxu0
      %v2875 = vadd.f32 %v2666, %v2874
      %2876 = vmatmul.f32.gmra.mxu0 %v834
      %v2877 = vpop.f32.mrf.mxu0
      %v2878 = vadd.f32 %v2669, %v2877
      %2879 = vmatmul.f32.gmra.mxu0 %v837
      %v2880 = vpop.f32.mrf.mxu0
      %v2881 = vadd.f32 %v2672, %v2880
      %2882 = vmatmul.f32.gmra.mxu0 %v840
      %v2883 = vpop.f32.mrf.mxu0
      %v2884 = vadd.f32 %v2675, %v2883
      %2885 = vmatmul.f32.gmra.mxu0 %v843
      %v2886 = vpop.f32.mrf.mxu0
      %v2887 = vadd.f32 %v2678, %v2886
      %2888 = vmatmul.f32.gmra.mxu0 %v846
      %v2889 = vpop.f32.mrf.mxu0
      %v2890 = vadd.f32 %v2681, %v2889
      %2891 = vdwg.mxu0
      %2892 = vmatpush.msra.mxu0 %v1506
      %2893 = vmatpush.msra.mxu0 %v1505
      %2894 = vmatpush.msra.mxu0 %v1504
      %2895 = vmatpush.msra.mxu0 %v1503
      %2896 = vmatpush.msra.mxu0 %v1502
      %2897 = vmatpush.msra.mxu0 %v1501
      %2898 = vmatpush.msra.mxu0 %v1500
      %2899 = vmatpush.msra.mxu0 %v1499
      %2900 = vmatpush.msra.mxu0 %v1498
      %2901 = vmatpush.msra.mxu0 %v1497
      %2902 = vmatpush.msra.mxu0 %v1496
      %2903 = vmatpush.msra.mxu0 %v1495
      %2904 = vmatpush.msra.mxu0 %v1494
      %2905 = vmatpush.msra.mxu0 %v1493
      %2906 = vmatpush.msra.mxu0 %v1492
      %2907 = vmatpush.msra.mxu0 %v1491
      %2908 = vmatmul.f32.gmra.mxu0 %v1016
      %v2909 = vpop.f32.mrf.mxu0
      %v2910 = vadd.f32 %v2701, %v2909
      %2911 = vmatmul.f32.gmra.mxu0 %v1019
      %v2912 = vpop.f32.mrf.mxu0
      %v2913 = vadd.f32 %v2704, %v2912
      %2914 = vmatmul.f32.gmra.mxu0 %v1022
      %v2915 = vpop.f32.mrf.mxu0
      %v2916 = vadd.f32 %v2707, %v2915
      %2917 = vmatmul.f32.gmra.mxu0 %v1025
      %v2918 = vpop.f32.mrf.mxu0
      %v2919 = vadd.f32 %v2710, %v2918
      %2920 = vmatmul.f32.gmra.mxu0 %v1028
      %v2921 = vpop.f32.mrf.mxu0
      %v2922 = vadd.f32 %v2713, %v2921
      %2923 = vmatmul.f32.gmra.mxu0 %v1031
      %v2924 = vpop.f32.mrf.mxu0
      %v2925 = vadd.f32 %v2716, %v2924
      %2926 = vmatmul.f32.gmra.mxu0 %v1034
      %v2927 = vpop.f32.mrf.mxu0
      %v2928 = vadd.f32 %v2719, %v2927
      %2929 = vmatmul.f32.gmra.mxu0 %v1037
      %v2930 = vpop.f32.mrf.mxu0
      %v2931 = vadd.f32 %v2722, %v2930
      %2932 = vmatmul.f32.gmra.mxu0 %v1046
      %v2933 = vpop.f32.mrf.mxu0
      %v2934 = vadd.f32 %v2725, %v2933
      %2935 = vmatmul.f32.gmra.mxu0 %v1049
      %v2936 = vpop.f32.mrf.mxu0
      %v2937 = vadd.f32 %v2728, %v2936
      %2938 = vmatmul.f32.gmra.mxu0 %v1052
      %v2939 = vpop.f32.mrf.mxu0
      %v2940 = vadd.f32 %v2731, %v2939
      %2941 = vmatmul.f32.gmra.mxu0 %v1055
      %v2942 = vpop.f32.mrf.mxu0
      %v2943 = vadd.f32 %v2734, %v2942
      %2944 = vmatmul.f32.gmra.mxu0 %v1058
      %v2945 = vpop.f32.mrf.mxu0
      %v2946 = vadd.f32 %v2737, %v2945
      %2947 = vmatmul.f32.gmra.mxu0 %v1061
      %v2948 = vpop.f32.mrf.mxu0
      %v2949 = vadd.f32 %v2740, %v2948
      %2950 = vmatmul.f32.gmra.mxu0 %v1064
      %v2951 = vpop.f32.mrf.mxu0
      %v2952 = vadd.f32 %v2743, %v2951
      %2953 = vmatmul.f32.gmra.mxu0 %v1067
      %v2954 = vpop.f32.mrf.mxu0
      %v2955 = vadd.f32 %v2746, %v2954
      %2956 = vmatmul.f32.gmra.mxu0 %v1076
      %v2957 = vpop.f32.mrf.mxu0
      %v2958 = vadd.f32 %v2749, %v2957
      %2959 = vmatmul.f32.gmra.mxu0 %v1079
      %v2960 = vpop.f32.mrf.mxu0
      %v2961 = vadd.f32 %v2752, %v2960
      %2962 = vmatmul.f32.gmra.mxu0 %v1082
      %v2963 = vpop.f32.mrf.mxu0
      %v2964 = vadd.f32 %v2755, %v2963
      %2965 = vmatmul.f32.gmra.mxu0 %v1085
      %v2966 = vpop.f32.mrf.mxu0
      %v2967 = vadd.f32 %v2758, %v2966
      %2968 = vmatmul.f32.gmra.mxu0 %v1088
      %v2969 = vpop.f32.mrf.mxu0
      %v2970 = vadd.f32 %v2761, %v2969
      %2971 = vmatmul.f32.gmra.mxu0 %v1091
      %v2972 = vpop.f32.mrf.mxu0
      %v2973 = vadd.f32 %v2764, %v2972
      %2974 = vmatmul.f32.gmra.mxu0 %v1094
      %v2975 = vpop.f32.mrf.mxu0
      %v2976 = vadd.f32 %v2767, %v2975
      %2977 = vmatmul.f32.gmra.mxu0 %v1097
      %v2978 = vpop.f32.mrf.mxu0
      %v2979 = vadd.f32 %v2770, %v2978
      %2980 = vmatmul.f32.gmra.mxu0 %v1106
      %v2981 = vpop.f32.mrf.mxu0
      %v2982 = vadd.f32 %v2773, %v2981
      %2983 = vmatmul.f32.gmra.mxu0 %v1109
      %v2984 = vpop.f32.mrf.mxu0
      %v2985 = vadd.f32 %v2776, %v2984
      %2986 = vmatmul.f32.gmra.mxu0 %v1112
      %v2987 = vpop.f32.mrf.mxu0
      %v2988 = vadd.f32 %v2779, %v2987
      %2989 = vmatmul.f32.gmra.mxu0 %v1115
      %v2990 = vpop.f32.mrf.mxu0
      %v2991 = vadd.f32 %v2782, %v2990
      %2992 = vmatmul.f32.gmra.mxu0 %v1118
      %v2993 = vpop.f32.mrf.mxu0
      %v2994 = vadd.f32 %v2785, %v2993
      %2995 = vmatmul.f32.gmra.mxu0 %v1121
      %v2996 = vpop.f32.mrf.mxu0
      %v2997 = vadd.f32 %v2788, %v2996
      %2998 = vmatmul.f32.gmra.mxu0 %v1124
      %v2999 = vpop.f32.mrf.mxu0
      %v3000 = vadd.f32 %v2791, %v2999
      %3001 = vmatmul.f32.gmra.mxu0 %v1127
      %v3002 = vpop.f32.mrf.mxu0
      %v3003 = vadd.f32 %v2794, %v3002
      %3004 = vmatmul.f32.gmra.mxu0 %v1136
      %v3005 = vpop.f32.mrf.mxu0
      %v3006 = vadd.f32 %v2797, %v3005
      %3007 = vmatmul.f32.gmra.mxu0 %v1139
      %v3008 = vpop.f32.mrf.mxu0
      %v3009 = vadd.f32 %v2800, %v3008
      %3010 = vmatmul.f32.gmra.mxu0 %v1142
      %v3011 = vpop.f32.mrf.mxu0
      %v3012 = vadd.f32 %v2803, %v3011
      %3013 = vmatmul.f32.gmra.mxu0 %v1145
      %v3014 = vpop.f32.mrf.mxu0
      %v3015 = vadd.f32 %v2806, %v3014
      %3016 = vmatmul.f32.gmra.mxu0 %v1148
      %v3017 = vpop.f32.mrf.mxu0
      %v3018 = vadd.f32 %v2809, %v3017
      %3019 = vmatmul.f32.gmra.mxu0 %v1151
      %v3020 = vpop.f32.mrf.mxu0
      %v3021 = vadd.f32 %v2812, %v3020
      %3022 = vmatmul.f32.gmra.mxu0 %v1154
      %v3023 = vpop.f32.mrf.mxu0
      %v3024 = vadd.f32 %v2815, %v3023
      %3025 = vmatmul.f32.gmra.mxu0 %v1157
      %v3026 = vpop.f32.mrf.mxu0
      %v3027 = vadd.f32 %v2818, %v3026
      %3028 = vmatmul.f32.gmra.mxu0 %v1166
      %v3029 = vpop.f32.mrf.mxu0
      %v3030 = vadd.f32 %v2821, %v3029
      %3031 = vmatmul.f32.gmra.mxu0 %v1169
      %v3032 = vpop.f32.mrf.mxu0
      %v3033 = vadd.f32 %v2824, %v3032
      %3034 = vmatmul.f32.gmra.mxu0 %v1172
      %v3035 = vpop.f32.mrf.mxu0
      %v3036 = vadd.f32 %v2827, %v3035
      %3037 = vmatmul.f32.gmra.mxu0 %v1175
      %v3038 = vpop.f32.mrf.mxu0
      %v3039 = vadd.f32 %v2830, %v3038
      %3040 = vmatmul.f32.gmra.mxu0 %v1178
      %v3041 = vpop.f32.mrf.mxu0
      %v3042 = vadd.f32 %v2833, %v3041
      %3043 = vmatmul.f32.gmra.mxu0 %v1181
      %v3044 = vpop.f32.mrf.mxu0
      %v3045 = vadd.f32 %v2836, %v3044
      %3046 = vmatmul.f32.gmra.mxu0 %v1184
      %v3047 = vpop.f32.mrf.mxu0
      %v3048 = vadd.f32 %v2839, %v3047
      %3049 = vmatmul.f32.gmra.mxu0 %v1187
      %v3050 = vpop.f32.mrf.mxu0
      %v3051 = vadd.f32 %v2842, %v3050
      %3052 = vmatmul.f32.gmra.mxu0 %v1196
      %v3053 = vpop.f32.mrf.mxu0
      %v3054 = vadd.f32 %v2845, %v3053
      %3055 = vmatmul.f32.gmra.mxu0 %v1199
      %v3056 = vpop.f32.mrf.mxu0
      %v3057 = vadd.f32 %v2848, %v3056
      %3058 = vmatmul.f32.gmra.mxu0 %v1202
      %v3059 = vpop.f32.mrf.mxu0
      %v3060 = vadd.f32 %v2851, %v3059
      %3061 = vmatmul.f32.gmra.mxu0 %v1205
      %v3062 = vpop.f32.mrf.mxu0
      %v3063 = vadd.f32 %v2854, %v3062
      %3064 = vmatmul.f32.gmra.mxu0 %v1208
      %v3065 = vpop.f32.mrf.mxu0
      %v3066 = vadd.f32 %v2857, %v3065
      %3067 = vmatmul.f32.gmra.mxu0 %v1211
      %v3068 = vpop.f32.mrf.mxu0
      %v3069 = vadd.f32 %v2860, %v3068
      %3070 = vmatmul.f32.gmra.mxu0 %v1214
      %v3071 = vpop.f32.mrf.mxu0
      %v3072 = vadd.f32 %v2863, %v3071
      %3073 = vmatmul.f32.gmra.mxu0 %v1217
      %v3074 = vpop.f32.mrf.mxu0
      %v3075 = vadd.f32 %v2866, %v3074
      %3076 = vmatmul.f32.gmra.mxu0 %v1226
      %v3077 = vpop.f32.mrf.mxu0
      %v3078 = vadd.f32 %v2869, %v3077
      %3079 = vmatmul.f32.gmra.mxu0 %v1229
      %v3080 = vpop.f32.mrf.mxu0
      %v3081 = vadd.f32 %v2872, %v3080
      %3082 = vmatmul.f32.gmra.mxu0 %v1232
      %v3083 = vpop.f32.mrf.mxu0
      %v3084 = vadd.f32 %v2875, %v3083
      %3085 = vmatmul.f32.gmra.mxu0 %v1235
      %v3086 = vpop.f32.mrf.mxu0
      %v3087 = vadd.f32 %v2878, %v3086
      %3088 = vmatmul.f32.gmra.mxu0 %v1238
      %v3089 = vpop.f32.mrf.mxu0
      %v3090 = vadd.f32 %v2881, %v3089
      %3091 = vmatmul.f32.gmra.mxu0 %v1241
      %v3092 = vpop.f32.mrf.mxu0
      %v3093 = vadd.f32 %v2884, %v3092
      %3094 = vmatmul.f32.gmra.mxu0 %v1244
      %v3095 = vpop.f32.mrf.mxu0
      %v3096 = vadd.f32 %v2887, %v3095
      %3097 = vmatmul.f32.gmra.mxu0 %v1247
      %v3098 = vpop.f32.mrf.mxu0
      %v3099 = vadd.f32 %v2890, %v3098
      %3100 = vdwg.mxu0
      %3101 = vmatpush.msra.mxu0 %v1522
      %3102 = vmatpush.msra.mxu0 %v1521
      %3103 = vmatpush.msra.mxu0 %v1520
      %3104 = vmatpush.msra.mxu0 %v1519
      %3105 = vmatpush.msra.mxu0 %v1518
      %3106 = vmatpush.msra.mxu0 %v1517
      %3107 = vmatpush.msra.mxu0 %v1516
      %3108 = vmatpush.msra.mxu0 %v1515
      %3109 = vmatpush.msra.mxu0 %v1514
      %3110 = vmatpush.msra.mxu0 %v1513
      %3111 = vmatpush.msra.mxu0 %v1512
      %3112 = vmatpush.msra.mxu0 %v1511
      %3113 = vmatpush.msra.mxu0 %v1510
      %3114 = vmatpush.msra.mxu0 %v1509
      %3115 = vmatpush.msra.mxu0 %v1508
      %3116 = vmatpush.msra.mxu0 %v1507
      %3117 = vmatmul.f32.gmra.mxu0 %v213
      %v3118 = vpop.f32.mrf.mxu0
      %v3119 = vadd.f32 %v2910, %v3118
      %3120 = vmatmul.f32.gmra.mxu0 %v215
      %v3121 = vpop.f32.mrf.mxu0
      %v3122 = vadd.f32 %v2913, %v3121
      %3123 = vmatmul.f32.gmra.mxu0 %v217
      %v3124 = vpop.f32.mrf.mxu0
      %v3125 = vadd.f32 %v2916, %v3124
      %3126 = vmatmul.f32.gmra.mxu0 %v219
      %v3127 = vpop.f32.mrf.mxu0
      %v3128 = vadd.f32 %v2919, %v3127
      %3129 = vmatmul.f32.gmra.mxu0 %v221
      %v3130 = vpop.f32.mrf.mxu0
      %v3131 = vadd.f32 %v2922, %v3130
      %3132 = vmatmul.f32.gmra.mxu0 %v223
      %v3133 = vpop.f32.mrf.mxu0
      %v3134 = vadd.f32 %v2925, %v3133
      %3135 = vmatmul.f32.gmra.mxu0 %v225
      %v3136 = vpop.f32.mrf.mxu0
      %v3137 = vadd.f32 %v2928, %v3136
      %3138 = vmatmul.f32.gmra.mxu0 %v227
      %v3139 = vpop.f32.mrf.mxu0
      %v3140 = vadd.f32 %v2931, %v3139
      %3141 = vmatmul.f32.gmra.mxu0 %v233
      %v3142 = vpop.f32.mrf.mxu0
      %v3143 = vadd.f32 %v2934, %v3142
      %3144 = vmatmul.f32.gmra.mxu0 %v235
      %v3145 = vpop.f32.mrf.mxu0
      %v3146 = vadd.f32 %v2937, %v3145
      %3147 = vmatmul.f32.gmra.mxu0 %v237
      %v3148 = vpop.f32.mrf.mxu0
      %v3149 = vadd.f32 %v2940, %v3148
      %3150 = vmatmul.f32.gmra.mxu0 %v239
      %v3151 = vpop.f32.mrf.mxu0
      %v3152 = vadd.f32 %v2943, %v3151
      %3153 = vmatmul.f32.gmra.mxu0 %v241
      %v3154 = vpop.f32.mrf.mxu0
      %v3155 = vadd.f32 %v2946, %v3154
      %3156 = vmatmul.f32.gmra.mxu0 %v243
      %v3157 = vpop.f32.mrf.mxu0
      %v3158 = vadd.f32 %v2949, %v3157
      %3159 = vmatmul.f32.gmra.mxu0 %v245
      %v3160 = vpop.f32.mrf.mxu0
      %v3161 = vadd.f32 %v2952, %v3160
      %3162 = vmatmul.f32.gmra.mxu0 %v247
      %v3163 = vpop.f32.mrf.mxu0
      %v3164 = vadd.f32 %v2955, %v3163
      %3165 = vmatmul.f32.gmra.mxu0 %v253
      %v3166 = vpop.f32.mrf.mxu0
      %v3167 = vadd.f32 %v2958, %v3166
      %3168 = vmatmul.f32.gmra.mxu0 %v255
      %v3169 = vpop.f32.mrf.mxu0
      %v3170 = vadd.f32 %v2961, %v3169
      %3171 = vmatmul.f32.gmra.mxu0 %v257
      %v3172 = vpop.f32.mrf.mxu0
      %v3173 = vadd.f32 %v2964, %v3172
      %3174 = vmatmul.f32.gmra.mxu0 %v259
      %v3175 = vpop.f32.mrf.mxu0
      %v3176 = vadd.f32 %v2967, %v3175
      %3177 = vmatmul.f32.gmra.mxu0 %v261
      %v3178 = vpop.f32.mrf.mxu0
      %v3179 = vadd.f32 %v2970, %v3178
      %3180 = vmatmul.f32.gmra.mxu0 %v263
      %v3181 = vpop.f32.mrf.mxu0
      %v3182 = vadd.f32 %v2973, %v3181
      %3183 = vmatmul.f32.gmra.mxu0 %v265
      %v3184 = vpop.f32.mrf.mxu0
      %v3185 = vadd.f32 %v2976, %v3184
      %3186 = vmatmul.f32.gmra.mxu0 %v267
      %v3187 = vpop.f32.mrf.mxu0
      %v3188 = vadd.f32 %v2979, %v3187
      %3189 = vmatmul.f32.gmra.mxu0 %v273
      %v3190 = vpop.f32.mrf.mxu0
      %v3191 = vadd.f32 %v2982, %v3190
      %3192 = vmatmul.f32.gmra.mxu0 %v275
      %v3193 = vpop.f32.mrf.mxu0
      %v3194 = vadd.f32 %v2985, %v3193
      %3195 = vmatmul.f32.gmra.mxu0 %v277
      %v3196 = vpop.f32.mrf.mxu0
      %v3197 = vadd.f32 %v2988, %v3196
      %3198 = vmatmul.f32.gmra.mxu0 %v279
      %v3199 = vpop.f32.mrf.mxu0
      %v3200 = vadd.f32 %v2991, %v3199
      %3201 = vmatmul.f32.gmra.mxu0 %v281
      %v3202 = vpop.f32.mrf.mxu0
      %v3203 = vadd.f32 %v2994, %v3202
      %3204 = vmatmul.f32.gmra.mxu0 %v283
      %v3205 = vpop.f32.mrf.mxu0
      %v3206 = vadd.f32 %v2997, %v3205
      %3207 = vmatmul.f32.gmra.mxu0 %v285
      %v3208 = vpop.f32.mrf.mxu0
      %v3209 = vadd.f32 %v3000, %v3208
      %3210 = vmatmul.f32.gmra.mxu0 %v287
      %v3211 = vpop.f32.mrf.mxu0
      %v3212 = vadd.f32 %v3003, %v3211
      %3213 = vmatmul.f32.gmra.mxu0 %v293
      %v3214 = vpop.f32.mrf.mxu0
      %v3215 = vadd.f32 %v3006, %v3214
      %3216 = vmatmul.f32.gmra.mxu0 %v295
      %v3217 = vpop.f32.mrf.mxu0
      %v3218 = vadd.f32 %v3009, %v3217
      %3219 = vmatmul.f32.gmra.mxu0 %v297
      %v3220 = vpop.f32.mrf.mxu0
      %v3221 = vadd.f32 %v3012, %v3220
      %3222 = vmatmul.f32.gmra.mxu0 %v299
      %v3223 = vpop.f32.mrf.mxu0
      %v3224 = vadd.f32 %v3015, %v3223
      %3225 = vmatmul.f32.gmra.mxu0 %v301
      %v3226 = vpop.f32.mrf.mxu0
      %v3227 = vadd.f32 %v3018, %v3226
      %3228 = vmatmul.f32.gmra.mxu0 %v303
      %v3229 = vpop.f32.mrf.mxu0
      %v3230 = vadd.f32 %v3021, %v3229
      %3231 = vmatmul.f32.gmra.mxu0 %v305
      %v3232 = vpop.f32.mrf.mxu0
      %v3233 = vadd.f32 %v3024, %v3232
      %3234 = vmatmul.f32.gmra.mxu0 %v307
      %v3235 = vpop.f32.mrf.mxu0
      %v3236 = vadd.f32 %v3027, %v3235
      %3237 = vmatmul.f32.gmra.mxu0 %v313
      %v3238 = vpop.f32.mrf.mxu0
      %v3239 = vadd.f32 %v3030, %v3238
      %3240 = vmatmul.f32.gmra.mxu0 %v315
      %v3241 = vpop.f32.mrf.mxu0
      %v3242 = vadd.f32 %v3033, %v3241
      %3243 = vmatmul.f32.gmra.mxu0 %v317
      %v3244 = vpop.f32.mrf.mxu0
      %v3245 = vadd.f32 %v3036, %v3244
      %3246 = vmatmul.f32.gmra.mxu0 %v319
      %v3247 = vpop.f32.mrf.mxu0
      %v3248 = vadd.f32 %v3039, %v3247
      %3249 = vmatmul.f32.gmra.mxu0 %v321
      %v3250 = vpop.f32.mrf.mxu0
      %v3251 = vadd.f32 %v3042, %v3250
      %3252 = vmatmul.f32.gmra.mxu0 %v323
      %v3253 = vpop.f32.mrf.mxu0
      %v3254 = vadd.f32 %v3045, %v3253
      %3255 = vmatmul.f32.gmra.mxu0 %v325
      %v3256 = vpop.f32.mrf.mxu0
      %v3257 = vadd.f32 %v3048, %v3256
      %3258 = vmatmul.f32.gmra.mxu0 %v327
      %v3259 = vpop.f32.mrf.mxu0
      %v3260 = vadd.f32 %v3051, %v3259
      %3261 = vmatmul.f32.gmra.mxu0 %v333
      %v3262 = vpop.f32.mrf.mxu0
      %v3263 = vadd.f32 %v3054, %v3262
      %3264 = vmatmul.f32.gmra.mxu0 %v335
      %v3265 = vpop.f32.mrf.mxu0
      %v3266 = vadd.f32 %v3057, %v3265
      %3267 = vmatmul.f32.gmra.mxu0 %v337
      %v3268 = vpop.f32.mrf.mxu0
      %v3269 = vadd.f32 %v3060, %v3268
      %3270 = vmatmul.f32.gmra.mxu0 %v339
      %v3271 = vpop.f32.mrf.mxu0
      %v3272 = vadd.f32 %v3063, %v3271
      %3273 = vmatmul.f32.gmra.mxu0 %v341
      %v3274 = vpop.f32.mrf.mxu0
      %v3275 = vadd.f32 %v3066, %v3274
      %3276 = vmatmul.f32.gmra.mxu0 %v343
      %v3277 = vpop.f32.mrf.mxu0
      %v3278 = vadd.f32 %v3069, %v3277
      %3279 = vmatmul.f32.gmra.mxu0 %v345
      %v3280 = vpop.f32.mrf.mxu0
      %v3281 = vadd.f32 %v3072, %v3280
      %3282 = vmatmul.f32.gmra.mxu0 %v347
      %v3283 = vpop.f32.mrf.mxu0
      %v3284 = vadd.f32 %v3075, %v3283
      %3285 = vmatmul.f32.gmra.mxu0 %v353
      %v3286 = vpop.f32.mrf.mxu0
      %v3287 = vadd.f32 %v3078, %v3286
      %3288 = vmatmul.f32.gmra.mxu0 %v355
      %v3289 = vpop.f32.mrf.mxu0
      %v3290 = vadd.f32 %v3081, %v3289
      %3291 = vmatmul.f32.gmra.mxu0 %v357
      %v3292 = vpop.f32.mrf.mxu0
      %v3293 = vadd.f32 %v3084, %v3292
      %3294 = vmatmul.f32.gmra.mxu0 %v359
      %v3295 = vpop.f32.mrf.mxu0
      %v3296 = vadd.f32 %v3087, %v3295
      %3297 = vmatmul.f32.gmra.mxu0 %v361
      %v3298 = vpop.f32.mrf.mxu0
      %v3299 = vadd.f32 %v3090, %v3298
      %3300 = vmatmul.f32.gmra.mxu0 %v363
      %v3301 = vpop.f32.mrf.mxu0
      %v3302 = vadd.f32 %v3093, %v3301
      %3303 = vmatmul.f32.gmra.mxu0 %v365
      %v3304 = vpop.f32.mrf.mxu0
      %v3305 = vadd.f32 %v3096, %v3304
      %3306 = vmatmul.f32.gmra.mxu0 %v367
      %v3307 = vpop.f32.mrf.mxu0
      %v3308 = vadd.f32 %v3099, %v3307
      %3309 = vdwg.mxu0
      %3310 = vmatpush.msra.mxu0 %v1538
      %3311 = vmatpush.msra.mxu0 %v1537
      %3312 = vmatpush.msra.mxu0 %v1536
      %3313 = vmatpush.msra.mxu0 %v1535
      %3314 = vmatpush.msra.mxu0 %v1534
      %3315 = vmatpush.msra.mxu0 %v1533
      %3316 = vmatpush.msra.mxu0 %v1532
      %3317 = vmatpush.msra.mxu0 %v1531
      %3318 = vmatpush.msra.mxu0 %v1530
      %3319 = vmatpush.msra.mxu0 %v1529
      %3320 = vmatpush.msra.mxu0 %v1528
      %3321 = vmatpush.msra.mxu0 %v1527
      %3322 = vmatpush.msra.mxu0 %v1526
      %3323 = vmatpush.msra.mxu0 %v1525
      %3324 = vmatpush.msra.mxu0 %v1524
      %3325 = vmatpush.msra.mxu0 %v1523
      %3326 = vmatmul.f32.gmra.mxu0 %v618
      %v3327 = vpop.f32.mrf.mxu0
      %v3328 = vadd.f32 %v3119, %v3327
      %3329 = vmatmul.f32.gmra.mxu0 %v621
      %v3330 = vpop.f32.mrf.mxu0
      %v3331 = vadd.f32 %v3122, %v3330
      %3332 = vmatmul.f32.gmra.mxu0 %v624
      %v3333 = vpop.f32.mrf.mxu0
      %v3334 = vadd.f32 %v3125, %v3333
      %3335 = vmatmul.f32.gmra.mxu0 %v627
      %v3336 = vpop.f32.mrf.mxu0
      %v3337 = vadd.f32 %v3128, %v3336
      %3338 = vmatmul.f32.gmra.mxu0 %v630
      %v3339 = vpop.f32.mrf.mxu0
      %v3340 = vadd.f32 %v3131, %v3339
      %3341 = vmatmul.f32.gmra.mxu0 %v633
      %v3342 = vpop.f32.mrf.mxu0
      %v3343 = vadd.f32 %v3134, %v3342
      %3344 = vmatmul.f32.gmra.mxu0 %v636
      %v3345 = vpop.f32.mrf.mxu0
      %v3346 = vadd.f32 %v3137, %v3345
      %3347 = vmatmul.f32.gmra.mxu0 %v639
      %v3348 = vpop.f32.mrf.mxu0
      %v3349 = vadd.f32 %v3140, %v3348
      %3350 = vmatmul.f32.gmra.mxu0 %v648
      %v3351 = vpop.f32.mrf.mxu0
      %v3352 = vadd.f32 %v3143, %v3351
      %3353 = vmatmul.f32.gmra.mxu0 %v651
      %v3354 = vpop.f32.mrf.mxu0
      %v3355 = vadd.f32 %v3146, %v3354
      %3356 = vmatmul.f32.gmra.mxu0 %v654
      %v3357 = vpop.f32.mrf.mxu0
      %v3358 = vadd.f32 %v3149, %v3357
      %3359 = vmatmul.f32.gmra.mxu0 %v657
      %v3360 = vpop.f32.mrf.mxu0
      %v3361 = vadd.f32 %v3152, %v3360
      %3362 = vmatmul.f32.gmra.mxu0 %v660
      %v3363 = vpop.f32.mrf.mxu0
      %v3364 = vadd.f32 %v3155, %v3363
      %3365 = vmatmul.f32.gmra.mxu0 %v663
      %v3366 = vpop.f32.mrf.mxu0
      %v3367 = vadd.f32 %v3158, %v3366
      %3368 = vmatmul.f32.gmra.mxu0 %v666
      %v3369 = vpop.f32.mrf.mxu0
      %v3370 = vadd.f32 %v3161, %v3369
      %3371 = vmatmul.f32.gmra.mxu0 %v669
      %v3372 = vpop.f32.mrf.mxu0
      %v3373 = vadd.f32 %v3164, %v3372
      %3374 = vmatmul.f32.gmra.mxu0 %v678
      %v3375 = vpop.f32.mrf.mxu0
      %v3376 = vadd.f32 %v3167, %v3375
      %3377 = vmatmul.f32.gmra.mxu0 %v681
      %v3378 = vpop.f32.mrf.mxu0
      %v3379 = vadd.f32 %v3170, %v3378
      %3380 = vmatmul.f32.gmra.mxu0 %v684
      %v3381 = vpop.f32.mrf.mxu0
      %v3382 = vadd.f32 %v3173, %v3381
      %3383 = vmatmul.f32.gmra.mxu0 %v687
      %v3384 = vpop.f32.mrf.mxu0
      %v3385 = vadd.f32 %v3176, %v3384
      %3386 = vmatmul.f32.gmra.mxu0 %v690
      %v3387 = vpop.f32.mrf.mxu0
      %v3388 = vadd.f32 %v3179, %v3387
      %3389 = vmatmul.f32.gmra.mxu0 %v693
      %v3390 = vpop.f32.mrf.mxu0
      %v3391 = vadd.f32 %v3182, %v3390
      %3392 = vmatmul.f32.gmra.mxu0 %v696
      %v3393 = vpop.f32.mrf.mxu0
      %v3394 = vadd.f32 %v3185, %v3393
      %3395 = vmatmul.f32.gmra.mxu0 %v699
      %v3396 = vpop.f32.mrf.mxu0
      %v3397 = vadd.f32 %v3188, %v3396
      %3398 = vmatmul.f32.gmra.mxu0 %v708
      %v3399 = vpop.f32.mrf.mxu0
      %v3400 = vadd.f32 %v3191, %v3399
      %3401 = vmatmul.f32.gmra.mxu0 %v711
      %v3402 = vpop.f32.mrf.mxu0
      %v3403 = vadd.f32 %v3194, %v3402
      %3404 = vmatmul.f32.gmra.mxu0 %v714
      %v3405 = vpop.f32.mrf.mxu0
      %v3406 = vadd.f32 %v3197, %v3405
      %3407 = vmatmul.f32.gmra.mxu0 %v717
      %v3408 = vpop.f32.mrf.mxu0
      %v3409 = vadd.f32 %v3200, %v3408
      %3410 = vmatmul.f32.gmra.mxu0 %v720
      %v3411 = vpop.f32.mrf.mxu0
      %v3412 = vadd.f32 %v3203, %v3411
      %3413 = vmatmul.f32.gmra.mxu0 %v723
      %v3414 = vpop.f32.mrf.mxu0
      %v3415 = vadd.f32 %v3206, %v3414
      %3416 = vmatmul.f32.gmra.mxu0 %v726
      %v3417 = vpop.f32.mrf.mxu0
      %v3418 = vadd.f32 %v3209, %v3417
      %3419 = vmatmul.f32.gmra.mxu0 %v729
      %v3420 = vpop.f32.mrf.mxu0
      %v3421 = vadd.f32 %v3212, %v3420
      %3422 = vmatmul.f32.gmra.mxu0 %v738
      %v3423 = vpop.f32.mrf.mxu0
      %v3424 = vadd.f32 %v3215, %v3423
      %3425 = vmatmul.f32.gmra.mxu0 %v741
      %v3426 = vpop.f32.mrf.mxu0
      %v3427 = vadd.f32 %v3218, %v3426
      %3428 = vmatmul.f32.gmra.mxu0 %v744
      %v3429 = vpop.f32.mrf.mxu0
      %v3430 = vadd.f32 %v3221, %v3429
      %3431 = vmatmul.f32.gmra.mxu0 %v747
      %v3432 = vpop.f32.mrf.mxu0
      %v3433 = vadd.f32 %v3224, %v3432
      %3434 = vmatmul.f32.gmra.mxu0 %v750
      %v3435 = vpop.f32.mrf.mxu0
      %v3436 = vadd.f32 %v3227, %v3435
      %3437 = vmatmul.f32.gmra.mxu0 %v753
      %v3438 = vpop.f32.mrf.mxu0
      %v3439 = vadd.f32 %v3230, %v3438
      %3440 = vmatmul.f32.gmra.mxu0 %v756
      %v3441 = vpop.f32.mrf.mxu0
      %v3442 = vadd.f32 %v3233, %v3441
      %3443 = vmatmul.f32.gmra.mxu0 %v759
      %v3444 = vpop.f32.mrf.mxu0
      %v3445 = vadd.f32 %v3236, %v3444
      %3446 = vmatmul.f32.gmra.mxu0 %v768
      %v3447 = vpop.f32.mrf.mxu0
      %v3448 = vadd.f32 %v3239, %v3447
      %3449 = vmatmul.f32.gmra.mxu0 %v771
      %v3450 = vpop.f32.mrf.mxu0
      %v3451 = vadd.f32 %v3242, %v3450
      %3452 = vmatmul.f32.gmra.mxu0 %v774
      %v3453 = vpop.f32.mrf.mxu0
      %v3454 = vadd.f32 %v3245, %v3453
      %3455 = vmatmul.f32.gmra.mxu0 %v777
      %v3456 = vpop.f32.mrf.mxu0
      %v3457 = vadd.f32 %v3248, %v3456
      %3458 = vmatmul.f32.gmra.mxu0 %v780
      %v3459 = vpop.f32.mrf.mxu0
      %v3460 = vadd.f32 %v3251, %v3459
      %3461 = vmatmul.f32.gmra.mxu0 %v783
      %v3462 = vpop.f32.mrf.mxu0
      %v3463 = vadd.f32 %v3254, %v3462
      %3464 = vmatmul.f32.gmra.mxu0 %v786
      %v3465 = vpop.f32.mrf.mxu0
      %v3466 = vadd.f32 %v3257, %v3465
      %3467 = vmatmul.f32.gmra.mxu0 %v789
      %v3468 = vpop.f32.mrf.mxu0
      %v3469 = vadd.f32 %v3260, %v3468
      %3470 = vmatmul.f32.gmra.mxu0 %v798
      %v3471 = vpop.f32.mrf.mxu0
      %v3472 = vadd.f32 %v3263, %v3471
      %3473 = vmatmul.f32.gmra.mxu0 %v801
      %v3474 = vpop.f32.mrf.mxu0
      %v3475 = vadd.f32 %v3266, %v3474
      %3476 = vmatmul.f32.gmra.mxu0 %v804
      %v3477 = vpop.f32.mrf.mxu0
      %v3478 = vadd.f32 %v3269, %v3477
      %3479 = vmatmul.f32.gmra.mxu0 %v807
      %v3480 = vpop.f32.mrf.mxu0
      %v3481 = vadd.f32 %v3272, %v3480
      %3482 = vmatmul.f32.gmra.mxu0 %v810
      %v3483 = vpop.f32.mrf.mxu0
      %v3484 = vadd.f32 %v3275, %v3483
      %3485 = vmatmul.f32.gmra.mxu0 %v813
      %v3486 = vpop.f32.mrf.mxu0
      %v3487 = vadd.f32 %v3278, %v3486
      %3488 = vmatmul.f32.gmra.mxu0 %v816
      %v3489 = vpop.f32.mrf.mxu0
      %v3490 = vadd.f32 %v3281, %v3489
      %3491 = vmatmul.f32.gmra.mxu0 %v819
      %v3492 = vpop.f32.mrf.mxu0
      %v3493 = vadd.f32 %v3284, %v3492
      %3494 = vmatmul.f32.gmra.mxu0 %v828
      %v3495 = vpop.f32.mrf.mxu0
      %v3496 = vadd.f32 %v3287, %v3495
      %3497 = vmatmul.f32.gmra.mxu0 %v831
      %v3498 = vpop.f32.mrf.mxu0
      %v3499 = vadd.f32 %v3290, %v3498
      %3500 = vmatmul.f32.gmra.mxu0 %v834
      %v3501 = vpop.f32.mrf.mxu0
      %v3502 = vadd.f32 %v3293, %v3501
      %3503 = vmatmul.f32.gmra.mxu0 %v837
      %v3504 = vpop.f32.mrf.mxu0
      %v3505 = vadd.f32 %v3296, %v3504
      %3506 = vmatmul.f32.gmra.mxu0 %v840
      %v3507 = vpop.f32.mrf.mxu0
      %v3508 = vadd.f32 %v3299, %v3507
      %3509 = vmatmul.f32.gmra.mxu0 %v843
      %v3510 = vpop.f32.mrf.mxu0
      %v3511 = vadd.f32 %v3302, %v3510
      %3512 = vmatmul.f32.gmra.mxu0 %v846
      %v3513 = vpop.f32.mrf.mxu0
      %v3514 = vadd.f32 %v3305, %v3513
      %3515 = vmatmul.f32.gmra.mxu0 %v849
      %v3516 = vpop.f32.mrf.mxu0
      %v3517 = vadd.f32 %v3308, %v3516
      %3518 = vdwg.mxu0
      %3519 = vmatpush.msra.mxu0 %v1554
      %3520 = vmatpush.msra.mxu0 %v1553
      %3521 = vmatpush.msra.mxu0 %v1552
      %3522 = vmatpush.msra.mxu0 %v1551
      %3523 = vmatpush.msra.mxu0 %v1550
      %3524 = vmatpush.msra.mxu0 %v1549
      %3525 = vmatpush.msra.mxu0 %v1548
      %3526 = vmatpush.msra.mxu0 %v1547
      %3527 = vmatpush.msra.mxu0 %v1546
      %3528 = vmatpush.msra.mxu0 %v1545
      %3529 = vmatpush.msra.mxu0 %v1544
      %3530 = vmatpush.msra.mxu0 %v1543
      %3531 = vmatpush.msra.mxu0 %v1542
      %3532 = vmatpush.msra.mxu0 %v1541
      %3533 = vmatpush.msra.mxu0 %v1540
      %3534 = vmatpush.msra.mxu0 %v1539
      %3535 = vmatmul.f32.gmra.mxu0 %v1019
      %v3536 = vpop.f32.mrf.mxu0
      %v3537 = vadd.f32 %v3328, %v3536
      %3538 = vmatmul.f32.gmra.mxu0 %v1022
      %v3539 = vpop.f32.mrf.mxu0
      %v3540 = vadd.f32 %v3331, %v3539
      %3541 = vmatmul.f32.gmra.mxu0 %v1025
      %v3542 = vpop.f32.mrf.mxu0
      %v3543 = vadd.f32 %v3334, %v3542
      %3544 = vmatmul.f32.gmra.mxu0 %v1028
      %v3545 = vpop.f32.mrf.mxu0
      %v3546 = vadd.f32 %v3337, %v3545
      %3547 = vmatmul.f32.gmra.mxu0 %v1031
      %v3548 = vpop.f32.mrf.mxu0
      %v3549 = vadd.f32 %v3340, %v3548
      %3550 = vmatmul.f32.gmra.mxu0 %v1034
      %v3551 = vpop.f32.mrf.mxu0
      %v3552 = vadd.f32 %v3343, %v3551
      %3553 = vmatmul.f32.gmra.mxu0 %v1037
      %v3554 = vpop.f32.mrf.mxu0
      %v3555 = vadd.f32 %v3346, %v3554
      %3556 = vmatmul.f32.gmra.mxu0 %v1040
      %v3557 = vpop.f32.mrf.mxu0
      %v3558 = vadd.f32 %v3349, %v3557
      %3559 = vmatmul.f32.gmra.mxu0 %v1049
      %v3560 = vpop.f32.mrf.mxu0
      %v3561 = vadd.f32 %v3352, %v3560
      %3562 = vmatmul.f32.gmra.mxu0 %v1052
      %v3563 = vpop.f32.mrf.mxu0
      %v3564 = vadd.f32 %v3355, %v3563
      %3565 = vmatmul.f32.gmra.mxu0 %v1055
      %v3566 = vpop.f32.mrf.mxu0
      %v3567 = vadd.f32 %v3358, %v3566
      %3568 = vmatmul.f32.gmra.mxu0 %v1058
      %v3569 = vpop.f32.mrf.mxu0
      %v3570 = vadd.f32 %v3361, %v3569
      %3571 = vmatmul.f32.gmra.mxu0 %v1061
      %v3572 = vpop.f32.mrf.mxu0
      %v3573 = vadd.f32 %v3364, %v3572
      %3574 = vmatmul.f32.gmra.mxu0 %v1064
      %v3575 = vpop.f32.mrf.mxu0
      %v3576 = vadd.f32 %v3367, %v3575
      %3577 = vmatmul.f32.gmra.mxu0 %v1067
      %v3578 = vpop.f32.mrf.mxu0
      %v3579 = vadd.f32 %v3370, %v3578
      %3580 = vmatmul.f32.gmra.mxu0 %v1070
      %v3581 = vpop.f32.mrf.mxu0
      %v3582 = vadd.f32 %v3373, %v3581
      %3583 = vmatmul.f32.gmra.mxu0 %v1079
      %v3584 = vpop.f32.mrf.mxu0
      %v3585 = vadd.f32 %v3376, %v3584
      %3586 = vmatmul.f32.gmra.mxu0 %v1082
      %v3587 = vpop.f32.mrf.mxu0
      %v3588 = vadd.f32 %v3379, %v3587
      %3589 = vmatmul.f32.gmra.mxu0 %v1085
      %v3590 = vpop.f32.mrf.mxu0
      %v3591 = vadd.f32 %v3382, %v3590
      %3592 = vmatmul.f32.gmra.mxu0 %v1088
      %v3593 = vpop.f32.mrf.mxu0
      %v3594 = vadd.f32 %v3385, %v3593
      %3595 = vmatmul.f32.gmra.mxu0 %v1091
      %v3596 = vpop.f32.mrf.mxu0
      %v3597 = vadd.f32 %v3388, %v3596
      %3598 = vmatmul.f32.gmra.mxu0 %v1094
      %v3599 = vpop.f32.mrf.mxu0
      %v3600 = vadd.f32 %v3391, %v3599
      %3601 = vmatmul.f32.gmra.mxu0 %v1097
      %v3602 = vpop.f32.mrf.mxu0
      %v3603 = vadd.f32 %v3394, %v3602
      %3604 = vmatmul.f32.gmra.mxu0 %v1100
      %v3605 = vpop.f32.mrf.mxu0
      %v3606 = vadd.f32 %v3397, %v3605
      %3607 = vmatmul.f32.gmra.mxu0 %v1109
      %v3608 = vpop.f32.mrf.mxu0
      %v3609 = vadd.f32 %v3400, %v3608
      %3610 = vmatmul.f32.gmra.mxu0 %v1112
      %v3611 = vpop.f32.mrf.mxu0
      %v3612 = vadd.f32 %v3403, %v3611
      %3613 = vmatmul.f32.gmra.mxu0 %v1115
      %v3614 = vpop.f32.mrf.mxu0
      %v3615 = vadd.f32 %v3406, %v3614
      %3616 = vmatmul.f32.gmra.mxu0 %v1118
      %v3617 = vpop.f32.mrf.mxu0
      %v3618 = vadd.f32 %v3409, %v3617
      %3619 = vmatmul.f32.gmra.mxu0 %v1121
      %v3620 = vpop.f32.mrf.mxu0
      %v3621 = vadd.f32 %v3412, %v3620
      %3622 = vmatmul.f32.gmra.mxu0 %v1124
      %v3623 = vpop.f32.mrf.mxu0
      %v3624 = vadd.f32 %v3415, %v3623
      %3625 = vmatmul.f32.gmra.mxu0 %v1127
      %v3626 = vpop.f32.mrf.mxu0
      %v3627 = vadd.f32 %v3418, %v3626
      %3628 = vmatmul.f32.gmra.mxu0 %v1130
      %v3629 = vpop.f32.mrf.mxu0
      %v3630 = vadd.f32 %v3421, %v3629
      %3631 = vmatmul.f32.gmra.mxu0 %v1139
      %v3632 = vpop.f32.mrf.mxu0
      %v3633 = vadd.f32 %v3424, %v3632
      %3634 = vmatmul.f32.gmra.mxu0 %v1142
      %v3635 = vpop.f32.mrf.mxu0
      %v3636 = vadd.f32 %v3427, %v3635
      %3637 = vmatmul.f32.gmra.mxu0 %v1145
      %v3638 = vpop.f32.mrf.mxu0
      %v3639 = vadd.f32 %v3430, %v3638
      %3640 = vmatmul.f32.gmra.mxu0 %v1148
      %v3641 = vpop.f32.mrf.mxu0
      %v3642 = vadd.f32 %v3433, %v3641
      %3643 = vmatmul.f32.gmra.mxu0 %v1151
      %v3644 = vpop.f32.mrf.mxu0
      %v3645 = vadd.f32 %v3436, %v3644
      %3646 = vmatmul.f32.gmra.mxu0 %v1154
      %v3647 = vpop.f32.mrf.mxu0
      %v3648 = vadd.f32 %v3439, %v3647
      %3649 = vmatmul.f32.gmra.mxu0 %v1157
      %v3650 = vpop.f32.mrf.mxu0
      %v3651 = vadd.f32 %v3442, %v3650
      %3652 = vmatmul.f32.gmra.mxu0 %v1160
      %v3653 = vpop.f32.mrf.mxu0
      %v3654 = vadd.f32 %v3445, %v3653
      %3655 = vmatmul.f32.gmra.mxu0 %v1169
      %v3656 = vpop.f32.mrf.mxu0
      %v3657 = vadd.f32 %v3448, %v3656
      %3658 = vmatmul.f32.gmra.mxu0 %v1172
      %v3659 = vpop.f32.mrf.mxu0
      %v3660 = vadd.f32 %v3451, %v3659
      %3661 = vmatmul.f32.gmra.mxu0 %v1175
      %v3662 = vpop.f32.mrf.mxu0
      %v3663 = vadd.f32 %v3454, %v3662
      %3664 = vmatmul.f32.gmra.mxu0 %v1178
      %v3665 = vpop.f32.mrf.mxu0
      %v3666 = vadd.f32 %v3457, %v3665
      %3667 = vmatmul.f32.gmra.mxu0 %v1181
      %v3668 = vpop.f32.mrf.mxu0
      %v3669 = vadd.f32 %v3460, %v3668
      %3670 = vmatmul.f32.gmra.mxu0 %v1184
      %v3671 = vpop.f32.mrf.mxu0
      %v3672 = vadd.f32 %v3463, %v3671
      %3673 = vmatmul.f32.gmra.mxu0 %v1187
      %v3674 = vpop.f32.mrf.mxu0
      %v3675 = vadd.f32 %v3466, %v3674
      %3676 = vmatmul.f32.gmra.mxu0 %v1190
      %v3677 = vpop.f32.mrf.mxu0
      %v3678 = vadd.f32 %v3469, %v3677
      %3679 = vmatmul.f32.gmra.mxu0 %v1199
      %v3680 = vpop.f32.mrf.mxu0
      %v3681 = vadd.f32 %v3472, %v3680
      %3682 = vmatmul.f32.gmra.mxu0 %v1202
      %v3683 = vpop.f32.mrf.mxu0
      %v3684 = vadd.f32 %v3475, %v3683
      %3685 = vmatmul.f32.gmra.mxu0 %v1205
      %v3686 = vpop.f32.mrf.mxu0
      %v3687 = vadd.f32 %v3478, %v3686
      %3688 = vmatmul.f32.gmra.mxu0 %v1208
      %v3689 = vpop.f32.mrf.mxu0
      %v3690 = vadd.f32 %v3481, %v3689
      %3691 = vmatmul.f32.gmra.mxu0 %v1211
      %v3692 = vpop.f32.mrf.mxu0
      %v3693 = vadd.f32 %v3484, %v3692
      %3694 = vmatmul.f32.gmra.mxu0 %v1214
      %v3695 = vpop.f32.mrf.mxu0
      %v3696 = vadd.f32 %v3487, %v3695
      %3697 = vmatmul.f32.gmra.mxu0 %v1217
      %v3698 = vpop.f32.mrf.mxu0
      %v3699 = vadd.f32 %v3490, %v3698
      %3700 = vmatmul.f32.gmra.mxu0 %v1220
      %v3701 = vpop.f32.mrf.mxu0
      %v3702 = vadd.f32 %v3493, %v3701
      %3703 = vmatmul.f32.gmra.mxu0 %v1229
      %v3704 = vpop.f32.mrf.mxu0
      %v3705 = vadd.f32 %v3496, %v3704
      %3706 = vmatmul.f32.gmra.mxu0 %v1232
      %v3707 = vpop.f32.mrf.mxu0
      %v3708 = vadd.f32 %v3499, %v3707
      %3709 = vmatmul.f32.gmra.mxu0 %v1235
      %v3710 = vpop.f32.mrf.mxu0
      %v3711 = vadd.f32 %v3502, %v3710
      %3712 = vmatmul.f32.gmra.mxu0 %v1238
      %v3713 = vpop.f32.mrf.mxu0
      %v3714 = vadd.f32 %v3505, %v3713
      %3715 = vmatmul.f32.gmra.mxu0 %v1241
      %v3716 = vpop.f32.mrf.mxu0
      %v3717 = vadd.f32 %v3508, %v3716
      %3718 = vmatmul.f32.gmra.mxu0 %v1244
      %v3719 = vpop.f32.mrf.mxu0
      %v3720 = vadd.f32 %v3511, %v3719
      %3721 = vmatmul.f32.gmra.mxu0 %v1247
      %v3722 = vpop.f32.mrf.mxu0
      %v3723 = vadd.f32 %v3514, %v3722
      %3724 = vmatmul.f32.gmra.mxu0 %v1250
      %v3725 = vpop.f32.mrf.mxu0
      %v3726 = vadd.f32 %v3517, %v3725
      %3727 = vdwg.mxu0
      %3728 = vmatpush.msra.mxu0 %v1570
      %3729 = vmatpush.msra.mxu0 %v1569
      %3730 = vmatpush.msra.mxu0 %v1568
      %3731 = vmatpush.msra.mxu0 %v1567
      %3732 = vmatpush.msra.mxu0 %v1566
      %3733 = vmatpush.msra.mxu0 %v1565
      %3734 = vmatpush.msra.mxu0 %v1564
      %3735 = vmatpush.msra.mxu0 %v1563
      %3736 = vmatpush.msra.mxu0 %v1562
      %3737 = vmatpush.msra.mxu0 %v1561
      %3738 = vmatpush.msra.mxu0 %v1560
      %3739 = vmatpush.msra.mxu0 %v1559
      %3740 = vmatpush.msra.mxu0 %v1558
      %3741 = vmatpush.msra.mxu0 %v1557
      %3742 = vmatpush.msra.mxu0 %v1556
      %3743 = vmatpush.msra.mxu0 %v1555
      %3744 = vmatmul.f32.gmra.mxu0 %v229
      %v3745 = vpop.f32.mrf.mxu0
      %v3746 = vadd.f32 %v3537, %v3745
      %3747 = vmatmul.f32.gmra.mxu0 %v231
      %v3748 = vpop.f32.mrf.mxu0
      %v3749 = vadd.f32 %v3540, %v3748
      %3750 = vmatmul.f32.gmra.mxu0 %v233
      %v3751 = vpop.f32.mrf.mxu0
      %v3752 = vadd.f32 %v3543, %v3751
      %3753 = vmatmul.f32.gmra.mxu0 %v235
      %v3754 = vpop.f32.mrf.mxu0
      %v3755 = vadd.f32 %v3546, %v3754
      %3756 = vmatmul.f32.gmra.mxu0 %v237
      %v3757 = vpop.f32.mrf.mxu0
      %v3758 = vadd.f32 %v3549, %v3757
      %3759 = vmatmul.f32.gmra.mxu0 %v239
      %v3760 = vpop.f32.mrf.mxu0
      %v3761 = vadd.f32 %v3552, %v3760
      %3762 = vmatmul.f32.gmra.mxu0 %v241
      %v3763 = vpop.f32.mrf.mxu0
      %v3764 = vadd.f32 %v3555, %v3763
      %3765 = vmatmul.f32.gmra.mxu0 %v243
      %v3766 = vpop.f32.mrf.mxu0
      %v3767 = vadd.f32 %v3558, %v3766
      %3768 = vmatmul.f32.gmra.mxu0 %v249
      %v3769 = vpop.f32.mrf.mxu0
      %v3770 = vadd.f32 %v3561, %v3769
      %3771 = vmatmul.f32.gmra.mxu0 %v251
      %v3772 = vpop.f32.mrf.mxu0
      %v3773 = vadd.f32 %v3564, %v3772
      %3774 = vmatmul.f32.gmra.mxu0 %v253
      %v3775 = vpop.f32.mrf.mxu0
      %v3776 = vadd.f32 %v3567, %v3775
      %3777 = vmatmul.f32.gmra.mxu0 %v255
      %v3778 = vpop.f32.mrf.mxu0
      %v3779 = vadd.f32 %v3570, %v3778
      %3780 = vmatmul.f32.gmra.mxu0 %v257
      %v3781 = vpop.f32.mrf.mxu0
      %v3782 = vadd.f32 %v3573, %v3781
      %3783 = vmatmul.f32.gmra.mxu0 %v259
      %v3784 = vpop.f32.mrf.mxu0
      %v3785 = vadd.f32 %v3576, %v3784
      %3786 = vmatmul.f32.gmra.mxu0 %v261
      %v3787 = vpop.f32.mrf.mxu0
      %v3788 = vadd.f32 %v3579, %v3787
      %3789 = vmatmul.f32.gmra.mxu0 %v263
      %v3790 = vpop.f32.mrf.mxu0
      %v3791 = vadd.f32 %v3582, %v3790
      %3792 = vmatmul.f32.gmra.mxu0 %v269
      %v3793 = vpop.f32.mrf.mxu0
      %v3794 = vadd.f32 %v3585, %v3793
      %3795 = vmatmul.f32.gmra.mxu0 %v271
      %v3796 = vpop.f32.mrf.mxu0
      %v3797 = vadd.f32 %v3588, %v3796
      %3798 = vmatmul.f32.gmra.mxu0 %v273
      %v3799 = vpop.f32.mrf.mxu0
      %v3800 = vadd.f32 %v3591, %v3799
      %3801 = vmatmul.f32.gmra.mxu0 %v275
      %v3802 = vpop.f32.mrf.mxu0
      %v3803 = vadd.f32 %v3594, %v3802
      %3804 = vmatmul.f32.gmra.mxu0 %v277
      %v3805 = vpop.f32.mrf.mxu0
      %v3806 = vadd.f32 %v3597, %v3805
      %3807 = vmatmul.f32.gmra.mxu0 %v279
      %v3808 = vpop.f32.mrf.mxu0
      %v3809 = vadd.f32 %v3600, %v3808
      %3810 = vmatmul.f32.gmra.mxu0 %v281
      %v3811 = vpop.f32.mrf.mxu0
      %v3812 = vadd.f32 %v3603, %v3811
      %3813 = vmatmul.f32.gmra.mxu0 %v283
      %v3814 = vpop.f32.mrf.mxu0
      %v3815 = vadd.f32 %v3606, %v3814
      %3816 = vmatmul.f32.gmra.mxu0 %v289
      %v3817 = vpop.f32.mrf.mxu0
      %v3818 = vadd.f32 %v3609, %v3817
      %3819 = vmatmul.f32.gmra.mxu0 %v291
      %v3820 = vpop.f32.mrf.mxu0
      %v3821 = vadd.f32 %v3612, %v3820
      %3822 = vmatmul.f32.gmra.mxu0 %v293
      %v3823 = vpop.f32.mrf.mxu0
      %v3824 = vadd.f32 %v3615, %v3823
      %3825 = vmatmul.f32.gmra.mxu0 %v295
      %v3826 = vpop.f32.mrf.mxu0
      %v3827 = vadd.f32 %v3618, %v3826
      %3828 = vmatmul.f32.gmra.mxu0 %v297
      %v3829 = vpop.f32.mrf.mxu0
      %v3830 = vadd.f32 %v3621, %v3829
      %3831 = vmatmul.f32.gmra.mxu0 %v299
      %v3832 = vpop.f32.mrf.mxu0
      %v3833 = vadd.f32 %v3624, %v3832
      %3834 = vmatmul.f32.gmra.mxu0 %v301
      %v3835 = vpop.f32.mrf.mxu0
      %v3836 = vadd.f32 %v3627, %v3835
      %3837 = vmatmul.f32.gmra.mxu0 %v303
      %v3838 = vpop.f32.mrf.mxu0
      %v3839 = vadd.f32 %v3630, %v3838
      %3840 = vmatmul.f32.gmra.mxu0 %v309
      %v3841 = vpop.f32.mrf.mxu0
      %v3842 = vadd.f32 %v3633, %v3841
      %3843 = vmatmul.f32.gmra.mxu0 %v311
      %v3844 = vpop.f32.mrf.mxu0
      %v3845 = vadd.f32 %v3636, %v3844
      %3846 = vmatmul.f32.gmra.mxu0 %v313
      %v3847 = vpop.f32.mrf.mxu0
      %v3848 = vadd.f32 %v3639, %v3847
      %3849 = vmatmul.f32.gmra.mxu0 %v315
      %v3850 = vpop.f32.mrf.mxu0
      %v3851 = vadd.f32 %v3642, %v3850
      %3852 = vmatmul.f32.gmra.mxu0 %v317
      %v3853 = vpop.f32.mrf.mxu0
      %v3854 = vadd.f32 %v3645, %v3853
      %3855 = vmatmul.f32.gmra.mxu0 %v319
      %v3856 = vpop.f32.mrf.mxu0
      %v3857 = vadd.f32 %v3648, %v3856
      %3858 = vmatmul.f32.gmra.mxu0 %v321
      %v3859 = vpop.f32.mrf.mxu0
      %v3860 = vadd.f32 %v3651, %v3859
      %3861 = vmatmul.f32.gmra.mxu0 %v323
      %v3862 = vpop.f32.mrf.mxu0
      %v3863 = vadd.f32 %v3654, %v3862
      %3864 = vmatmul.f32.gmra.mxu0 %v329
      %v3865 = vpop.f32.mrf.mxu0
      %v3866 = vadd.f32 %v3657, %v3865
      %3867 = vmatmul.f32.gmra.mxu0 %v331
      %v3868 = vpop.f32.mrf.mxu0
      %v3869 = vadd.f32 %v3660, %v3868
      %3870 = vmatmul.f32.gmra.mxu0 %v333
      %v3871 = vpop.f32.mrf.mxu0
      %v3872 = vadd.f32 %v3663, %v3871
      %3873 = vmatmul.f32.gmra.mxu0 %v335
      %v3874 = vpop.f32.mrf.mxu0
      %v3875 = vadd.f32 %v3666, %v3874
      %3876 = vmatmul.f32.gmra.mxu0 %v337
      %v3877 = vpop.f32.mrf.mxu0
      %v3878 = vadd.f32 %v3669, %v3877
      %3879 = vmatmul.f32.gmra.mxu0 %v339
      %v3880 = vpop.f32.mrf.mxu0
      %v3881 = vadd.f32 %v3672, %v3880
      %3882 = vmatmul.f32.gmra.mxu0 %v341
      %v3883 = vpop.f32.mrf.mxu0
      %v3884 = vadd.f32 %v3675, %v3883
      %3885 = vmatmul.f32.gmra.mxu0 %v343
      %v3886 = vpop.f32.mrf.mxu0
      %v3887 = vadd.f32 %v3678, %v3886
      %3888 = vmatmul.f32.gmra.mxu0 %v349
      %v3889 = vpop.f32.mrf.mxu0
      %v3890 = vadd.f32 %v3681, %v3889
      %3891 = vmatmul.f32.gmra.mxu0 %v351
      %v3892 = vpop.f32.mrf.mxu0
      %v3893 = vadd.f32 %v3684, %v3892
      %3894 = vmatmul.f32.gmra.mxu0 %v353
      %v3895 = vpop.f32.mrf.mxu0
      %v3896 = vadd.f32 %v3687, %v3895
      %3897 = vmatmul.f32.gmra.mxu0 %v355
      %v3898 = vpop.f32.mrf.mxu0
      %v3899 = vadd.f32 %v3690, %v3898
      %3900 = vmatmul.f32.gmra.mxu0 %v357
      %v3901 = vpop.f32.mrf.mxu0
      %v3902 = vadd.f32 %v3693, %v3901
      %3903 = vmatmul.f32.gmra.mxu0 %v359
      %v3904 = vpop.f32.mrf.mxu0
      %v3905 = vadd.f32 %v3696, %v3904
      %3906 = vmatmul.f32.gmra.mxu0 %v361
      %v3907 = vpop.f32.mrf.mxu0
      %v3908 = vadd.f32 %v3699, %v3907
      %3909 = vmatmul.f32.gmra.mxu0 %v363
      %v3910 = vpop.f32.mrf.mxu0
      %v3911 = vadd.f32 %v3702, %v3910
      %3912 = vmatmul.f32.gmra.mxu0 %v369
      %v3913 = vpop.f32.mrf.mxu0
      %v3914 = vadd.f32 %v3705, %v3913
      %3915 = vmatmul.f32.gmra.mxu0 %v371
      %v3916 = vpop.f32.mrf.mxu0
      %v3917 = vadd.f32 %v3708, %v3916
      %3918 = vmatmul.f32.gmra.mxu0 %v373
      %v3919 = vpop.f32.mrf.mxu0
      %v3920 = vadd.f32 %v3711, %v3919
      %3921 = vmatmul.f32.gmra.mxu0 %v375
      %v3922 = vpop.f32.mrf.mxu0
      %v3923 = vadd.f32 %v3714, %v3922
      %3924 = vmatmul.f32.gmra.mxu0 %v377
      %v3925 = vpop.f32.mrf.mxu0
      %v3926 = vadd.f32 %v3717, %v3925
      %3927 = vmatmul.f32.gmra.mxu0 %v379
      %v3928 = vpop.f32.mrf.mxu0
      %v3929 = vadd.f32 %v3720, %v3928
      %3930 = vmatmul.f32.gmra.mxu0 %v381
      %v3931 = vpop.f32.mrf.mxu0
      %v3932 = vadd.f32 %v3723, %v3931
      %3933 = vmatmul.f32.gmra.mxu0 %v383
      %v3934 = vpop.f32.mrf.mxu0
      %v3935 = vadd.f32 %v3726, %v3934
      %3936 = vdwg.mxu0
      %3937 = vmatpush.msra.mxu0 %v1586
      %3938 = vmatpush.msra.mxu0 %v1585
      %3939 = vmatpush.msra.mxu0 %v1584
      %3940 = vmatpush.msra.mxu0 %v1583
      %3941 = vmatpush.msra.mxu0 %v1582
      %3942 = vmatpush.msra.mxu0 %v1581
      %3943 = vmatpush.msra.mxu0 %v1580
      %3944 = vmatpush.msra.mxu0 %v1579
      %3945 = vmatpush.msra.mxu0 %v1578
      %3946 = vmatpush.msra.mxu0 %v1577
      %3947 = vmatpush.msra.mxu0 %v1576
      %3948 = vmatpush.msra.mxu0 %v1575
      %3949 = vmatpush.msra.mxu0 %v1574
      %3950 = vmatpush.msra.mxu0 %v1573
      %3951 = vmatpush.msra.mxu0 %v1572
      %3952 = vmatpush.msra.mxu0 %v1571
      %3953 = vmatmul.f32.gmra.mxu0 %v642
      %v3954 = vpop.f32.mrf.mxu0
      %v3955 = vadd.f32 %v3746, %v3954
      %3956 = vmatmul.f32.gmra.mxu0 %v645
      %v3957 = vpop.f32.mrf.mxu0
      %v3958 = vadd.f32 %v3749, %v3957
      %3959 = vmatmul.f32.gmra.mxu0 %v648
      %v3960 = vpop.f32.mrf.mxu0
      %v3961 = vadd.f32 %v3752, %v3960
      %3962 = vmatmul.f32.gmra.mxu0 %v651
      %v3963 = vpop.f32.mrf.mxu0
      %v3964 = vadd.f32 %v3755, %v3963
      %3965 = vmatmul.f32.gmra.mxu0 %v654
      %v3966 = vpop.f32.mrf.mxu0
      %v3967 = vadd.f32 %v3758, %v3966
      %3968 = vmatmul.f32.gmra.mxu0 %v657
      %v3969 = vpop.f32.mrf.mxu0
      %v3970 = vadd.f32 %v3761, %v3969
      %3971 = vmatmul.f32.gmra.mxu0 %v660
      %v3972 = vpop.f32.mrf.mxu0
      %v3973 = vadd.f32 %v3764, %v3972
      %3974 = vmatmul.f32.gmra.mxu0 %v663
      %v3975 = vpop.f32.mrf.mxu0
      %v3976 = vadd.f32 %v3767, %v3975
      %3977 = vmatmul.f32.gmra.mxu0 %v672
      %v3978 = vpop.f32.mrf.mxu0
      %v3979 = vadd.f32 %v3770, %v3978
      %3980 = vmatmul.f32.gmra.mxu0 %v675
      %v3981 = vpop.f32.mrf.mxu0
      %v3982 = vadd.f32 %v3773, %v3981
      %3983 = vmatmul.f32.gmra.mxu0 %v678
      %v3984 = vpop.f32.mrf.mxu0
      %v3985 = vadd.f32 %v3776, %v3984
      %3986 = vmatmul.f32.gmra.mxu0 %v681
      %v3987 = vpop.f32.mrf.mxu0
      %v3988 = vadd.f32 %v3779, %v3987
      %3989 = vmatmul.f32.gmra.mxu0 %v684
      %v3990 = vpop.f32.mrf.mxu0
      %v3991 = vadd.f32 %v3782, %v3990
      %3992 = vmatmul.f32.gmra.mxu0 %v687
      %v3993 = vpop.f32.mrf.mxu0
      %v3994 = vadd.f32 %v3785, %v3993
      %3995 = vmatmul.f32.gmra.mxu0 %v690
      %v3996 = vpop.f32.mrf.mxu0
      %v3997 = vadd.f32 %v3788, %v3996
      %3998 = vmatmul.f32.gmra.mxu0 %v693
      %v3999 = vpop.f32.mrf.mxu0
      %v4000 = vadd.f32 %v3791, %v3999
      %4001 = vmatmul.f32.gmra.mxu0 %v702
      %v4002 = vpop.f32.mrf.mxu0
      %v4003 = vadd.f32 %v3794, %v4002
      %4004 = vmatmul.f32.gmra.mxu0 %v705
      %v4005 = vpop.f32.mrf.mxu0
      %v4006 = vadd.f32 %v3797, %v4005
      %4007 = vmatmul.f32.gmra.mxu0 %v708
      %v4008 = vpop.f32.mrf.mxu0
      %v4009 = vadd.f32 %v3800, %v4008
      %4010 = vmatmul.f32.gmra.mxu0 %v711
      %v4011 = vpop.f32.mrf.mxu0
      %v4012 = vadd.f32 %v3803, %v4011
      %4013 = vmatmul.f32.gmra.mxu0 %v714
      %v4014 = vpop.f32.mrf.mxu0
      %v4015 = vadd.f32 %v3806, %v4014
      %4016 = vmatmul.f32.gmra.mxu0 %v717
      %v4017 = vpop.f32.mrf.mxu0
      %v4018 = vadd.f32 %v3809, %v4017
      %4019 = vmatmul.f32.gmra.mxu0 %v720
      %v4020 = vpop.f32.mrf.mxu0
      %v4021 = vadd.f32 %v3812, %v4020
      %4022 = vmatmul.f32.gmra.mxu0 %v723
      %v4023 = vpop.f32.mrf.mxu0
      %v4024 = vadd.f32 %v3815, %v4023
      %4025 = vmatmul.f32.gmra.mxu0 %v732
      %v4026 = vpop.f32.mrf.mxu0
      %v4027 = vadd.f32 %v3818, %v4026
      %4028 = vmatmul.f32.gmra.mxu0 %v735
      %v4029 = vpop.f32.mrf.mxu0
      %v4030 = vadd.f32 %v3821, %v4029
      %4031 = vmatmul.f32.gmra.mxu0 %v738
      %v4032 = vpop.f32.mrf.mxu0
      %v4033 = vadd.f32 %v3824, %v4032
      %4034 = vmatmul.f32.gmra.mxu0 %v741
      %v4035 = vpop.f32.mrf.mxu0
      %v4036 = vadd.f32 %v3827, %v4035
      %4037 = vmatmul.f32.gmra.mxu0 %v744
      %v4038 = vpop.f32.mrf.mxu0
      %v4039 = vadd.f32 %v3830, %v4038
      %4040 = vmatmul.f32.gmra.mxu0 %v747
      %v4041 = vpop.f32.mrf.mxu0
      %v4042 = vadd.f32 %v3833, %v4041
      %4043 = vmatmul.f32.gmra.mxu0 %v750
      %v4044 = vpop.f32.mrf.mxu0
      %v4045 = vadd.f32 %v3836, %v4044
      %4046 = vmatmul.f32.gmra.mxu0 %v753
      %v4047 = vpop.f32.mrf.mxu0
      %v4048 = vadd.f32 %v3839, %v4047
      %4049 = vmatmul.f32.gmra.mxu0 %v762
      %v4050 = vpop.f32.mrf.mxu0
      %v4051 = vadd.f32 %v3842, %v4050
      %4052 = vmatmul.f32.gmra.mxu0 %v765
      %v4053 = vpop.f32.mrf.mxu0
      %v4054 = vadd.f32 %v3845, %v4053
      %4055 = vmatmul.f32.gmra.mxu0 %v768
      %v4056 = vpop.f32.mrf.mxu0
      %v4057 = vadd.f32 %v3848, %v4056
      %4058 = vmatmul.f32.gmra.mxu0 %v771
      %v4059 = vpop.f32.mrf.mxu0
      %v4060 = vadd.f32 %v3851, %v4059
      %4061 = vmatmul.f32.gmra.mxu0 %v774
      %v4062 = vpop.f32.mrf.mxu0
      %v4063 = vadd.f32 %v3854, %v4062
      %4064 = vmatmul.f32.gmra.mxu0 %v777
      %v4065 = vpop.f32.mrf.mxu0
      %v4066 = vadd.f32 %v3857, %v4065
      %4067 = vmatmul.f32.gmra.mxu0 %v780
      %v4068 = vpop.f32.mrf.mxu0
      %v4069 = vadd.f32 %v3860, %v4068
      %4070 = vmatmul.f32.gmra.mxu0 %v783
      %v4071 = vpop.f32.mrf.mxu0
      %v4072 = vadd.f32 %v3863, %v4071
      %4073 = vmatmul.f32.gmra.mxu0 %v792
      %v4074 = vpop.f32.mrf.mxu0
      %v4075 = vadd.f32 %v3866, %v4074
      %4076 = vmatmul.f32.gmra.mxu0 %v795
      %v4077 = vpop.f32.mrf.mxu0
      %v4078 = vadd.f32 %v3869, %v4077
      %4079 = vmatmul.f32.gmra.mxu0 %v798
      %v4080 = vpop.f32.mrf.mxu0
      %v4081 = vadd.f32 %v3872, %v4080
      %4082 = vmatmul.f32.gmra.mxu0 %v801
      %v4083 = vpop.f32.mrf.mxu0
      %v4084 = vadd.f32 %v3875, %v4083
      %4085 = vmatmul.f32.gmra.mxu0 %v804
      %v4086 = vpop.f32.mrf.mxu0
      %v4087 = vadd.f32 %v3878, %v4086
      %4088 = vmatmul.f32.gmra.mxu0 %v807
      %v4089 = vpop.f32.mrf.mxu0
      %v4090 = vadd.f32 %v3881, %v4089
      %4091 = vmatmul.f32.gmra.mxu0 %v810
      %v4092 = vpop.f32.mrf.mxu0
      %v4093 = vadd.f32 %v3884, %v4092
      %4094 = vmatmul.f32.gmra.mxu0 %v813
      %v4095 = vpop.f32.mrf.mxu0
      %v4096 = vadd.f32 %v3887, %v4095
      %4097 = vmatmul.f32.gmra.mxu0 %v822
      %v4098 = vpop.f32.mrf.mxu0
      %v4099 = vadd.f32 %v3890, %v4098
      %4100 = vmatmul.f32.gmra.mxu0 %v825
      %v4101 = vpop.f32.mrf.mxu0
      %v4102 = vadd.f32 %v3893, %v4101
      %4103 = vmatmul.f32.gmra.mxu0 %v828
      %v4104 = vpop.f32.mrf.mxu0
      %v4105 = vadd.f32 %v3896, %v4104
      %4106 = vmatmul.f32.gmra.mxu0 %v831
      %v4107 = vpop.f32.mrf.mxu0
      %v4108 = vadd.f32 %v3899, %v4107
      %4109 = vmatmul.f32.gmra.mxu0 %v834
      %v4110 = vpop.f32.mrf.mxu0
      %v4111 = vadd.f32 %v3902, %v4110
      %4112 = vmatmul.f32.gmra.mxu0 %v837
      %v4113 = vpop.f32.mrf.mxu0
      %v4114 = vadd.f32 %v3905, %v4113
      %4115 = vmatmul.f32.gmra.mxu0 %v840
      %v4116 = vpop.f32.mrf.mxu0
      %v4117 = vadd.f32 %v3908, %v4116
      %4118 = vmatmul.f32.gmra.mxu0 %v843
      %v4119 = vpop.f32.mrf.mxu0
      %v4120 = vadd.f32 %v3911, %v4119
      %4121 = vmatmul.f32.gmra.mxu0 %v852
      %v4122 = vpop.f32.mrf.mxu0
      %v4123 = vadd.f32 %v3914, %v4122
      %4124 = vmatmul.f32.gmra.mxu0 %v855
      %v4125 = vpop.f32.mrf.mxu0
      %v4126 = vadd.f32 %v3917, %v4125
      %4127 = vmatmul.f32.gmra.mxu0 %v858
      %v4128 = vpop.f32.mrf.mxu0
      %v4129 = vadd.f32 %v3920, %v4128
      %4130 = vmatmul.f32.gmra.mxu0 %v861
      %v4131 = vpop.f32.mrf.mxu0
      %v4132 = vadd.f32 %v3923, %v4131
      %4133 = vmatmul.f32.gmra.mxu0 %v864
      %v4134 = vpop.f32.mrf.mxu0
      %v4135 = vadd.f32 %v3926, %v4134
      %4136 = vmatmul.f32.gmra.mxu0 %v867
      %v4137 = vpop.f32.mrf.mxu0
      %v4138 = vadd.f32 %v3929, %v4137
      %4139 = vmatmul.f32.gmra.mxu0 %v870
      %v4140 = vpop.f32.mrf.mxu0
      %v4141 = vadd.f32 %v3932, %v4140
      %4142 = vmatmul.f32.gmra.mxu0 %v873
      %v4143 = vpop.f32.mrf.mxu0
      %v4144 = vadd.f32 %v3935, %v4143
      %4145 = vdwg.mxu0
      %4146 = vmatpush.msra.mxu0 %v1602
      %4147 = vmatpush.msra.mxu0 %v1601
      %4148 = vmatpush.msra.mxu0 %v1600
      %4149 = vmatpush.msra.mxu0 %v1599
      %4150 = vmatpush.msra.mxu0 %v1598
      %4151 = vmatpush.msra.mxu0 %v1597
      %4152 = vmatpush.msra.mxu0 %v1596
      %4153 = vmatpush.msra.mxu0 %v1595
      %4154 = vmatpush.msra.mxu0 %v1594
      %4155 = vmatpush.msra.mxu0 %v1593
      %4156 = vmatpush.msra.mxu0 %v1592
      %4157 = vmatpush.msra.mxu0 %v1591
      %4158 = vmatpush.msra.mxu0 %v1590
      %4159 = vmatpush.msra.mxu0 %v1589
      %4160 = vmatpush.msra.mxu0 %v1588
      %4161 = vmatpush.msra.mxu0 %v1587
      %4162 = vmatmul.f32.gmra.mxu0 %v1043
      %v4163 = vpop.f32.mrf.mxu0
      %v4164 = vadd.f32 %v3955, %v4163
      %4165 = vmatmul.f32.gmra.mxu0 %v1046
      %v4166 = vpop.f32.mrf.mxu0
      %v4167 = vadd.f32 %v3958, %v4166
      %4168 = vmatmul.f32.gmra.mxu0 %v1049
      %v4169 = vpop.f32.mrf.mxu0
      %v4170 = vadd.f32 %v3961, %v4169
      %4171 = vmatmul.f32.gmra.mxu0 %v1052
      %v4172 = vpop.f32.mrf.mxu0
      %v4173 = vadd.f32 %v3964, %v4172
      %4174 = vmatmul.f32.gmra.mxu0 %v1055
      %v4175 = vpop.f32.mrf.mxu0
      %v4176 = vadd.f32 %v3967, %v4175
      %4177 = vmatmul.f32.gmra.mxu0 %v1058
      %v4178 = vpop.f32.mrf.mxu0
      %v4179 = vadd.f32 %v3970, %v4178
      %4180 = vmatmul.f32.gmra.mxu0 %v1061
      %v4181 = vpop.f32.mrf.mxu0
      %v4182 = vadd.f32 %v3973, %v4181
      %4183 = vmatmul.f32.gmra.mxu0 %v1064
      %v4184 = vpop.f32.mrf.mxu0
      %v4185 = vadd.f32 %v3976, %v4184
      %4186 = vmatmul.f32.gmra.mxu0 %v1073
      %v4187 = vpop.f32.mrf.mxu0
      %v4188 = vadd.f32 %v3979, %v4187
      %4189 = vmatmul.f32.gmra.mxu0 %v1076
      %v4190 = vpop.f32.mrf.mxu0
      %v4191 = vadd.f32 %v3982, %v4190
      %4192 = vmatmul.f32.gmra.mxu0 %v1079
      %v4193 = vpop.f32.mrf.mxu0
      %v4194 = vadd.f32 %v3985, %v4193
      %4195 = vmatmul.f32.gmra.mxu0 %v1082
      %v4196 = vpop.f32.mrf.mxu0
      %v4197 = vadd.f32 %v3988, %v4196
      %4198 = vmatmul.f32.gmra.mxu0 %v1085
      %v4199 = vpop.f32.mrf.mxu0
      %v4200 = vadd.f32 %v3991, %v4199
      %4201 = vmatmul.f32.gmra.mxu0 %v1088
      %v4202 = vpop.f32.mrf.mxu0
      %v4203 = vadd.f32 %v3994, %v4202
      %4204 = vmatmul.f32.gmra.mxu0 %v1091
      %v4205 = vpop.f32.mrf.mxu0
      %v4206 = vadd.f32 %v3997, %v4205
      %4207 = vmatmul.f32.gmra.mxu0 %v1094
      %v4208 = vpop.f32.mrf.mxu0
      %v4209 = vadd.f32 %v4000, %v4208
      %4210 = vmatmul.f32.gmra.mxu0 %v1103
      %v4211 = vpop.f32.mrf.mxu0
      %v4212 = vadd.f32 %v4003, %v4211
      %4213 = vmatmul.f32.gmra.mxu0 %v1106
      %v4214 = vpop.f32.mrf.mxu0
      %v4215 = vadd.f32 %v4006, %v4214
      %4216 = vmatmul.f32.gmra.mxu0 %v1109
      %v4217 = vpop.f32.mrf.mxu0
      %v4218 = vadd.f32 %v4009, %v4217
      %4219 = vmatmul.f32.gmra.mxu0 %v1112
      %v4220 = vpop.f32.mrf.mxu0
      %v4221 = vadd.f32 %v4012, %v4220
      %4222 = vmatmul.f32.gmra.mxu0 %v1115
      %v4223 = vpop.f32.mrf.mxu0
      %v4224 = vadd.f32 %v4015, %v4223
      %4225 = vmatmul.f32.gmra.mxu0 %v1118
      %v4226 = vpop.f32.mrf.mxu0
      %v4227 = vadd.f32 %v4018, %v4226
      %4228 = vmatmul.f32.gmra.mxu0 %v1121
      %v4229 = vpop.f32.mrf.mxu0
      %v4230 = vadd.f32 %v4021, %v4229
      %4231 = vmatmul.f32.gmra.mxu0 %v1124
      %v4232 = vpop.f32.mrf.mxu0
      %v4233 = vadd.f32 %v4024, %v4232
      %4234 = vmatmul.f32.gmra.mxu0 %v1133
      %v4235 = vpop.f32.mrf.mxu0
      %v4236 = vadd.f32 %v4027, %v4235
      %4237 = vmatmul.f32.gmra.mxu0 %v1136
      %v4238 = vpop.f32.mrf.mxu0
      %v4239 = vadd.f32 %v4030, %v4238
      %4240 = vmatmul.f32.gmra.mxu0 %v1139
      %v4241 = vpop.f32.mrf.mxu0
      %v4242 = vadd.f32 %v4033, %v4241
      %4243 = vmatmul.f32.gmra.mxu0 %v1142
      %v4244 = vpop.f32.mrf.mxu0
      %v4245 = vadd.f32 %v4036, %v4244
      %4246 = vmatmul.f32.gmra.mxu0 %v1145
      %v4247 = vpop.f32.mrf.mxu0
      %v4248 = vadd.f32 %v4039, %v4247
      %4249 = vmatmul.f32.gmra.mxu0 %v1148
      %v4250 = vpop.f32.mrf.mxu0
      %v4251 = vadd.f32 %v4042, %v4250
      %4252 = vmatmul.f32.gmra.mxu0 %v1151
      %v4253 = vpop.f32.mrf.mxu0
      %v4254 = vadd.f32 %v4045, %v4253
      %4255 = vmatmul.f32.gmra.mxu0 %v1154
      %v4256 = vpop.f32.mrf.mxu0
      %v4257 = vadd.f32 %v4048, %v4256
      %4258 = vmatmul.f32.gmra.mxu0 %v1163
      %v4259 = vpop.f32.mrf.mxu0
      %v4260 = vadd.f32 %v4051, %v4259
      %4261 = vmatmul.f32.gmra.mxu0 %v1166
      %v4262 = vpop.f32.mrf.mxu0
      %v4263 = vadd.f32 %v4054, %v4262
      %4264 = vmatmul.f32.gmra.mxu0 %v1169
      %v4265 = vpop.f32.mrf.mxu0
      %v4266 = vadd.f32 %v4057, %v4265
      %4267 = vmatmul.f32.gmra.mxu0 %v1172
      %v4268 = vpop.f32.mrf.mxu0
      %v4269 = vadd.f32 %v4060, %v4268
      %4270 = vmatmul.f32.gmra.mxu0 %v1175
      %v4271 = vpop.f32.mrf.mxu0
      %v4272 = vadd.f32 %v4063, %v4271
      %4273 = vmatmul.f32.gmra.mxu0 %v1178
      %v4274 = vpop.f32.mrf.mxu0
      %v4275 = vadd.f32 %v4066, %v4274
      %4276 = vmatmul.f32.gmra.mxu0 %v1181
      %v4277 = vpop.f32.mrf.mxu0
      %v4278 = vadd.f32 %v4069, %v4277
      %4279 = vmatmul.f32.gmra.mxu0 %v1184
      %v4280 = vpop.f32.mrf.mxu0
      %v4281 = vadd.f32 %v4072, %v4280
      %4282 = vmatmul.f32.gmra.mxu0 %v1193
      %v4283 = vpop.f32.mrf.mxu0
      %v4284 = vadd.f32 %v4075, %v4283
      %4285 = vmatmul.f32.gmra.mxu0 %v1196
      %v4286 = vpop.f32.mrf.mxu0
      %v4287 = vadd.f32 %v4078, %v4286
      %4288 = vmatmul.f32.gmra.mxu0 %v1199
      %v4289 = vpop.f32.mrf.mxu0
      %v4290 = vadd.f32 %v4081, %v4289
      %4291 = vmatmul.f32.gmra.mxu0 %v1202
      %v4292 = vpop.f32.mrf.mxu0
      %v4293 = vadd.f32 %v4084, %v4292
      %4294 = vmatmul.f32.gmra.mxu0 %v1205
      %v4295 = vpop.f32.mrf.mxu0
      %v4296 = vadd.f32 %v4087, %v4295
      %4297 = vmatmul.f32.gmra.mxu0 %v1208
      %v4298 = vpop.f32.mrf.mxu0
      %v4299 = vadd.f32 %v4090, %v4298
      %4300 = vmatmul.f32.gmra.mxu0 %v1211
      %v4301 = vpop.f32.mrf.mxu0
      %v4302 = vadd.f32 %v4093, %v4301
      %4303 = vmatmul.f32.gmra.mxu0 %v1214
      %v4304 = vpop.f32.mrf.mxu0
      %v4305 = vadd.f32 %v4096, %v4304
      %4306 = vmatmul.f32.gmra.mxu0 %v1223
      %v4307 = vpop.f32.mrf.mxu0
      %v4308 = vadd.f32 %v4099, %v4307
      %4309 = vmatmul.f32.gmra.mxu0 %v1226
      %v4310 = vpop.f32.mrf.mxu0
      %v4311 = vadd.f32 %v4102, %v4310
      %4312 = vmatmul.f32.gmra.mxu0 %v1229
      %v4313 = vpop.f32.mrf.mxu0
      %v4314 = vadd.f32 %v4105, %v4313
      %4315 = vmatmul.f32.gmra.mxu0 %v1232
      %v4316 = vpop.f32.mrf.mxu0
      %v4317 = vadd.f32 %v4108, %v4316
      %4318 = vmatmul.f32.gmra.mxu0 %v1235
      %v4319 = vpop.f32.mrf.mxu0
      %v4320 = vadd.f32 %v4111, %v4319
      %4321 = vmatmul.f32.gmra.mxu0 %v1238
      %v4322 = vpop.f32.mrf.mxu0
      %v4323 = vadd.f32 %v4114, %v4322
      %4324 = vmatmul.f32.gmra.mxu0 %v1241
      %v4325 = vpop.f32.mrf.mxu0
      %v4326 = vadd.f32 %v4117, %v4325
      %4327 = vmatmul.f32.gmra.mxu0 %v1244
      %v4328 = vpop.f32.mrf.mxu0
      %v4329 = vadd.f32 %v4120, %v4328
      %4330 = vmatmul.f32.gmra.mxu0 %v1253
      %v4331 = vpop.f32.mrf.mxu0
      %v4332 = vadd.f32 %v4123, %v4331
      %4333 = vmatmul.f32.gmra.mxu0 %v1256
      %v4334 = vpop.f32.mrf.mxu0
      %v4335 = vadd.f32 %v4126, %v4334
      %4336 = vmatmul.f32.gmra.mxu0 %v1259
      %v4337 = vpop.f32.mrf.mxu0
      %v4338 = vadd.f32 %v4129, %v4337
      %4339 = vmatmul.f32.gmra.mxu0 %v1262
      %v4340 = vpop.f32.mrf.mxu0
      %v4341 = vadd.f32 %v4132, %v4340
      %4342 = vmatmul.f32.gmra.mxu0 %v1265
      %v4343 = vpop.f32.mrf.mxu0
      %v4344 = vadd.f32 %v4135, %v4343
      %4345 = vmatmul.f32.gmra.mxu0 %v1268
      %v4346 = vpop.f32.mrf.mxu0
      %v4347 = vadd.f32 %v4138, %v4346
      %4348 = vmatmul.f32.gmra.mxu0 %v1271
      %v4349 = vpop.f32.mrf.mxu0
      %v4350 = vadd.f32 %v4141, %v4349
      %4351 = vmatmul.f32.gmra.mxu0 %v1274
      %v4352 = vpop.f32.mrf.mxu0
      %v4353 = vadd.f32 %v4144, %v4352
      %4354 = vdwg.mxu0
      %4355 = vmatpush.msra.mxu0 %v1618
      %4356 = vmatpush.msra.mxu0 %v1617
      %4357 = vmatpush.msra.mxu0 %v1616
      %4358 = vmatpush.msra.mxu0 %v1615
      %4359 = vmatpush.msra.mxu0 %v1614
      %4360 = vmatpush.msra.mxu0 %v1613
      %4361 = vmatpush.msra.mxu0 %v1612
      %4362 = vmatpush.msra.mxu0 %v1611
      %4363 = vmatpush.msra.mxu0 %v1610
      %4364 = vmatpush.msra.mxu0 %v1609
      %4365 = vmatpush.msra.mxu0 %v1608
      %4366 = vmatpush.msra.mxu0 %v1607
      %4367 = vmatpush.msra.mxu0 %v1606
      %4368 = vmatpush.msra.mxu0 %v1605
      %4369 = vmatpush.msra.mxu0 %v1604
      %4370 = vmatpush.msra.mxu0 %v1603
      %4371 = vmatmul.f32.gmra.mxu0 %v231
      %v4372 = vpop.f32.mrf.mxu0
      %v4373 = vadd.f32 %v4164, %v4372
      %4374 = vmatmul.f32.gmra.mxu0 %v233
      %v4375 = vpop.f32.mrf.mxu0
      %v4376 = vadd.f32 %v4167, %v4375
      %4377 = vmatmul.f32.gmra.mxu0 %v235
      %v4378 = vpop.f32.mrf.mxu0
      %v4379 = vadd.f32 %v4170, %v4378
      %4380 = vmatmul.f32.gmra.mxu0 %v237
      %v4381 = vpop.f32.mrf.mxu0
      %v4382 = vadd.f32 %v4173, %v4381
      %4383 = vmatmul.f32.gmra.mxu0 %v239
      %v4384 = vpop.f32.mrf.mxu0
      %v4385 = vadd.f32 %v4176, %v4384
      %4386 = vmatmul.f32.gmra.mxu0 %v241
      %v4387 = vpop.f32.mrf.mxu0
      %v4388 = vadd.f32 %v4179, %v4387
      %4389 = vmatmul.f32.gmra.mxu0 %v243
      %v4390 = vpop.f32.mrf.mxu0
      %v4391 = vadd.f32 %v4182, %v4390
      %4392 = vmatmul.f32.gmra.mxu0 %v245
      %v4393 = vpop.f32.mrf.mxu0
      %v4394 = vadd.f32 %v4185, %v4393
      %4395 = vmatmul.f32.gmra.mxu0 %v251
      %v4396 = vpop.f32.mrf.mxu0
      %v4397 = vadd.f32 %v4188, %v4396
      %4398 = vmatmul.f32.gmra.mxu0 %v253
      %v4399 = vpop.f32.mrf.mxu0
      %v4400 = vadd.f32 %v4191, %v4399
      %4401 = vmatmul.f32.gmra.mxu0 %v255
      %v4402 = vpop.f32.mrf.mxu0
      %v4403 = vadd.f32 %v4194, %v4402
      %4404 = vmatmul.f32.gmra.mxu0 %v257
      %v4405 = vpop.f32.mrf.mxu0
      %v4406 = vadd.f32 %v4197, %v4405
      %4407 = vmatmul.f32.gmra.mxu0 %v259
      %v4408 = vpop.f32.mrf.mxu0
      %v4409 = vadd.f32 %v4200, %v4408
      %4410 = vmatmul.f32.gmra.mxu0 %v261
      %v4411 = vpop.f32.mrf.mxu0
      %v4412 = vadd.f32 %v4203, %v4411
      %4413 = vmatmul.f32.gmra.mxu0 %v263
      %v4414 = vpop.f32.mrf.mxu0
      %v4415 = vadd.f32 %v4206, %v4414
      %4416 = vmatmul.f32.gmra.mxu0 %v265
      %v4417 = vpop.f32.mrf.mxu0
      %v4418 = vadd.f32 %v4209, %v4417
      %4419 = vmatmul.f32.gmra.mxu0 %v271
      %v4420 = vpop.f32.mrf.mxu0
      %v4421 = vadd.f32 %v4212, %v4420
      %4422 = vmatmul.f32.gmra.mxu0 %v273
      %v4423 = vpop.f32.mrf.mxu0
      %v4424 = vadd.f32 %v4215, %v4423
      %4425 = vmatmul.f32.gmra.mxu0 %v275
      %v4426 = vpop.f32.mrf.mxu0
      %v4427 = vadd.f32 %v4218, %v4426
      %4428 = vmatmul.f32.gmra.mxu0 %v277
      %v4429 = vpop.f32.mrf.mxu0
      %v4430 = vadd.f32 %v4221, %v4429
      %4431 = vmatmul.f32.gmra.mxu0 %v279
      %v4432 = vpop.f32.mrf.mxu0
      %v4433 = vadd.f32 %v4224, %v4432
      %4434 = vmatmul.f32.gmra.mxu0 %v281
      %v4435 = vpop.f32.mrf.mxu0
      %v4436 = vadd.f32 %v4227, %v4435
      %4437 = vmatmul.f32.gmra.mxu0 %v283
      %v4438 = vpop.f32.mrf.mxu0
      %v4439 = vadd.f32 %v4230, %v4438
      %4440 = vmatmul.f32.gmra.mxu0 %v285
      %v4441 = vpop.f32.mrf.mxu0
      %v4442 = vadd.f32 %v4233, %v4441
      %4443 = vmatmul.f32.gmra.mxu0 %v291
      %v4444 = vpop.f32.mrf.mxu0
      %v4445 = vadd.f32 %v4236, %v4444
      %4446 = vmatmul.f32.gmra.mxu0 %v293
      %v4447 = vpop.f32.mrf.mxu0
      %v4448 = vadd.f32 %v4239, %v4447
      %4449 = vmatmul.f32.gmra.mxu0 %v295
      %v4450 = vpop.f32.mrf.mxu0
      %v4451 = vadd.f32 %v4242, %v4450
      %4452 = vmatmul.f32.gmra.mxu0 %v297
      %v4453 = vpop.f32.mrf.mxu0
      %v4454 = vadd.f32 %v4245, %v4453
      %4455 = vmatmul.f32.gmra.mxu0 %v299
      %v4456 = vpop.f32.mrf.mxu0
      %v4457 = vadd.f32 %v4248, %v4456
      %4458 = vmatmul.f32.gmra.mxu0 %v301
      %v4459 = vpop.f32.mrf.mxu0
      %v4460 = vadd.f32 %v4251, %v4459
      %4461 = vmatmul.f32.gmra.mxu0 %v303
      %v4462 = vpop.f32.mrf.mxu0
      %v4463 = vadd.f32 %v4254, %v4462
      %4464 = vmatmul.f32.gmra.mxu0 %v305
      %v4465 = vpop.f32.mrf.mxu0
      %v4466 = vadd.f32 %v4257, %v4465
      %4467 = vmatmul.f32.gmra.mxu0 %v311
      %v4468 = vpop.f32.mrf.mxu0
      %v4469 = vadd.f32 %v4260, %v4468
      %4470 = vmatmul.f32.gmra.mxu0 %v313
      %v4471 = vpop.f32.mrf.mxu0
      %v4472 = vadd.f32 %v4263, %v4471
      %4473 = vmatmul.f32.gmra.mxu0 %v315
      %v4474 = vpop.f32.mrf.mxu0
      %v4475 = vadd.f32 %v4266, %v4474
      %4476 = vmatmul.f32.gmra.mxu0 %v317
      %v4477 = vpop.f32.mrf.mxu0
      %v4478 = vadd.f32 %v4269, %v4477
      %4479 = vmatmul.f32.gmra.mxu0 %v319
      %v4480 = vpop.f32.mrf.mxu0
      %v4481 = vadd.f32 %v4272, %v4480
      %4482 = vmatmul.f32.gmra.mxu0 %v321
      %v4483 = vpop.f32.mrf.mxu0
      %v4484 = vadd.f32 %v4275, %v4483
      %4485 = vmatmul.f32.gmra.mxu0 %v323
      %v4486 = vpop.f32.mrf.mxu0
      %v4487 = vadd.f32 %v4278, %v4486
      %4488 = vmatmul.f32.gmra.mxu0 %v325
      %v4489 = vpop.f32.mrf.mxu0
      %v4490 = vadd.f32 %v4281, %v4489
      %4491 = vmatmul.f32.gmra.mxu0 %v331
      %v4492 = vpop.f32.mrf.mxu0
      %v4493 = vadd.f32 %v4284, %v4492
      %4494 = vmatmul.f32.gmra.mxu0 %v333
      %v4495 = vpop.f32.mrf.mxu0
      %v4496 = vadd.f32 %v4287, %v4495
      %4497 = vmatmul.f32.gmra.mxu0 %v335
      %v4498 = vpop.f32.mrf.mxu0
      %v4499 = vadd.f32 %v4290, %v4498
      %4500 = vmatmul.f32.gmra.mxu0 %v337
      %v4501 = vpop.f32.mrf.mxu0
      %v4502 = vadd.f32 %v4293, %v4501
      %4503 = vmatmul.f32.gmra.mxu0 %v339
      %v4504 = vpop.f32.mrf.mxu0
      %v4505 = vadd.f32 %v4296, %v4504
      %4506 = vmatmul.f32.gmra.mxu0 %v341
      %v4507 = vpop.f32.mrf.mxu0
      %v4508 = vadd.f32 %v4299, %v4507
      %4509 = vmatmul.f32.gmra.mxu0 %v343
      %v4510 = vpop.f32.mrf.mxu0
      %v4511 = vadd.f32 %v4302, %v4510
      %4512 = vmatmul.f32.gmra.mxu0 %v345
      %v4513 = vpop.f32.mrf.mxu0
      %v4514 = vadd.f32 %v4305, %v4513
      %4515 = vmatmul.f32.gmra.mxu0 %v351
      %v4516 = vpop.f32.mrf.mxu0
      %v4517 = vadd.f32 %v4308, %v4516
      %4518 = vmatmul.f32.gmra.mxu0 %v353
      %v4519 = vpop.f32.mrf.mxu0
      %v4520 = vadd.f32 %v4311, %v4519
      %4521 = vmatmul.f32.gmra.mxu0 %v355
      %v4522 = vpop.f32.mrf.mxu0
      %v4523 = vadd.f32 %v4314, %v4522
      %4524 = vmatmul.f32.gmra.mxu0 %v357
      %v4525 = vpop.f32.mrf.mxu0
      %v4526 = vadd.f32 %v4317, %v4525
      %4527 = vmatmul.f32.gmra.mxu0 %v359
      %v4528 = vpop.f32.mrf.mxu0
      %v4529 = vadd.f32 %v4320, %v4528
      %4530 = vmatmul.f32.gmra.mxu0 %v361
      %v4531 = vpop.f32.mrf.mxu0
      %v4532 = vadd.f32 %v4323, %v4531
      %4533 = vmatmul.f32.gmra.mxu0 %v363
      %v4534 = vpop.f32.mrf.mxu0
      %v4535 = vadd.f32 %v4326, %v4534
      %4536 = vmatmul.f32.gmra.mxu0 %v365
      %v4537 = vpop.f32.mrf.mxu0
      %v4538 = vadd.f32 %v4329, %v4537
      %4539 = vmatmul.f32.gmra.mxu0 %v371
      %v4540 = vpop.f32.mrf.mxu0
      %v4541 = vadd.f32 %v4332, %v4540
      %4542 = vmatmul.f32.gmra.mxu0 %v373
      %v4543 = vpop.f32.mrf.mxu0
      %v4544 = vadd.f32 %v4335, %v4543
      %4545 = vmatmul.f32.gmra.mxu0 %v375
      %v4546 = vpop.f32.mrf.mxu0
      %v4547 = vadd.f32 %v4338, %v4546
      %4548 = vmatmul.f32.gmra.mxu0 %v377
      %v4549 = vpop.f32.mrf.mxu0
      %v4550 = vadd.f32 %v4341, %v4549
      %4551 = vmatmul.f32.gmra.mxu0 %v379
      %v4552 = vpop.f32.mrf.mxu0
      %v4553 = vadd.f32 %v4344, %v4552
      %4554 = vmatmul.f32.gmra.mxu0 %v381
      %v4555 = vpop.f32.mrf.mxu0
      %v4556 = vadd.f32 %v4347, %v4555
      %4557 = vmatmul.f32.gmra.mxu0 %v383
      %v4558 = vpop.f32.mrf.mxu0
      %v4559 = vadd.f32 %v4350, %v4558
      %4560 = vmatmul.f32.gmra.mxu0 %v385
      %v4561 = vpop.f32.mrf.mxu0
      %v4562 = vadd.f32 %v4353, %v4561
      %4563 = vdwg.mxu0
      %4564 = vmatpush.msra.mxu0 %v1634
      %4565 = vmatpush.msra.mxu0 %v1633
      %4566 = vmatpush.msra.mxu0 %v1632
      %4567 = vmatpush.msra.mxu0 %v1631
      %4568 = vmatpush.msra.mxu0 %v1630
      %4569 = vmatpush.msra.mxu0 %v1629
      %4570 = vmatpush.msra.mxu0 %v1628
      %4571 = vmatpush.msra.mxu0 %v1627
      %4572 = vmatpush.msra.mxu0 %v1626
      %4573 = vmatpush.msra.mxu0 %v1625
      %4574 = vmatpush.msra.mxu0 %v1624
      %4575 = vmatpush.msra.mxu0 %v1623
      %4576 = vmatpush.msra.mxu0 %v1622
      %4577 = vmatpush.msra.mxu0 %v1621
      %4578 = vmatpush.msra.mxu0 %v1620
      %4579 = vmatpush.msra.mxu0 %v1619
      %4580 = vmatmul.f32.gmra.mxu0 %v645
      %v4581 = vpop.f32.mrf.mxu0
      %v4582 = vadd.f32 %v4373, %v4581
      %4583 = vmatmul.f32.gmra.mxu0 %v648
      %v4584 = vpop.f32.mrf.mxu0
      %v4585 = vadd.f32 %v4376, %v4584
      %4586 = vmatmul.f32.gmra.mxu0 %v651
      %v4587 = vpop.f32.mrf.mxu0
      %v4588 = vadd.f32 %v4379, %v4587
      %4589 = vmatmul.f32.gmra.mxu0 %v654
      %v4590 = vpop.f32.mrf.mxu0
      %v4591 = vadd.f32 %v4382, %v4590
      %4592 = vmatmul.f32.gmra.mxu0 %v657
      %v4593 = vpop.f32.mrf.mxu0
      %v4594 = vadd.f32 %v4385, %v4593
      %4595 = vmatmul.f32.gmra.mxu0 %v660
      %v4596 = vpop.f32.mrf.mxu0
      %v4597 = vadd.f32 %v4388, %v4596
      %4598 = vmatmul.f32.gmra.mxu0 %v663
      %v4599 = vpop.f32.mrf.mxu0
      %v4600 = vadd.f32 %v4391, %v4599
      %4601 = vmatmul.f32.gmra.mxu0 %v666
      %v4602 = vpop.f32.mrf.mxu0
      %v4603 = vadd.f32 %v4394, %v4602
      %4604 = vmatmul.f32.gmra.mxu0 %v675
      %v4605 = vpop.f32.mrf.mxu0
      %v4606 = vadd.f32 %v4397, %v4605
      %4607 = vmatmul.f32.gmra.mxu0 %v678
      %v4608 = vpop.f32.mrf.mxu0
      %v4609 = vadd.f32 %v4400, %v4608
      %4610 = vmatmul.f32.gmra.mxu0 %v681
      %v4611 = vpop.f32.mrf.mxu0
      %v4612 = vadd.f32 %v4403, %v4611
      %4613 = vmatmul.f32.gmra.mxu0 %v684
      %v4614 = vpop.f32.mrf.mxu0
      %v4615 = vadd.f32 %v4406, %v4614
      %4616 = vmatmul.f32.gmra.mxu0 %v687
      %v4617 = vpop.f32.mrf.mxu0
      %v4618 = vadd.f32 %v4409, %v4617
      %4619 = vmatmul.f32.gmra.mxu0 %v690
      %v4620 = vpop.f32.mrf.mxu0
      %v4621 = vadd.f32 %v4412, %v4620
      %4622 = vmatmul.f32.gmra.mxu0 %v693
      %v4623 = vpop.f32.mrf.mxu0
      %v4624 = vadd.f32 %v4415, %v4623
      %4625 = vmatmul.f32.gmra.mxu0 %v696
      %v4626 = vpop.f32.mrf.mxu0
      %v4627 = vadd.f32 %v4418, %v4626
      %4628 = vmatmul.f32.gmra.mxu0 %v705
      %v4629 = vpop.f32.mrf.mxu0
      %v4630 = vadd.f32 %v4421, %v4629
      %4631 = vmatmul.f32.gmra.mxu0 %v708
      %v4632 = vpop.f32.mrf.mxu0
      %v4633 = vadd.f32 %v4424, %v4632
      %4634 = vmatmul.f32.gmra.mxu0 %v711
      %v4635 = vpop.f32.mrf.mxu0
      %v4636 = vadd.f32 %v4427, %v4635
      %4637 = vmatmul.f32.gmra.mxu0 %v714
      %v4638 = vpop.f32.mrf.mxu0
      %v4639 = vadd.f32 %v4430, %v4638
      %4640 = vmatmul.f32.gmra.mxu0 %v717
      %v4641 = vpop.f32.mrf.mxu0
      %v4642 = vadd.f32 %v4433, %v4641
      %4643 = vmatmul.f32.gmra.mxu0 %v720
      %v4644 = vpop.f32.mrf.mxu0
      %v4645 = vadd.f32 %v4436, %v4644
      %4646 = vmatmul.f32.gmra.mxu0 %v723
      %v4647 = vpop.f32.mrf.mxu0
      %v4648 = vadd.f32 %v4439, %v4647
      %4649 = vmatmul.f32.gmra.mxu0 %v726
      %v4650 = vpop.f32.mrf.mxu0
      %v4651 = vadd.f32 %v4442, %v4650
      %4652 = vmatmul.f32.gmra.mxu0 %v735
      %v4653 = vpop.f32.mrf.mxu0
      %v4654 = vadd.f32 %v4445, %v4653
      %4655 = vmatmul.f32.gmra.mxu0 %v738
      %v4656 = vpop.f32.mrf.mxu0
      %v4657 = vadd.f32 %v4448, %v4656
      %4658 = vmatmul.f32.gmra.mxu0 %v741
      %v4659 = vpop.f32.mrf.mxu0
      %v4660 = vadd.f32 %v4451, %v4659
      %4661 = vmatmul.f32.gmra.mxu0 %v744
      %v4662 = vpop.f32.mrf.mxu0
      %v4663 = vadd.f32 %v4454, %v4662
      %4664 = vmatmul.f32.gmra.mxu0 %v747
      %v4665 = vpop.f32.mrf.mxu0
      %v4666 = vadd.f32 %v4457, %v4665
      %4667 = vmatmul.f32.gmra.mxu0 %v750
      %v4668 = vpop.f32.mrf.mxu0
      %v4669 = vadd.f32 %v4460, %v4668
      %4670 = vmatmul.f32.gmra.mxu0 %v753
      %v4671 = vpop.f32.mrf.mxu0
      %v4672 = vadd.f32 %v4463, %v4671
      %4673 = vmatmul.f32.gmra.mxu0 %v756
      %v4674 = vpop.f32.mrf.mxu0
      %v4675 = vadd.f32 %v4466, %v4674
      %4676 = vmatmul.f32.gmra.mxu0 %v765
      %v4677 = vpop.f32.mrf.mxu0
      %v4678 = vadd.f32 %v4469, %v4677
      %4679 = vmatmul.f32.gmra.mxu0 %v768
      %v4680 = vpop.f32.mrf.mxu0
      %v4681 = vadd.f32 %v4472, %v4680
      %4682 = vmatmul.f32.gmra.mxu0 %v771
      %v4683 = vpop.f32.mrf.mxu0
      %v4684 = vadd.f32 %v4475, %v4683
      %4685 = vmatmul.f32.gmra.mxu0 %v774
      %v4686 = vpop.f32.mrf.mxu0
      %v4687 = vadd.f32 %v4478, %v4686
      %4688 = vmatmul.f32.gmra.mxu0 %v777
      %v4689 = vpop.f32.mrf.mxu0
      %v4690 = vadd.f32 %v4481, %v4689
      %4691 = vmatmul.f32.gmra.mxu0 %v780
      %v4692 = vpop.f32.mrf.mxu0
      %v4693 = vadd.f32 %v4484, %v4692
      %4694 = vmatmul.f32.gmra.mxu0 %v783
      %v4695 = vpop.f32.mrf.mxu0
      %v4696 = vadd.f32 %v4487, %v4695
      %4697 = vmatmul.f32.gmra.mxu0 %v786
      %v4698 = vpop.f32.mrf.mxu0
      %v4699 = vadd.f32 %v4490, %v4698
      %4700 = vmatmul.f32.gmra.mxu0 %v795
      %v4701 = vpop.f32.mrf.mxu0
      %v4702 = vadd.f32 %v4493, %v4701
      %4703 = vmatmul.f32.gmra.mxu0 %v798
      %v4704 = vpop.f32.mrf.mxu0
      %v4705 = vadd.f32 %v4496, %v4704
      %4706 = vmatmul.f32.gmra.mxu0 %v801
      %v4707 = vpop.f32.mrf.mxu0
      %v4708 = vadd.f32 %v4499, %v4707
      %4709 = vmatmul.f32.gmra.mxu0 %v804
      %v4710 = vpop.f32.mrf.mxu0
      %v4711 = vadd.f32 %v4502, %v4710
      %4712 = vmatmul.f32.gmra.mxu0 %v807
      %v4713 = vpop.f32.mrf.mxu0
      %v4714 = vadd.f32 %v4505, %v4713
      %4715 = vmatmul.f32.gmra.mxu0 %v810
      %v4716 = vpop.f32.mrf.mxu0
      %v4717 = vadd.f32 %v4508, %v4716
      %4718 = vmatmul.f32.gmra.mxu0 %v813
      %v4719 = vpop.f32.mrf.mxu0
      %v4720 = vadd.f32 %v4511, %v4719
      %4721 = vmatmul.f32.gmra.mxu0 %v816
      %v4722 = vpop.f32.mrf.mxu0
      %v4723 = vadd.f32 %v4514, %v4722
      %4724 = vmatmul.f32.gmra.mxu0 %v825
      %v4725 = vpop.f32.mrf.mxu0
      %v4726 = vadd.f32 %v4517, %v4725
      %4727 = vmatmul.f32.gmra.mxu0 %v828
      %v4728 = vpop.f32.mrf.mxu0
      %v4729 = vadd.f32 %v4520, %v4728
      %4730 = vmatmul.f32.gmra.mxu0 %v831
      %v4731 = vpop.f32.mrf.mxu0
      %v4732 = vadd.f32 %v4523, %v4731
      %4733 = vmatmul.f32.gmra.mxu0 %v834
      %v4734 = vpop.f32.mrf.mxu0
      %v4735 = vadd.f32 %v4526, %v4734
      %4736 = vmatmul.f32.gmra.mxu0 %v837
      %v4737 = vpop.f32.mrf.mxu0
      %v4738 = vadd.f32 %v4529, %v4737
      %4739 = vmatmul.f32.gmra.mxu0 %v840
      %v4740 = vpop.f32.mrf.mxu0
      %v4741 = vadd.f32 %v4532, %v4740
      %4742 = vmatmul.f32.gmra.mxu0 %v843
      %v4743 = vpop.f32.mrf.mxu0
      %v4744 = vadd.f32 %v4535, %v4743
      %4745 = vmatmul.f32.gmra.mxu0 %v846
      %v4746 = vpop.f32.mrf.mxu0
      %v4747 = vadd.f32 %v4538, %v4746
      %4748 = vmatmul.f32.gmra.mxu0 %v855
      %v4749 = vpop.f32.mrf.mxu0
      %v4750 = vadd.f32 %v4541, %v4749
      %4751 = vmatmul.f32.gmra.mxu0 %v858
      %v4752 = vpop.f32.mrf.mxu0
      %v4753 = vadd.f32 %v4544, %v4752
      %4754 = vmatmul.f32.gmra.mxu0 %v861
      %v4755 = vpop.f32.mrf.mxu0
      %v4756 = vadd.f32 %v4547, %v4755
      %4757 = vmatmul.f32.gmra.mxu0 %v864
      %v4758 = vpop.f32.mrf.mxu0
      %v4759 = vadd.f32 %v4550, %v4758
      %4760 = vmatmul.f32.gmra.mxu0 %v867
      %v4761 = vpop.f32.mrf.mxu0
      %v4762 = vadd.f32 %v4553, %v4761
      %4763 = vmatmul.f32.gmra.mxu0 %v870
      %v4764 = vpop.f32.mrf.mxu0
      %v4765 = vadd.f32 %v4556, %v4764
      %4766 = vmatmul.f32.gmra.mxu0 %v873
      %v4767 = vpop.f32.mrf.mxu0
      %v4768 = vadd.f32 %v4559, %v4767
      %4769 = vmatmul.f32.gmra.mxu0 %v876
      %v4770 = vpop.f32.mrf.mxu0
      %v4771 = vadd.f32 %v4562, %v4770
      %4772 = vdwg.mxu0
      %4773 = vmatpush.msra.mxu0 %v1650
      %4774 = vmatpush.msra.mxu0 %v1649
      %4775 = vmatpush.msra.mxu0 %v1648
      %4776 = vmatpush.msra.mxu0 %v1647
      %4777 = vmatpush.msra.mxu0 %v1646
      %4778 = vmatpush.msra.mxu0 %v1645
      %4779 = vmatpush.msra.mxu0 %v1644
      %4780 = vmatpush.msra.mxu0 %v1643
      %4781 = vmatpush.msra.mxu0 %v1642
      %4782 = vmatpush.msra.mxu0 %v1641
      %4783 = vmatpush.msra.mxu0 %v1640
      %4784 = vmatpush.msra.mxu0 %v1639
      %4785 = vmatpush.msra.mxu0 %v1638
      %4786 = vmatpush.msra.mxu0 %v1637
      %4787 = vmatpush.msra.mxu0 %v1636
      %4788 = vmatpush.msra.mxu0 %v1635
      %4789 = vmatmul.f32.gmra.mxu0 %v1046
      %v4790 = vpop.f32.mrf.mxu0
      %v4791 = vadd.f32 %v4582, %v4790
      %4792 = vmatmul.f32.gmra.mxu0 %v1049
      %v4793 = vpop.f32.mrf.mxu0
      %v4794 = vadd.f32 %v4585, %v4793
      %4795 = vmatmul.f32.gmra.mxu0 %v1052
      %v4796 = vpop.f32.mrf.mxu0
      %v4797 = vadd.f32 %v4588, %v4796
      %4798 = vmatmul.f32.gmra.mxu0 %v1055
      %v4799 = vpop.f32.mrf.mxu0
      %v4800 = vadd.f32 %v4591, %v4799
      %4801 = vmatmul.f32.gmra.mxu0 %v1058
      %v4802 = vpop.f32.mrf.mxu0
      %v4803 = vadd.f32 %v4594, %v4802
      %4804 = vmatmul.f32.gmra.mxu0 %v1061
      %v4805 = vpop.f32.mrf.mxu0
      %v4806 = vadd.f32 %v4597, %v4805
      %4807 = vmatmul.f32.gmra.mxu0 %v1064
      %v4808 = vpop.f32.mrf.mxu0
      %v4809 = vadd.f32 %v4600, %v4808
      %4810 = vmatmul.f32.gmra.mxu0 %v1067
      %v4811 = vpop.f32.mrf.mxu0
      %v4812 = vadd.f32 %v4603, %v4811
      %4813 = vmatmul.f32.gmra.mxu0 %v1076
      %v4814 = vpop.f32.mrf.mxu0
      %v4815 = vadd.f32 %v4606, %v4814
      %4816 = vmatmul.f32.gmra.mxu0 %v1079
      %v4817 = vpop.f32.mrf.mxu0
      %v4818 = vadd.f32 %v4609, %v4817
      %4819 = vmatmul.f32.gmra.mxu0 %v1082
      %v4820 = vpop.f32.mrf.mxu0
      %v4821 = vadd.f32 %v4612, %v4820
      %4822 = vmatmul.f32.gmra.mxu0 %v1085
      %v4823 = vpop.f32.mrf.mxu0
      %v4824 = vadd.f32 %v4615, %v4823
      %4825 = vmatmul.f32.gmra.mxu0 %v1088
      %v4826 = vpop.f32.mrf.mxu0
      %v4827 = vadd.f32 %v4618, %v4826
      %4828 = vmatmul.f32.gmra.mxu0 %v1091
      %v4829 = vpop.f32.mrf.mxu0
      %v4830 = vadd.f32 %v4621, %v4829
      %4831 = vmatmul.f32.gmra.mxu0 %v1094
      %v4832 = vpop.f32.mrf.mxu0
      %v4833 = vadd.f32 %v4624, %v4832
      %4834 = vmatmul.f32.gmra.mxu0 %v1097
      %v4835 = vpop.f32.mrf.mxu0
      %v4836 = vadd.f32 %v4627, %v4835
      %4837 = vmatmul.f32.gmra.mxu0 %v1106
      %v4838 = vpop.f32.mrf.mxu0
      %v4839 = vadd.f32 %v4630, %v4838
      %4840 = vmatmul.f32.gmra.mxu0 %v1109
      %v4841 = vpop.f32.mrf.mxu0
      %v4842 = vadd.f32 %v4633, %v4841
      %4843 = vmatmul.f32.gmra.mxu0 %v1112
      %v4844 = vpop.f32.mrf.mxu0
      %v4845 = vadd.f32 %v4636, %v4844
      %4846 = vmatmul.f32.gmra.mxu0 %v1115
      %v4847 = vpop.f32.mrf.mxu0
      %v4848 = vadd.f32 %v4639, %v4847
      %4849 = vmatmul.f32.gmra.mxu0 %v1118
      %v4850 = vpop.f32.mrf.mxu0
      %v4851 = vadd.f32 %v4642, %v4850
      %4852 = vmatmul.f32.gmra.mxu0 %v1121
      %v4853 = vpop.f32.mrf.mxu0
      %v4854 = vadd.f32 %v4645, %v4853
      %4855 = vmatmul.f32.gmra.mxu0 %v1124
      %v4856 = vpop.f32.mrf.mxu0
      %v4857 = vadd.f32 %v4648, %v4856
      %4858 = vmatmul.f32.gmra.mxu0 %v1127
      %v4859 = vpop.f32.mrf.mxu0
      %v4860 = vadd.f32 %v4651, %v4859
      %4861 = vmatmul.f32.gmra.mxu0 %v1136
      %v4862 = vpop.f32.mrf.mxu0
      %v4863 = vadd.f32 %v4654, %v4862
      %4864 = vmatmul.f32.gmra.mxu0 %v1139
      %v4865 = vpop.f32.mrf.mxu0
      %v4866 = vadd.f32 %v4657, %v4865
      %4867 = vmatmul.f32.gmra.mxu0 %v1142
      %v4868 = vpop.f32.mrf.mxu0
      %v4869 = vadd.f32 %v4660, %v4868
      %4870 = vmatmul.f32.gmra.mxu0 %v1145
      %v4871 = vpop.f32.mrf.mxu0
      %v4872 = vadd.f32 %v4663, %v4871
      %4873 = vmatmul.f32.gmra.mxu0 %v1148
      %v4874 = vpop.f32.mrf.mxu0
      %v4875 = vadd.f32 %v4666, %v4874
      %4876 = vmatmul.f32.gmra.mxu0 %v1151
      %v4877 = vpop.f32.mrf.mxu0
      %v4878 = vadd.f32 %v4669, %v4877
      %4879 = vmatmul.f32.gmra.mxu0 %v1154
      %v4880 = vpop.f32.mrf.mxu0
      %v4881 = vadd.f32 %v4672, %v4880
      %4882 = vmatmul.f32.gmra.mxu0 %v1157
      %v4883 = vpop.f32.mrf.mxu0
      %v4884 = vadd.f32 %v4675, %v4883
      %4885 = vmatmul.f32.gmra.mxu0 %v1166
      %v4886 = vpop.f32.mrf.mxu0
      %v4887 = vadd.f32 %v4678, %v4886
      %4888 = vmatmul.f32.gmra.mxu0 %v1169
      %v4889 = vpop.f32.mrf.mxu0
      %v4890 = vadd.f32 %v4681, %v4889
      %4891 = vmatmul.f32.gmra.mxu0 %v1172
      %v4892 = vpop.f32.mrf.mxu0
      %v4893 = vadd.f32 %v4684, %v4892
      %4894 = vmatmul.f32.gmra.mxu0 %v1175
      %v4895 = vpop.f32.mrf.mxu0
      %v4896 = vadd.f32 %v4687, %v4895
      %4897 = vmatmul.f32.gmra.mxu0 %v1178
      %v4898 = vpop.f32.mrf.mxu0
      %v4899 = vadd.f32 %v4690, %v4898
      %4900 = vmatmul.f32.gmra.mxu0 %v1181
      %v4901 = vpop.f32.mrf.mxu0
      %v4902 = vadd.f32 %v4693, %v4901
      %4903 = vmatmul.f32.gmra.mxu0 %v1184
      %v4904 = vpop.f32.mrf.mxu0
      %v4905 = vadd.f32 %v4696, %v4904
      %4906 = vmatmul.f32.gmra.mxu0 %v1187
      %v4907 = vpop.f32.mrf.mxu0
      %v4908 = vadd.f32 %v4699, %v4907
      %4909 = vmatmul.f32.gmra.mxu0 %v1196
      %v4910 = vpop.f32.mrf.mxu0
      %v4911 = vadd.f32 %v4702, %v4910
      %4912 = vmatmul.f32.gmra.mxu0 %v1199
      %v4913 = vpop.f32.mrf.mxu0
      %v4914 = vadd.f32 %v4705, %v4913
      %4915 = vmatmul.f32.gmra.mxu0 %v1202
      %v4916 = vpop.f32.mrf.mxu0
      %v4917 = vadd.f32 %v4708, %v4916
      %4918 = vmatmul.f32.gmra.mxu0 %v1205
      %v4919 = vpop.f32.mrf.mxu0
      %v4920 = vadd.f32 %v4711, %v4919
      %4921 = vmatmul.f32.gmra.mxu0 %v1208
      %v4922 = vpop.f32.mrf.mxu0
      %v4923 = vadd.f32 %v4714, %v4922
      %4924 = vmatmul.f32.gmra.mxu0 %v1211
      %v4925 = vpop.f32.mrf.mxu0
      %v4926 = vadd.f32 %v4717, %v4925
      %4927 = vmatmul.f32.gmra.mxu0 %v1214
      %v4928 = vpop.f32.mrf.mxu0
      %v4929 = vadd.f32 %v4720, %v4928
      %4930 = vmatmul.f32.gmra.mxu0 %v1217
      %v4931 = vpop.f32.mrf.mxu0
      %v4932 = vadd.f32 %v4723, %v4931
      %4933 = vmatmul.f32.gmra.mxu0 %v1226
      %v4934 = vpop.f32.mrf.mxu0
      %v4935 = vadd.f32 %v4726, %v4934
      %4936 = vmatmul.f32.gmra.mxu0 %v1229
      %v4937 = vpop.f32.mrf.mxu0
      %v4938 = vadd.f32 %v4729, %v4937
      %4939 = vmatmul.f32.gmra.mxu0 %v1232
      %v4940 = vpop.f32.mrf.mxu0
      %v4941 = vadd.f32 %v4732, %v4940
      %4942 = vmatmul.f32.gmra.mxu0 %v1235
      %v4943 = vpop.f32.mrf.mxu0
      %v4944 = vadd.f32 %v4735, %v4943
      %4945 = vmatmul.f32.gmra.mxu0 %v1238
      %v4946 = vpop.f32.mrf.mxu0
      %v4947 = vadd.f32 %v4738, %v4946
      %4948 = vmatmul.f32.gmra.mxu0 %v1241
      %v4949 = vpop.f32.mrf.mxu0
      %v4950 = vadd.f32 %v4741, %v4949
      %4951 = vmatmul.f32.gmra.mxu0 %v1244
      %v4952 = vpop.f32.mrf.mxu0
      %v4953 = vadd.f32 %v4744, %v4952
      %4954 = vmatmul.f32.gmra.mxu0 %v1247
      %v4955 = vpop.f32.mrf.mxu0
      %v4956 = vadd.f32 %v4747, %v4955
      %4957 = vmatmul.f32.gmra.mxu0 %v1256
      %v4958 = vpop.f32.mrf.mxu0
      %v4959 = vadd.f32 %v4750, %v4958
      %4960 = vmatmul.f32.gmra.mxu0 %v1259
      %v4961 = vpop.f32.mrf.mxu0
      %v4962 = vadd.f32 %v4753, %v4961
      %4963 = vmatmul.f32.gmra.mxu0 %v1262
      %v4964 = vpop.f32.mrf.mxu0
      %v4965 = vadd.f32 %v4756, %v4964
      %4966 = vmatmul.f32.gmra.mxu0 %v1265
      %v4967 = vpop.f32.mrf.mxu0
      %v4968 = vadd.f32 %v4759, %v4967
      %4969 = vmatmul.f32.gmra.mxu0 %v1268
      %v4970 = vpop.f32.mrf.mxu0
      %v4971 = vadd.f32 %v4762, %v4970
      %4972 = vmatmul.f32.gmra.mxu0 %v1271
      %v4973 = vpop.f32.mrf.mxu0
      %v4974 = vadd.f32 %v4765, %v4973
      %4975 = vmatmul.f32.gmra.mxu0 %v1274
      %v4976 = vpop.f32.mrf.mxu0
      %v4977 = vadd.f32 %v4768, %v4976
      %4978 = vmatmul.f32.gmra.mxu0 %v1277
      %v4979 = vpop.f32.mrf.mxu0
      %v4980 = vadd.f32 %v4771, %v4979
      %4981 = vdwg.mxu0
      %4982 = vmatpush.msra.mxu0 %v1666
      %4983 = vmatpush.msra.mxu0 %v1665
      %4984 = vmatpush.msra.mxu0 %v1664
      %4985 = vmatpush.msra.mxu0 %v1663
      %4986 = vmatpush.msra.mxu0 %v1662
      %4987 = vmatpush.msra.mxu0 %v1661
      %4988 = vmatpush.msra.mxu0 %v1660
      %4989 = vmatpush.msra.mxu0 %v1659
      %4990 = vmatpush.msra.mxu0 %v1658
      %4991 = vmatpush.msra.mxu0 %v1657
      %4992 = vmatpush.msra.mxu0 %v1656
      %4993 = vmatpush.msra.mxu0 %v1655
      %4994 = vmatpush.msra.mxu0 %v1654
      %4995 = vmatpush.msra.mxu0 %v1653
      %4996 = vmatpush.msra.mxu0 %v1652
      %4997 = vmatpush.msra.mxu0 %v1651
      %4998 = vmatmul.f32.gmra.mxu0 %v233
      %v4999 = vpop.f32.mrf.mxu0
      %v5000 = vadd.f32 %v4791, %v4999
      %5001 = vmatmul.f32.gmra.mxu0 %v235
      %v5002 = vpop.f32.mrf.mxu0
      %v5003 = vadd.f32 %v4794, %v5002
      %5004 = vmatmul.f32.gmra.mxu0 %v237
      %v5005 = vpop.f32.mrf.mxu0
      %v5006 = vadd.f32 %v4797, %v5005
      %5007 = vmatmul.f32.gmra.mxu0 %v239
      %v5008 = vpop.f32.mrf.mxu0
      %v5009 = vadd.f32 %v4800, %v5008
      %5010 = vmatmul.f32.gmra.mxu0 %v241
      %v5011 = vpop.f32.mrf.mxu0
      %v5012 = vadd.f32 %v4803, %v5011
      %5013 = vmatmul.f32.gmra.mxu0 %v243
      %v5014 = vpop.f32.mrf.mxu0
      %v5015 = vadd.f32 %v4806, %v5014
      %5016 = vmatmul.f32.gmra.mxu0 %v245
      %v5017 = vpop.f32.mrf.mxu0
      %v5018 = vadd.f32 %v4809, %v5017
      %5019 = vmatmul.f32.gmra.mxu0 %v247
      %v5020 = vpop.f32.mrf.mxu0
      %v5021 = vadd.f32 %v4812, %v5020
      %5022 = vmatmul.f32.gmra.mxu0 %v253
      %v5023 = vpop.f32.mrf.mxu0
      %v5024 = vadd.f32 %v4815, %v5023
      %5025 = vmatmul.f32.gmra.mxu0 %v255
      %v5026 = vpop.f32.mrf.mxu0
      %v5027 = vadd.f32 %v4818, %v5026
      %5028 = vmatmul.f32.gmra.mxu0 %v257
      %v5029 = vpop.f32.mrf.mxu0
      %v5030 = vadd.f32 %v4821, %v5029
      %5031 = vmatmul.f32.gmra.mxu0 %v259
      %v5032 = vpop.f32.mrf.mxu0
      %v5033 = vadd.f32 %v4824, %v5032
      %5034 = vmatmul.f32.gmra.mxu0 %v261
      %v5035 = vpop.f32.mrf.mxu0
      %v5036 = vadd.f32 %v4827, %v5035
      %5037 = vmatmul.f32.gmra.mxu0 %v263
      %v5038 = vpop.f32.mrf.mxu0
      %v5039 = vadd.f32 %v4830, %v5038
      %5040 = vmatmul.f32.gmra.mxu0 %v265
      %v5041 = vpop.f32.mrf.mxu0
      %v5042 = vadd.f32 %v4833, %v5041
      %5043 = vmatmul.f32.gmra.mxu0 %v267
      %v5044 = vpop.f32.mrf.mxu0
      %v5045 = vadd.f32 %v4836, %v5044
      %5046 = vmatmul.f32.gmra.mxu0 %v273
      %v5047 = vpop.f32.mrf.mxu0
      %v5048 = vadd.f32 %v4839, %v5047
      %5049 = vmatmul.f32.gmra.mxu0 %v275
      %v5050 = vpop.f32.mrf.mxu0
      %v5051 = vadd.f32 %v4842, %v5050
      %5052 = vmatmul.f32.gmra.mxu0 %v277
      %v5053 = vpop.f32.mrf.mxu0
      %v5054 = vadd.f32 %v4845, %v5053
      %5055 = vmatmul.f32.gmra.mxu0 %v279
      %v5056 = vpop.f32.mrf.mxu0
      %v5057 = vadd.f32 %v4848, %v5056
      %5058 = vmatmul.f32.gmra.mxu0 %v281
      %v5059 = vpop.f32.mrf.mxu0
      %v5060 = vadd.f32 %v4851, %v5059
      %5061 = vmatmul.f32.gmra.mxu0 %v283
      %v5062 = vpop.f32.mrf.mxu0
      %v5063 = vadd.f32 %v4854, %v5062
      %5064 = vmatmul.f32.gmra.mxu0 %v285
      %v5065 = vpop.f32.mrf.mxu0
      %v5066 = vadd.f32 %v4857, %v5065
      %5067 = vmatmul.f32.gmra.mxu0 %v287
      %v5068 = vpop.f32.mrf.mxu0
      %v5069 = vadd.f32 %v4860, %v5068
      %5070 = vmatmul.f32.gmra.mxu0 %v293
      %v5071 = vpop.f32.mrf.mxu0
      %v5072 = vadd.f32 %v4863, %v5071
      %5073 = vmatmul.f32.gmra.mxu0 %v295
      %v5074 = vpop.f32.mrf.mxu0
      %v5075 = vadd.f32 %v4866, %v5074
      %5076 = vmatmul.f32.gmra.mxu0 %v297
      %v5077 = vpop.f32.mrf.mxu0
      %v5078 = vadd.f32 %v4869, %v5077
      %5079 = vmatmul.f32.gmra.mxu0 %v299
      %v5080 = vpop.f32.mrf.mxu0
      %v5081 = vadd.f32 %v4872, %v5080
      %5082 = vmatmul.f32.gmra.mxu0 %v301
      %v5083 = vpop.f32.mrf.mxu0
      %v5084 = vadd.f32 %v4875, %v5083
      %5085 = vmatmul.f32.gmra.mxu0 %v303
      %v5086 = vpop.f32.mrf.mxu0
      %v5087 = vadd.f32 %v4878, %v5086
      %5088 = vmatmul.f32.gmra.mxu0 %v305
      %v5089 = vpop.f32.mrf.mxu0
      %v5090 = vadd.f32 %v4881, %v5089
      %5091 = vmatmul.f32.gmra.mxu0 %v307
      %v5092 = vpop.f32.mrf.mxu0
      %v5093 = vadd.f32 %v4884, %v5092
      %5094 = vmatmul.f32.gmra.mxu0 %v313
      %v5095 = vpop.f32.mrf.mxu0
      %v5096 = vadd.f32 %v4887, %v5095
      %5097 = vmatmul.f32.gmra.mxu0 %v315
      %v5098 = vpop.f32.mrf.mxu0
      %v5099 = vadd.f32 %v4890, %v5098
      %5100 = vmatmul.f32.gmra.mxu0 %v317
      %v5101 = vpop.f32.mrf.mxu0
      %v5102 = vadd.f32 %v4893, %v5101
      %5103 = vmatmul.f32.gmra.mxu0 %v319
      %v5104 = vpop.f32.mrf.mxu0
      %v5105 = vadd.f32 %v4896, %v5104
      %5106 = vmatmul.f32.gmra.mxu0 %v321
      %v5107 = vpop.f32.mrf.mxu0
      %v5108 = vadd.f32 %v4899, %v5107
      %5109 = vmatmul.f32.gmra.mxu0 %v323
      %v5110 = vpop.f32.mrf.mxu0
      %v5111 = vadd.f32 %v4902, %v5110
      %5112 = vmatmul.f32.gmra.mxu0 %v325
      %v5113 = vpop.f32.mrf.mxu0
      %v5114 = vadd.f32 %v4905, %v5113
      %5115 = vmatmul.f32.gmra.mxu0 %v327
      %v5116 = vpop.f32.mrf.mxu0
      %v5117 = vadd.f32 %v4908, %v5116
      %5118 = vmatmul.f32.gmra.mxu0 %v333
      %v5119 = vpop.f32.mrf.mxu0
      %v5120 = vadd.f32 %v4911, %v5119
      %5121 = vmatmul.f32.gmra.mxu0 %v335
      %v5122 = vpop.f32.mrf.mxu0
      %v5123 = vadd.f32 %v4914, %v5122
      %5124 = vmatmul.f32.gmra.mxu0 %v337
      %v5125 = vpop.f32.mrf.mxu0
      %v5126 = vadd.f32 %v4917, %v5125
      %5127 = vmatmul.f32.gmra.mxu0 %v339
      %v5128 = vpop.f32.mrf.mxu0
      %v5129 = vadd.f32 %v4920, %v5128
      %5130 = vmatmul.f32.gmra.mxu0 %v341
      %v5131 = vpop.f32.mrf.mxu0
      %v5132 = vadd.f32 %v4923, %v5131
      %5133 = vmatmul.f32.gmra.mxu0 %v343
      %v5134 = vpop.f32.mrf.mxu0
      %v5135 = vadd.f32 %v4926, %v5134
      %5136 = vmatmul.f32.gmra.mxu0 %v345
      %v5137 = vpop.f32.mrf.mxu0
      %v5138 = vadd.f32 %v4929, %v5137
      %5139 = vmatmul.f32.gmra.mxu0 %v347
      %v5140 = vpop.f32.mrf.mxu0
      %v5141 = vadd.f32 %v4932, %v5140
      %5142 = vmatmul.f32.gmra.mxu0 %v353
      %v5143 = vpop.f32.mrf.mxu0
      %v5144 = vadd.f32 %v4935, %v5143
      %5145 = vmatmul.f32.gmra.mxu0 %v355
      %v5146 = vpop.f32.mrf.mxu0
      %v5147 = vadd.f32 %v4938, %v5146
      %5148 = vmatmul.f32.gmra.mxu0 %v357
      %v5149 = vpop.f32.mrf.mxu0
      %v5150 = vadd.f32 %v4941, %v5149
      %5151 = vmatmul.f32.gmra.mxu0 %v359
      %v5152 = vpop.f32.mrf.mxu0
      %v5153 = vadd.f32 %v4944, %v5152
      %5154 = vmatmul.f32.gmra.mxu0 %v361
      %v5155 = vpop.f32.mrf.mxu0
      %v5156 = vadd.f32 %v4947, %v5155
      %5157 = vmatmul.f32.gmra.mxu0 %v363
      %v5158 = vpop.f32.mrf.mxu0
      %v5159 = vadd.f32 %v4950, %v5158
      %5160 = vmatmul.f32.gmra.mxu0 %v365
      %v5161 = vpop.f32.mrf.mxu0
      %v5162 = vadd.f32 %v4953, %v5161
      %5163 = vmatmul.f32.gmra.mxu0 %v367
      %v5164 = vpop.f32.mrf.mxu0
      %v5165 = vadd.f32 %v4956, %v5164
      %5166 = vmatmul.f32.gmra.mxu0 %v373
      %v5167 = vpop.f32.mrf.mxu0
      %v5168 = vadd.f32 %v4959, %v5167
      %5169 = vmatmul.f32.gmra.mxu0 %v375
      %v5170 = vpop.f32.mrf.mxu0
      %v5171 = vadd.f32 %v4962, %v5170
      %5172 = vmatmul.f32.gmra.mxu0 %v377
      %v5173 = vpop.f32.mrf.mxu0
      %v5174 = vadd.f32 %v4965, %v5173
      %5175 = vmatmul.f32.gmra.mxu0 %v379
      %v5176 = vpop.f32.mrf.mxu0
      %v5177 = vadd.f32 %v4968, %v5176
      %5178 = vmatmul.f32.gmra.mxu0 %v381
      %v5179 = vpop.f32.mrf.mxu0
      %v5180 = vadd.f32 %v4971, %v5179
      %5181 = vmatmul.f32.gmra.mxu0 %v383
      %v5182 = vpop.f32.mrf.mxu0
      %v5183 = vadd.f32 %v4974, %v5182
      %5184 = vmatmul.f32.gmra.mxu0 %v385
      %v5185 = vpop.f32.mrf.mxu0
      %v5186 = vadd.f32 %v4977, %v5185
      %5187 = vmatmul.f32.gmra.mxu0 %v387
      %v5188 = vpop.f32.mrf.mxu0
      %v5189 = vadd.f32 %v4980, %v5188
      %5190 = vdwg.mxu0
      %5191 = vmatpush.msra.mxu0 %v1682
      %5192 = vmatpush.msra.mxu0 %v1681
      %5193 = vmatpush.msra.mxu0 %v1680
      %5194 = vmatpush.msra.mxu0 %v1679
      %5195 = vmatpush.msra.mxu0 %v1678
      %5196 = vmatpush.msra.mxu0 %v1677
      %5197 = vmatpush.msra.mxu0 %v1676
      %5198 = vmatpush.msra.mxu0 %v1675
      %5199 = vmatpush.msra.mxu0 %v1674
      %5200 = vmatpush.msra.mxu0 %v1673
      %5201 = vmatpush.msra.mxu0 %v1672
      %5202 = vmatpush.msra.mxu0 %v1671
      %5203 = vmatpush.msra.mxu0 %v1670
      %5204 = vmatpush.msra.mxu0 %v1669
      %5205 = vmatpush.msra.mxu0 %v1668
      %5206 = vmatpush.msra.mxu0 %v1667
      %5207 = vmatmul.f32.gmra.mxu0 %v648
      %v5208 = vpop.f32.mrf.mxu0
      %v5209 = vadd.f32 %v5000, %v5208
      %5210 = vmatmul.f32.gmra.mxu0 %v651
      %v5211 = vpop.f32.mrf.mxu0
      %v5212 = vadd.f32 %v5003, %v5211
      %5213 = vmatmul.f32.gmra.mxu0 %v654
      %v5214 = vpop.f32.mrf.mxu0
      %v5215 = vadd.f32 %v5006, %v5214
      %5216 = vmatmul.f32.gmra.mxu0 %v657
      %v5217 = vpop.f32.mrf.mxu0
      %v5218 = vadd.f32 %v5009, %v5217
      %5219 = vmatmul.f32.gmra.mxu0 %v660
      %v5220 = vpop.f32.mrf.mxu0
      %v5221 = vadd.f32 %v5012, %v5220
      %5222 = vmatmul.f32.gmra.mxu0 %v663
      %v5223 = vpop.f32.mrf.mxu0
      %v5224 = vadd.f32 %v5015, %v5223
      %5225 = vmatmul.f32.gmra.mxu0 %v666
      %v5226 = vpop.f32.mrf.mxu0
      %v5227 = vadd.f32 %v5018, %v5226
      %5228 = vmatmul.f32.gmra.mxu0 %v669
      %v5229 = vpop.f32.mrf.mxu0
      %v5230 = vadd.f32 %v5021, %v5229
      %5231 = vmatmul.f32.gmra.mxu0 %v678
      %v5232 = vpop.f32.mrf.mxu0
      %v5233 = vadd.f32 %v5024, %v5232
      %5234 = vmatmul.f32.gmra.mxu0 %v681
      %v5235 = vpop.f32.mrf.mxu0
      %v5236 = vadd.f32 %v5027, %v5235
      %5237 = vmatmul.f32.gmra.mxu0 %v684
      %v5238 = vpop.f32.mrf.mxu0
      %v5239 = vadd.f32 %v5030, %v5238
      %5240 = vmatmul.f32.gmra.mxu0 %v687
      %v5241 = vpop.f32.mrf.mxu0
      %v5242 = vadd.f32 %v5033, %v5241
      %5243 = vmatmul.f32.gmra.mxu0 %v690
      %v5244 = vpop.f32.mrf.mxu0
      %v5245 = vadd.f32 %v5036, %v5244
      %5246 = vmatmul.f32.gmra.mxu0 %v693
      %v5247 = vpop.f32.mrf.mxu0
      %v5248 = vadd.f32 %v5039, %v5247
      %5249 = vmatmul.f32.gmra.mxu0 %v696
      %v5250 = vpop.f32.mrf.mxu0
      %v5251 = vadd.f32 %v5042, %v5250
      %5252 = vmatmul.f32.gmra.mxu0 %v699
      %v5253 = vpop.f32.mrf.mxu0
      %v5254 = vadd.f32 %v5045, %v5253
      %5255 = vmatmul.f32.gmra.mxu0 %v708
      %v5256 = vpop.f32.mrf.mxu0
      %v5257 = vadd.f32 %v5048, %v5256
      %5258 = vmatmul.f32.gmra.mxu0 %v711
      %v5259 = vpop.f32.mrf.mxu0
      %v5260 = vadd.f32 %v5051, %v5259
      %5261 = vmatmul.f32.gmra.mxu0 %v714
      %v5262 = vpop.f32.mrf.mxu0
      %v5263 = vadd.f32 %v5054, %v5262
      %5264 = vmatmul.f32.gmra.mxu0 %v717
      %v5265 = vpop.f32.mrf.mxu0
      %v5266 = vadd.f32 %v5057, %v5265
      %5267 = vmatmul.f32.gmra.mxu0 %v720
      %v5268 = vpop.f32.mrf.mxu0
      %v5269 = vadd.f32 %v5060, %v5268
      %5270 = vmatmul.f32.gmra.mxu0 %v723
      %v5271 = vpop.f32.mrf.mxu0
      %v5272 = vadd.f32 %v5063, %v5271
      %5273 = vmatmul.f32.gmra.mxu0 %v726
      %v5274 = vpop.f32.mrf.mxu0
      %v5275 = vadd.f32 %v5066, %v5274
      %5276 = vmatmul.f32.gmra.mxu0 %v729
      %v5277 = vpop.f32.mrf.mxu0
      %v5278 = vadd.f32 %v5069, %v5277
      %5279 = vmatmul.f32.gmra.mxu0 %v738
      %v5280 = vpop.f32.mrf.mxu0
      %v5281 = vadd.f32 %v5072, %v5280
      %5282 = vmatmul.f32.gmra.mxu0 %v741
      %v5283 = vpop.f32.mrf.mxu0
      %v5284 = vadd.f32 %v5075, %v5283
      %5285 = vmatmul.f32.gmra.mxu0 %v744
      %v5286 = vpop.f32.mrf.mxu0
      %v5287 = vadd.f32 %v5078, %v5286
      %5288 = vmatmul.f32.gmra.mxu0 %v747
      %v5289 = vpop.f32.mrf.mxu0
      %v5290 = vadd.f32 %v5081, %v5289
      %5291 = vmatmul.f32.gmra.mxu0 %v750
      %v5292 = vpop.f32.mrf.mxu0
      %v5293 = vadd.f32 %v5084, %v5292
      %5294 = vmatmul.f32.gmra.mxu0 %v753
      %v5295 = vpop.f32.mrf.mxu0
      %v5296 = vadd.f32 %v5087, %v5295
      %5297 = vmatmul.f32.gmra.mxu0 %v756
      %v5298 = vpop.f32.mrf.mxu0
      %v5299 = vadd.f32 %v5090, %v5298
      %5300 = vmatmul.f32.gmra.mxu0 %v759
      %v5301 = vpop.f32.mrf.mxu0
      %v5302 = vadd.f32 %v5093, %v5301
      %5303 = vmatmul.f32.gmra.mxu0 %v768
      %v5304 = vpop.f32.mrf.mxu0
      %v5305 = vadd.f32 %v5096, %v5304
      %5306 = vmatmul.f32.gmra.mxu0 %v771
      %v5307 = vpop.f32.mrf.mxu0
      %v5308 = vadd.f32 %v5099, %v5307
      %5309 = vmatmul.f32.gmra.mxu0 %v774
      %v5310 = vpop.f32.mrf.mxu0
      %v5311 = vadd.f32 %v5102, %v5310
      %5312 = vmatmul.f32.gmra.mxu0 %v777
      %v5313 = vpop.f32.mrf.mxu0
      %v5314 = vadd.f32 %v5105, %v5313
      %5315 = vmatmul.f32.gmra.mxu0 %v780
      %v5316 = vpop.f32.mrf.mxu0
      %v5317 = vadd.f32 %v5108, %v5316
      %5318 = vmatmul.f32.gmra.mxu0 %v783
      %v5319 = vpop.f32.mrf.mxu0
      %v5320 = vadd.f32 %v5111, %v5319
      %5321 = vmatmul.f32.gmra.mxu0 %v786
      %v5322 = vpop.f32.mrf.mxu0
      %v5323 = vadd.f32 %v5114, %v5322
      %5324 = vmatmul.f32.gmra.mxu0 %v789
      %v5325 = vpop.f32.mrf.mxu0
      %v5326 = vadd.f32 %v5117, %v5325
      %5327 = vmatmul.f32.gmra.mxu0 %v798
      %v5328 = vpop.f32.mrf.mxu0
      %v5329 = vadd.f32 %v5120, %v5328
      %5330 = vmatmul.f32.gmra.mxu0 %v801
      %v5331 = vpop.f32.mrf.mxu0
      %v5332 = vadd.f32 %v5123, %v5331
      %5333 = vmatmul.f32.gmra.mxu0 %v804
      %v5334 = vpop.f32.mrf.mxu0
      %v5335 = vadd.f32 %v5126, %v5334
      %5336 = vmatmul.f32.gmra.mxu0 %v807
      %v5337 = vpop.f32.mrf.mxu0
      %v5338 = vadd.f32 %v5129, %v5337
      %5339 = vmatmul.f32.gmra.mxu0 %v810
      %v5340 = vpop.f32.mrf.mxu0
      %v5341 = vadd.f32 %v5132, %v5340
      %5342 = vmatmul.f32.gmra.mxu0 %v813
      %v5343 = vpop.f32.mrf.mxu0
      %v5344 = vadd.f32 %v5135, %v5343
      %5345 = vmatmul.f32.gmra.mxu0 %v816
      %v5346 = vpop.f32.mrf.mxu0
      %v5347 = vadd.f32 %v5138, %v5346
      %5348 = vmatmul.f32.gmra.mxu0 %v819
      %v5349 = vpop.f32.mrf.mxu0
      %v5350 = vadd.f32 %v5141, %v5349
      %5351 = vmatmul.f32.gmra.mxu0 %v828
      %v5352 = vpop.f32.mrf.mxu0
      %v5353 = vadd.f32 %v5144, %v5352
      %5354 = vmatmul.f32.gmra.mxu0 %v831
      %v5355 = vpop.f32.mrf.mxu0
      %v5356 = vadd.f32 %v5147, %v5355
      %5357 = vmatmul.f32.gmra.mxu0 %v834
      %v5358 = vpop.f32.mrf.mxu0
      %v5359 = vadd.f32 %v5150, %v5358
      %5360 = vmatmul.f32.gmra.mxu0 %v837
      %v5361 = vpop.f32.mrf.mxu0
      %v5362 = vadd.f32 %v5153, %v5361
      %5363 = vmatmul.f32.gmra.mxu0 %v840
      %v5364 = vpop.f32.mrf.mxu0
      %v5365 = vadd.f32 %v5156, %v5364
      %5366 = vmatmul.f32.gmra.mxu0 %v843
      %v5367 = vpop.f32.mrf.mxu0
      %v5368 = vadd.f32 %v5159, %v5367
      %5369 = vmatmul.f32.gmra.mxu0 %v846
      %v5370 = vpop.f32.mrf.mxu0
      %v5371 = vadd.f32 %v5162, %v5370
      %5372 = vmatmul.f32.gmra.mxu0 %v849
      %v5373 = vpop.f32.mrf.mxu0
      %v5374 = vadd.f32 %v5165, %v5373
      %5375 = vmatmul.f32.gmra.mxu0 %v858
      %v5376 = vpop.f32.mrf.mxu0
      %v5377 = vadd.f32 %v5168, %v5376
      %5378 = vmatmul.f32.gmra.mxu0 %v861
      %v5379 = vpop.f32.mrf.mxu0
      %v5380 = vadd.f32 %v5171, %v5379
      %5381 = vmatmul.f32.gmra.mxu0 %v864
      %v5382 = vpop.f32.mrf.mxu0
      %v5383 = vadd.f32 %v5174, %v5382
      %5384 = vmatmul.f32.gmra.mxu0 %v867
      %v5385 = vpop.f32.mrf.mxu0
      %v5386 = vadd.f32 %v5177, %v5385
      %5387 = vmatmul.f32.gmra.mxu0 %v870
      %v5388 = vpop.f32.mrf.mxu0
      %v5389 = vadd.f32 %v5180, %v5388
      %5390 = vmatmul.f32.gmra.mxu0 %v873
      %v5391 = vpop.f32.mrf.mxu0
      %v5392 = vadd.f32 %v5183, %v5391
      %5393 = vmatmul.f32.gmra.mxu0 %v876
      %v5394 = vpop.f32.mrf.mxu0
      %v5395 = vadd.f32 %v5186, %v5394
      %5396 = vmatmul.f32.gmra.mxu0 %v879
      %v5397 = vpop.f32.mrf.mxu0
      %v5398 = vadd.f32 %v5189, %v5397
      %5399 = vdwg.mxu0
      %5400 = vmatpush.msra.mxu0 %v1698
      %5401 = vmatpush.msra.mxu0 %v1697
      %5402 = vmatpush.msra.mxu0 %v1696
      %5403 = vmatpush.msra.mxu0 %v1695
      %5404 = vmatpush.msra.mxu0 %v1694
      %5405 = vmatpush.msra.mxu0 %v1693
      %5406 = vmatpush.msra.mxu0 %v1692
      %5407 = vmatpush.msra.mxu0 %v1691
      %5408 = vmatpush.msra.mxu0 %v1690
      %5409 = vmatpush.msra.mxu0 %v1689
      %5410 = vmatpush.msra.mxu0 %v1688
      %5411 = vmatpush.msra.mxu0 %v1687
      %5412 = vmatpush.msra.mxu0 %v1686
      %5413 = vmatpush.msra.mxu0 %v1685
      %5414 = vmatpush.msra.mxu0 %v1684
      %5415 = vmatpush.msra.mxu0 %v1683
      %5416 = vmatmul.f32.gmra.mxu0 %v1049
      %v5417 = vpop.f32.mrf.mxu0
      %v5418 = vadd.f32 %v5209, %v5417
      %5419 = vmatmul.f32.gmra.mxu0 %v1052
      %v5420 = vpop.f32.mrf.mxu0
      %v5421 = vadd.f32 %v5212, %v5420
      %5422 = vmatmul.f32.gmra.mxu0 %v1055
      %v5423 = vpop.f32.mrf.mxu0
      %v5424 = vadd.f32 %v5215, %v5423
      %5425 = vmatmul.f32.gmra.mxu0 %v1058
      %v5426 = vpop.f32.mrf.mxu0
      %v5427 = vadd.f32 %v5218, %v5426
      %5428 = vmatmul.f32.gmra.mxu0 %v1061
      %v5429 = vpop.f32.mrf.mxu0
      %v5430 = vadd.f32 %v5221, %v5429
      %5431 = vmatmul.f32.gmra.mxu0 %v1064
      %v5432 = vpop.f32.mrf.mxu0
      %v5433 = vadd.f32 %v5224, %v5432
      %5434 = vmatmul.f32.gmra.mxu0 %v1067
      %v5435 = vpop.f32.mrf.mxu0
      %v5436 = vadd.f32 %v5227, %v5435
      %5437 = vmatmul.f32.gmra.mxu0 %v1070
      %v5438 = vpop.f32.mrf.mxu0
      %v5439 = vadd.f32 %v5230, %v5438
      %5440 = vmatmul.f32.gmra.mxu0 %v1079
      %v5441 = vpop.f32.mrf.mxu0
      %v5442 = vadd.f32 %v5233, %v5441
      %5443 = vmatmul.f32.gmra.mxu0 %v1082
      %v5444 = vpop.f32.mrf.mxu0
      %v5445 = vadd.f32 %v5236, %v5444
      %5446 = vmatmul.f32.gmra.mxu0 %v1085
      %v5447 = vpop.f32.mrf.mxu0
      %v5448 = vadd.f32 %v5239, %v5447
      %5449 = vmatmul.f32.gmra.mxu0 %v1088
      %v5450 = vpop.f32.mrf.mxu0
      %v5451 = vadd.f32 %v5242, %v5450
      %5452 = vmatmul.f32.gmra.mxu0 %v1091
      %v5453 = vpop.f32.mrf.mxu0
      %v5454 = vadd.f32 %v5245, %v5453
      %5455 = vmatmul.f32.gmra.mxu0 %v1094
      %v5456 = vpop.f32.mrf.mxu0
      %v5457 = vadd.f32 %v5248, %v5456
      %5458 = vmatmul.f32.gmra.mxu0 %v1097
      %v5459 = vpop.f32.mrf.mxu0
      %v5460 = vadd.f32 %v5251, %v5459
      %5461 = vmatmul.f32.gmra.mxu0 %v1100
      %v5462 = vpop.f32.mrf.mxu0
      %v5463 = vadd.f32 %v5254, %v5462
      %5464 = vmatmul.f32.gmra.mxu0 %v1109
      %v5465 = vpop.f32.mrf.mxu0
      %v5466 = vadd.f32 %v5257, %v5465
      %5467 = vmatmul.f32.gmra.mxu0 %v1112
      %v5468 = vpop.f32.mrf.mxu0
      %v5469 = vadd.f32 %v5260, %v5468
      %5470 = vmatmul.f32.gmra.mxu0 %v1115
      %v5471 = vpop.f32.mrf.mxu0
      %v5472 = vadd.f32 %v5263, %v5471
      %5473 = vmatmul.f32.gmra.mxu0 %v1118
      %v5474 = vpop.f32.mrf.mxu0
      %v5475 = vadd.f32 %v5266, %v5474
      %5476 = vmatmul.f32.gmra.mxu0 %v1121
      %v5477 = vpop.f32.mrf.mxu0
      %v5478 = vadd.f32 %v5269, %v5477
      %5479 = vmatmul.f32.gmra.mxu0 %v1124
      %v5480 = vpop.f32.mrf.mxu0
      %v5481 = vadd.f32 %v5272, %v5480
      %5482 = vmatmul.f32.gmra.mxu0 %v1127
      %v5483 = vpop.f32.mrf.mxu0
      %v5484 = vadd.f32 %v5275, %v5483
      %5485 = vmatmul.f32.gmra.mxu0 %v1130
      %v5486 = vpop.f32.mrf.mxu0
      %v5487 = vadd.f32 %v5278, %v5486
      %5488 = vmatmul.f32.gmra.mxu0 %v1139
      %v5489 = vpop.f32.mrf.mxu0
      %v5490 = vadd.f32 %v5281, %v5489
      %5491 = vmatmul.f32.gmra.mxu0 %v1142
      %v5492 = vpop.f32.mrf.mxu0
      %v5493 = vadd.f32 %v5284, %v5492
      %5494 = vmatmul.f32.gmra.mxu0 %v1145
      %v5495 = vpop.f32.mrf.mxu0
      %v5496 = vadd.f32 %v5287, %v5495
      %5497 = vmatmul.f32.gmra.mxu0 %v1148
      %v5498 = vpop.f32.mrf.mxu0
      %v5499 = vadd.f32 %v5290, %v5498
      %5500 = vmatmul.f32.gmra.mxu0 %v1151
      %v5501 = vpop.f32.mrf.mxu0
      %v5502 = vadd.f32 %v5293, %v5501
      %5503 = vmatmul.f32.gmra.mxu0 %v1154
      %v5504 = vpop.f32.mrf.mxu0
      %v5505 = vadd.f32 %v5296, %v5504
      %5506 = vmatmul.f32.gmra.mxu0 %v1157
      %v5507 = vpop.f32.mrf.mxu0
      %v5508 = vadd.f32 %v5299, %v5507
      %5509 = vmatmul.f32.gmra.mxu0 %v1160
      %v5510 = vpop.f32.mrf.mxu0
      %v5511 = vadd.f32 %v5302, %v5510
      %5512 = vmatmul.f32.gmra.mxu0 %v1169
      %v5513 = vpop.f32.mrf.mxu0
      %v5514 = vadd.f32 %v5305, %v5513
      %5515 = vmatmul.f32.gmra.mxu0 %v1172
      %v5516 = vpop.f32.mrf.mxu0
      %v5517 = vadd.f32 %v5308, %v5516
      %5518 = vmatmul.f32.gmra.mxu0 %v1175
      %v5519 = vpop.f32.mrf.mxu0
      %v5520 = vadd.f32 %v5311, %v5519
      %5521 = vmatmul.f32.gmra.mxu0 %v1178
      %v5522 = vpop.f32.mrf.mxu0
      %v5523 = vadd.f32 %v5314, %v5522
      %5524 = vmatmul.f32.gmra.mxu0 %v1181
      %v5525 = vpop.f32.mrf.mxu0
      %v5526 = vadd.f32 %v5317, %v5525
      %5527 = vmatmul.f32.gmra.mxu0 %v1184
      %v5528 = vpop.f32.mrf.mxu0
      %v5529 = vadd.f32 %v5320, %v5528
      %5530 = vmatmul.f32.gmra.mxu0 %v1187
      %v5531 = vpop.f32.mrf.mxu0
      %v5532 = vadd.f32 %v5323, %v5531
      %5533 = vmatmul.f32.gmra.mxu0 %v1190
      %v5534 = vpop.f32.mrf.mxu0
      %v5535 = vadd.f32 %v5326, %v5534
      %5536 = vmatmul.f32.gmra.mxu0 %v1199
      %v5537 = vpop.f32.mrf.mxu0
      %v5538 = vadd.f32 %v5329, %v5537
      %5539 = vmatmul.f32.gmra.mxu0 %v1202
      %v5540 = vpop.f32.mrf.mxu0
      %v5541 = vadd.f32 %v5332, %v5540
      %5542 = vmatmul.f32.gmra.mxu0 %v1205
      %v5543 = vpop.f32.mrf.mxu0
      %v5544 = vadd.f32 %v5335, %v5543
      %5545 = vmatmul.f32.gmra.mxu0 %v1208
      %v5546 = vpop.f32.mrf.mxu0
      %v5547 = vadd.f32 %v5338, %v5546
      %5548 = vmatmul.f32.gmra.mxu0 %v1211
      %v5549 = vpop.f32.mrf.mxu0
      %v5550 = vadd.f32 %v5341, %v5549
      %5551 = vmatmul.f32.gmra.mxu0 %v1214
      %v5552 = vpop.f32.mrf.mxu0
      %v5553 = vadd.f32 %v5344, %v5552
      %5554 = vmatmul.f32.gmra.mxu0 %v1217
      %v5555 = vpop.f32.mrf.mxu0
      %v5556 = vadd.f32 %v5347, %v5555
      %5557 = vmatmul.f32.gmra.mxu0 %v1220
      %v5558 = vpop.f32.mrf.mxu0
      %v5559 = vadd.f32 %v5350, %v5558
      %5560 = vmatmul.f32.gmra.mxu0 %v1229
      %v5561 = vpop.f32.mrf.mxu0
      %v5562 = vadd.f32 %v5353, %v5561
      %5563 = vmatmul.f32.gmra.mxu0 %v1232
      %v5564 = vpop.f32.mrf.mxu0
      %v5565 = vadd.f32 %v5356, %v5564
      %5566 = vmatmul.f32.gmra.mxu0 %v1235
      %v5567 = vpop.f32.mrf.mxu0
      %v5568 = vadd.f32 %v5359, %v5567
      %5569 = vmatmul.f32.gmra.mxu0 %v1238
      %v5570 = vpop.f32.mrf.mxu0
      %v5571 = vadd.f32 %v5362, %v5570
      %5572 = vmatmul.f32.gmra.mxu0 %v1241
      %v5573 = vpop.f32.mrf.mxu0
      %v5574 = vadd.f32 %v5365, %v5573
      %5575 = vmatmul.f32.gmra.mxu0 %v1244
      %v5576 = vpop.f32.mrf.mxu0
      %v5577 = vadd.f32 %v5368, %v5576
      %5578 = vmatmul.f32.gmra.mxu0 %v1247
      %v5579 = vpop.f32.mrf.mxu0
      %v5580 = vadd.f32 %v5371, %v5579
      %5581 = vmatmul.f32.gmra.mxu0 %v1250
      %v5582 = vpop.f32.mrf.mxu0
      %v5583 = vadd.f32 %v5374, %v5582
      %5584 = vmatmul.f32.gmra.mxu0 %v1259
      %v5585 = vpop.f32.mrf.mxu0
      %v5586 = vadd.f32 %v5377, %v5585
      %5587 = vmatmul.f32.gmra.mxu0 %v1262
      %v5588 = vpop.f32.mrf.mxu0
      %v5589 = vadd.f32 %v5380, %v5588
      %5590 = vmatmul.f32.gmra.mxu0 %v1265
      %v5591 = vpop.f32.mrf.mxu0
      %v5592 = vadd.f32 %v5383, %v5591
      %5593 = vmatmul.f32.gmra.mxu0 %v1268
      %v5594 = vpop.f32.mrf.mxu0
      %v5595 = vadd.f32 %v5386, %v5594
      %5596 = vmatmul.f32.gmra.mxu0 %v1271
      %v5597 = vpop.f32.mrf.mxu0
      %v5598 = vadd.f32 %v5389, %v5597
      %5599 = vmatmul.f32.gmra.mxu0 %v1274
      %v5600 = vpop.f32.mrf.mxu0
      %v5601 = vadd.f32 %v5392, %v5600
      %5602 = vmatmul.f32.gmra.mxu0 %v1277
      %v5603 = vpop.f32.mrf.mxu0
      %v5604 = vadd.f32 %v5395, %v5603
      %5605 = vmatmul.f32.gmra.mxu0 %v1280
      %v5606 = vpop.f32.mrf.mxu0
      %v5607 = vadd.f32 %v5398, %v5606
      %5608 = vdwg.mxu0
      %5609 = vmatpush.msra.mxu0 %v1714
      %5610 = vmatpush.msra.mxu0 %v1713
      %5611 = vmatpush.msra.mxu0 %v1712
      %5612 = vmatpush.msra.mxu0 %v1711
      %5613 = vmatpush.msra.mxu0 %v1710
      %5614 = vmatpush.msra.mxu0 %v1709
      %5615 = vmatpush.msra.mxu0 %v1708
      %5616 = vmatpush.msra.mxu0 %v1707
      %5617 = vmatpush.msra.mxu0 %v1706
      %5618 = vmatpush.msra.mxu0 %v1705
      %5619 = vmatpush.msra.mxu0 %v1704
      %5620 = vmatpush.msra.mxu0 %v1703
      %5621 = vmatpush.msra.mxu0 %v1702
      %5622 = vmatpush.msra.mxu0 %v1701
      %5623 = vmatpush.msra.mxu0 %v1700
      %5624 = vmatpush.msra.mxu0 %v1699
      %5625 = vmatmul.f32.gmra.mxu0 %v249
      %v5626 = vpop.f32.mrf.mxu0
      %v5627 = vadd.f32 %v5418, %v5626
      %5628 = vmatmul.f32.gmra.mxu0 %v251
      %v5629 = vpop.f32.mrf.mxu0
      %v5630 = vadd.f32 %v5421, %v5629
      %5631 = vmatmul.f32.gmra.mxu0 %v253
      %v5632 = vpop.f32.mrf.mxu0
      %v5633 = vadd.f32 %v5424, %v5632
      %5634 = vmatmul.f32.gmra.mxu0 %v255
      %v5635 = vpop.f32.mrf.mxu0
      %v5636 = vadd.f32 %v5427, %v5635
      %5637 = vmatmul.f32.gmra.mxu0 %v257
      %v5638 = vpop.f32.mrf.mxu0
      %v5639 = vadd.f32 %v5430, %v5638
      %5640 = vmatmul.f32.gmra.mxu0 %v259
      %v5641 = vpop.f32.mrf.mxu0
      %v5642 = vadd.f32 %v5433, %v5641
      %5643 = vmatmul.f32.gmra.mxu0 %v261
      %v5644 = vpop.f32.mrf.mxu0
      %v5645 = vadd.f32 %v5436, %v5644
      %5646 = vmatmul.f32.gmra.mxu0 %v263
      %v5647 = vpop.f32.mrf.mxu0
      %v5648 = vadd.f32 %v5439, %v5647
      %5649 = vmatmul.f32.gmra.mxu0 %v269
      %v5650 = vpop.f32.mrf.mxu0
      %v5651 = vadd.f32 %v5442, %v5650
      %5652 = vmatmul.f32.gmra.mxu0 %v271
      %v5653 = vpop.f32.mrf.mxu0
      %v5654 = vadd.f32 %v5445, %v5653
      %5655 = vmatmul.f32.gmra.mxu0 %v273
      %v5656 = vpop.f32.mrf.mxu0
      %v5657 = vadd.f32 %v5448, %v5656
      %5658 = vmatmul.f32.gmra.mxu0 %v275
      %v5659 = vpop.f32.mrf.mxu0
      %v5660 = vadd.f32 %v5451, %v5659
      %5661 = vmatmul.f32.gmra.mxu0 %v277
      %v5662 = vpop.f32.mrf.mxu0
      %v5663 = vadd.f32 %v5454, %v5662
      %5664 = vmatmul.f32.gmra.mxu0 %v279
      %v5665 = vpop.f32.mrf.mxu0
      %v5666 = vadd.f32 %v5457, %v5665
      %5667 = vmatmul.f32.gmra.mxu0 %v281
      %v5668 = vpop.f32.mrf.mxu0
      %v5669 = vadd.f32 %v5460, %v5668
      %5670 = vmatmul.f32.gmra.mxu0 %v283
      %v5671 = vpop.f32.mrf.mxu0
      %v5672 = vadd.f32 %v5463, %v5671
      %5673 = vmatmul.f32.gmra.mxu0 %v289
      %v5674 = vpop.f32.mrf.mxu0
      %v5675 = vadd.f32 %v5466, %v5674
      %5676 = vmatmul.f32.gmra.mxu0 %v291
      %v5677 = vpop.f32.mrf.mxu0
      %v5678 = vadd.f32 %v5469, %v5677
      %5679 = vmatmul.f32.gmra.mxu0 %v293
      %v5680 = vpop.f32.mrf.mxu0
      %v5681 = vadd.f32 %v5472, %v5680
      %5682 = vmatmul.f32.gmra.mxu0 %v295
      %v5683 = vpop.f32.mrf.mxu0
      %v5684 = vadd.f32 %v5475, %v5683
      %5685 = vmatmul.f32.gmra.mxu0 %v297
      %v5686 = vpop.f32.mrf.mxu0
      %v5687 = vadd.f32 %v5478, %v5686
      %5688 = vmatmul.f32.gmra.mxu0 %v299
      %v5689 = vpop.f32.mrf.mxu0
      %v5690 = vadd.f32 %v5481, %v5689
      %5691 = vmatmul.f32.gmra.mxu0 %v301
      %v5692 = vpop.f32.mrf.mxu0
      %v5693 = vadd.f32 %v5484, %v5692
      %5694 = vmatmul.f32.gmra.mxu0 %v303
      %v5695 = vpop.f32.mrf.mxu0
      %v5696 = vadd.f32 %v5487, %v5695
      %5697 = vmatmul.f32.gmra.mxu0 %v309
      %v5698 = vpop.f32.mrf.mxu0
      %v5699 = vadd.f32 %v5490, %v5698
      %5700 = vmatmul.f32.gmra.mxu0 %v311
      %v5701 = vpop.f32.mrf.mxu0
      %v5702 = vadd.f32 %v5493, %v5701
      %5703 = vmatmul.f32.gmra.mxu0 %v313
      %v5704 = vpop.f32.mrf.mxu0
      %v5705 = vadd.f32 %v5496, %v5704
      %5706 = vmatmul.f32.gmra.mxu0 %v315
      %v5707 = vpop.f32.mrf.mxu0
      %v5708 = vadd.f32 %v5499, %v5707
      %5709 = vmatmul.f32.gmra.mxu0 %v317
      %v5710 = vpop.f32.mrf.mxu0
      %v5711 = vadd.f32 %v5502, %v5710
      %5712 = vmatmul.f32.gmra.mxu0 %v319
      %v5713 = vpop.f32.mrf.mxu0
      %v5714 = vadd.f32 %v5505, %v5713
      %5715 = vmatmul.f32.gmra.mxu0 %v321
      %v5716 = vpop.f32.mrf.mxu0
      %v5717 = vadd.f32 %v5508, %v5716
      %5718 = vmatmul.f32.gmra.mxu0 %v323
      %v5719 = vpop.f32.mrf.mxu0
      %v5720 = vadd.f32 %v5511, %v5719
      %5721 = vmatmul.f32.gmra.mxu0 %v329
      %v5722 = vpop.f32.mrf.mxu0
      %v5723 = vadd.f32 %v5514, %v5722
      %5724 = vmatmul.f32.gmra.mxu0 %v331
      %v5725 = vpop.f32.mrf.mxu0
      %v5726 = vadd.f32 %v5517, %v5725
      %5727 = vmatmul.f32.gmra.mxu0 %v333
      %v5728 = vpop.f32.mrf.mxu0
      %v5729 = vadd.f32 %v5520, %v5728
      %5730 = vmatmul.f32.gmra.mxu0 %v335
      %v5731 = vpop.f32.mrf.mxu0
      %v5732 = vadd.f32 %v5523, %v5731
      %5733 = vmatmul.f32.gmra.mxu0 %v337
      %v5734 = vpop.f32.mrf.mxu0
      %v5735 = vadd.f32 %v5526, %v5734
      %5736 = vmatmul.f32.gmra.mxu0 %v339
      %v5737 = vpop.f32.mrf.mxu0
      %v5738 = vadd.f32 %v5529, %v5737
      %5739 = vmatmul.f32.gmra.mxu0 %v341
      %v5740 = vpop.f32.mrf.mxu0
      %v5741 = vadd.f32 %v5532, %v5740
      %5742 = vmatmul.f32.gmra.mxu0 %v343
      %v5743 = vpop.f32.mrf.mxu0
      %v5744 = vadd.f32 %v5535, %v5743
      %5745 = vmatmul.f32.gmra.mxu0 %v349
      %v5746 = vpop.f32.mrf.mxu0
      %v5747 = vadd.f32 %v5538, %v5746
      %5748 = vmatmul.f32.gmra.mxu0 %v351
      %v5749 = vpop.f32.mrf.mxu0
      %v5750 = vadd.f32 %v5541, %v5749
      %5751 = vmatmul.f32.gmra.mxu0 %v353
      %v5752 = vpop.f32.mrf.mxu0
      %v5753 = vadd.f32 %v5544, %v5752
      %5754 = vmatmul.f32.gmra.mxu0 %v355
      %v5755 = vpop.f32.mrf.mxu0
      %v5756 = vadd.f32 %v5547, %v5755
      %5757 = vmatmul.f32.gmra.mxu0 %v357
      %v5758 = vpop.f32.mrf.mxu0
      %v5759 = vadd.f32 %v5550, %v5758
      %5760 = vmatmul.f32.gmra.mxu0 %v359
      %v5761 = vpop.f32.mrf.mxu0
      %v5762 = vadd.f32 %v5553, %v5761
      %5763 = vmatmul.f32.gmra.mxu0 %v361
      %v5764 = vpop.f32.mrf.mxu0
      %v5765 = vadd.f32 %v5556, %v5764
      %5766 = vmatmul.f32.gmra.mxu0 %v363
      %v5767 = vpop.f32.mrf.mxu0
      %v5768 = vadd.f32 %v5559, %v5767
      %5769 = vmatmul.f32.gmra.mxu0 %v369
      %v5770 = vpop.f32.mrf.mxu0
      %v5771 = vadd.f32 %v5562, %v5770
      %5772 = vmatmul.f32.gmra.mxu0 %v371
      %v5773 = vpop.f32.mrf.mxu0
      %v5774 = vadd.f32 %v5565, %v5773
      %5775 = vmatmul.f32.gmra.mxu0 %v373
      %v5776 = vpop.f32.mrf.mxu0
      %v5777 = vadd.f32 %v5568, %v5776
      %5778 = vmatmul.f32.gmra.mxu0 %v375
      %v5779 = vpop.f32.mrf.mxu0
      %v5780 = vadd.f32 %v5571, %v5779
      %5781 = vmatmul.f32.gmra.mxu0 %v377
      %v5782 = vpop.f32.mrf.mxu0
      %v5783 = vadd.f32 %v5574, %v5782
      %5784 = vmatmul.f32.gmra.mxu0 %v379
      %v5785 = vpop.f32.mrf.mxu0
      %v5786 = vadd.f32 %v5577, %v5785
      %5787 = vmatmul.f32.gmra.mxu0 %v381
      %v5788 = vpop.f32.mrf.mxu0
      %v5789 = vadd.f32 %v5580, %v5788
      %5790 = vmatmul.f32.gmra.mxu0 %v383
      %v5791 = vpop.f32.mrf.mxu0
      %v5792 = vadd.f32 %v5583, %v5791
      %5793 = vmatmul.f32.gmra.mxu0 %v389
      %v5794 = vpop.f32.mrf.mxu0
      %v5795 = vadd.f32 %v5586, %v5794
      %5796 = vmatmul.f32.gmra.mxu0 %v391
      %v5797 = vpop.f32.mrf.mxu0
      %v5798 = vadd.f32 %v5589, %v5797
      %5799 = vmatmul.f32.gmra.mxu0 %v393
      %v5800 = vpop.f32.mrf.mxu0
      %v5801 = vadd.f32 %v5592, %v5800
      %5802 = vmatmul.f32.gmra.mxu0 %v395
      %v5803 = vpop.f32.mrf.mxu0
      %v5804 = vadd.f32 %v5595, %v5803
      %5805 = vmatmul.f32.gmra.mxu0 %v397
      %v5806 = vpop.f32.mrf.mxu0
      %v5807 = vadd.f32 %v5598, %v5806
      %5808 = vmatmul.f32.gmra.mxu0 %v399
      %v5809 = vpop.f32.mrf.mxu0
      %v5810 = vadd.f32 %v5601, %v5809
      %5811 = vmatmul.f32.gmra.mxu0 %v401
      %v5812 = vpop.f32.mrf.mxu0
      %v5813 = vadd.f32 %v5604, %v5812
      %5814 = vmatmul.f32.gmra.mxu0 %v403
      %v5815 = vpop.f32.mrf.mxu0
      %v5816 = vadd.f32 %v5607, %v5815
      %5817 = vdwg.mxu0
      %5818 = vmatpush.msra.mxu0 %v1730
      %5819 = vmatpush.msra.mxu0 %v1729
      %5820 = vmatpush.msra.mxu0 %v1728
      %5821 = vmatpush.msra.mxu0 %v1727
      %5822 = vmatpush.msra.mxu0 %v1726
      %5823 = vmatpush.msra.mxu0 %v1725
      %5824 = vmatpush.msra.mxu0 %v1724
      %5825 = vmatpush.msra.mxu0 %v1723
      %5826 = vmatpush.msra.mxu0 %v1722
      %5827 = vmatpush.msra.mxu0 %v1721
      %5828 = vmatpush.msra.mxu0 %v1720
      %5829 = vmatpush.msra.mxu0 %v1719
      %5830 = vmatpush.msra.mxu0 %v1718
      %5831 = vmatpush.msra.mxu0 %v1717
      %5832 = vmatpush.msra.mxu0 %v1716
      %5833 = vmatpush.msra.mxu0 %v1715
      %5834 = vmatmul.f32.gmra.mxu0 %v672
      %v5835 = vpop.f32.mrf.mxu0
      %v5836 = vadd.f32 %v5627, %v5835
      %5837 = vmatmul.f32.gmra.mxu0 %v675
      %v5838 = vpop.f32.mrf.mxu0
      %v5839 = vadd.f32 %v5630, %v5838
      %5840 = vmatmul.f32.gmra.mxu0 %v678
      %v5841 = vpop.f32.mrf.mxu0
      %v5842 = vadd.f32 %v5633, %v5841
      %5843 = vmatmul.f32.gmra.mxu0 %v681
      %v5844 = vpop.f32.mrf.mxu0
      %v5845 = vadd.f32 %v5636, %v5844
      %5846 = vmatmul.f32.gmra.mxu0 %v684
      %v5847 = vpop.f32.mrf.mxu0
      %v5848 = vadd.f32 %v5639, %v5847
      %5849 = vmatmul.f32.gmra.mxu0 %v687
      %v5850 = vpop.f32.mrf.mxu0
      %v5851 = vadd.f32 %v5642, %v5850
      %5852 = vmatmul.f32.gmra.mxu0 %v690
      %v5853 = vpop.f32.mrf.mxu0
      %v5854 = vadd.f32 %v5645, %v5853
      %5855 = vmatmul.f32.gmra.mxu0 %v693
      %v5856 = vpop.f32.mrf.mxu0
      %v5857 = vadd.f32 %v5648, %v5856
      %5858 = vmatmul.f32.gmra.mxu0 %v702
      %v5859 = vpop.f32.mrf.mxu0
      %v5860 = vadd.f32 %v5651, %v5859
      %5861 = vmatmul.f32.gmra.mxu0 %v705
      %v5862 = vpop.f32.mrf.mxu0
      %v5863 = vadd.f32 %v5654, %v5862
      %5864 = vmatmul.f32.gmra.mxu0 %v708
      %v5865 = vpop.f32.mrf.mxu0
      %v5866 = vadd.f32 %v5657, %v5865
      %5867 = vmatmul.f32.gmra.mxu0 %v711
      %v5868 = vpop.f32.mrf.mxu0
      %v5869 = vadd.f32 %v5660, %v5868
      %5870 = vmatmul.f32.gmra.mxu0 %v714
      %v5871 = vpop.f32.mrf.mxu0
      %v5872 = vadd.f32 %v5663, %v5871
      %5873 = vmatmul.f32.gmra.mxu0 %v717
      %v5874 = vpop.f32.mrf.mxu0
      %v5875 = vadd.f32 %v5666, %v5874
      %5876 = vmatmul.f32.gmra.mxu0 %v720
      %v5877 = vpop.f32.mrf.mxu0
      %v5878 = vadd.f32 %v5669, %v5877
      %5879 = vmatmul.f32.gmra.mxu0 %v723
      %v5880 = vpop.f32.mrf.mxu0
      %v5881 = vadd.f32 %v5672, %v5880
      %5882 = vmatmul.f32.gmra.mxu0 %v732
      %v5883 = vpop.f32.mrf.mxu0
      %v5884 = vadd.f32 %v5675, %v5883
      %5885 = vmatmul.f32.gmra.mxu0 %v735
      %v5886 = vpop.f32.mrf.mxu0
      %v5887 = vadd.f32 %v5678, %v5886
      %5888 = vmatmul.f32.gmra.mxu0 %v738
      %v5889 = vpop.f32.mrf.mxu0
      %v5890 = vadd.f32 %v5681, %v5889
      %5891 = vmatmul.f32.gmra.mxu0 %v741
      %v5892 = vpop.f32.mrf.mxu0
      %v5893 = vadd.f32 %v5684, %v5892
      %5894 = vmatmul.f32.gmra.mxu0 %v744
      %v5895 = vpop.f32.mrf.mxu0
      %v5896 = vadd.f32 %v5687, %v5895
      %5897 = vmatmul.f32.gmra.mxu0 %v747
      %v5898 = vpop.f32.mrf.mxu0
      %v5899 = vadd.f32 %v5690, %v5898
      %5900 = vmatmul.f32.gmra.mxu0 %v750
      %v5901 = vpop.f32.mrf.mxu0
      %v5902 = vadd.f32 %v5693, %v5901
      %5903 = vmatmul.f32.gmra.mxu0 %v753
      %v5904 = vpop.f32.mrf.mxu0
      %v5905 = vadd.f32 %v5696, %v5904
      %5906 = vmatmul.f32.gmra.mxu0 %v762
      %v5907 = vpop.f32.mrf.mxu0
      %v5908 = vadd.f32 %v5699, %v5907
      %5909 = vmatmul.f32.gmra.mxu0 %v765
      %v5910 = vpop.f32.mrf.mxu0
      %v5911 = vadd.f32 %v5702, %v5910
      %5912 = vmatmul.f32.gmra.mxu0 %v768
      %v5913 = vpop.f32.mrf.mxu0
      %v5914 = vadd.f32 %v5705, %v5913
      %5915 = vmatmul.f32.gmra.mxu0 %v771
      %v5916 = vpop.f32.mrf.mxu0
      %v5917 = vadd.f32 %v5708, %v5916
      %5918 = vmatmul.f32.gmra.mxu0 %v774
      %v5919 = vpop.f32.mrf.mxu0
      %v5920 = vadd.f32 %v5711, %v5919
      %5921 = vmatmul.f32.gmra.mxu0 %v777
      %v5922 = vpop.f32.mrf.mxu0
      %v5923 = vadd.f32 %v5714, %v5922
      %5924 = vmatmul.f32.gmra.mxu0 %v780
      %v5925 = vpop.f32.mrf.mxu0
      %v5926 = vadd.f32 %v5717, %v5925
      %5927 = vmatmul.f32.gmra.mxu0 %v783
      %v5928 = vpop.f32.mrf.mxu0
      %v5929 = vadd.f32 %v5720, %v5928
      %5930 = vmatmul.f32.gmra.mxu0 %v792
      %v5931 = vpop.f32.mrf.mxu0
      %v5932 = vadd.f32 %v5723, %v5931
      %5933 = vmatmul.f32.gmra.mxu0 %v795
      %v5934 = vpop.f32.mrf.mxu0
      %v5935 = vadd.f32 %v5726, %v5934
      %5936 = vmatmul.f32.gmra.mxu0 %v798
      %v5937 = vpop.f32.mrf.mxu0
      %v5938 = vadd.f32 %v5729, %v5937
      %5939 = vmatmul.f32.gmra.mxu0 %v801
      %v5940 = vpop.f32.mrf.mxu0
      %v5941 = vadd.f32 %v5732, %v5940
      %5942 = vmatmul.f32.gmra.mxu0 %v804
      %v5943 = vpop.f32.mrf.mxu0
      %v5944 = vadd.f32 %v5735, %v5943
      %5945 = vmatmul.f32.gmra.mxu0 %v807
      %v5946 = vpop.f32.mrf.mxu0
      %v5947 = vadd.f32 %v5738, %v5946
      %5948 = vmatmul.f32.gmra.mxu0 %v810
      %v5949 = vpop.f32.mrf.mxu0
      %v5950 = vadd.f32 %v5741, %v5949
      %5951 = vmatmul.f32.gmra.mxu0 %v813
      %v5952 = vpop.f32.mrf.mxu0
      %v5953 = vadd.f32 %v5744, %v5952
      %5954 = vmatmul.f32.gmra.mxu0 %v822
      %v5955 = vpop.f32.mrf.mxu0
      %v5956 = vadd.f32 %v5747, %v5955
      %5957 = vmatmul.f32.gmra.mxu0 %v825
      %v5958 = vpop.f32.mrf.mxu0
      %v5959 = vadd.f32 %v5750, %v5958
      %5960 = vmatmul.f32.gmra.mxu0 %v828
      %v5961 = vpop.f32.mrf.mxu0
      %v5962 = vadd.f32 %v5753, %v5961
      %5963 = vmatmul.f32.gmra.mxu0 %v831
      %v5964 = vpop.f32.mrf.mxu0
      %v5965 = vadd.f32 %v5756, %v5964
      %5966 = vmatmul.f32.gmra.mxu0 %v834
      %v5967 = vpop.f32.mrf.mxu0
      %v5968 = vadd.f32 %v5759, %v5967
      %5969 = vmatmul.f32.gmra.mxu0 %v837
      %v5970 = vpop.f32.mrf.mxu0
      %v5971 = vadd.f32 %v5762, %v5970
      %5972 = vmatmul.f32.gmra.mxu0 %v840
      %v5973 = vpop.f32.mrf.mxu0
      %v5974 = vadd.f32 %v5765, %v5973
      %5975 = vmatmul.f32.gmra.mxu0 %v843
      %v5976 = vpop.f32.mrf.mxu0
      %v5977 = vadd.f32 %v5768, %v5976
      %5978 = vmatmul.f32.gmra.mxu0 %v852
      %v5979 = vpop.f32.mrf.mxu0
      %v5980 = vadd.f32 %v5771, %v5979
      %5981 = vmatmul.f32.gmra.mxu0 %v855
      %v5982 = vpop.f32.mrf.mxu0
      %v5983 = vadd.f32 %v5774, %v5982
      %5984 = vmatmul.f32.gmra.mxu0 %v858
      %v5985 = vpop.f32.mrf.mxu0
      %v5986 = vadd.f32 %v5777, %v5985
      %5987 = vmatmul.f32.gmra.mxu0 %v861
      %v5988 = vpop.f32.mrf.mxu0
      %v5989 = vadd.f32 %v5780, %v5988
      %5990 = vmatmul.f32.gmra.mxu0 %v864
      %v5991 = vpop.f32.mrf.mxu0
      %v5992 = vadd.f32 %v5783, %v5991
      %5993 = vmatmul.f32.gmra.mxu0 %v867
      %v5994 = vpop.f32.mrf.mxu0
      %v5995 = vadd.f32 %v5786, %v5994
      %5996 = vmatmul.f32.gmra.mxu0 %v870
      %v5997 = vpop.f32.mrf.mxu0
      %v5998 = vadd.f32 %v5789, %v5997
      %5999 = vmatmul.f32.gmra.mxu0 %v873
      %v6000 = vpop.f32.mrf.mxu0
      %v6001 = vadd.f32 %v5792, %v6000
      %6002 = vmatmul.f32.gmra.mxu0 %v882
      %v6003 = vpop.f32.mrf.mxu0
      %v6004 = vadd.f32 %v5795, %v6003
      %6005 = vmatmul.f32.gmra.mxu0 %v885
      %v6006 = vpop.f32.mrf.mxu0
      %v6007 = vadd.f32 %v5798, %v6006
      %6008 = vmatmul.f32.gmra.mxu0 %v888
      %v6009 = vpop.f32.mrf.mxu0
      %v6010 = vadd.f32 %v5801, %v6009
      %6011 = vmatmul.f32.gmra.mxu0 %v891
      %v6012 = vpop.f32.mrf.mxu0
      %v6013 = vadd.f32 %v5804, %v6012
      %6014 = vmatmul.f32.gmra.mxu0 %v894
      %v6015 = vpop.f32.mrf.mxu0
      %v6016 = vadd.f32 %v5807, %v6015
      %6017 = vmatmul.f32.gmra.mxu0 %v897
      %v6018 = vpop.f32.mrf.mxu0
      %v6019 = vadd.f32 %v5810, %v6018
      %6020 = vmatmul.f32.gmra.mxu0 %v900
      %v6021 = vpop.f32.mrf.mxu0
      %v6022 = vadd.f32 %v5813, %v6021
      %6023 = vmatmul.f32.gmra.mxu0 %v903
      %v6024 = vpop.f32.mrf.mxu0
      %v6025 = vadd.f32 %v5816, %v6024
      %6026 = vdwg.mxu0
      %6027 = vmatpush.msra.mxu0 %v1746
      %6028 = vmatpush.msra.mxu0 %v1745
      %6029 = vmatpush.msra.mxu0 %v1744
      %6030 = vmatpush.msra.mxu0 %v1743
      %6031 = vmatpush.msra.mxu0 %v1742
      %6032 = vmatpush.msra.mxu0 %v1741
      %6033 = vmatpush.msra.mxu0 %v1740
      %6034 = vmatpush.msra.mxu0 %v1739
      %6035 = vmatpush.msra.mxu0 %v1738
      %6036 = vmatpush.msra.mxu0 %v1737
      %6037 = vmatpush.msra.mxu0 %v1736
      %6038 = vmatpush.msra.mxu0 %v1735
      %6039 = vmatpush.msra.mxu0 %v1734
      %6040 = vmatpush.msra.mxu0 %v1733
      %6041 = vmatpush.msra.mxu0 %v1732
      %6042 = vmatpush.msra.mxu0 %v1731
      %6043 = vmatmul.f32.gmra.mxu0 %v1073
      %v6044 = vpop.f32.mrf.mxu0
      %v6045 = vadd.f32 %v5836, %v6044
      %6046 = vmatmul.f32.gmra.mxu0 %v1076
      %v6047 = vpop.f32.mrf.mxu0
      %v6048 = vadd.f32 %v5839, %v6047
      %6049 = vmatmul.f32.gmra.mxu0 %v1079
      %v6050 = vpop.f32.mrf.mxu0
      %v6051 = vadd.f32 %v5842, %v6050
      %6052 = vmatmul.f32.gmra.mxu0 %v1082
      %v6053 = vpop.f32.mrf.mxu0
      %v6054 = vadd.f32 %v5845, %v6053
      %6055 = vmatmul.f32.gmra.mxu0 %v1085
      %v6056 = vpop.f32.mrf.mxu0
      %v6057 = vadd.f32 %v5848, %v6056
      %6058 = vmatmul.f32.gmra.mxu0 %v1088
      %v6059 = vpop.f32.mrf.mxu0
      %v6060 = vadd.f32 %v5851, %v6059
      %6061 = vmatmul.f32.gmra.mxu0 %v1091
      %v6062 = vpop.f32.mrf.mxu0
      %v6063 = vadd.f32 %v5854, %v6062
      %6064 = vmatmul.f32.gmra.mxu0 %v1094
      %v6065 = vpop.f32.mrf.mxu0
      %v6066 = vadd.f32 %v5857, %v6065
      %6067 = vmatmul.f32.gmra.mxu0 %v1103
      %v6068 = vpop.f32.mrf.mxu0
      %v6069 = vadd.f32 %v5860, %v6068
      %6070 = vmatmul.f32.gmra.mxu0 %v1106
      %v6071 = vpop.f32.mrf.mxu0
      %v6072 = vadd.f32 %v5863, %v6071
      %6073 = vmatmul.f32.gmra.mxu0 %v1109
      %v6074 = vpop.f32.mrf.mxu0
      %v6075 = vadd.f32 %v5866, %v6074
      %6076 = vmatmul.f32.gmra.mxu0 %v1112
      %v6077 = vpop.f32.mrf.mxu0
      %v6078 = vadd.f32 %v5869, %v6077
      %6079 = vmatmul.f32.gmra.mxu0 %v1115
      %v6080 = vpop.f32.mrf.mxu0
      %v6081 = vadd.f32 %v5872, %v6080
      %6082 = vmatmul.f32.gmra.mxu0 %v1118
      %v6083 = vpop.f32.mrf.mxu0
      %v6084 = vadd.f32 %v5875, %v6083
      %6085 = vmatmul.f32.gmra.mxu0 %v1121
      %v6086 = vpop.f32.mrf.mxu0
      %v6087 = vadd.f32 %v5878, %v6086
      %6088 = vmatmul.f32.gmra.mxu0 %v1124
      %v6089 = vpop.f32.mrf.mxu0
      %v6090 = vadd.f32 %v5881, %v6089
      %6091 = vmatmul.f32.gmra.mxu0 %v1133
      %v6092 = vpop.f32.mrf.mxu0
      %v6093 = vadd.f32 %v5884, %v6092
      %6094 = vmatmul.f32.gmra.mxu0 %v1136
      %v6095 = vpop.f32.mrf.mxu0
      %v6096 = vadd.f32 %v5887, %v6095
      %6097 = vmatmul.f32.gmra.mxu0 %v1139
      %v6098 = vpop.f32.mrf.mxu0
      %v6099 = vadd.f32 %v5890, %v6098
      %6100 = vmatmul.f32.gmra.mxu0 %v1142
      %v6101 = vpop.f32.mrf.mxu0
      %v6102 = vadd.f32 %v5893, %v6101
      %6103 = vmatmul.f32.gmra.mxu0 %v1145
      %v6104 = vpop.f32.mrf.mxu0
      %v6105 = vadd.f32 %v5896, %v6104
      %6106 = vmatmul.f32.gmra.mxu0 %v1148
      %v6107 = vpop.f32.mrf.mxu0
      %v6108 = vadd.f32 %v5899, %v6107
      %6109 = vmatmul.f32.gmra.mxu0 %v1151
      %v6110 = vpop.f32.mrf.mxu0
      %v6111 = vadd.f32 %v5902, %v6110
      %6112 = vmatmul.f32.gmra.mxu0 %v1154
      %v6113 = vpop.f32.mrf.mxu0
      %v6114 = vadd.f32 %v5905, %v6113
      %6115 = vmatmul.f32.gmra.mxu0 %v1163
      %v6116 = vpop.f32.mrf.mxu0
      %v6117 = vadd.f32 %v5908, %v6116
      %6118 = vmatmul.f32.gmra.mxu0 %v1166
      %v6119 = vpop.f32.mrf.mxu0
      %v6120 = vadd.f32 %v5911, %v6119
      %6121 = vmatmul.f32.gmra.mxu0 %v1169
      %v6122 = vpop.f32.mrf.mxu0
      %v6123 = vadd.f32 %v5914, %v6122
      %6124 = vmatmul.f32.gmra.mxu0 %v1172
      %v6125 = vpop.f32.mrf.mxu0
      %v6126 = vadd.f32 %v5917, %v6125
      %6127 = vmatmul.f32.gmra.mxu0 %v1175
      %v6128 = vpop.f32.mrf.mxu0
      %v6129 = vadd.f32 %v5920, %v6128
      %6130 = vmatmul.f32.gmra.mxu0 %v1178
      %v6131 = vpop.f32.mrf.mxu0
      %v6132 = vadd.f32 %v5923, %v6131
      %6133 = vmatmul.f32.gmra.mxu0 %v1181
      %v6134 = vpop.f32.mrf.mxu0
      %v6135 = vadd.f32 %v5926, %v6134
      %6136 = vmatmul.f32.gmra.mxu0 %v1184
      %v6137 = vpop.f32.mrf.mxu0
      %v6138 = vadd.f32 %v5929, %v6137
      %6139 = vmatmul.f32.gmra.mxu0 %v1193
      %v6140 = vpop.f32.mrf.mxu0
      %v6141 = vadd.f32 %v5932, %v6140
      %6142 = vmatmul.f32.gmra.mxu0 %v1196
      %v6143 = vpop.f32.mrf.mxu0
      %v6144 = vadd.f32 %v5935, %v6143
      %6145 = vmatmul.f32.gmra.mxu0 %v1199
      %v6146 = vpop.f32.mrf.mxu0
      %v6147 = vadd.f32 %v5938, %v6146
      %6148 = vmatmul.f32.gmra.mxu0 %v1202
      %v6149 = vpop.f32.mrf.mxu0
      %v6150 = vadd.f32 %v5941, %v6149
      %6151 = vmatmul.f32.gmra.mxu0 %v1205
      %v6152 = vpop.f32.mrf.mxu0
      %v6153 = vadd.f32 %v5944, %v6152
      %6154 = vmatmul.f32.gmra.mxu0 %v1208
      %v6155 = vpop.f32.mrf.mxu0
      %v6156 = vadd.f32 %v5947, %v6155
      %6157 = vmatmul.f32.gmra.mxu0 %v1211
      %v6158 = vpop.f32.mrf.mxu0
      %v6159 = vadd.f32 %v5950, %v6158
      %6160 = vmatmul.f32.gmra.mxu0 %v1214
      %v6161 = vpop.f32.mrf.mxu0
      %v6162 = vadd.f32 %v5953, %v6161
      %6163 = vmatmul.f32.gmra.mxu0 %v1223
      %v6164 = vpop.f32.mrf.mxu0
      %v6165 = vadd.f32 %v5956, %v6164
      %6166 = vmatmul.f32.gmra.mxu0 %v1226
      %v6167 = vpop.f32.mrf.mxu0
      %v6168 = vadd.f32 %v5959, %v6167
      %6169 = vmatmul.f32.gmra.mxu0 %v1229
      %v6170 = vpop.f32.mrf.mxu0
      %v6171 = vadd.f32 %v5962, %v6170
      %6172 = vmatmul.f32.gmra.mxu0 %v1232
      %v6173 = vpop.f32.mrf.mxu0
      %v6174 = vadd.f32 %v5965, %v6173
      %6175 = vmatmul.f32.gmra.mxu0 %v1235
      %v6176 = vpop.f32.mrf.mxu0
      %v6177 = vadd.f32 %v5968, %v6176
      %6178 = vmatmul.f32.gmra.mxu0 %v1238
      %v6179 = vpop.f32.mrf.mxu0
      %v6180 = vadd.f32 %v5971, %v6179
      %6181 = vmatmul.f32.gmra.mxu0 %v1241
      %v6182 = vpop.f32.mrf.mxu0
      %v6183 = vadd.f32 %v5974, %v6182
      %6184 = vmatmul.f32.gmra.mxu0 %v1244
      %v6185 = vpop.f32.mrf.mxu0
      %v6186 = vadd.f32 %v5977, %v6185
      %6187 = vmatmul.f32.gmra.mxu0 %v1253
      %v6188 = vpop.f32.mrf.mxu0
      %v6189 = vadd.f32 %v5980, %v6188
      %6190 = vmatmul.f32.gmra.mxu0 %v1256
      %v6191 = vpop.f32.mrf.mxu0
      %v6192 = vadd.f32 %v5983, %v6191
      %6193 = vmatmul.f32.gmra.mxu0 %v1259
      %v6194 = vpop.f32.mrf.mxu0
      %v6195 = vadd.f32 %v5986, %v6194
      %6196 = vmatmul.f32.gmra.mxu0 %v1262
      %v6197 = vpop.f32.mrf.mxu0
      %v6198 = vadd.f32 %v5989, %v6197
      %6199 = vmatmul.f32.gmra.mxu0 %v1265
      %v6200 = vpop.f32.mrf.mxu0
      %v6201 = vadd.f32 %v5992, %v6200
      %6202 = vmatmul.f32.gmra.mxu0 %v1268
      %v6203 = vpop.f32.mrf.mxu0
      %v6204 = vadd.f32 %v5995, %v6203
      %6205 = vmatmul.f32.gmra.mxu0 %v1271
      %v6206 = vpop.f32.mrf.mxu0
      %v6207 = vadd.f32 %v5998, %v6206
      %6208 = vmatmul.f32.gmra.mxu0 %v1274
      %v6209 = vpop.f32.mrf.mxu0
      %v6210 = vadd.f32 %v6001, %v6209
      %6211 = vmatmul.f32.gmra.mxu0 %v1283
      %v6212 = vpop.f32.mrf.mxu0
      %v6213 = vadd.f32 %v6004, %v6212
      %6214 = vmatmul.f32.gmra.mxu0 %v1286
      %v6215 = vpop.f32.mrf.mxu0
      %v6216 = vadd.f32 %v6007, %v6215
      %6217 = vmatmul.f32.gmra.mxu0 %v1289
      %v6218 = vpop.f32.mrf.mxu0
      %v6219 = vadd.f32 %v6010, %v6218
      %6220 = vmatmul.f32.gmra.mxu0 %v1292
      %v6221 = vpop.f32.mrf.mxu0
      %v6222 = vadd.f32 %v6013, %v6221
      %6223 = vmatmul.f32.gmra.mxu0 %v1295
      %v6224 = vpop.f32.mrf.mxu0
      %v6225 = vadd.f32 %v6016, %v6224
      %6226 = vmatmul.f32.gmra.mxu0 %v1298
      %v6227 = vpop.f32.mrf.mxu0
      %v6228 = vadd.f32 %v6019, %v6227
      %6229 = vmatmul.f32.gmra.mxu0 %v1301
      %v6230 = vpop.f32.mrf.mxu0
      %v6231 = vadd.f32 %v6022, %v6230
      %6232 = vmatmul.f32.gmra.mxu0 %v1304
      %v6233 = vpop.f32.mrf.mxu0
      %v6234 = vadd.f32 %v6025, %v6233
      %6235 = vdwg.mxu0
      %6236 = vmatpush.msra.mxu0 %v1762
      %6237 = vmatpush.msra.mxu0 %v1761
      %6238 = vmatpush.msra.mxu0 %v1760
      %6239 = vmatpush.msra.mxu0 %v1759
      %6240 = vmatpush.msra.mxu0 %v1758
      %6241 = vmatpush.msra.mxu0 %v1757
      %6242 = vmatpush.msra.mxu0 %v1756
      %6243 = vmatpush.msra.mxu0 %v1755
      %6244 = vmatpush.msra.mxu0 %v1754
      %6245 = vmatpush.msra.mxu0 %v1753
      %6246 = vmatpush.msra.mxu0 %v1752
      %6247 = vmatpush.msra.mxu0 %v1751
      %6248 = vmatpush.msra.mxu0 %v1750
      %6249 = vmatpush.msra.mxu0 %v1749
      %6250 = vmatpush.msra.mxu0 %v1748
      %6251 = vmatpush.msra.mxu0 %v1747
      %6252 = vmatmul.f32.gmra.mxu0 %v251
      %v6253 = vpop.f32.mrf.mxu0
      %v6254 = vadd.f32 %v6045, %v6253
      %6255 = vmatmul.f32.gmra.mxu0 %v253
      %v6256 = vpop.f32.mrf.mxu0
      %v6257 = vadd.f32 %v6048, %v6256
      %6258 = vmatmul.f32.gmra.mxu0 %v255
      %v6259 = vpop.f32.mrf.mxu0
      %v6260 = vadd.f32 %v6051, %v6259
      %6261 = vmatmul.f32.gmra.mxu0 %v257
      %v6262 = vpop.f32.mrf.mxu0
      %v6263 = vadd.f32 %v6054, %v6262
      %6264 = vmatmul.f32.gmra.mxu0 %v259
      %v6265 = vpop.f32.mrf.mxu0
      %v6266 = vadd.f32 %v6057, %v6265
      %6267 = vmatmul.f32.gmra.mxu0 %v261
      %v6268 = vpop.f32.mrf.mxu0
      %v6269 = vadd.f32 %v6060, %v6268
      %6270 = vmatmul.f32.gmra.mxu0 %v263
      %v6271 = vpop.f32.mrf.mxu0
      %v6272 = vadd.f32 %v6063, %v6271
      %6273 = vmatmul.f32.gmra.mxu0 %v265
      %v6274 = vpop.f32.mrf.mxu0
      %v6275 = vadd.f32 %v6066, %v6274
      %6276 = vmatmul.f32.gmra.mxu0 %v271
      %v6277 = vpop.f32.mrf.mxu0
      %v6278 = vadd.f32 %v6069, %v6277
      %6279 = vmatmul.f32.gmra.mxu0 %v273
      %v6280 = vpop.f32.mrf.mxu0
      %v6281 = vadd.f32 %v6072, %v6280
      %6282 = vmatmul.f32.gmra.mxu0 %v275
      %v6283 = vpop.f32.mrf.mxu0
      %v6284 = vadd.f32 %v6075, %v6283
      %6285 = vmatmul.f32.gmra.mxu0 %v277
      %v6286 = vpop.f32.mrf.mxu0
      %v6287 = vadd.f32 %v6078, %v6286
      %6288 = vmatmul.f32.gmra.mxu0 %v279
      %v6289 = vpop.f32.mrf.mxu0
      %v6290 = vadd.f32 %v6081, %v6289
      %6291 = vmatmul.f32.gmra.mxu0 %v281
      %v6292 = vpop.f32.mrf.mxu0
      %v6293 = vadd.f32 %v6084, %v6292
      %6294 = vmatmul.f32.gmra.mxu0 %v283
      %v6295 = vpop.f32.mrf.mxu0
      %v6296 = vadd.f32 %v6087, %v6295
      %6297 = vmatmul.f32.gmra.mxu0 %v285
      %v6298 = vpop.f32.mrf.mxu0
      %v6299 = vadd.f32 %v6090, %v6298
      %6300 = vmatmul.f32.gmra.mxu0 %v291
      %v6301 = vpop.f32.mrf.mxu0
      %v6302 = vadd.f32 %v6093, %v6301
      %6303 = vmatmul.f32.gmra.mxu0 %v293
      %v6304 = vpop.f32.mrf.mxu0
      %v6305 = vadd.f32 %v6096, %v6304
      %6306 = vmatmul.f32.gmra.mxu0 %v295
      %v6307 = vpop.f32.mrf.mxu0
      %v6308 = vadd.f32 %v6099, %v6307
      %6309 = vmatmul.f32.gmra.mxu0 %v297
      %v6310 = vpop.f32.mrf.mxu0
      %v6311 = vadd.f32 %v6102, %v6310
      %6312 = vmatmul.f32.gmra.mxu0 %v299
      %v6313 = vpop.f32.mrf.mxu0
      %v6314 = vadd.f32 %v6105, %v6313
      %6315 = vmatmul.f32.gmra.mxu0 %v301
      %v6316 = vpop.f32.mrf.mxu0
      %v6317 = vadd.f32 %v6108, %v6316
      %6318 = vmatmul.f32.gmra.mxu0 %v303
      %v6319 = vpop.f32.mrf.mxu0
      %v6320 = vadd.f32 %v6111, %v6319
      %6321 = vmatmul.f32.gmra.mxu0 %v305
      %v6322 = vpop.f32.mrf.mxu0
      %v6323 = vadd.f32 %v6114, %v6322
      %6324 = vmatmul.f32.gmra.mxu0 %v311
      %v6325 = vpop.f32.mrf.mxu0
      %v6326 = vadd.f32 %v6117, %v6325
      %6327 = vmatmul.f32.gmra.mxu0 %v313
      %v6328 = vpop.f32.mrf.mxu0
      %v6329 = vadd.f32 %v6120, %v6328
      %6330 = vmatmul.f32.gmra.mxu0 %v315
      %v6331 = vpop.f32.mrf.mxu0
      %v6332 = vadd.f32 %v6123, %v6331
      %6333 = vmatmul.f32.gmra.mxu0 %v317
      %v6334 = vpop.f32.mrf.mxu0
      %v6335 = vadd.f32 %v6126, %v6334
      %6336 = vmatmul.f32.gmra.mxu0 %v319
      %v6337 = vpop.f32.mrf.mxu0
      %v6338 = vadd.f32 %v6129, %v6337
      %6339 = vmatmul.f32.gmra.mxu0 %v321
      %v6340 = vpop.f32.mrf.mxu0
      %v6341 = vadd.f32 %v6132, %v6340
      %6342 = vmatmul.f32.gmra.mxu0 %v323
      %v6343 = vpop.f32.mrf.mxu0
      %v6344 = vadd.f32 %v6135, %v6343
      %6345 = vmatmul.f32.gmra.mxu0 %v325
      %v6346 = vpop.f32.mrf.mxu0
      %v6347 = vadd.f32 %v6138, %v6346
      %6348 = vmatmul.f32.gmra.mxu0 %v331
      %v6349 = vpop.f32.mrf.mxu0
      %v6350 = vadd.f32 %v6141, %v6349
      %6351 = vmatmul.f32.gmra.mxu0 %v333
      %v6352 = vpop.f32.mrf.mxu0
      %v6353 = vadd.f32 %v6144, %v6352
      %6354 = vmatmul.f32.gmra.mxu0 %v335
      %v6355 = vpop.f32.mrf.mxu0
      %v6356 = vadd.f32 %v6147, %v6355
      %6357 = vmatmul.f32.gmra.mxu0 %v337
      %v6358 = vpop.f32.mrf.mxu0
      %v6359 = vadd.f32 %v6150, %v6358
      %6360 = vmatmul.f32.gmra.mxu0 %v339
      %v6361 = vpop.f32.mrf.mxu0
      %v6362 = vadd.f32 %v6153, %v6361
      %6363 = vmatmul.f32.gmra.mxu0 %v341
      %v6364 = vpop.f32.mrf.mxu0
      %v6365 = vadd.f32 %v6156, %v6364
      %6366 = vmatmul.f32.gmra.mxu0 %v343
      %v6367 = vpop.f32.mrf.mxu0
      %v6368 = vadd.f32 %v6159, %v6367
      %6369 = vmatmul.f32.gmra.mxu0 %v345
      %v6370 = vpop.f32.mrf.mxu0
      %v6371 = vadd.f32 %v6162, %v6370
      %6372 = vmatmul.f32.gmra.mxu0 %v351
      %v6373 = vpop.f32.mrf.mxu0
      %v6374 = vadd.f32 %v6165, %v6373
      %6375 = vmatmul.f32.gmra.mxu0 %v353
      %v6376 = vpop.f32.mrf.mxu0
      %v6377 = vadd.f32 %v6168, %v6376
      %6378 = vmatmul.f32.gmra.mxu0 %v355
      %v6379 = vpop.f32.mrf.mxu0
      %v6380 = vadd.f32 %v6171, %v6379
      %6381 = vmatmul.f32.gmra.mxu0 %v357
      %v6382 = vpop.f32.mrf.mxu0
      %v6383 = vadd.f32 %v6174, %v6382
      %6384 = vmatmul.f32.gmra.mxu0 %v359
      %v6385 = vpop.f32.mrf.mxu0
      %v6386 = vadd.f32 %v6177, %v6385
      %6387 = vmatmul.f32.gmra.mxu0 %v361
      %v6388 = vpop.f32.mrf.mxu0
      %v6389 = vadd.f32 %v6180, %v6388
      %6390 = vmatmul.f32.gmra.mxu0 %v363
      %v6391 = vpop.f32.mrf.mxu0
      %v6392 = vadd.f32 %v6183, %v6391
      %6393 = vmatmul.f32.gmra.mxu0 %v365
      %v6394 = vpop.f32.mrf.mxu0
      %v6395 = vadd.f32 %v6186, %v6394
      %6396 = vmatmul.f32.gmra.mxu0 %v371
      %v6397 = vpop.f32.mrf.mxu0
      %v6398 = vadd.f32 %v6189, %v6397
      %6399 = vmatmul.f32.gmra.mxu0 %v373
      %v6400 = vpop.f32.mrf.mxu0
      %v6401 = vadd.f32 %v6192, %v6400
      %6402 = vmatmul.f32.gmra.mxu0 %v375
      %v6403 = vpop.f32.mrf.mxu0
      %v6404 = vadd.f32 %v6195, %v6403
      %6405 = vmatmul.f32.gmra.mxu0 %v377
      %v6406 = vpop.f32.mrf.mxu0
      %v6407 = vadd.f32 %v6198, %v6406
      %6408 = vmatmul.f32.gmra.mxu0 %v379
      %v6409 = vpop.f32.mrf.mxu0
      %v6410 = vadd.f32 %v6201, %v6409
      %6411 = vmatmul.f32.gmra.mxu0 %v381
      %v6412 = vpop.f32.mrf.mxu0
      %v6413 = vadd.f32 %v6204, %v6412
      %6414 = vmatmul.f32.gmra.mxu0 %v383
      %v6415 = vpop.f32.mrf.mxu0
      %v6416 = vadd.f32 %v6207, %v6415
      %6417 = vmatmul.f32.gmra.mxu0 %v385
      %v6418 = vpop.f32.mrf.mxu0
      %v6419 = vadd.f32 %v6210, %v6418
      %6420 = vmatmul.f32.gmra.mxu0 %v391
      %v6421 = vpop.f32.mrf.mxu0
      %v6422 = vadd.f32 %v6213, %v6421
      %6423 = vmatmul.f32.gmra.mxu0 %v393
      %v6424 = vpop.f32.mrf.mxu0
      %v6425 = vadd.f32 %v6216, %v6424
      %6426 = vmatmul.f32.gmra.mxu0 %v395
      %v6427 = vpop.f32.mrf.mxu0
      %v6428 = vadd.f32 %v6219, %v6427
      %6429 = vmatmul.f32.gmra.mxu0 %v397
      %v6430 = vpop.f32.mrf.mxu0
      %v6431 = vadd.f32 %v6222, %v6430
      %6432 = vmatmul.f32.gmra.mxu0 %v399
      %v6433 = vpop.f32.mrf.mxu0
      %v6434 = vadd.f32 %v6225, %v6433
      %6435 = vmatmul.f32.gmra.mxu0 %v401
      %v6436 = vpop.f32.mrf.mxu0
      %v6437 = vadd.f32 %v6228, %v6436
      %6438 = vmatmul.f32.gmra.mxu0 %v403
      %v6439 = vpop.f32.mrf.mxu0
      %v6440 = vadd.f32 %v6231, %v6439
      %6441 = vmatmul.f32.gmra.mxu0 %v405
      %v6442 = vpop.f32.mrf.mxu0
      %v6443 = vadd.f32 %v6234, %v6442
      %6444 = vdwg.mxu0
      %6445 = vmatpush.msra.mxu0 %v1778
      %6446 = vmatpush.msra.mxu0 %v1777
      %6447 = vmatpush.msra.mxu0 %v1776
      %6448 = vmatpush.msra.mxu0 %v1775
      %6449 = vmatpush.msra.mxu0 %v1774
      %6450 = vmatpush.msra.mxu0 %v1773
      %6451 = vmatpush.msra.mxu0 %v1772
      %6452 = vmatpush.msra.mxu0 %v1771
      %6453 = vmatpush.msra.mxu0 %v1770
      %6454 = vmatpush.msra.mxu0 %v1769
      %6455 = vmatpush.msra.mxu0 %v1768
      %6456 = vmatpush.msra.mxu0 %v1767
      %6457 = vmatpush.msra.mxu0 %v1766
      %6458 = vmatpush.msra.mxu0 %v1765
      %6459 = vmatpush.msra.mxu0 %v1764
      %6460 = vmatpush.msra.mxu0 %v1763
      %6461 = vmatmul.f32.gmra.mxu0 %v675
      %v6462 = vpop.f32.mrf.mxu0
      %v6463 = vadd.f32 %v6254, %v6462
      %6464 = vmatmul.f32.gmra.mxu0 %v678
      %v6465 = vpop.f32.mrf.mxu0
      %v6466 = vadd.f32 %v6257, %v6465
      %6467 = vmatmul.f32.gmra.mxu0 %v681
      %v6468 = vpop.f32.mrf.mxu0
      %v6469 = vadd.f32 %v6260, %v6468
      %6470 = vmatmul.f32.gmra.mxu0 %v684
      %v6471 = vpop.f32.mrf.mxu0
      %v6472 = vadd.f32 %v6263, %v6471
      %6473 = vmatmul.f32.gmra.mxu0 %v687
      %v6474 = vpop.f32.mrf.mxu0
      %v6475 = vadd.f32 %v6266, %v6474
      %6476 = vmatmul.f32.gmra.mxu0 %v690
      %v6477 = vpop.f32.mrf.mxu0
      %v6478 = vadd.f32 %v6269, %v6477
      %6479 = vmatmul.f32.gmra.mxu0 %v693
      %v6480 = vpop.f32.mrf.mxu0
      %v6481 = vadd.f32 %v6272, %v6480
      %6482 = vmatmul.f32.gmra.mxu0 %v696
      %v6483 = vpop.f32.mrf.mxu0
      %v6484 = vadd.f32 %v6275, %v6483
      %6485 = vmatmul.f32.gmra.mxu0 %v705
      %v6486 = vpop.f32.mrf.mxu0
      %v6487 = vadd.f32 %v6278, %v6486
      %6488 = vmatmul.f32.gmra.mxu0 %v708
      %v6489 = vpop.f32.mrf.mxu0
      %v6490 = vadd.f32 %v6281, %v6489
      %6491 = vmatmul.f32.gmra.mxu0 %v711
      %v6492 = vpop.f32.mrf.mxu0
      %v6493 = vadd.f32 %v6284, %v6492
      %6494 = vmatmul.f32.gmra.mxu0 %v714
      %v6495 = vpop.f32.mrf.mxu0
      %v6496 = vadd.f32 %v6287, %v6495
      %6497 = vmatmul.f32.gmra.mxu0 %v717
      %v6498 = vpop.f32.mrf.mxu0
      %v6499 = vadd.f32 %v6290, %v6498
      %6500 = vmatmul.f32.gmra.mxu0 %v720
      %v6501 = vpop.f32.mrf.mxu0
      %v6502 = vadd.f32 %v6293, %v6501
      %6503 = vmatmul.f32.gmra.mxu0 %v723
      %v6504 = vpop.f32.mrf.mxu0
      %v6505 = vadd.f32 %v6296, %v6504
      %6506 = vmatmul.f32.gmra.mxu0 %v726
      %v6507 = vpop.f32.mrf.mxu0
      %v6508 = vadd.f32 %v6299, %v6507
      %6509 = vmatmul.f32.gmra.mxu0 %v735
      %v6510 = vpop.f32.mrf.mxu0
      %v6511 = vadd.f32 %v6302, %v6510
      %6512 = vmatmul.f32.gmra.mxu0 %v738
      %v6513 = vpop.f32.mrf.mxu0
      %v6514 = vadd.f32 %v6305, %v6513
      %6515 = vmatmul.f32.gmra.mxu0 %v741
      %v6516 = vpop.f32.mrf.mxu0
      %v6517 = vadd.f32 %v6308, %v6516
      %6518 = vmatmul.f32.gmra.mxu0 %v744
      %v6519 = vpop.f32.mrf.mxu0
      %v6520 = vadd.f32 %v6311, %v6519
      %6521 = vmatmul.f32.gmra.mxu0 %v747
      %v6522 = vpop.f32.mrf.mxu0
      %v6523 = vadd.f32 %v6314, %v6522
      %6524 = vmatmul.f32.gmra.mxu0 %v750
      %v6525 = vpop.f32.mrf.mxu0
      %v6526 = vadd.f32 %v6317, %v6525
      %6527 = vmatmul.f32.gmra.mxu0 %v753
      %v6528 = vpop.f32.mrf.mxu0
      %v6529 = vadd.f32 %v6320, %v6528
      %6530 = vmatmul.f32.gmra.mxu0 %v756
      %v6531 = vpop.f32.mrf.mxu0
      %v6532 = vadd.f32 %v6323, %v6531
      %6533 = vmatmul.f32.gmra.mxu0 %v765
      %v6534 = vpop.f32.mrf.mxu0
      %v6535 = vadd.f32 %v6326, %v6534
      %6536 = vmatmul.f32.gmra.mxu0 %v768
      %v6537 = vpop.f32.mrf.mxu0
      %v6538 = vadd.f32 %v6329, %v6537
      %6539 = vmatmul.f32.gmra.mxu0 %v771
      %v6540 = vpop.f32.mrf.mxu0
      %v6541 = vadd.f32 %v6332, %v6540
      %6542 = vmatmul.f32.gmra.mxu0 %v774
      %v6543 = vpop.f32.mrf.mxu0
      %v6544 = vadd.f32 %v6335, %v6543
      %6545 = vmatmul.f32.gmra.mxu0 %v777
      %v6546 = vpop.f32.mrf.mxu0
      %v6547 = vadd.f32 %v6338, %v6546
      %6548 = vmatmul.f32.gmra.mxu0 %v780
      %v6549 = vpop.f32.mrf.mxu0
      %v6550 = vadd.f32 %v6341, %v6549
      %6551 = vmatmul.f32.gmra.mxu0 %v783
      %v6552 = vpop.f32.mrf.mxu0
      %v6553 = vadd.f32 %v6344, %v6552
      %6554 = vmatmul.f32.gmra.mxu0 %v786
      %v6555 = vpop.f32.mrf.mxu0
      %v6556 = vadd.f32 %v6347, %v6555
      %6557 = vmatmul.f32.gmra.mxu0 %v795
      %v6558 = vpop.f32.mrf.mxu0
      %v6559 = vadd.f32 %v6350, %v6558
      %6560 = vmatmul.f32.gmra.mxu0 %v798
      %v6561 = vpop.f32.mrf.mxu0
      %v6562 = vadd.f32 %v6353, %v6561
      %6563 = vmatmul.f32.gmra.mxu0 %v801
      %v6564 = vpop.f32.mrf.mxu0
      %v6565 = vadd.f32 %v6356, %v6564
      %6566 = vmatmul.f32.gmra.mxu0 %v804
      %v6567 = vpop.f32.mrf.mxu0
      %v6568 = vadd.f32 %v6359, %v6567
      %6569 = vmatmul.f32.gmra.mxu0 %v807
      %v6570 = vpop.f32.mrf.mxu0
      %v6571 = vadd.f32 %v6362, %v6570
      %6572 = vmatmul.f32.gmra.mxu0 %v810
      %v6573 = vpop.f32.mrf.mxu0
      %v6574 = vadd.f32 %v6365, %v6573
      %6575 = vmatmul.f32.gmra.mxu0 %v813
      %v6576 = vpop.f32.mrf.mxu0
      %v6577 = vadd.f32 %v6368, %v6576
      %6578 = vmatmul.f32.gmra.mxu0 %v816
      %v6579 = vpop.f32.mrf.mxu0
      %v6580 = vadd.f32 %v6371, %v6579
      %6581 = vmatmul.f32.gmra.mxu0 %v825
      %v6582 = vpop.f32.mrf.mxu0
      %v6583 = vadd.f32 %v6374, %v6582
      %6584 = vmatmul.f32.gmra.mxu0 %v828
      %v6585 = vpop.f32.mrf.mxu0
      %v6586 = vadd.f32 %v6377, %v6585
      %6587 = vmatmul.f32.gmra.mxu0 %v831
      %v6588 = vpop.f32.mrf.mxu0
      %v6589 = vadd.f32 %v6380, %v6588
      %6590 = vmatmul.f32.gmra.mxu0 %v834
      %v6591 = vpop.f32.mrf.mxu0
      %v6592 = vadd.f32 %v6383, %v6591
      %6593 = vmatmul.f32.gmra.mxu0 %v837
      %v6594 = vpop.f32.mrf.mxu0
      %v6595 = vadd.f32 %v6386, %v6594
      %6596 = vmatmul.f32.gmra.mxu0 %v840
      %v6597 = vpop.f32.mrf.mxu0
      %v6598 = vadd.f32 %v6389, %v6597
      %6599 = vmatmul.f32.gmra.mxu0 %v843
      %v6600 = vpop.f32.mrf.mxu0
      %v6601 = vadd.f32 %v6392, %v6600
      %6602 = vmatmul.f32.gmra.mxu0 %v846
      %v6603 = vpop.f32.mrf.mxu0
      %v6604 = vadd.f32 %v6395, %v6603
      %6605 = vmatmul.f32.gmra.mxu0 %v855
      %v6606 = vpop.f32.mrf.mxu0
      %v6607 = vadd.f32 %v6398, %v6606
      %6608 = vmatmul.f32.gmra.mxu0 %v858
      %v6609 = vpop.f32.mrf.mxu0
      %v6610 = vadd.f32 %v6401, %v6609
      %6611 = vmatmul.f32.gmra.mxu0 %v861
      %v6612 = vpop.f32.mrf.mxu0
      %v6613 = vadd.f32 %v6404, %v6612
      %6614 = vmatmul.f32.gmra.mxu0 %v864
      %v6615 = vpop.f32.mrf.mxu0
      %v6616 = vadd.f32 %v6407, %v6615
      %6617 = vmatmul.f32.gmra.mxu0 %v867
      %v6618 = vpop.f32.mrf.mxu0
      %v6619 = vadd.f32 %v6410, %v6618
      %6620 = vmatmul.f32.gmra.mxu0 %v870
      %v6621 = vpop.f32.mrf.mxu0
      %v6622 = vadd.f32 %v6413, %v6621
      %6623 = vmatmul.f32.gmra.mxu0 %v873
      %v6624 = vpop.f32.mrf.mxu0
      %v6625 = vadd.f32 %v6416, %v6624
      %6626 = vmatmul.f32.gmra.mxu0 %v876
      %v6627 = vpop.f32.mrf.mxu0
      %v6628 = vadd.f32 %v6419, %v6627
      %6629 = vmatmul.f32.gmra.mxu0 %v885
      %v6630 = vpop.f32.mrf.mxu0
      %v6631 = vadd.f32 %v6422, %v6630
      %6632 = vmatmul.f32.gmra.mxu0 %v888
      %v6633 = vpop.f32.mrf.mxu0
      %v6634 = vadd.f32 %v6425, %v6633
      %6635 = vmatmul.f32.gmra.mxu0 %v891
      %v6636 = vpop.f32.mrf.mxu0
      %v6637 = vadd.f32 %v6428, %v6636
      %6638 = vmatmul.f32.gmra.mxu0 %v894
      %v6639 = vpop.f32.mrf.mxu0
      %v6640 = vadd.f32 %v6431, %v6639
      %6641 = vmatmul.f32.gmra.mxu0 %v897
      %v6642 = vpop.f32.mrf.mxu0
      %v6643 = vadd.f32 %v6434, %v6642
      %6644 = vmatmul.f32.gmra.mxu0 %v900
      %v6645 = vpop.f32.mrf.mxu0
      %v6646 = vadd.f32 %v6437, %v6645
      %6647 = vmatmul.f32.gmra.mxu0 %v903
      %v6648 = vpop.f32.mrf.mxu0
      %v6649 = vadd.f32 %v6440, %v6648
      %6650 = vmatmul.f32.gmra.mxu0 %v906
      %v6651 = vpop.f32.mrf.mxu0
      %v6652 = vadd.f32 %v6443, %v6651
      %6653 = vdwg.mxu0
      %6654 = vmatpush.msra.mxu0 %v1794
      %6655 = vmatpush.msra.mxu0 %v1793
      %6656 = vmatpush.msra.mxu0 %v1792
      %6657 = vmatpush.msra.mxu0 %v1791
      %6658 = vmatpush.msra.mxu0 %v1790
      %6659 = vmatpush.msra.mxu0 %v1789
      %6660 = vmatpush.msra.mxu0 %v1788
      %6661 = vmatpush.msra.mxu0 %v1787
      %6662 = vmatpush.msra.mxu0 %v1786
      %6663 = vmatpush.msra.mxu0 %v1785
      %6664 = vmatpush.msra.mxu0 %v1784
      %6665 = vmatpush.msra.mxu0 %v1783
      %6666 = vmatpush.msra.mxu0 %v1782
      %6667 = vmatpush.msra.mxu0 %v1781
      %6668 = vmatpush.msra.mxu0 %v1780
      %6669 = vmatpush.msra.mxu0 %v1779
      %6670 = vmatmul.f32.gmra.mxu0 %v1076
      %v6671 = vpop.f32.mrf.mxu0
      %v6672 = vadd.f32 %v6463, %v6671
      %6673 = vmatmul.f32.gmra.mxu0 %v1079
      %v6674 = vpop.f32.mrf.mxu0
      %v6675 = vadd.f32 %v6466, %v6674
      %6676 = vmatmul.f32.gmra.mxu0 %v1082
      %v6677 = vpop.f32.mrf.mxu0
      %v6678 = vadd.f32 %v6469, %v6677
      %6679 = vmatmul.f32.gmra.mxu0 %v1085
      %v6680 = vpop.f32.mrf.mxu0
      %v6681 = vadd.f32 %v6472, %v6680
      %6682 = vmatmul.f32.gmra.mxu0 %v1088
      %v6683 = vpop.f32.mrf.mxu0
      %v6684 = vadd.f32 %v6475, %v6683
      %6685 = vmatmul.f32.gmra.mxu0 %v1091
      %v6686 = vpop.f32.mrf.mxu0
      %v6687 = vadd.f32 %v6478, %v6686
      %6688 = vmatmul.f32.gmra.mxu0 %v1094
      %v6689 = vpop.f32.mrf.mxu0
      %v6690 = vadd.f32 %v6481, %v6689
      %6691 = vmatmul.f32.gmra.mxu0 %v1097
      %v6692 = vpop.f32.mrf.mxu0
      %v6693 = vadd.f32 %v6484, %v6692
      %6694 = vmatmul.f32.gmra.mxu0 %v1106
      %v6695 = vpop.f32.mrf.mxu0
      %v6696 = vadd.f32 %v6487, %v6695
      %6697 = vmatmul.f32.gmra.mxu0 %v1109
      %v6698 = vpop.f32.mrf.mxu0
      %v6699 = vadd.f32 %v6490, %v6698
      %6700 = vmatmul.f32.gmra.mxu0 %v1112
      %v6701 = vpop.f32.mrf.mxu0
      %v6702 = vadd.f32 %v6493, %v6701
      %6703 = vmatmul.f32.gmra.mxu0 %v1115
      %v6704 = vpop.f32.mrf.mxu0
      %v6705 = vadd.f32 %v6496, %v6704
      %6706 = vmatmul.f32.gmra.mxu0 %v1118
      %v6707 = vpop.f32.mrf.mxu0
      %v6708 = vadd.f32 %v6499, %v6707
      %6709 = vmatmul.f32.gmra.mxu0 %v1121
      %v6710 = vpop.f32.mrf.mxu0
      %v6711 = vadd.f32 %v6502, %v6710
      %6712 = vmatmul.f32.gmra.mxu0 %v1124
      %v6713 = vpop.f32.mrf.mxu0
      %v6714 = vadd.f32 %v6505, %v6713
      %6715 = vmatmul.f32.gmra.mxu0 %v1127
      %v6716 = vpop.f32.mrf.mxu0
      %v6717 = vadd.f32 %v6508, %v6716
      %6718 = vmatmul.f32.gmra.mxu0 %v1136
      %v6719 = vpop.f32.mrf.mxu0
      %v6720 = vadd.f32 %v6511, %v6719
      %6721 = vmatmul.f32.gmra.mxu0 %v1139
      %v6722 = vpop.f32.mrf.mxu0
      %v6723 = vadd.f32 %v6514, %v6722
      %6724 = vmatmul.f32.gmra.mxu0 %v1142
      %v6725 = vpop.f32.mrf.mxu0
      %v6726 = vadd.f32 %v6517, %v6725
      %6727 = vmatmul.f32.gmra.mxu0 %v1145
      %v6728 = vpop.f32.mrf.mxu0
      %v6729 = vadd.f32 %v6520, %v6728
      %6730 = vmatmul.f32.gmra.mxu0 %v1148
      %v6731 = vpop.f32.mrf.mxu0
      %v6732 = vadd.f32 %v6523, %v6731
      %6733 = vmatmul.f32.gmra.mxu0 %v1151
      %v6734 = vpop.f32.mrf.mxu0
      %v6735 = vadd.f32 %v6526, %v6734
      %6736 = vmatmul.f32.gmra.mxu0 %v1154
      %v6737 = vpop.f32.mrf.mxu0
      %v6738 = vadd.f32 %v6529, %v6737
      %6739 = vmatmul.f32.gmra.mxu0 %v1157
      %v6740 = vpop.f32.mrf.mxu0
      %v6741 = vadd.f32 %v6532, %v6740
      %6742 = vmatmul.f32.gmra.mxu0 %v1166
      %v6743 = vpop.f32.mrf.mxu0
      %v6744 = vadd.f32 %v6535, %v6743
      %6745 = vmatmul.f32.gmra.mxu0 %v1169
      %v6746 = vpop.f32.mrf.mxu0
      %v6747 = vadd.f32 %v6538, %v6746
      %6748 = vmatmul.f32.gmra.mxu0 %v1172
      %v6749 = vpop.f32.mrf.mxu0
      %v6750 = vadd.f32 %v6541, %v6749
      %6751 = vmatmul.f32.gmra.mxu0 %v1175
      %v6752 = vpop.f32.mrf.mxu0
      %v6753 = vadd.f32 %v6544, %v6752
      %6754 = vmatmul.f32.gmra.mxu0 %v1178
      %v6755 = vpop.f32.mrf.mxu0
      %v6756 = vadd.f32 %v6547, %v6755
      %6757 = vmatmul.f32.gmra.mxu0 %v1181
      %v6758 = vpop.f32.mrf.mxu0
      %v6759 = vadd.f32 %v6550, %v6758
      %6760 = vmatmul.f32.gmra.mxu0 %v1184
      %v6761 = vpop.f32.mrf.mxu0
      %v6762 = vadd.f32 %v6553, %v6761
      %6763 = vmatmul.f32.gmra.mxu0 %v1187
      %v6764 = vpop.f32.mrf.mxu0
      %v6765 = vadd.f32 %v6556, %v6764
      %6766 = vmatmul.f32.gmra.mxu0 %v1196
      %v6767 = vpop.f32.mrf.mxu0
      %v6768 = vadd.f32 %v6559, %v6767
      %6769 = vmatmul.f32.gmra.mxu0 %v1199
      %v6770 = vpop.f32.mrf.mxu0
      %v6771 = vadd.f32 %v6562, %v6770
      %6772 = vmatmul.f32.gmra.mxu0 %v1202
      %v6773 = vpop.f32.mrf.mxu0
      %v6774 = vadd.f32 %v6565, %v6773
      %6775 = vmatmul.f32.gmra.mxu0 %v1205
      %v6776 = vpop.f32.mrf.mxu0
      %v6777 = vadd.f32 %v6568, %v6776
      %6778 = vmatmul.f32.gmra.mxu0 %v1208
      %v6779 = vpop.f32.mrf.mxu0
      %v6780 = vadd.f32 %v6571, %v6779
      %6781 = vmatmul.f32.gmra.mxu0 %v1211
      %v6782 = vpop.f32.mrf.mxu0
      %v6783 = vadd.f32 %v6574, %v6782
      %6784 = vmatmul.f32.gmra.mxu0 %v1214
      %v6785 = vpop.f32.mrf.mxu0
      %v6786 = vadd.f32 %v6577, %v6785
      %6787 = vmatmul.f32.gmra.mxu0 %v1217
      %v6788 = vpop.f32.mrf.mxu0
      %v6789 = vadd.f32 %v6580, %v6788
      %6790 = vmatmul.f32.gmra.mxu0 %v1226
      %v6791 = vpop.f32.mrf.mxu0
      %v6792 = vadd.f32 %v6583, %v6791
      %6793 = vmatmul.f32.gmra.mxu0 %v1229
      %v6794 = vpop.f32.mrf.mxu0
      %v6795 = vadd.f32 %v6586, %v6794
      %6796 = vmatmul.f32.gmra.mxu0 %v1232
      %v6797 = vpop.f32.mrf.mxu0
      %v6798 = vadd.f32 %v6589, %v6797
      %6799 = vmatmul.f32.gmra.mxu0 %v1235
      %v6800 = vpop.f32.mrf.mxu0
      %v6801 = vadd.f32 %v6592, %v6800
      %6802 = vmatmul.f32.gmra.mxu0 %v1238
      %v6803 = vpop.f32.mrf.mxu0
      %v6804 = vadd.f32 %v6595, %v6803
      %6805 = vmatmul.f32.gmra.mxu0 %v1241
      %v6806 = vpop.f32.mrf.mxu0
      %v6807 = vadd.f32 %v6598, %v6806
      %6808 = vmatmul.f32.gmra.mxu0 %v1244
      %v6809 = vpop.f32.mrf.mxu0
      %v6810 = vadd.f32 %v6601, %v6809
      %6811 = vmatmul.f32.gmra.mxu0 %v1247
      %v6812 = vpop.f32.mrf.mxu0
      %v6813 = vadd.f32 %v6604, %v6812
      %6814 = vmatmul.f32.gmra.mxu0 %v1256
      %v6815 = vpop.f32.mrf.mxu0
      %v6816 = vadd.f32 %v6607, %v6815
      %6817 = vmatmul.f32.gmra.mxu0 %v1259
      %v6818 = vpop.f32.mrf.mxu0
      %v6819 = vadd.f32 %v6610, %v6818
      %6820 = vmatmul.f32.gmra.mxu0 %v1262
      %v6821 = vpop.f32.mrf.mxu0
      %v6822 = vadd.f32 %v6613, %v6821
      %6823 = vmatmul.f32.gmra.mxu0 %v1265
      %v6824 = vpop.f32.mrf.mxu0
      %v6825 = vadd.f32 %v6616, %v6824
      %6826 = vmatmul.f32.gmra.mxu0 %v1268
      %v6827 = vpop.f32.mrf.mxu0
      %v6828 = vadd.f32 %v6619, %v6827
      %6829 = vmatmul.f32.gmra.mxu0 %v1271
      %v6830 = vpop.f32.mrf.mxu0
      %v6831 = vadd.f32 %v6622, %v6830
      %6832 = vmatmul.f32.gmra.mxu0 %v1274
      %v6833 = vpop.f32.mrf.mxu0
      %v6834 = vadd.f32 %v6625, %v6833
      %6835 = vmatmul.f32.gmra.mxu0 %v1277
      %v6836 = vpop.f32.mrf.mxu0
      %v6837 = vadd.f32 %v6628, %v6836
      %6838 = vmatmul.f32.gmra.mxu0 %v1286
      %v6839 = vpop.f32.mrf.mxu0
      %v6840 = vadd.f32 %v6631, %v6839
      %6841 = vmatmul.f32.gmra.mxu0 %v1289
      %v6842 = vpop.f32.mrf.mxu0
      %v6843 = vadd.f32 %v6634, %v6842
      %6844 = vmatmul.f32.gmra.mxu0 %v1292
      %v6845 = vpop.f32.mrf.mxu0
      %v6846 = vadd.f32 %v6637, %v6845
      %6847 = vmatmul.f32.gmra.mxu0 %v1295
      %v6848 = vpop.f32.mrf.mxu0
      %v6849 = vadd.f32 %v6640, %v6848
      %6850 = vmatmul.f32.gmra.mxu0 %v1298
      %v6851 = vpop.f32.mrf.mxu0
      %v6852 = vadd.f32 %v6643, %v6851
      %6853 = vmatmul.f32.gmra.mxu0 %v1301
      %v6854 = vpop.f32.mrf.mxu0
      %v6855 = vadd.f32 %v6646, %v6854
      %6856 = vmatmul.f32.gmra.mxu0 %v1304
      %v6857 = vpop.f32.mrf.mxu0
      %v6858 = vadd.f32 %v6649, %v6857
      %6859 = vmatmul.f32.gmra.mxu0 %v1307
      %v6860 = vpop.f32.mrf.mxu0
      %v6861 = vadd.f32 %v6652, %v6860
      %6862 = vdwg.mxu0
      %6863 = vmatpush.msra.mxu0 %v1810
      %6864 = vmatpush.msra.mxu0 %v1809
      %6865 = vmatpush.msra.mxu0 %v1808
      %6866 = vmatpush.msra.mxu0 %v1807
      %6867 = vmatpush.msra.mxu0 %v1806
      %6868 = vmatpush.msra.mxu0 %v1805
      %6869 = vmatpush.msra.mxu0 %v1804
      %6870 = vmatpush.msra.mxu0 %v1803
      %6871 = vmatpush.msra.mxu0 %v1802
      %6872 = vmatpush.msra.mxu0 %v1801
      %6873 = vmatpush.msra.mxu0 %v1800
      %6874 = vmatpush.msra.mxu0 %v1799
      %6875 = vmatpush.msra.mxu0 %v1798
      %6876 = vmatpush.msra.mxu0 %v1797
      %6877 = vmatpush.msra.mxu0 %v1796
      %6878 = vmatpush.msra.mxu0 %v1795
      %6879 = vmatmul.f32.gmra.mxu0 %v253
      %v6880 = vpop.f32.mrf.mxu0
      %v6881 = vadd.f32 %v6672, %v6880
      %6882 = vmatmul.f32.gmra.mxu0 %v255
      %v6883 = vpop.f32.mrf.mxu0
      %v6884 = vadd.f32 %v6675, %v6883
      %6885 = vmatmul.f32.gmra.mxu0 %v257
      %v6886 = vpop.f32.mrf.mxu0
      %v6887 = vadd.f32 %v6678, %v6886
      %6888 = vmatmul.f32.gmra.mxu0 %v259
      %v6889 = vpop.f32.mrf.mxu0
      %v6890 = vadd.f32 %v6681, %v6889
      %6891 = vmatmul.f32.gmra.mxu0 %v261
      %v6892 = vpop.f32.mrf.mxu0
      %v6893 = vadd.f32 %v6684, %v6892
      %6894 = vmatmul.f32.gmra.mxu0 %v263
      %v6895 = vpop.f32.mrf.mxu0
      %v6896 = vadd.f32 %v6687, %v6895
      %6897 = vmatmul.f32.gmra.mxu0 %v265
      %v6898 = vpop.f32.mrf.mxu0
      %v6899 = vadd.f32 %v6690, %v6898
      %6900 = vmatmul.f32.gmra.mxu0 %v267
      %v6901 = vpop.f32.mrf.mxu0
      %v6902 = vadd.f32 %v6693, %v6901
      %6903 = vmatmul.f32.gmra.mxu0 %v273
      %v6904 = vpop.f32.mrf.mxu0
      %v6905 = vadd.f32 %v6696, %v6904
      %6906 = vmatmul.f32.gmra.mxu0 %v275
      %v6907 = vpop.f32.mrf.mxu0
      %v6908 = vadd.f32 %v6699, %v6907
      %6909 = vmatmul.f32.gmra.mxu0 %v277
      %v6910 = vpop.f32.mrf.mxu0
      %v6911 = vadd.f32 %v6702, %v6910
      %6912 = vmatmul.f32.gmra.mxu0 %v279
      %v6913 = vpop.f32.mrf.mxu0
      %v6914 = vadd.f32 %v6705, %v6913
      %6915 = vmatmul.f32.gmra.mxu0 %v281
      %v6916 = vpop.f32.mrf.mxu0
      %v6917 = vadd.f32 %v6708, %v6916
      %6918 = vmatmul.f32.gmra.mxu0 %v283
      %v6919 = vpop.f32.mrf.mxu0
      %v6920 = vadd.f32 %v6711, %v6919
      %6921 = vmatmul.f32.gmra.mxu0 %v285
      %v6922 = vpop.f32.mrf.mxu0
      %v6923 = vadd.f32 %v6714, %v6922
      %6924 = vmatmul.f32.gmra.mxu0 %v287
      %v6925 = vpop.f32.mrf.mxu0
      %v6926 = vadd.f32 %v6717, %v6925
      %6927 = vmatmul.f32.gmra.mxu0 %v293
      %v6928 = vpop.f32.mrf.mxu0
      %v6929 = vadd.f32 %v6720, %v6928
      %6930 = vmatmul.f32.gmra.mxu0 %v295
      %v6931 = vpop.f32.mrf.mxu0
      %v6932 = vadd.f32 %v6723, %v6931
      %6933 = vmatmul.f32.gmra.mxu0 %v297
      %v6934 = vpop.f32.mrf.mxu0
      %v6935 = vadd.f32 %v6726, %v6934
      %6936 = vmatmul.f32.gmra.mxu0 %v299
      %v6937 = vpop.f32.mrf.mxu0
      %v6938 = vadd.f32 %v6729, %v6937
      %6939 = vmatmul.f32.gmra.mxu0 %v301
      %v6940 = vpop.f32.mrf.mxu0
      %v6941 = vadd.f32 %v6732, %v6940
      %6942 = vmatmul.f32.gmra.mxu0 %v303
      %v6943 = vpop.f32.mrf.mxu0
      %v6944 = vadd.f32 %v6735, %v6943
      %6945 = vmatmul.f32.gmra.mxu0 %v305
      %v6946 = vpop.f32.mrf.mxu0
      %v6947 = vadd.f32 %v6738, %v6946
      %6948 = vmatmul.f32.gmra.mxu0 %v307
      %v6949 = vpop.f32.mrf.mxu0
      %v6950 = vadd.f32 %v6741, %v6949
      %6951 = vmatmul.f32.gmra.mxu0 %v313
      %v6952 = vpop.f32.mrf.mxu0
      %v6953 = vadd.f32 %v6744, %v6952
      %6954 = vmatmul.f32.gmra.mxu0 %v315
      %v6955 = vpop.f32.mrf.mxu0
      %v6956 = vadd.f32 %v6747, %v6955
      %6957 = vmatmul.f32.gmra.mxu0 %v317
      %v6958 = vpop.f32.mrf.mxu0
      %v6959 = vadd.f32 %v6750, %v6958
      %6960 = vmatmul.f32.gmra.mxu0 %v319
      %v6961 = vpop.f32.mrf.mxu0
      %v6962 = vadd.f32 %v6753, %v6961
      %6963 = vmatmul.f32.gmra.mxu0 %v321
      %v6964 = vpop.f32.mrf.mxu0
      %v6965 = vadd.f32 %v6756, %v6964
      %6966 = vmatmul.f32.gmra.mxu0 %v323
      %v6967 = vpop.f32.mrf.mxu0
      %v6968 = vadd.f32 %v6759, %v6967
      %6969 = vmatmul.f32.gmra.mxu0 %v325
      %v6970 = vpop.f32.mrf.mxu0
      %v6971 = vadd.f32 %v6762, %v6970
      %6972 = vmatmul.f32.gmra.mxu0 %v327
      %v6973 = vpop.f32.mrf.mxu0
      %v6974 = vadd.f32 %v6765, %v6973
      %6975 = vmatmul.f32.gmra.mxu0 %v333
      %v6976 = vpop.f32.mrf.mxu0
      %v6977 = vadd.f32 %v6768, %v6976
      %6978 = vmatmul.f32.gmra.mxu0 %v335
      %v6979 = vpop.f32.mrf.mxu0
      %v6980 = vadd.f32 %v6771, %v6979
      %6981 = vmatmul.f32.gmra.mxu0 %v337
      %v6982 = vpop.f32.mrf.mxu0
      %v6983 = vadd.f32 %v6774, %v6982
      %6984 = vmatmul.f32.gmra.mxu0 %v339
      %v6985 = vpop.f32.mrf.mxu0
      %v6986 = vadd.f32 %v6777, %v6985
      %6987 = vmatmul.f32.gmra.mxu0 %v341
      %v6988 = vpop.f32.mrf.mxu0
      %v6989 = vadd.f32 %v6780, %v6988
      %6990 = vmatmul.f32.gmra.mxu0 %v343
      %v6991 = vpop.f32.mrf.mxu0
      %v6992 = vadd.f32 %v6783, %v6991
      %6993 = vmatmul.f32.gmra.mxu0 %v345
      %v6994 = vpop.f32.mrf.mxu0
      %v6995 = vadd.f32 %v6786, %v6994
      %6996 = vmatmul.f32.gmra.mxu0 %v347
      %v6997 = vpop.f32.mrf.mxu0
      %v6998 = vadd.f32 %v6789, %v6997
      %6999 = vmatmul.f32.gmra.mxu0 %v353
      %v7000 = vpop.f32.mrf.mxu0
      %v7001 = vadd.f32 %v6792, %v7000
      %7002 = vmatmul.f32.gmra.mxu0 %v355
      %v7003 = vpop.f32.mrf.mxu0
      %v7004 = vadd.f32 %v6795, %v7003
      %7005 = vmatmul.f32.gmra.mxu0 %v357
      %v7006 = vpop.f32.mrf.mxu0
      %v7007 = vadd.f32 %v6798, %v7006
      %7008 = vmatmul.f32.gmra.mxu0 %v359
      %v7009 = vpop.f32.mrf.mxu0
      %v7010 = vadd.f32 %v6801, %v7009
      %7011 = vmatmul.f32.gmra.mxu0 %v361
      %v7012 = vpop.f32.mrf.mxu0
      %v7013 = vadd.f32 %v6804, %v7012
      %7014 = vmatmul.f32.gmra.mxu0 %v363
      %v7015 = vpop.f32.mrf.mxu0
      %v7016 = vadd.f32 %v6807, %v7015
      %7017 = vmatmul.f32.gmra.mxu0 %v365
      %v7018 = vpop.f32.mrf.mxu0
      %v7019 = vadd.f32 %v6810, %v7018
      %7020 = vmatmul.f32.gmra.mxu0 %v367
      %v7021 = vpop.f32.mrf.mxu0
      %v7022 = vadd.f32 %v6813, %v7021
      %7023 = vmatmul.f32.gmra.mxu0 %v373
      %v7024 = vpop.f32.mrf.mxu0
      %v7025 = vadd.f32 %v6816, %v7024
      %7026 = vmatmul.f32.gmra.mxu0 %v375
      %v7027 = vpop.f32.mrf.mxu0
      %v7028 = vadd.f32 %v6819, %v7027
      %7029 = vmatmul.f32.gmra.mxu0 %v377
      %v7030 = vpop.f32.mrf.mxu0
      %v7031 = vadd.f32 %v6822, %v7030
      %7032 = vmatmul.f32.gmra.mxu0 %v379
      %v7033 = vpop.f32.mrf.mxu0
      %v7034 = vadd.f32 %v6825, %v7033
      %7035 = vmatmul.f32.gmra.mxu0 %v381
      %v7036 = vpop.f32.mrf.mxu0
      %v7037 = vadd.f32 %v6828, %v7036
      %7038 = vmatmul.f32.gmra.mxu0 %v383
      %v7039 = vpop.f32.mrf.mxu0
      %v7040 = vadd.f32 %v6831, %v7039
      %7041 = vmatmul.f32.gmra.mxu0 %v385
      %v7042 = vpop.f32.mrf.mxu0
      %v7043 = vadd.f32 %v6834, %v7042
      %7044 = vmatmul.f32.gmra.mxu0 %v387
      %v7045 = vpop.f32.mrf.mxu0
      %v7046 = vadd.f32 %v6837, %v7045
      %7047 = vmatmul.f32.gmra.mxu0 %v393
      %v7048 = vpop.f32.mrf.mxu0
      %v7049 = vadd.f32 %v6840, %v7048
      %7050 = vmatmul.f32.gmra.mxu0 %v395
      %v7051 = vpop.f32.mrf.mxu0
      %v7052 = vadd.f32 %v6843, %v7051
      %7053 = vmatmul.f32.gmra.mxu0 %v397
      %v7054 = vpop.f32.mrf.mxu0
      %v7055 = vadd.f32 %v6846, %v7054
      %7056 = vmatmul.f32.gmra.mxu0 %v399
      %v7057 = vpop.f32.mrf.mxu0
      %v7058 = vadd.f32 %v6849, %v7057
      %7059 = vmatmul.f32.gmra.mxu0 %v401
      %v7060 = vpop.f32.mrf.mxu0
      %v7061 = vadd.f32 %v6852, %v7060
      %7062 = vmatmul.f32.gmra.mxu0 %v403
      %v7063 = vpop.f32.mrf.mxu0
      %v7064 = vadd.f32 %v6855, %v7063
      %7065 = vmatmul.f32.gmra.mxu0 %v405
      %v7066 = vpop.f32.mrf.mxu0
      %v7067 = vadd.f32 %v6858, %v7066
      %7068 = vmatmul.f32.gmra.mxu0 %v407
      %v7069 = vpop.f32.mrf.mxu0
      %v7070 = vadd.f32 %v6861, %v7069
      %7071 = vdwg.mxu0
      %7072 = vmatpush.msra.mxu0 %v1826
      %7073 = vmatpush.msra.mxu0 %v1825
      %7074 = vmatpush.msra.mxu0 %v1824
      %7075 = vmatpush.msra.mxu0 %v1823
      %7076 = vmatpush.msra.mxu0 %v1822
      %7077 = vmatpush.msra.mxu0 %v1821
      %7078 = vmatpush.msra.mxu0 %v1820
      %7079 = vmatpush.msra.mxu0 %v1819
      %7080 = vmatpush.msra.mxu0 %v1818
      %7081 = vmatpush.msra.mxu0 %v1817
      %7082 = vmatpush.msra.mxu0 %v1816
      %7083 = vmatpush.msra.mxu0 %v1815
      %7084 = vmatpush.msra.mxu0 %v1814
      %7085 = vmatpush.msra.mxu0 %v1813
      %7086 = vmatpush.msra.mxu0 %v1812
      %7087 = vmatpush.msra.mxu0 %v1811
      %7088 = vmatmul.f32.gmra.mxu0 %v678
      %v7089 = vpop.f32.mrf.mxu0
      %v7090 = vadd.f32 %v6881, %v7089
      %7091 = vmatmul.f32.gmra.mxu0 %v681
      %v7092 = vpop.f32.mrf.mxu0
      %v7093 = vadd.f32 %v6884, %v7092
      %7094 = vmatmul.f32.gmra.mxu0 %v684
      %v7095 = vpop.f32.mrf.mxu0
      %v7096 = vadd.f32 %v6887, %v7095
      %7097 = vmatmul.f32.gmra.mxu0 %v687
      %v7098 = vpop.f32.mrf.mxu0
      %v7099 = vadd.f32 %v6890, %v7098
      %7100 = vmatmul.f32.gmra.mxu0 %v690
      %v7101 = vpop.f32.mrf.mxu0
      %v7102 = vadd.f32 %v6893, %v7101
      %7103 = vmatmul.f32.gmra.mxu0 %v693
      %v7104 = vpop.f32.mrf.mxu0
      %v7105 = vadd.f32 %v6896, %v7104
      %7106 = vmatmul.f32.gmra.mxu0 %v696
      %v7107 = vpop.f32.mrf.mxu0
      %v7108 = vadd.f32 %v6899, %v7107
      %7109 = vmatmul.f32.gmra.mxu0 %v699
      %v7110 = vpop.f32.mrf.mxu0
      %v7111 = vadd.f32 %v6902, %v7110
      %7112 = vmatmul.f32.gmra.mxu0 %v708
      %v7113 = vpop.f32.mrf.mxu0
      %v7114 = vadd.f32 %v6905, %v7113
      %7115 = vmatmul.f32.gmra.mxu0 %v711
      %v7116 = vpop.f32.mrf.mxu0
      %v7117 = vadd.f32 %v6908, %v7116
      %7118 = vmatmul.f32.gmra.mxu0 %v714
      %v7119 = vpop.f32.mrf.mxu0
      %v7120 = vadd.f32 %v6911, %v7119
      %7121 = vmatmul.f32.gmra.mxu0 %v717
      %v7122 = vpop.f32.mrf.mxu0
      %v7123 = vadd.f32 %v6914, %v7122
      %7124 = vmatmul.f32.gmra.mxu0 %v720
      %v7125 = vpop.f32.mrf.mxu0
      %v7126 = vadd.f32 %v6917, %v7125
      %7127 = vmatmul.f32.gmra.mxu0 %v723
      %v7128 = vpop.f32.mrf.mxu0
      %v7129 = vadd.f32 %v6920, %v7128
      %7130 = vmatmul.f32.gmra.mxu0 %v726
      %v7131 = vpop.f32.mrf.mxu0
      %v7132 = vadd.f32 %v6923, %v7131
      %7133 = vmatmul.f32.gmra.mxu0 %v729
      %v7134 = vpop.f32.mrf.mxu0
      %v7135 = vadd.f32 %v6926, %v7134
      %7136 = vmatmul.f32.gmra.mxu0 %v738
      %v7137 = vpop.f32.mrf.mxu0
      %v7138 = vadd.f32 %v6929, %v7137
      %7139 = vmatmul.f32.gmra.mxu0 %v741
      %v7140 = vpop.f32.mrf.mxu0
      %v7141 = vadd.f32 %v6932, %v7140
      %7142 = vmatmul.f32.gmra.mxu0 %v744
      %v7143 = vpop.f32.mrf.mxu0
      %v7144 = vadd.f32 %v6935, %v7143
      %7145 = vmatmul.f32.gmra.mxu0 %v747
      %v7146 = vpop.f32.mrf.mxu0
      %v7147 = vadd.f32 %v6938, %v7146
      %7148 = vmatmul.f32.gmra.mxu0 %v750
      %v7149 = vpop.f32.mrf.mxu0
      %v7150 = vadd.f32 %v6941, %v7149
      %7151 = vmatmul.f32.gmra.mxu0 %v753
      %v7152 = vpop.f32.mrf.mxu0
      %v7153 = vadd.f32 %v6944, %v7152
      %7154 = vmatmul.f32.gmra.mxu0 %v756
      %v7155 = vpop.f32.mrf.mxu0
      %v7156 = vadd.f32 %v6947, %v7155
      %7157 = vmatmul.f32.gmra.mxu0 %v759
      %v7158 = vpop.f32.mrf.mxu0
      %v7159 = vadd.f32 %v6950, %v7158
      %7160 = vmatmul.f32.gmra.mxu0 %v768
      %v7161 = vpop.f32.mrf.mxu0
      %v7162 = vadd.f32 %v6953, %v7161
      %7163 = vmatmul.f32.gmra.mxu0 %v771
      %v7164 = vpop.f32.mrf.mxu0
      %v7165 = vadd.f32 %v6956, %v7164
      %7166 = vmatmul.f32.gmra.mxu0 %v774
      %v7167 = vpop.f32.mrf.mxu0
      %v7168 = vadd.f32 %v6959, %v7167
      %7169 = vmatmul.f32.gmra.mxu0 %v777
      %v7170 = vpop.f32.mrf.mxu0
      %v7171 = vadd.f32 %v6962, %v7170
      %7172 = vmatmul.f32.gmra.mxu0 %v780
      %v7173 = vpop.f32.mrf.mxu0
      %v7174 = vadd.f32 %v6965, %v7173
      %7175 = vmatmul.f32.gmra.mxu0 %v783
      %v7176 = vpop.f32.mrf.mxu0
      %v7177 = vadd.f32 %v6968, %v7176
      %7178 = vmatmul.f32.gmra.mxu0 %v786
      %v7179 = vpop.f32.mrf.mxu0
      %v7180 = vadd.f32 %v6971, %v7179
      %7181 = vmatmul.f32.gmra.mxu0 %v789
      %v7182 = vpop.f32.mrf.mxu0
      %v7183 = vadd.f32 %v6974, %v7182
      %7184 = vmatmul.f32.gmra.mxu0 %v798
      %v7185 = vpop.f32.mrf.mxu0
      %v7186 = vadd.f32 %v6977, %v7185
      %7187 = vmatmul.f32.gmra.mxu0 %v801
      %v7188 = vpop.f32.mrf.mxu0
      %v7189 = vadd.f32 %v6980, %v7188
      %7190 = vmatmul.f32.gmra.mxu0 %v804
      %v7191 = vpop.f32.mrf.mxu0
      %v7192 = vadd.f32 %v6983, %v7191
      %7193 = vmatmul.f32.gmra.mxu0 %v807
      %v7194 = vpop.f32.mrf.mxu0
      %v7195 = vadd.f32 %v6986, %v7194
      %7196 = vmatmul.f32.gmra.mxu0 %v810
      %v7197 = vpop.f32.mrf.mxu0
      %v7198 = vadd.f32 %v6989, %v7197
      %7199 = vmatmul.f32.gmra.mxu0 %v813
      %v7200 = vpop.f32.mrf.mxu0
      %v7201 = vadd.f32 %v6992, %v7200
      %7202 = vmatmul.f32.gmra.mxu0 %v816
      %v7203 = vpop.f32.mrf.mxu0
      %v7204 = vadd.f32 %v6995, %v7203
      %7205 = vmatmul.f32.gmra.mxu0 %v819
      %v7206 = vpop.f32.mrf.mxu0
      %v7207 = vadd.f32 %v6998, %v7206
      %7208 = vmatmul.f32.gmra.mxu0 %v828
      %v7209 = vpop.f32.mrf.mxu0
      %v7210 = vadd.f32 %v7001, %v7209
      %7211 = vmatmul.f32.gmra.mxu0 %v831
      %v7212 = vpop.f32.mrf.mxu0
      %v7213 = vadd.f32 %v7004, %v7212
      %7214 = vmatmul.f32.gmra.mxu0 %v834
      %v7215 = vpop.f32.mrf.mxu0
      %v7216 = vadd.f32 %v7007, %v7215
      %7217 = vmatmul.f32.gmra.mxu0 %v837
      %v7218 = vpop.f32.mrf.mxu0
      %v7219 = vadd.f32 %v7010, %v7218
      %7220 = vmatmul.f32.gmra.mxu0 %v840
      %v7221 = vpop.f32.mrf.mxu0
      %v7222 = vadd.f32 %v7013, %v7221
      %7223 = vmatmul.f32.gmra.mxu0 %v843
      %v7224 = vpop.f32.mrf.mxu0
      %v7225 = vadd.f32 %v7016, %v7224
      %7226 = vmatmul.f32.gmra.mxu0 %v846
      %v7227 = vpop.f32.mrf.mxu0
      %v7228 = vadd.f32 %v7019, %v7227
      %7229 = vmatmul.f32.gmra.mxu0 %v849
      %v7230 = vpop.f32.mrf.mxu0
      %v7231 = vadd.f32 %v7022, %v7230
      %7232 = vmatmul.f32.gmra.mxu0 %v858
      %v7233 = vpop.f32.mrf.mxu0
      %v7234 = vadd.f32 %v7025, %v7233
      %7235 = vmatmul.f32.gmra.mxu0 %v861
      %v7236 = vpop.f32.mrf.mxu0
      %v7237 = vadd.f32 %v7028, %v7236
      %7238 = vmatmul.f32.gmra.mxu0 %v864
      %v7239 = vpop.f32.mrf.mxu0
      %v7240 = vadd.f32 %v7031, %v7239
      %7241 = vmatmul.f32.gmra.mxu0 %v867
      %v7242 = vpop.f32.mrf.mxu0
      %v7243 = vadd.f32 %v7034, %v7242
      %7244 = vmatmul.f32.gmra.mxu0 %v870
      %v7245 = vpop.f32.mrf.mxu0
      %v7246 = vadd.f32 %v7037, %v7245
      %7247 = vmatmul.f32.gmra.mxu0 %v873
      %v7248 = vpop.f32.mrf.mxu0
      %v7249 = vadd.f32 %v7040, %v7248
      %7250 = vmatmul.f32.gmra.mxu0 %v876
      %v7251 = vpop.f32.mrf.mxu0
      %v7252 = vadd.f32 %v7043, %v7251
      %7253 = vmatmul.f32.gmra.mxu0 %v879
      %v7254 = vpop.f32.mrf.mxu0
      %v7255 = vadd.f32 %v7046, %v7254
      %7256 = vmatmul.f32.gmra.mxu0 %v888
      %v7257 = vpop.f32.mrf.mxu0
      %v7258 = vadd.f32 %v7049, %v7257
      %7259 = vmatmul.f32.gmra.mxu0 %v891
      %v7260 = vpop.f32.mrf.mxu0
      %v7261 = vadd.f32 %v7052, %v7260
      %7262 = vmatmul.f32.gmra.mxu0 %v894
      %v7263 = vpop.f32.mrf.mxu0
      %v7264 = vadd.f32 %v7055, %v7263
      %7265 = vmatmul.f32.gmra.mxu0 %v897
      %v7266 = vpop.f32.mrf.mxu0
      %v7267 = vadd.f32 %v7058, %v7266
      %7268 = vmatmul.f32.gmra.mxu0 %v900
      %v7269 = vpop.f32.mrf.mxu0
      %v7270 = vadd.f32 %v7061, %v7269
      %7271 = vmatmul.f32.gmra.mxu0 %v903
      %v7272 = vpop.f32.mrf.mxu0
      %v7273 = vadd.f32 %v7064, %v7272
      %7274 = vmatmul.f32.gmra.mxu0 %v906
      %v7275 = vpop.f32.mrf.mxu0
      %v7276 = vadd.f32 %v7067, %v7275
      %7277 = vmatmul.f32.gmra.mxu0 %v909
      %v7278 = vpop.f32.mrf.mxu0
      %v7279 = vadd.f32 %v7070, %v7278
      %7280 = vdwg.mxu0
      %7281 = vmatpush.msra.mxu0 %v1842
      %7282 = vmatpush.msra.mxu0 %v1841
      %7283 = vmatpush.msra.mxu0 %v1840
      %7284 = vmatpush.msra.mxu0 %v1839
      %7285 = vmatpush.msra.mxu0 %v1838
      %7286 = vmatpush.msra.mxu0 %v1837
      %7287 = vmatpush.msra.mxu0 %v1836
      %7288 = vmatpush.msra.mxu0 %v1835
      %7289 = vmatpush.msra.mxu0 %v1834
      %7290 = vmatpush.msra.mxu0 %v1833
      %7291 = vmatpush.msra.mxu0 %v1832
      %7292 = vmatpush.msra.mxu0 %v1831
      %7293 = vmatpush.msra.mxu0 %v1830
      %7294 = vmatpush.msra.mxu0 %v1829
      %7295 = vmatpush.msra.mxu0 %v1828
      %7296 = vmatpush.msra.mxu0 %v1827
      %7297 = vmatmul.f32.gmra.mxu0 %v1079
      %v7298 = vpop.f32.mrf.mxu0
      %v7299 = vadd.f32 %v7090, %v7298
      %7300 = vmatmul.f32.gmra.mxu0 %v1082
      %v7301 = vpop.f32.mrf.mxu0
      %v7302 = vadd.f32 %v7093, %v7301
      %7303 = vmatmul.f32.gmra.mxu0 %v1085
      %v7304 = vpop.f32.mrf.mxu0
      %v7305 = vadd.f32 %v7096, %v7304
      %7306 = vmatmul.f32.gmra.mxu0 %v1088
      %v7307 = vpop.f32.mrf.mxu0
      %v7308 = vadd.f32 %v7099, %v7307
      %7309 = vmatmul.f32.gmra.mxu0 %v1091
      %v7310 = vpop.f32.mrf.mxu0
      %v7311 = vadd.f32 %v7102, %v7310
      %7312 = vmatmul.f32.gmra.mxu0 %v1094
      %v7313 = vpop.f32.mrf.mxu0
      %v7314 = vadd.f32 %v7105, %v7313
      %7315 = vmatmul.f32.gmra.mxu0 %v1097
      %v7316 = vpop.f32.mrf.mxu0
      %v7317 = vadd.f32 %v7108, %v7316
      %7318 = vmatmul.f32.gmra.mxu0 %v1100
      %v7319 = vpop.f32.mrf.mxu0
      %v7320 = vadd.f32 %v7111, %v7319
      %7321 = vmatmul.f32.gmra.mxu0 %v1109
      %v7322 = vpop.f32.mrf.mxu0
      %v7323 = vadd.f32 %v7114, %v7322
      %7324 = vmatmul.f32.gmra.mxu0 %v1112
      %v7325 = vpop.f32.mrf.mxu0
      %v7326 = vadd.f32 %v7117, %v7325
      %7327 = vmatmul.f32.gmra.mxu0 %v1115
      %v7328 = vpop.f32.mrf.mxu0
      %v7329 = vadd.f32 %v7120, %v7328
      %7330 = vmatmul.f32.gmra.mxu0 %v1118
      %v7331 = vpop.f32.mrf.mxu0
      %v7332 = vadd.f32 %v7123, %v7331
      %7333 = vmatmul.f32.gmra.mxu0 %v1121
      %v7334 = vpop.f32.mrf.mxu0
      %v7335 = vadd.f32 %v7126, %v7334
      %7336 = vmatmul.f32.gmra.mxu0 %v1124
      %v7337 = vpop.f32.mrf.mxu0
      %v7338 = vadd.f32 %v7129, %v7337
      %7339 = vmatmul.f32.gmra.mxu0 %v1127
      %v7340 = vpop.f32.mrf.mxu0
      %v7341 = vadd.f32 %v7132, %v7340
      %7342 = vmatmul.f32.gmra.mxu0 %v1130
      %v7343 = vpop.f32.mrf.mxu0
      %v7344 = vadd.f32 %v7135, %v7343
      %7345 = vmatmul.f32.gmra.mxu0 %v1139
      %v7346 = vpop.f32.mrf.mxu0
      %v7347 = vadd.f32 %v7138, %v7346
      %7348 = vmatmul.f32.gmra.mxu0 %v1142
      %v7349 = vpop.f32.mrf.mxu0
      %v7350 = vadd.f32 %v7141, %v7349
      %7351 = vmatmul.f32.gmra.mxu0 %v1145
      %v7352 = vpop.f32.mrf.mxu0
      %v7353 = vadd.f32 %v7144, %v7352
      %7354 = vmatmul.f32.gmra.mxu0 %v1148
      %v7355 = vpop.f32.mrf.mxu0
      %v7356 = vadd.f32 %v7147, %v7355
      %7357 = vmatmul.f32.gmra.mxu0 %v1151
      %v7358 = vpop.f32.mrf.mxu0
      %v7359 = vadd.f32 %v7150, %v7358
      %7360 = vmatmul.f32.gmra.mxu0 %v1154
      %v7361 = vpop.f32.mrf.mxu0
      %v7362 = vadd.f32 %v7153, %v7361
      %7363 = vmatmul.f32.gmra.mxu0 %v1157
      %v7364 = vpop.f32.mrf.mxu0
      %v7365 = vadd.f32 %v7156, %v7364
      %7366 = vmatmul.f32.gmra.mxu0 %v1160
      %v7367 = vpop.f32.mrf.mxu0
      %v7368 = vadd.f32 %v7159, %v7367
      %7369 = vmatmul.f32.gmra.mxu0 %v1169
      %v7370 = vpop.f32.mrf.mxu0
      %v7371 = vadd.f32 %v7162, %v7370
      %7372 = vmatmul.f32.gmra.mxu0 %v1172
      %v7373 = vpop.f32.mrf.mxu0
      %v7374 = vadd.f32 %v7165, %v7373
      %7375 = vmatmul.f32.gmra.mxu0 %v1175
      %v7376 = vpop.f32.mrf.mxu0
      %v7377 = vadd.f32 %v7168, %v7376
      %7378 = vmatmul.f32.gmra.mxu0 %v1178
      %v7379 = vpop.f32.mrf.mxu0
      %v7380 = vadd.f32 %v7171, %v7379
      %7381 = vmatmul.f32.gmra.mxu0 %v1181
      %v7382 = vpop.f32.mrf.mxu0
      %v7383 = vadd.f32 %v7174, %v7382
      %7384 = vmatmul.f32.gmra.mxu0 %v1184
      %v7385 = vpop.f32.mrf.mxu0
      %v7386 = vadd.f32 %v7177, %v7385
      %7387 = vmatmul.f32.gmra.mxu0 %v1187
      %v7388 = vpop.f32.mrf.mxu0
      %v7389 = vadd.f32 %v7180, %v7388
      %7390 = vmatmul.f32.gmra.mxu0 %v1190
      %v7391 = vpop.f32.mrf.mxu0
      %v7392 = vadd.f32 %v7183, %v7391
      %7393 = vmatmul.f32.gmra.mxu0 %v1199
      %v7394 = vpop.f32.mrf.mxu0
      %v7395 = vadd.f32 %v7186, %v7394
      %7396 = vmatmul.f32.gmra.mxu0 %v1202
      %v7397 = vpop.f32.mrf.mxu0
      %v7398 = vadd.f32 %v7189, %v7397
      %7399 = vmatmul.f32.gmra.mxu0 %v1205
      %v7400 = vpop.f32.mrf.mxu0
      %v7401 = vadd.f32 %v7192, %v7400
      %7402 = vmatmul.f32.gmra.mxu0 %v1208
      %v7403 = vpop.f32.mrf.mxu0
      %v7404 = vadd.f32 %v7195, %v7403
      %7405 = vmatmul.f32.gmra.mxu0 %v1211
      %v7406 = vpop.f32.mrf.mxu0
      %v7407 = vadd.f32 %v7198, %v7406
      %7408 = vmatmul.f32.gmra.mxu0 %v1214
      %v7409 = vpop.f32.mrf.mxu0
      %v7410 = vadd.f32 %v7201, %v7409
      %7411 = vmatmul.f32.gmra.mxu0 %v1217
      %v7412 = vpop.f32.mrf.mxu0
      %v7413 = vadd.f32 %v7204, %v7412
      %7414 = vmatmul.f32.gmra.mxu0 %v1220
      %v7415 = vpop.f32.mrf.mxu0
      %v7416 = vadd.f32 %v7207, %v7415
      %7417 = vmatmul.f32.gmra.mxu0 %v1229
      %v7418 = vpop.f32.mrf.mxu0
      %v7419 = vadd.f32 %v7210, %v7418
      %7420 = vmatmul.f32.gmra.mxu0 %v1232
      %v7421 = vpop.f32.mrf.mxu0
      %v7422 = vadd.f32 %v7213, %v7421
      %7423 = vmatmul.f32.gmra.mxu0 %v1235
      %v7424 = vpop.f32.mrf.mxu0
      %v7425 = vadd.f32 %v7216, %v7424
      %7426 = vmatmul.f32.gmra.mxu0 %v1238
      %v7427 = vpop.f32.mrf.mxu0
      %v7428 = vadd.f32 %v7219, %v7427
      %7429 = vmatmul.f32.gmra.mxu0 %v1241
      %v7430 = vpop.f32.mrf.mxu0
      %v7431 = vadd.f32 %v7222, %v7430
      %7432 = vmatmul.f32.gmra.mxu0 %v1244
      %v7433 = vpop.f32.mrf.mxu0
      %v7434 = vadd.f32 %v7225, %v7433
      %7435 = vmatmul.f32.gmra.mxu0 %v1247
      %v7436 = vpop.f32.mrf.mxu0
      %v7437 = vadd.f32 %v7228, %v7436
      %7438 = vmatmul.f32.gmra.mxu0 %v1250
      %v7439 = vpop.f32.mrf.mxu0
      %v7440 = vadd.f32 %v7231, %v7439
      %7441 = vmatmul.f32.gmra.mxu0 %v1259
      %v7442 = vpop.f32.mrf.mxu0
      %v7443 = vadd.f32 %v7234, %v7442
      %7444 = vmatmul.f32.gmra.mxu0 %v1262
      %v7445 = vpop.f32.mrf.mxu0
      %v7446 = vadd.f32 %v7237, %v7445
      %7447 = vmatmul.f32.gmra.mxu0 %v1265
      %v7448 = vpop.f32.mrf.mxu0
      %v7449 = vadd.f32 %v7240, %v7448
      %7450 = vmatmul.f32.gmra.mxu0 %v1268
      %v7451 = vpop.f32.mrf.mxu0
      %v7452 = vadd.f32 %v7243, %v7451
      %7453 = vmatmul.f32.gmra.mxu0 %v1271
      %v7454 = vpop.f32.mrf.mxu0
      %v7455 = vadd.f32 %v7246, %v7454
      %7456 = vmatmul.f32.gmra.mxu0 %v1274
      %v7457 = vpop.f32.mrf.mxu0
      %v7458 = vadd.f32 %v7249, %v7457
      %7459 = vmatmul.f32.gmra.mxu0 %v1277
      %v7460 = vpop.f32.mrf.mxu0
      %v7461 = vadd.f32 %v7252, %v7460
      %7462 = vmatmul.f32.gmra.mxu0 %v1280
      %v7463 = vpop.f32.mrf.mxu0
      %v7464 = vadd.f32 %v7255, %v7463
      %7465 = vmatmul.f32.gmra.mxu0 %v1289
      %v7466 = vpop.f32.mrf.mxu0
      %v7467 = vadd.f32 %v7258, %v7466
      %7468 = vmatmul.f32.gmra.mxu0 %v1292
      %v7469 = vpop.f32.mrf.mxu0
      %v7470 = vadd.f32 %v7261, %v7469
      %7471 = vmatmul.f32.gmra.mxu0 %v1295
      %v7472 = vpop.f32.mrf.mxu0
      %v7473 = vadd.f32 %v7264, %v7472
      %7474 = vmatmul.f32.gmra.mxu0 %v1298
      %v7475 = vpop.f32.mrf.mxu0
      %v7476 = vadd.f32 %v7267, %v7475
      %7477 = vmatmul.f32.gmra.mxu0 %v1301
      %v7478 = vpop.f32.mrf.mxu0
      %v7479 = vadd.f32 %v7270, %v7478
      %7480 = vmatmul.f32.gmra.mxu0 %v1304
      %v7481 = vpop.f32.mrf.mxu0
      %v7482 = vadd.f32 %v7273, %v7481
      %7483 = vmatmul.f32.gmra.mxu0 %v1307
      %v7484 = vpop.f32.mrf.mxu0
      %v7485 = vadd.f32 %v7276, %v7484
      %7486 = vmatmul.f32.gmra.mxu0 %v1310
      %v7487 = vpop.f32.mrf.mxu0
      %v7488 = vadd.f32 %v7279, %v7487
      %7489 = vdwg.mxu0
      %v7490 = vadd.f32 %v7299, %v7302
      %v7491 = vadd.f32 %v7490, %v7305
      %v7492 = vadd.f32 %v7491, %v7308
      %v7493 = vadd.f32 %v7492, %v7311
      %v7494 = vadd.f32 %v7493, %v7314
      %v7495 = vadd.f32 %v7494, %v7317
      %v7496 = vadd.f32 %v7495, %v7320
      %v7497 = vadd.f32 %v7496, %v7323
      %v7498 = vadd.f32 %v7497, %v7326
      %v7499 = vadd.f32 %v7498, %v7329
      %v7500 = vadd.f32 %v7499, %v7332
      %v7501 = vadd.f32 %v7500, %v7335
      %v7502 = vadd.f32 %v7501, %v7338
      %v7503 = vadd.f32 %v7502, %v7341
      %v7504 = vadd.f32 %v7503, %v7344
      %v7505 = vadd.f32 %v7504, %v7347
      %v7506 = vadd.f32 %v7505, %v7350
      %v7507 = vadd.f32 %v7506, %v7353
      %v7508 = vadd.f32 %v7507, %v7356
      %v7509 = vadd.f32 %v7508, %v7359
      %v7510 = vadd.f32 %v7509, %v7362
      %v7511 = vadd.f32 %v7510, %v7365
      %v7512 = vadd.f32 %v7511, %v7368
      %v7513 = vadd.f32 %v7512, %v7371
      %v7514 = vadd.f32 %v7513, %v7374
      %v7515 = vadd.f32 %v7514, %v7377
      %v7516 = vadd.f32 %v7515, %v7380
      %v7517 = vadd.f32 %v7516, %v7383
      %v7518 = vadd.f32 %v7517, %v7386
      %v7519 = vadd.f32 %v7518, %v7389
      %v7520 = vadd.f32 %v7519, %v7392
      %v7521 = vadd.f32 %v7520, %v7395
      %v7522 = vadd.f32 %v7521, %v7398
      %v7523 = vadd.f32 %v7522, %v7401
      %v7524 = vadd.f32 %v7523, %v7404
      %v7525 = vadd.f32 %v7524, %v7407
      %v7526 = vadd.f32 %v7525, %v7410
      %v7527 = vadd.f32 %v7526, %v7413
      %v7528 = vadd.f32 %v7527, %v7416
      %v7529 = vadd.f32 %v7528, %v7419
      %v7530 = vadd.f32 %v7529, %v7422
      %v7531 = vadd.f32 %v7530, %v7425
      %v7532 = vadd.f32 %v7531, %v7428
      %v7533 = vadd.f32 %v7532, %v7431
      %v7534 = vadd.f32 %v7533, %v7434
      %v7535 = vadd.f32 %v7534, %v7437
      %v7536 = vadd.f32 %v7535, %v7440
      %v7537 = vadd.f32 %v7536, %v7443
      %v7538 = vadd.f32 %v7537, %v7446
      %v7539 = vadd.f32 %v7538, %v7449
      %v7540 = vadd.f32 %v7539, %v7452
      %v7541 = vadd.f32 %v7540, %v7455
      %v7542 = vadd.f32 %v7541, %v7458
      %v7543 = vadd.f32 %v7542, %v7461
      %v7544 = vadd.f32 %v7543, %v7464
      %v7545 = vadd.f32 %v7544, %v7467
      %v7546 = vadd.f32 %v7545, %v7470
      %v7547 = vadd.f32 %v7546, %v7473
      %v7548 = vadd.f32 %v7547, %v7476
      %v7549 = vadd.f32 %v7548, %v7479
      %v7550 = vadd.f32 %v7549, %v7482
      %v7551 = vadd.f32 %v7550, %v7485
      %v7552 = vadd.f32 %v7551, %v7488
      %v7553 = vrot.slane %v7552, 4
      %v7554 = vadd.f32 %v7552, %v7553
      %v7555 = vrot.slane %v7554, 2
      %v7556 = vadd.f32 %v7554, %v7555
      %v7557 = vrot.slane %v7556, 1
      %v7558 = vadd.f32 %v7556, %v7557
      %v7559 = vmul.f32 %v7299, %v7299
      %v7560 = vmul.f32 %v7302, %v7302
      %v7561 = vmul.f32 %v7305, %v7305
      %v7562 = vmul.f32 %v7308, %v7308
      %v7563 = vmul.f32 %v7311, %v7311
      %v7564 = vmul.f32 %v7314, %v7314
      %v7565 = vmul.f32 %v7317, %v7317
      %v7566 = vmul.f32 %v7320, %v7320
      %v7567 = vmul.f32 %v7323, %v7323
      %v7568 = vmul.f32 %v7326, %v7326
      %v7569 = vmul.f32 %v7329, %v7329
      %v7570 = vmul.f32 %v7332, %v7332
      %v7571 = vmul.f32 %v7335, %v7335
      %v7572 = vmul.f32 %v7338, %v7338
      %v7573 = vmul.f32 %v7341, %v7341
      %v7574 = vmul.f32 %v7344, %v7344
      %v7575 = vmul.f32 %v7347, %v7347
      %v7576 = vmul.f32 %v7350, %v7350
      %v7577 = vmul.f32 %v7353, %v7353
      %v7578 = vmul.f32 %v7356, %v7356
      %v7579 = vmul.f32 %v7359, %v7359
      %v7580 = vmul.f32 %v7362, %v7362
      %v7581 = vmul.f32 %v7365, %v7365
      %v7582 = vmul.f32 %v7368, %v7368
      %v7583 = vmul.f32 %v7371, %v7371
      %v7584 = vmul.f32 %v7374, %v7374
      %v7585 = vmul.f32 %v7377, %v7377
      %v7586 = vmul.f32 %v7380, %v7380
      %v7587 = vmul.f32 %v7383, %v7383
      %v7588 = vmul.f32 %v7386, %v7386
      %v7589 = vmul.f32 %v7389, %v7389
      %v7590 = vmul.f32 %v7392, %v7392
      %v7591 = vmul.f32 %v7395, %v7395
      %v7592 = vmul.f32 %v7398, %v7398
      %v7593 = vmul.f32 %v7401, %v7401
      %v7594 = vmul.f32 %v7404, %v7404
      %v7595 = vmul.f32 %v7407, %v7407
      %v7596 = vmul.f32 %v7410, %v7410
      %v7597 = vmul.f32 %v7413, %v7413
      %v7598 = vmul.f32 %v7416, %v7416
      %v7599 = vmul.f32 %v7419, %v7419
      %v7600 = vmul.f32 %v7422, %v7422
      %v7601 = vmul.f32 %v7425, %v7425
      %v7602 = vmul.f32 %v7428, %v7428
      %v7603 = vmul.f32 %v7431, %v7431
      %v7604 = vmul.f32 %v7434, %v7434
      %v7605 = vmul.f32 %v7437, %v7437
      %v7606 = vmul.f32 %v7440, %v7440
      %v7607 = vmul.f32 %v7443, %v7443
      %v7608 = vmul.f32 %v7446, %v7446
      %v7609 = vmul.f32 %v7449, %v7449
      %v7610 = vmul.f32 %v7452, %v7452
      %v7611 = vmul.f32 %v7455, %v7455
      %v7612 = vmul.f32 %v7458, %v7458
      %v7613 = vmul.f32 %v7461, %v7461
      %v7614 = vmul.f32 %v7464, %v7464
      %v7615 = vmul.f32 %v7467, %v7467
      %v7616 = vmul.f32 %v7470, %v7470
      %v7617 = vmul.f32 %v7473, %v7473
      %v7618 = vmul.f32 %v7476, %v7476
      %v7619 = vmul.f32 %v7479, %v7479
      %v7620 = vmul.f32 %v7482, %v7482
      %v7621 = vmul.f32 %v7485, %v7485
      %v7622 = vmul.f32 %v7488, %v7488
      %v7623 = vadd.f32 %v7559, %v7560
      %v7624 = vadd.f32 %v7623, %v7561
      %v7625 = vadd.f32 %v7624, %v7562
      %v7626 = vadd.f32 %v7625, %v7563
      %v7627 = vadd.f32 %v7626, %v7564
      %v7628 = vadd.f32 %v7627, %v7565
      %v7629 = vadd.f32 %v7628, %v7566
      %v7630 = vadd.f32 %v7629, %v7567
      %v7631 = vadd.f32 %v7630, %v7568
      %v7632 = vadd.f32 %v7631, %v7569
      %v7633 = vadd.f32 %v7632, %v7570
      %v7634 = vadd.f32 %v7633, %v7571
      %v7635 = vadd.f32 %v7634, %v7572
      %v7636 = vadd.f32 %v7635, %v7573
      %v7637 = vadd.f32 %v7636, %v7574
      %v7638 = vadd.f32 %v7637, %v7575
      %v7639 = vadd.f32 %v7638, %v7576
      %v7640 = vadd.f32 %v7639, %v7577
      %v7641 = vadd.f32 %v7640, %v7578
      %v7642 = vadd.f32 %v7641, %v7579
      %v7643 = vadd.f32 %v7642, %v7580
      %v7644 = vadd.f32 %v7643, %v7581
      %v7645 = vadd.f32 %v7644, %v7582
      %v7646 = vadd.f32 %v7645, %v7583
      %v7647 = vadd.f32 %v7646, %v7584
      %v7648 = vadd.f32 %v7647, %v7585
      %v7649 = vadd.f32 %v7648, %v7586
      %v7650 = vadd.f32 %v7649, %v7587
      %v7651 = vadd.f32 %v7650, %v7588
      %v7652 = vadd.f32 %v7651, %v7589
      %v7653 = vadd.f32 %v7652, %v7590
      %v7654 = vadd.f32 %v7653, %v7591
      %v7655 = vadd.f32 %v7654, %v7592
      %v7656 = vadd.f32 %v7655, %v7593
      %v7657 = vadd.f32 %v7656, %v7594
      %v7658 = vadd.f32 %v7657, %v7595
      %v7659 = vadd.f32 %v7658, %v7596
      %v7660 = vadd.f32 %v7659, %v7597
      %v7661 = vadd.f32 %v7660, %v7598
      %v7662 = vadd.f32 %v7661, %v7599
      %v7663 = vadd.f32 %v7662, %v7600
      %v7664 = vadd.f32 %v7663, %v7601
      %v7665 = vadd.f32 %v7664, %v7602
      %v7666 = vadd.f32 %v7665, %v7603
      %v7667 = vadd.f32 %v7666, %v7604
      %v7668 = vadd.f32 %v7667, %v7605
      %v7669 = vadd.f32 %v7668, %v7606
      %v7670 = vadd.f32 %v7669, %v7607
      %v7671 = vadd.f32 %v7670, %v7608
      %v7672 = vadd.f32 %v7671, %v7609
      %v7673 = vadd.f32 %v7672, %v7610
      %v7674 = vadd.f32 %v7673, %v7611
      %v7675 = vadd.f32 %v7674, %v7612
      %v7676 = vadd.f32 %v7675, %v7613
      %v7677 = vadd.f32 %v7676, %v7614
      %v7678 = vadd.f32 %v7677, %v7615
      %v7679 = vadd.f32 %v7678, %v7616
      %v7680 = vadd.f32 %v7679, %v7617
      %v7681 = vadd.f32 %v7680, %v7618
      %v7682 = vadd.f32 %v7681, %v7619
      %v7683 = vadd.f32 %v7682, %v7620
      %v7684 = vadd.f32 %v7683, %v7621
      %v7685 = vadd.f32 %v7684, %v7622
      %v7686 = vrot.slane %v7685, 4
      %v7687 = vadd.f32 %v7685, %v7686
      %v7688 = vrot.slane %v7687, 2
      %v7689 = vadd.f32 %v7687, %v7688
      %v7690 = vrot.slane %v7689, 1
      %v7691 = vadd.f32 %v7689, %v7690
      %v7694 = vrot.slane %v7691, 7
      %vm7695 = vcmask 1040384
      %v7696 = vsel %vm7695, %v7558, %v7694
      %v7698 = vlaneseq
      %vm7699 = vcmp.ge.s32.totalorder %v7698, 0
      %vm7700 = vcmp.lt.s32.totalorder %v7698, 256
      %vm7701 = vmand %vm7699, %vm7700
      %7702 = vst.msk [vmem:[%s208] sm:$0x3] %vm7701, %v7696
      %7703 = vst [vmem:[%s204] sm:$0xff] %v7299
      %7704 = vst [vmem:[%s204 + $0x8] sm:$0xff] %v7302
      %7705 = vst [vmem:[%s204 + $0x10] sm:$0xff] %v7305
      %7706 = vst [vmem:[%s204 + $0x18] sm:$0xff] %v7308
      %7707 = vst [vmem:[%s204 + $0x20] sm:$0xff] %v7311
      %7708 = vst [vmem:[%s204 + $0x28] sm:$0xff] %v7314
      %7709 = vst [vmem:[%s204 + $0x30] sm:$0xff] %v7317
      %7710 = vst [vmem:[%s204 + $0x38] sm:$0xff] %v7320
      %7711 = vst [vmem:[%s204 + $0x40] sm:$0xff] %v7323
      %7712 = vst [vmem:[%s204 + $0x48] sm:$0xff] %v7326
      %7713 = vst [vmem:[%s204 + $0x50] sm:$0xff] %v7329
      %7714 = vst [vmem:[%s204 + $0x58] sm:$0xff] %v7332
      %7715 = vst [vmem:[%s204 + $0x60] sm:$0xff] %v7335
      %7716 = vst [vmem:[%s204 + $0x68] sm:$0xff] %v7338
      %7717 = vst [vmem:[%s204 + $0x70] sm:$0xff] %v7341
      %7718 = vst [vmem:[%s204 + $0x78] sm:$0xff] %v7344
      %7719 = vst [vmem:[%s204 + $0x80] sm:$0xff] %v7347
      %7720 = vst [vmem:[%s204 + $0x88] sm:$0xff] %v7350
      %7721 = vst [vmem:[%s204 + $0x90] sm:$0xff] %v7353
      %7722 = vst [vmem:[%s204 + $0x98] sm:$0xff] %v7356
      %7723 = vst [vmem:[%s204 + $0xa0] sm:$0xff] %v7359
      %7724 = vst [vmem:[%s204 + $0xa8] sm:$0xff] %v7362
      %7725 = vst [vmem:[%s204 + $0xb0] sm:$0xff] %v7365
      %7726 = vst [vmem:[%s204 + $0xb8] sm:$0xff] %v7368
      %7727 = vst [vmem:[%s204 + $0xc0] sm:$0xff] %v7371
      %7728 = vst [vmem:[%s204 + $0xc8] sm:$0xff] %v7374
      %7729 = vst [vmem:[%s204 + $0xd0] sm:$0xff] %v7377
      %7730 = vst [vmem:[%s204 + $0xd8] sm:$0xff] %v7380
      %7731 = vst [vmem:[%s204 + $0xe0] sm:$0xff] %v7383
      %7732 = vst [vmem:[%s204 + $0xe8] sm:$0xff] %v7386
      %7733 = vst [vmem:[%s204 + $0xf0] sm:$0xff] %v7389
      %7734 = vst [vmem:[%s204 + $0xf8] sm:$0xff] %v7392
      %7735 = vst [vmem:[%s204 + $0x100] sm:$0xff] %v7395
      %7736 = vst [vmem:[%s204 + $0x108] sm:$0xff] %v7398
      %7737 = vst [vmem:[%s204 + $0x110] sm:$0xff] %v7401
      %7738 = vst [vmem:[%s204 + $0x118] sm:$0xff] %v7404
      %7739 = vst [vmem:[%s204 + $0x120] sm:$0xff] %v7407
      %7740 = vst [vmem:[%s204 + $0x128] sm:$0xff] %v7410
      %7741 = vst [vmem:[%s204 + $0x130] sm:$0xff] %v7413
      %7742 = vst [vmem:[%s204 + $0x138] sm:$0xff] %v7416
      %7743 = vst [vmem:[%s204 + $0x140] sm:$0xff] %v7419
      %7744 = vst [vmem:[%s204 + $0x148] sm:$0xff] %v7422
      %7745 = vst [vmem:[%s204 + $0x150] sm:$0xff] %v7425
      %7746 = vst [vmem:[%s204 + $0x158] sm:$0xff] %v7428
      %7747 = vst [vmem:[%s204 + $0x160] sm:$0xff] %v7431
      %7748 = vst [vmem:[%s204 + $0x168] sm:$0xff] %v7434
      %7749 = vst [vmem:[%s204 + $0x170] sm:$0xff] %v7437
      %7750 = vst [vmem:[%s204 + $0x178] sm:$0xff] %v7440
      %7751 = vst [vmem:[%s204 + $0x180] sm:$0xff] %v7443
      %7752 = vst [vmem:[%s204 + $0x188] sm:$0xff] %v7446
      %7753 = vst [vmem:[%s204 + $0x190] sm:$0xff] %v7449
      %7754 = vst [vmem:[%s204 + $0x198] sm:$0xff] %v7452
      %7755 = vst [vmem:[%s204 + $0x1a0] sm:$0xff] %v7455
      %7756 = vst [vmem:[%s204 + $0x1a8] sm:$0xff] %v7458
      %7757 = vst [vmem:[%s204 + $0x1b0] sm:$0xff] %v7461
      %7758 = vst [vmem:[%s204 + $0x1b8] sm:$0xff] %v7464
      %7759 = vst [vmem:[%s204 + $0x1c0] sm:$0xff] %v7467
      %7760 = vst [vmem:[%s204 + $0x1c8] sm:$0xff] %v7470
      %7761 = vst [vmem:[%s204 + $0x1d0] sm:$0xff] %v7473
      %7762 = vst [vmem:[%s204 + $0x1d8] sm:$0xff] %v7476
      %7763 = vst [vmem:[%s204 + $0x1e0] sm:$0xff] %v7479
      %7764 = vst [vmem:[%s204 + $0x1e8] sm:$0xff] %v7482
      %7765 = vst [vmem:[%s204 + $0x1f0] sm:$0xff] %v7485
      %7766 = vst [vmem:[%s204 + $0x1f8] sm:$0xff] %v7488
      %p7767 = scmp.lt.s32.totalorder %s16, 1
      %s7768 = scalar_select %p7767, %s16, 1
      %s7769 = smul.addr %s7768, 64
      %s7770 = smul.addr %s7769, 8
      %s7771 = scalar_lea.vmem %s3, %s7770
      %p7772 = scmp.lt.s32.totalorder %s16, 1
      %s7773 = scalar_select %p7772, %s16, 1
      %s7774 = smul.addr %s7773, 2
      %s7775 = scalar_lea.vmem %s4, %s7774
      // Predicated region
      $region33: #{double_conv_forward.3} parent=31 // pred_check
        %p7776 = pneg %p102
      $region34: #{double_conv_forward.3} parent=31 // pred_check_branch
        %7778 = sbr.rel (%p7776) target = $region36
      $region35: #{double_conv_forward.3} parent=31 // pred_region
        _
      $region36: #{double_conv_forward.3} parent=31 // pred_fallthru
        _
      // Predicated region
      $region37: #{double_conv_forward.3} parent=31 // pred_check
        %p7779 = pneg %p128
      $region38: #{double_conv_forward.3} parent=31 // pred_check_branch
        %7781 = sbr.rel (%p7779) target = $region40
      $region39: #{double_conv_forward.3} parent=31 // pred_region
        _
      $region40: #{double_conv_forward.3} parent=31 // pred_fallthru
        _
    $region32: #{double_conv_forward.3} parent=5 // pred_fallthru
      _
    %p7782 = scmp.le.s32.totalorder 2, %s11
    // Predicated region
    $region41: #{double_conv_forward.3} parent=5 // pred_check
      %p7783 = pneg %p7782
    $region42: #{double_conv_forward.3} parent=5 // pred_check_branch
      %7785 = sbr.rel (%p7783) target = $region44
    $region43: #{double_conv_forward.3} parent=5 // pred_region
      %s7786 = ssub.s32 %s11, 2
      // Predicated region
      $region45: #{double_conv_forward.3} parent=43 // pred_check
        %p7787 = pneg %p108
      $region46: #{double_conv_forward.3} parent=43 // pred_check_branch
        %7789 = sbr.rel (%p7787) target = $region48
      $region47: #{double_conv_forward.3} parent=43 // pred_region
        %p7790 = scmp.lt.s32.totalorder %s17, 1
        %s7791 = scalar_select %p7790, %s17, 1
        %s7792 = smul.addr %s7791, 64
        %s7793 = smul.addr %s7792, 8
        %s7794 = scalar_lea.vmem %s3, %s7793
      $region48: #{double_conv_forward.3} parent=43 // pred_fallthru
        _
      // Predicated region
      $region49: #{double_conv_forward.3} parent=43 // pred_check
        %p7795 = pneg %p134
      $region50: #{double_conv_forward.3} parent=43 // pred_check_branch
        %7797 = sbr.rel (%p7795) target = $region52
      $region51: #{double_conv_forward.3} parent=43 // pred_region
        %p7798 = scmp.lt.s32.totalorder %s17, 1
        %s7799 = scalar_select %p7798, %s17, 1
        %s7800 = smul.addr %s7799, 2
        %s7801 = scalar_lea.vmem %s4, %s7800
      $region52: #{double_conv_forward.3} parent=43 // pred_fallthru
        _
    $region44: #{double_conv_forward.3} parent=5 // pred_fallthru
      _
  $region6: #{double_conv_forward.3} parent=0 // loop_footer
    %s15 = sadd.s32 1, %s11
  $region7: #{double_conv_forward.3} parent=0 // loop_footer_branch
    %10 = sbr.rel target = $region3
  $region8: #{double_conv_forward.3} parent=0 // loop_exit
    _

</llo_original>
